<compile_context>
chip_gen: v5e
topology: v5e:2x2
jax: 0.10.0
libtpu: 0.0.40
codegen_flags: <defaults>
</compile_context>

<pallas_src>
import math
import numpy as np
import jax
import jax.numpy as jnp
from jax.experimental import pallas as pl
from jax.experimental.pallas import tpu as pltpu

# ----------------------------- config ----------------------------------------
B = 32                     # batch of news items
NUM_WORDS_TITLE = 8        # title field length = 3*8 = 24
WORD_DIM = 32              # args.word_embedding_dim (BERT hidden-size stand-in)
N_HEADS = 4
D_K = 20
D_V = 20
DP = 32                    # per-head dim zero-padded to 32 (lane aligned)
ATT_DIM = N_HEADS * D_V    # 80  (true MultiHeadAttention output dim)
HDP = N_HEADS * DP         # 128 (padded layout used inside the kernel)
QUERY_DIM = 32             # args.news_query_vector_dim
QPAD = 128                 # query dim padded to a full vreg of lanes
NEWS_DIM = 16              # args.news_dim
OUT_PAD = 128              # padded output lanes (lane-dense stores), sliced host-side
VOCAB = 64
CAT_SIZE = 10
SUBCAT_SIZE = 12
N_ELEM = 2                 # category + subcategory
TITLE_LEN = NUM_WORDS_TITLE * 3
TOTAL_LEN = TITLE_LEN + 1 + 1
INV_SQRT_DK = 1.0 / math.sqrt(D_K)

# lane offsets inside the single packed small-vector array (all 128-lane aligned)
OFF_BQKV = 0                       # (1, 3*HDP)  fused q|k|v bias
OFF_A1B = OFF_BQKV + 3 * HDP       # (1, QPAD)   att_fc1 bias  (zeros past QUERY_DIM)
OFF_A2W = OFF_A1B + QPAD           # (1, QPAD)   att_fc2 weight row (zeros past QUERY_DIM)
OFF_A2B = OFF_A2W + QPAD           # (1, 128)    att_fc2 bias scalar at lane 0, rest zero
OFF_RB = OFF_A2B + 128             # (1, OUT_PAD) reduce_dim bias (zeros past NEWS_DIM)
VEC_LEN = OFF_RB + OUT_PAD         # 896 lanes total


# ----------------------------- Pallas kernel ---------------------------------
def news_encoder_kernel(word_ref, elem_ref, wqkv_ref, a1w_ref, rw_ref, vecs_ref, out_ref):
    """One grid step == block_b news items.

    word_ref : (Bt, S, WORD_DIM) bf16   "BERT" word embeddings
    elem_ref : (Bt, HDP) f32            pre-summed element vectors (head-padded layout)
    wqkv_ref : (WORD_DIM, 3*HDP) bf16   fused Q|K|V projection
    a1w_ref  : (HDP, QPAD) bf16         att_fc1 weight (zero rows/cols in padding)
    rw_ref   : (HDP, OUT_PAD) bf16      reduce_dim weight, 1/3 mean factor folded in
    vecs_ref : (1, VEC_LEN) f32         packed small vectors (biases, att_fc2 row)
    out_ref  : (Bt, OUT_PAD) f32        lane-dense padded news vectors
    """
    Bt, S, WD = word_ref.shape
    H = N_HEADS

    # ---- fused Q|K|V projection: one (Bt*S, WD) x (WD, 3*HDP) bf16 matmul ----
    x2 = word_ref[...].reshape(Bt * S, WD)
    qkv = jnp.dot(x2, wqkv_ref[...], preferred_element_type=jnp.float32)
    qkv = qkv + vecs_ref[:, OFF_BQKV:OFF_BQKV + 3 * HDP]
    qkv3 = qkv.reshape(Bt, S, 3 * HDP)
    q3 = qkv3[:, :, 0 * HDP:1 * HDP]           # (Bt, S, HDP) — full-vreg slices
    k3 = qkv3[:, :, 1 * HDP:2 * HDP]
    v3 = qkv3[:, :, 2 * HDP:3 * HDP]

    # ---- per-head 0/1 lane masks (H, HDP), built on the VPU (no extra input) ----
    h_idx = jax.lax.broadcasted_iota(jnp.int32, (H, HDP), 0)
    d_idx = jax.lax.broadcasted_iota(jnp.int32, (H, HDP), 1)
    hmask = ((d_idx >= h_idx * DP) & (d_idx < (h_idx + 1) * DP)).astype(jnp.float32)

    # ---- batched (Bt*H) full-width masked scaled-dot-product attention ----
    # masked lanes are zero, so q_masked.k_masked == q_h.k_h and attn_h @ v_masked
    # lands head h's context in head h's 32-lane block (lane-dense "concat" for free).
    qm = (q3[:, None, :, :] * hmask[None, :, None, :]).reshape(Bt * H, S, HDP)
    km = (k3[:, None, :, :] * hmask[None, :, None, :]).reshape(Bt * H, S, HDP)
    vm = (v3[:, None, :, :] * hmask[None, :, None, :]).reshape(Bt * H, S, HDP)
    s = jnp.exp(jnp.einsum('bqd,bkd->bqk', qm, km,
                           preferred_element_type=jnp.float32) * INV_SQRT_DK)
    attn = s * pl.reciprocal(jnp.sum(s, axis=-1, keepdims=True) + 1e-8, approx=True)
    ctx4 = jnp.einsum('bqk,bkd->bqd', attn, vm,
                      preferred_element_type=jnp.float32)          # (Bt*H, S, HDP)
    ctx = jnp.sum(ctx4.reshape(Bt, H, S, HDP), axis=1)             # (Bt, S, HDP)

    # ---- AdditiveAttention pooling over the sequence (QUERY_DIM padded to 128) ----
    ctx2 = ctx.reshape(Bt * S, HDP)
    e = jnp.tanh(jnp.dot(ctx2.astype(jnp.bfloat16), a1w_ref[...],
                         preferred_element_type=jnp.float32)
                 + vecs_ref[:, OFF_A1B:OFF_A1B + QPAD])            # (Bt*S, QPAD)
    a2w_row = vecs_ref[:, OFF_A2W:OFF_A2W + QPAD]                  # (1, QPAD)
    a2b = jnp.sum(vecs_ref[:, OFF_A2B:OFF_A2B + 128],
                  axis=-1, keepdims=True)                          # (1,1) scalar (lane 0)
    # att_fc2 as VPU multiply + lane reduce instead of an N=1 MXU matmul
    alpha = jnp.exp(jnp.sum(e * a2w_row, axis=-1, keepdims=True) + a2b)   # (Bt*S, 1)
    alpha3 = alpha.reshape(Bt, S, 1)
    w3 = alpha3 * pl.reciprocal(jnp.sum(alpha3, axis=1, keepdims=True) + 1e-8,
                                approx=True)
    text_vec = jnp.sum(ctx * w3, axis=1)                           # (Bt, HDP)

    # ---- mean over [title, category, subcategory] folded into rw + reduce_dim ----
    mv = text_vec + elem_ref[...]                                  # (Bt, HDP)
    out_ref[...] = (jnp.dot(mv.astype(jnp.bfloat16), rw_ref[...],
                            preferred_element_type=jnp.float32)
                    + vecs_ref[:, OFF_RB:OFF_RB + OUT_PAD])


def _default_block_b(Btot):
    """One grid step on single-TC chips (v5e/v6e); two parallel steps on dual-TC v7x."""
    try:
        kind = jax.devices()[0].device_kind.lower()
    except Exception:
        kind = ""
    if ("v7" in kind or "7x" in kind) and Btot % 2 == 0:
        return Btot // 2
    return Btot


def news_encoder_pallas(word_emb, elem_sum, fused, *, block_b=None):
    """word_emb: (B, S, WORD_DIM) f32;  elem_sum: (B, HDP) f32 (head-padded, pre-summed)."""
    Btot, S, WD = word_emb.shape
    if block_b is None:
        block_b = _default_block_b(Btot)
    assert Btot % block_b == 0
    grid = (Btot // block_b,)

    def full2(shape):
        return pl.BlockSpec(shape, lambda b: (0, 0))

    in_specs = [
        pl.BlockSpec((block_b, S, WD), lambda b: (b, 0, 0)),   # word embeddings (bf16)
        pl.BlockSpec((block_b, HDP), lambda b: (b, 0)),        # pre-summed element vectors
        full2((WD, 3 * HDP)),                                  # fused Wqkv (bf16)
        full2((HDP, QPAD)),                                    # att_fc1 weight (bf16)
        full2((HDP, OUT_PAD)),                                 # reduce_dim weight (bf16)
        full2((1, VEC_LEN)),                                   # packed small vectors (f32)
    ]
    out_specs = pl.BlockSpec((block_b, OUT_PAD), lambda b: (b, 0))

    out = pl.pallas_call(
        news_encoder_kernel,
        out_shape=jax.ShapeDtypeStruct((Btot, OUT_PAD), jnp.float32),
        grid=grid,
        in_specs=in_specs,
        out_specs=out_specs,
        compiler_params=pltpu.CompilerParams(dimension_semantics=("parallel",)),
    )(word_emb.astype(jnp.bfloat16), elem_sum,
      fused["wqkv"], fused["a1w"], fused["rw"], fused["vecs"])
    return out[:, :NEWS_DIM]


# ----------------------------- host-side param packing -----------------------
def pad_heads_last(x):
    """Pad last dim from H*20 layout to H*32 layout (zeros in padded lanes)."""
    *lead, hd = x.shape
    assert hd == N_HEADS * D_V
    x = x.reshape(*lead, N_HEADS, D_V)
    x = jnp.pad(x, [(0, 0)] * len(lead) + [(0, 0), (0, DP - D_V)])
    return x.reshape(*lead, HDP)


def pad_heads_first(x):
    """Pad first (row) dim from H*20 to H*32 with zero rows."""
    hd, n = x.shape
    assert hd == N_HEADS * D_V
    x = x.reshape(N_HEADS, D_V, n)
    x = jnp.pad(x, [(0, 0), (0, DP - D_V), (0, 0)])
    return x.reshape(HDP, n)


def pack_params(p):
    bf16 = jnp.bfloat16
    wqkv = jnp.concatenate([pad_heads_last(p["wq"]),
                            pad_heads_last(p["wk"]),
                            pad_heads_last(p["wv"])], axis=1)            # (WD, 3*HDP)
    bqkv = jnp.concatenate([pad_heads_last(p["bq"]),
                            pad_heads_last(p["bk"]),
                            pad_heads_last(p["bv"])], axis=1)            # (1, 3*HDP)
    a1w = jnp.pad(pad_heads_first(p["a1w"]), ((0, 0), (0, QPAD - QUERY_DIM)))
    a1b = jnp.pad(p["a1b"], ((0, 0), (0, QPAD - QUERY_DIM)))             # (1, QPAD)
    a2w_row = jnp.pad(p["a2w"].T, ((0, 0), (0, QPAD - QUERY_DIM)))       # (1, QPAD)
    a2b_seg = jnp.pad(p["a2b"], ((0, 0), (0, 128 - 1)))                  # (1, 128) lane 0
    # fold the 1/(1+N_ELEM) mean factor into the reduce_dim weight
    rw = jnp.pad(pad_heads_first(p["rw"]) * (1.0 / (1 + N_ELEM)),
                 ((0, 0), (0, OUT_PAD - NEWS_DIM)))                      # (HDP, OUT_PAD)
    rb = jnp.pad(p["rb"], ((0, 0), (0, OUT_PAD - NEWS_DIM)))             # (1, OUT_PAD)
    vecs = jnp.concatenate([bqkv, a1b, a2w_row, a2b_seg, rb], axis=1)    # (1, VEC_LEN)
    assert vecs.shape == (1, VEC_LEN)
    return {"wqkv": wqkv.astype(bf16), "a1w": a1w.astype(bf16),
            "rw": rw.astype(bf16), "vecs": vecs.astype(jnp.float32)}


# ----------------------------- pure-JAX reference (unpadded params, f32) -----
def news_encoder_ref(word_emb, elem_vecs, p):
    ctx_heads = []
    for h in range(N_HEADS):
        sl = slice(h * D_K, (h + 1) * D_K)
        q = word_emb @ p["wq"][:, sl] + p["bq"][0, sl]
        k = word_emb @ p["wk"][:, sl] + p["bk"][0, sl]
        v = word_emb @ p["wv"][:, sl] + p["bv"][0, sl]
        s = jnp.exp(jnp.einsum("bqd,bkd->bqk", q, k) * INV_SQRT_DK)
        attn = s / (jnp.sum(s, axis=-1, keepdims=True) + 1e-8)
        ctx_heads.append(jnp.einsum("bqk,bkd->bqd", attn, v))
    ctx = jnp.concatenate(ctx_heads, axis=-1)                       # (B, S, ATT_DIM)
    e = jnp.tanh(ctx @ p["a1w"] + p["a1b"][0])
    alpha = jnp.exp(e @ p["a2w"] + p["a2b"][0])
    alpha = alpha / (jnp.sum(alpha, axis=1, keepdims=True) + 1e-8)
    text_vec = jnp.sum(ctx * alpha, axis=1)                         # (B, ATT_DIM)
    all_vecs = jnp.concatenate([text_vec[:, None, :], elem_vecs], axis=1)
    mean_vec = jnp.mean(all_vecs, axis=1)
    return mean_vec @ p["rw"] + p["rb"][0]


# ----------------------------- main -------------------------------------------
if __name__ == "__main__":
    key = jax.random.PRNGKey(0)
    ks = jax.random.split(key, 16)

    def w(k, shape, scale=0.05):
        return (scale * jax.random.normal(k, shape)).astype(jnp.float32)

    params = {
        "wq": w(ks[0], (WORD_DIM, ATT_DIM)), "bq": w(ks[1], (1, ATT_DIM)),
        "wk": w(ks[2], (WORD_DIM, ATT_DIM)), "bk": w(ks[3], (1, ATT_DIM)),
        "wv": w(ks[4], (WORD_DIM, ATT_DIM)), "bv": w(ks[5], (1, ATT_DIM)),
        "a1w": w(ks[6], (ATT_DIM, QUERY_DIM)), "a1b": w(ks[7], (1, QUERY_DIM)),
        "a2w": w(ks[8], (QUERY_DIM, 1)), "a2b": w(ks[9], (1, 1)),
        "rw": w(ks[10], (ATT_DIM, NEWS_DIM)), "rb": w(ks[11], (1, NEWS_DIM)),
    }

    # Embedding tables (stand-in "BERT" word table; element tables, padding_idx=0 -> 0)
    word_table = w(ks[12], (VOCAB, WORD_DIM), scale=0.5)
    cat_table = w(ks[13], (CAT_SIZE + 1, ATT_DIM), scale=0.5).at[0].set(0.0)
    subcat_table = w(ks[14], (SUBCAT_SIZE + 1, ATT_DIM), scale=0.5).at[0].set(0.0)

    # news tensor: [title_ids | title_type | title_attmask | category | subcategory]
    kid = jax.random.split(ks[15], 3)
    title_ids = jax.random.randint(kid[0], (B, NUM_WORDS_TITLE), 1, VOCAB, dtype=jnp.int32)
    title_type = jnp.zeros((B, NUM_WORDS_TITLE), jnp.int32)
    title_attm = jnp.ones((B, NUM_WORDS_TITLE), jnp.int32)
    cat_ids = jax.random.randint(kid[1], (B, 1), 0, CAT_SIZE + 1, dtype=jnp.int32)
    subcat_ids = jax.random.randint(kid[2], (B, 1), 0, SUBCAT_SIZE + 1, dtype=jnp.int32)
    news = jnp.concatenate([title_ids, title_type, title_attm, cat_ids, subcat_ids], axis=1)
    assert news.shape == (B, TOTAL_LEN)

    # glue (plain JAX): attribute narrowing + embedding gathers
    ids = news[:, :NUM_WORDS_TITLE]
    cat = news[:, TITLE_LEN]
    subcat = news[:, TITLE_LEN + 1]
    word_emb = jnp.take(word_table, ids, axis=0)                   # (B, S, WORD_DIM) f32
    elem_vecs = jnp.stack([jnp.take(cat_table, cat, axis=0),
                           jnp.take(subcat_table, subcat, axis=0)], axis=1)   # (B, 2, 80)
    elem_sum = pad_heads_last(jnp.sum(elem_vecs, axis=1))          # (B, HDP) pre-summed
    fused = pack_params(params)

    # run kernel + verify against the f32 reference (bf16 weights -> looser tolerance)
    out = news_encoder_pallas(word_emb, elem_sum, fused)
    jax.block_until_ready(out)
    ref = news_encoder_ref(word_emb, elem_vecs, params)
    np.testing.assert_allclose(np.asarray(out), np.asarray(ref), rtol=2e-2, atol=3e-3)
    assert out.shape == (B, NEWS_DIM)
    print("KERNEL_OK")
</pallas_src>

<mosaic_0001>
module attributes {stable_mosaic.version = 11 : i64} {
  func.func @news_encoder_kernel(%arg0: i32, %arg1: memref<32x8x32xbf16, #tpu.memory_space<vmem>>, %arg2: memref<32x128xf32, #tpu.memory_space<vmem>>, %arg3: memref<32x384xbf16, #tpu.memory_space<vmem>>, %arg4: memref<128x128xbf16, #tpu.memory_space<vmem>>, %arg5: memref<128x128xbf16, #tpu.memory_space<vmem>>, %arg6: memref<1x896xf32, #tpu.memory_space<vmem>>, %arg7: memref<32x128xf32, #tpu.memory_space<vmem>>) attributes {dimension_semantics = [#tpu.dimension_semantics<parallel>], iteration_bounds = array<i64: 1>, scalar_prefetch = 0 : i64, scratch_operands = 0 : i64, tpu.core_type = #tpu.core_type<tc>, window_params = [{transform_indices = @transform_0, window_bounds = array<i64: 32, 8, 32>}, {transform_indices = @transform_1, window_bounds = array<i64: 32, 128>}, {pipeline_mode = #tpu.pipeline_mode<synchronous>, transform_indices = @transform_2, window_bounds = array<i64: 32, 384>}, {pipeline_mode = #tpu.pipeline_mode<synchronous>, transform_indices = @transform_3, window_bounds = array<i64: 128, 128>}, {pipeline_mode = #tpu.pipeline_mode<synchronous>, transform_indices = @transform_4, window_bounds = array<i64: 128, 128>}, {pipeline_mode = #tpu.pipeline_mode<synchronous>, transform_indices = @transform_5, window_bounds = array<i64: 1, 896>}, {transform_indices = @transform_6, window_bounds = array<i64: 32, 128>}]} {
    %c0 = arith.constant 0 : index
    %c0_0 = arith.constant 0 : index
    %c0_1 = arith.constant 0 : index
    %0 = vector.load %arg1[%c0, %c0_0, %c0_1] : memref<32x8x32xbf16, #tpu.memory_space<vmem>>, vector<32x8x32xbf16>
    %1 = vector.shape_cast %0 : vector<32x8x32xbf16> to vector<256x32xbf16>
    %c0_2 = arith.constant 0 : index
    %c0_3 = arith.constant 0 : index
    %2 = vector.load %arg3[%c0_2, %c0_3] : memref<32x384xbf16, #tpu.memory_space<vmem>>, vector<32x384xbf16>
    %cst = arith.constant dense<0.000000e+00> : vector<256x384xf32>
    %3 = tpu.matmul %1, %2, %cst {dimension_numbers = #tpu.dot_dimension_numbers<[1], [0], [0], [1], [0, 0, 1, 1], [], []>} : vector<256x32xbf16>, vector<32x384xbf16>, vector<256x384xf32> -> vector<256x384xf32>
    %c0_4 = arith.constant 0 : index
    %c0_5 = arith.constant 0 : index
    %4 = vector.load %arg6[%c0_4, %c0_5] : memref<1x896xf32, #tpu.memory_space<vmem>>, vector<1x384xf32>
    %5 = vector.broadcast %4 : vector<1x384xf32> to vector<256x384xf32>
    %6 = arith.addf %3, %5 : vector<256x384xf32>
    %7 = vector.shape_cast %6 : vector<256x384xf32> to vector<32x8x384xf32>
    %8 = vector.extract_strided_slice %7 {offsets = [0, 0, 0], sizes = [32, 8, 128], strides = [1, 1, 1]} : vector<32x8x384xf32> to vector<32x8x128xf32>
    %9 = vector.extract_strided_slice %7 {offsets = [0, 0, 128], sizes = [32, 8, 128], strides = [1, 1, 1]} : vector<32x8x384xf32> to vector<32x8x128xf32>
    %10 = vector.extract_strided_slice %7 {offsets = [0, 0, 256], sizes = [32, 8, 128], strides = [1, 1, 1]} : vector<32x8x384xf32> to vector<32x8x128xf32>
    %11 = tpu.iota {dimensions = array<i32: 0>} : vector<4x128xi32>
    %12 = tpu.iota {dimensions = array<i32: 1>} : vector<4x128xi32>
    %c32_i32 = arith.constant 32 : i32
    %13 = vector.broadcast %c32_i32 : i32 to vector<4x128xi32>
    %14 = arith.muli %11, %13 : vector<4x128xi32>
    %15 = arith.cmpi sge, %12, %14 : vector<4x128xi32>
    %c1_i32 = arith.constant 1 : i32
    %16 = vector.broadcast %c1_i32 : i32 to vector<4x128xi32>
    %17 = arith.addi %11, %16 : vector<4x128xi32>
    %c32_i32_6 = arith.constant 32 : i32
    %18 = vector.broadcast %c32_i32_6 : i32 to vector<4x128xi32>
    %19 = arith.muli %17, %18 : vector<4x128xi32>
    %20 = arith.cmpi slt, %12, %19 : vector<4x128xi32>
    %21 = arith.andi %15, %20 : vector<4x128xi1>
    %22 = arith.extui %21 : vector<4x128xi1> to vector<4x128xi32>
    %23 = arith.sitofp %22 : vector<4x128xi32> to vector<4x128xf32>
    %24 = vector.shape_cast %8 : vector<32x8x128xf32> to vector<32x1x8x128xf32>
    %25 = vector.shape_cast %23 : vector<4x128xf32> to vector<1x4x1x128xf32>
    %26 = vector.broadcast %24 : vector<32x1x8x128xf32> to vector<32x4x8x128xf32>
    %27 = vector.broadcast %25 : vector<1x4x1x128xf32> to vector<32x4x8x128xf32>
    %28 = arith.mulf %26, %27 : vector<32x4x8x128xf32>
    %29 = vector.shape_cast %28 : vector<32x4x8x128xf32> to vector<128x8x128xf32>
    %30 = vector.shape_cast %9 : vector<32x8x128xf32> to vector<32x1x8x128xf32>
    %31 = vector.shape_cast %23 : vector<4x128xf32> to vector<1x4x1x128xf32>
    %32 = vector.broadcast %30 : vector<32x1x8x128xf32> to vector<32x4x8x128xf32>
    %33 = vector.broadcast %31 : vector<1x4x1x128xf32> to vector<32x4x8x128xf32>
    %34 = arith.mulf %32, %33 : vector<32x4x8x128xf32>
    %35 = vector.shape_cast %34 : vector<32x4x8x128xf32> to vector<128x8x128xf32>
    %36 = vector.shape_cast %10 : vector<32x8x128xf32> to vector<32x1x8x128xf32>
    %37 = vector.shape_cast %23 : vector<4x128xf32> to vector<1x4x1x128xf32>
    %38 = vector.broadcast %36 : vector<32x1x8x128xf32> to vector<32x4x8x128xf32>
    %39 = vector.broadcast %37 : vector<1x4x1x128xf32> to vector<32x4x8x128xf32>
    %40 = arith.mulf %38, %39 : vector<32x4x8x128xf32>
    %41 = vector.shape_cast %40 : vector<32x4x8x128xf32> to vector<128x8x128xf32>
    "tpu.trace_start"() <{level = 10 : i32, message = "bqd,bkd->bqk"}> : () -> ()
    %cst_7 = arith.constant dense<0.000000e+00> : vector<128x8x8xf32>
    %42 = tpu.matmul %29, %35, %cst_7 {dimension_numbers = #tpu.dot_dimension_numbers<[2], [2], [1], [1], [0, 0, 0, 1, 1, 1], [0], [0]>} : vector<128x8x128xf32>, vector<128x8x128xf32>, vector<128x8x8xf32> -> vector<128x8x8xf32>
    "tpu.trace_stop"() : () -> ()
    %cst_8 = arith.constant 0.223606795 : f32
    %43 = vector.broadcast %cst_8 : f32 to vector<128x8x8xf32>
    %44 = arith.mulf %42, %43 : vector<128x8x8xf32>
    %45 = math.exp %44 : vector<128x8x8xf32>
    %cst_9 = arith.constant dense<0.000000e+00> : vector<128x8xf32>
    %46 = vector.multi_reduction <add>, %45, %cst_9 [2] : vector<128x8x8xf32> to vector<128x8xf32>
    %47 = vector.shape_cast %46 : vector<128x8xf32> to vector<128x8x1xf32>
    %cst_10 = arith.constant 9.99999993E-9 : f32
    %48 = vector.broadcast %cst_10 : f32 to vector<128x8x1xf32>
    %49 = arith.addf %47, %48 : vector<128x8x1xf32>
    %50 = tpu.reciprocal %49 {approx = true} : vector<128x8x1xf32> -> vector<128x8x1xf32>
    %51 = vector.broadcast %50 : vector<128x8x1xf32> to vector<128x8x8xf32>
    %52 = arith.mulf %45, %51 : vector<128x8x8xf32>
    "tpu.trace_start"() <{level = 10 : i32, message = "bqk,bkd->bqd"}> : () -> ()
    %cst_11 = arith.constant dense<0.000000e+00> : vector<128x8x128xf32>
    %53 = tpu.matmul %52, %41, %cst_11 {dimension_numbers = #tpu.dot_dimension_numbers<[2], [1], [1], [2], [0, 0, 0, 1, 1, 2], [0], [0]>} : vector<128x8x8xf32>, vector<128x8x128xf32>, vector<128x8x128xf32> -> vector<128x8x128xf32>
    "tpu.trace_stop"() : () -> ()
    %54 = vector.shape_cast %53 : vector<128x8x128xf32> to vector<32x4x8x128xf32>
    %cst_12 = arith.constant dense<0.000000e+00> : vector<32x8x128xf32>
    %55 = vector.multi_reduction <add>, %54, %cst_12 [1] : vector<32x4x8x128xf32> to vector<32x8x128xf32>
    %56 = vector.shape_cast %55 : vector<32x8x128xf32> to vector<256x128xf32>
    %57 = arith.truncf %56 : vector<256x128xf32> to vector<256x128xbf16>
    %c0_13 = arith.constant 0 : index
    %c0_14 = arith.constant 0 : index
    %58 = vector.load %arg4[%c0_13, %c0_14] : memref<128x128xbf16, #tpu.memory_space<vmem>>, vector<128x128xbf16>
    %cst_15 = arith.constant dense<0.000000e+00> : vector<256x128xf32>
    %59 = tpu.matmul %57, %58, %cst_15 {dimension_numbers = #tpu.dot_dimension_numbers<[1], [0], [0], [1], [0, 0, 1, 1], [], []>} : vector<256x128xbf16>, vector<128x128xbf16>, vector<256x128xf32> -> vector<256x128xf32>
    %c0_16 = arith.constant 0 : index
    %c384 = arith.constant 384 : index
    %60 = vector.load %arg6[%c0_16, %c384] : memref<1x896xf32, #tpu.memory_space<vmem>>, vector<1x128xf32>
    %61 = vector.broadcast %60 : vector<1x128xf32> to vector<256x128xf32>
    %62 = arith.addf %59, %61 : vector<256x128xf32>
    %63 = math.tanh %62 : vector<256x128xf32>
    %c0_17 = arith.constant 0 : index
    %c512 = arith.constant 512 : index
    %64 = vector.load %arg6[%c0_17, %c512] : memref<1x896xf32, #tpu.memory_space<vmem>>, vector<1x128xf32>
    %c0_18 = arith.constant 0 : index
    %c640 = arith.constant 640 : index
    %65 = vector.load %arg6[%c0_18, %c640] : memref<1x896xf32, #tpu.memory_space<vmem>>, vector<1x128xf32>
    %cst_19 = arith.constant dense<0.000000e+00> : vector<1xf32>
    %66 = vector.multi_reduction <add>, %65, %cst_19 [1] : vector<1x128xf32> to vector<1xf32>
    %67 = vector.shape_cast %66 : vector<1xf32> to vector<1x1xf32>
    %68 = vector.broadcast %64 : vector<1x128xf32> to vector<256x128xf32>
    %69 = arith.mulf %63, %68 : vector<256x128xf32>
    %cst_20 = arith.constant dense<0.000000e+00> : vector<256xf32>
    %70 = vector.multi_reduction <add>, %69, %cst_20 [1] : vector<256x128xf32> to vector<256xf32>
    %71 = vector.shape_cast %70 : vector<256xf32> to vector<256x1xf32>
    %72 = vector.broadcast %67 : vector<1x1xf32> to vector<256x1xf32>
    %73 = arith.addf %71, %72 : vector<256x1xf32>
    %74 = math.exp %73 : vector<256x1xf32>
    %75 = vector.shape_cast %74 : vector<256x1xf32> to vector<32x8x1xf32>
    %cst_21 = arith.constant dense<0.000000e+00> : vector<32x1xf32>
    %76 = vector.multi_reduction <add>, %75, %cst_21 [1] : vector<32x8x1xf32> to vector<32x1xf32>
    %77 = vector.shape_cast %76 : vector<32x1xf32> to vector<32x1x1xf32>
    %cst_22 = arith.constant 9.99999993E-9 : f32
    %78 = vector.broadcast %cst_22 : f32 to vector<32x1x1xf32>
    %79 = arith.addf %77, %78 : vector<32x1x1xf32>
    %80 = tpu.reciprocal %79 {approx = true} : vector<32x1x1xf32> -> vector<32x1x1xf32>
    %81 = vector.broadcast %80 : vector<32x1x1xf32> to vector<32x8x1xf32>
    %82 = arith.mulf %75, %81 : vector<32x8x1xf32>
    %83 = vector.broadcast %82 : vector<32x8x1xf32> to vector<32x8x128xf32>
    %84 = arith.mulf %55, %83 : vector<32x8x128xf32>
    %cst_23 = arith.constant dense<0.000000e+00> : vector<32x128xf32>
    %85 = vector.multi_reduction <add>, %84, %cst_23 [1] : vector<32x8x128xf32> to vector<32x128xf32>
    %c0_24 = arith.constant 0 : index
    %c0_25 = arith.constant 0 : index
    %86 = vector.load %arg2[%c0_24, %c0_25] : memref<32x128xf32, #tpu.memory_space<vmem>>, vector<32x128xf32>
    %87 = arith.addf %85, %86 : vector<32x128xf32>
    %88 = arith.truncf %87 : vector<32x128xf32> to vector<32x128xbf16>
    %c0_26 = arith.constant 0 : index
    %c0_27 = arith.constant 0 : index
    %89 = vector.load %arg5[%c0_26, %c0_27] : memref<128x128xbf16, #tpu.memory_space<vmem>>, vector<128x128xbf16>
    %cst_28 = arith.constant dense<0.000000e+00> : vector<32x128xf32>
    %90 = tpu.matmul %88, %89, %cst_28 {dimension_numbers = #tpu.dot_dimension_numbers<[1], [0], [0], [1], [0, 0, 1, 1], [], []>} : vector<32x128xbf16>, vector<128x128xbf16>, vector<32x128xf32> -> vector<32x128xf32>
    %c0_29 = arith.constant 0 : index
    %c768 = arith.constant 768 : index
    %91 = vector.load %arg6[%c0_29, %c768] : memref<1x896xf32, #tpu.memory_space<vmem>>, vector<1x128xf32>
    %92 = vector.broadcast %91 : vector<1x128xf32> to vector<32x128xf32>
    %93 = arith.addf %90, %92 : vector<32x128xf32>
    %c0_30 = arith.constant 0 : index
    %c0_31 = arith.constant 0 : index
    %94 = vector.load %arg7[%c0_30, %c0_31] : memref<32x128xf32, #tpu.memory_space<vmem>>, vector<32x128xf32>
    tpu.vector_store %arg7[%c0_30, %c0_31], %93 {strides = array<i32>} : memref<32x128xf32, #tpu.memory_space<vmem>>, vector<32x128xf32>,
    return
  }
  func.func @transform_0(%arg0: i32) -> (i32, i32, i32) {
    %c0_i32 = arith.constant 0 : i32
    %c0_i32_0 = arith.constant 0 : i32
    %c0_i32_1 = arith.constant 0 : i32
    return %arg0, %c0_i32, %c0_i32_0 : i32, i32, i32
  }
  func.func @transform_1(%arg0: i32) -> (i32, i32) {
    %c0_i32 = arith.constant 0 : i32
    %c0_i32_0 = arith.constant 0 : i32
    return %arg0, %c0_i32 : i32, i32
  }
  func.func @transform_2(%arg0: i32) -> (i32, i32) {
    %c0_i32 = arith.constant 0 : i32
    %c0_i32_0 = arith.constant 0 : i32
    %c0_i32_1 = arith.constant 0 : i32
    return %c0_i32, %c0_i32_0 : i32, i32
  }
  func.func @transform_3(%arg0: i32) -> (i32, i32) {
    %c0_i32 = arith.constant 0 : i32
    %c0_i32_0 = arith.constant 0 : i32
    %c0_i32_1 = arith.constant 0 : i32
    return %c0_i32, %c0_i32_0 : i32, i32
  }
  func.func @transform_4(%arg0: i32) -> (i32, i32) {
    %c0_i32 = arith.constant 0 : i32
    %c0_i32_0 = arith.constant 0 : i32
    %c0_i32_1 = arith.constant 0 : i32
    return %c0_i32, %c0_i32_0 : i32, i32
  }
  func.func @transform_5(%arg0: i32) -> (i32, i32) {
    %c0_i32 = arith.constant 0 : i32
    %c0_i32_0 = arith.constant 0 : i32
    %c0_i32_1 = arith.constant 0 : i32
    return %c0_i32, %c0_i32_0 : i32, i32
  }
  func.func @transform_6(%arg0: i32) -> (i32, i32) {
    %c0_i32 = arith.constant 0 : i32
    %c0_i32_0 = arith.constant 0 : i32
    return %arg0, %c0_i32 : i32, i32
  }
}

</mosaic_0001>

<llo_original>
// kernel: tpu_custom_call.1
$region0: #{tpu_custom_call.1}
  #allocation0 [shape = 'u32[]', space=smem, size = 0x4, offset = 0x4, fixed_abs, tag = 'smem constant byte address 0x4 - core index']
  #allocation1 [shape = 'u32[72,128]{1,0:T(1,128)}', space=vmem, size = 0x9000, scoped, tag = 'internal scratch']
  %s0 = inlined_call_operand.hbm [shape: bf16[32,8,32], index: 0, kind: input, shape index: {}]
  %s1 = inlined_call_operand.hbm [shape: f32[32,128], index: 1, kind: input, shape index: {}]
  %s2 = inlined_call_operand.hbm [shape: bf16[32,384], index: 2, kind: input, shape index: {}]
  %s3 = inlined_call_operand.hbm [shape: bf16[128,128], index: 3, kind: input, shape index: {}]
  %s4 = inlined_call_operand.hbm [shape: bf16[128,128], index: 4, kind: input, shape index: {}]
  %s5 = inlined_call_operand.hbm [shape: f32[1,896], index: 5, kind: input, shape index: {}]
  %s6 = inlined_call_operand.hbm [shape: f32[32,128], index: 6, kind: output, shape index: {}]
  %s7 = sld [smem:[#allocation0]]
  $region58: #{tpu_custom_call.1} parent=0
    _
  %s9 = ssub.s32 1, %s7
  %s10 = scalar_select 0, %s9, %s7
  $region1: #{tpu_custom_call.1} parent=0
    #allocation2 [shape = 'u8[65536]{0}', space=vmem, size = 0x10000, scoped, tag = 'input window, operand 0, single buffered']
    #allocation3 [shape = 's32[1]{0}', space=sflag, size = 0x4, scoped, tag = 'scoped memory for tpu_custom_call.1']
    #allocation4 [shape = 's32[1]{0}', space=sflag, size = 0x4, scoped, tag = 'scoped memory for tpu_custom_call.1']
    #allocation5 [shape = 'u8[16384]{0}', space=vmem, size = 0x4000, scoped, tag = 'input window, operand 1, single buffered']
    #allocation6 [shape = 's32[1]{0}', space=sflag, size = 0x4, scoped, tag = 'scoped memory for tpu_custom_call.1']
    #allocation7 [shape = 'u8[24576]{0}', space=vmem, size = 0x6000, scoped, tag = 'input window, operand 2, single buffered']
    #allocation8 [shape = 'u8[32768]{0}', space=vmem, size = 0x8000, scoped, tag = 'input window, operand 3, single buffered']
    #allocation9 [shape = 's32[1]{0}', space=sflag, size = 0x4, scoped, tag = 'scoped memory for tpu_custom_call.1']
    #allocation10 [shape = 'u8[32768]{0}', space=vmem, size = 0x8000, scoped, tag = 'input window, operand 4, single buffered']
    #allocation11 [shape = 'u8[3584]{0}', space=vmem, size = 0x1000, scoped, tag = 'input window, operand 5, single buffered']
    #allocation12 [shape = 's32[1]{0}', space=sflag, size = 0x4, scoped, tag = 'scoped memory for tpu_custom_call.1']
    #allocation13 [shape = 'u8[16384]{0}', space=vmem, size = 0x4000, scoped, tag = 'output window, operand 0, single buffered']
    %11 = vsyncpa [#allocation3], 0
    %12 = vsyncpa [#allocation6], 0
    %13 = vsyncpa [#allocation9], 0
    %14 = vsyncpa [#allocation12], 0
    %15 = vsyncpa [#allocation4], 0
    // Predicated region
    $region2: #{tpu_custom_call.1} parent=1 // pred_check
      _
    $region3: #{tpu_custom_call.1} parent=1 // pred_check_branch
      %17 = sbr.rel (0) target = $region5
    $region4: #{tpu_custom_call.1} parent=1 // pred_region
      %19 = vsyncadd [#allocation3], 0
      %s20 = sshll.u32 %s0, 4
      %s21 = int_to_ptr.hbm [resolvable:$true] %s20
      %s22 = sshll.u32 [#allocation2], 4
      %s23 = int_to_ptr.vmem [resolvable:$true] %s22
      %28 = dma.hbm_to_vmem [thread:$0]  %s21, 2048, %s23, [#allocation3], 64, 64, 4
    $region5: #{tpu_custom_call.1} parent=1 // pred_fallthru
      _
    // Predicated region
    $region6: #{tpu_custom_call.1} parent=1 // pred_check
      _
    $region7: #{tpu_custom_call.1} parent=1 // pred_check_branch
      %30 = sbr.rel (0) target = $region9
    $region8: #{tpu_custom_call.1} parent=1 // pred_region
      %32 = vsyncadd [#allocation6], 0
      %s33 = sshll.u32 %s1, 4
      %s34 = int_to_ptr.hbm [resolvable:$true] %s33
      %s35 = sshll.u32 [#allocation5], 4
      %s36 = int_to_ptr.vmem [resolvable:$true] %s35
      %41 = dma.hbm_to_vmem [thread:$0]  %s34, 512, %s36, [#allocation6], 128, 128, 8
    $region9: #{tpu_custom_call.1} parent=1 // pred_fallthru
      _
    // Predicated region
    $region10: #{tpu_custom_call.1} parent=1 // pred_check
      _
    $region11: #{tpu_custom_call.1} parent=1 // pred_check_branch
      %43 = sbr.rel (0) target = $region13
    $region12: #{tpu_custom_call.1} parent=1 // pred_region
      %45 = vsyncadd [#allocation6], 0
      %s46 = sshll.u32 %s2, 4
      %s47 = int_to_ptr.hbm [resolvable:$true] %s46
      %s48 = sshll.u32 [#allocation7], 4
      %s49 = int_to_ptr.vmem [resolvable:$true] %s48
      %54 = dma.hbm_to_vmem [thread:$0]  %s47, 768, %s49, [#allocation6], 192, 192, 12
    $region13: #{tpu_custom_call.1} parent=1 // pred_fallthru
      _
    // Predicated region
    $region14: #{tpu_custom_call.1} parent=1 // pred_check
      _
    $region15: #{tpu_custom_call.1} parent=1 // pred_check_branch
      %56 = sbr.rel (0) target = $region17
    $region16: #{tpu_custom_call.1} parent=1 // pred_region
      %58 = vsyncadd [#allocation9], 0
      %s59 = sshll.u32 %s3, 4
      %s60 = int_to_ptr.hbm [resolvable:$true] %s59
      %s61 = sshll.u32 [#allocation8], 4
      %s62 = int_to_ptr.vmem [resolvable:$true] %s61
      %67 = dma.hbm_to_vmem [thread:$0]  %s60, 1024, %s62, [#allocation9], 64, 64, 4
    $region17: #{tpu_custom_call.1} parent=1 // pred_fallthru
      _
    // Predicated region
    $region18: #{tpu_custom_call.1} parent=1 // pred_check
      _
    $region19: #{tpu_custom_call.1} parent=1 // pred_check_branch
      %69 = sbr.rel (0) target = $region21
    $region20: #{tpu_custom_call.1} parent=1 // pred_region
      %71 = vsyncadd [#allocation9], 0
      %s72 = sshll.u32 %s4, 4
      %s73 = int_to_ptr.hbm [resolvable:$true] %s72
      %s74 = sshll.u32 [#allocation10], 4
      %s75 = int_to_ptr.vmem [resolvable:$true] %s74
      %80 = dma.hbm_to_vmem [thread:$0]  %s73, 1024, %s75, [#allocation9], 64, 64, 4
    $region21: #{tpu_custom_call.1} parent=1 // pred_fallthru
      _
    // Predicated region
    $region22: #{tpu_custom_call.1} parent=1 // pred_check
      _
    $region23: #{tpu_custom_call.1} parent=1 // pred_check_branch
      %82 = sbr.rel (0) target = $region25
    $region24: #{tpu_custom_call.1} parent=1 // pred_region
      %84 = vsyncadd [#allocation12], 0
      %s86 = sshll.u32 %s5, 4
      %s87 = int_to_ptr.hbm [resolvable:$true] %s86
      %s88 = sshll.u32 [#allocation11], 4
      %s89 = int_to_ptr.vmem [resolvable:$true] %s88
      %91 = dma.hbm_to_vmem [thread:$0]  %s87, 112, %s89, [#allocation12]
    $region25: #{tpu_custom_call.1} parent=1 // pred_fallthru
      _
    // Predicated region
    $region26: #{tpu_custom_call.1} parent=1 // pred_check
      _
    $region27: #{tpu_custom_call.1} parent=1 // pred_check_branch
      %93 = sbr.rel (0) target = $region29
    $region28: #{tpu_custom_call.1} parent=1 // pred_region
      %95 = dma.done [#allocation3], 2048
    $region29: #{tpu_custom_call.1} parent=1 // pred_fallthru
      _
    // Predicated region
    $region30: #{tpu_custom_call.1} parent=1 // pred_check
      _
    $region31: #{tpu_custom_call.1} parent=1 // pred_check_branch
      %97 = sbr.rel (0) target = $region33
    $region32: #{tpu_custom_call.1} parent=1 // pred_region
      %99 = dma.done [#allocation6], 512
    $region33: #{tpu_custom_call.1} parent=1 // pred_fallthru
      _
    // Predicated region
    $region34: #{tpu_custom_call.1} parent=1 // pred_check
      _
    $region35: #{tpu_custom_call.1} parent=1 // pred_check_branch
      %101 = sbr.rel (0) target = $region37
    $region36: #{tpu_custom_call.1} parent=1 // pred_region
      %103 = dma.done [#allocation6], 768
    $region37: #{tpu_custom_call.1} parent=1 // pred_fallthru
      _
    // Predicated region
    $region38: #{tpu_custom_call.1} parent=1 // pred_check
      _
    $region39: #{tpu_custom_call.1} parent=1 // pred_check_branch
      %105 = sbr.rel (0) target = $region41
    $region40: #{tpu_custom_call.1} parent=1 // pred_region
      %107 = dma.done [#allocation9], 1024
    $region41: #{tpu_custom_call.1} parent=1 // pred_fallthru
      _
    // Predicated region
    $region42: #{tpu_custom_call.1} parent=1 // pred_check
      _
    $region43: #{tpu_custom_call.1} parent=1 // pred_check_branch
      %109 = sbr.rel (0) target = $region45
    $region44: #{tpu_custom_call.1} parent=1 // pred_region
      %111 = dma.done [#allocation9], 1024
    $region45: #{tpu_custom_call.1} parent=1 // pred_fallthru
      _
    // Predicated region
    $region46: #{tpu_custom_call.1} parent=1 // pred_check
      _
    $region47: #{tpu_custom_call.1} parent=1 // pred_check_branch
      %113 = sbr.rel (0) target = $region49
    $region48: #{tpu_custom_call.1} parent=1 // pred_region
      %115 = dma.done [#allocation12], 112
    $region49: #{tpu_custom_call.1} parent=1 // pred_fallthru
      _
    %v117 = vld [vmem:[#allocation2] sm:$0xf]
    %v118 = vld [vmem:[#allocation2 + $0x4] sm:$0xf]
    %v119 = vld [vmem:[#allocation2 + $0x8] sm:$0xf]
    %v120 = vld [vmem:[#allocation2 + $0xc] sm:$0xf]
    %v121 = vld [vmem:[#allocation2 + $0x10] sm:$0xf]
    %v122 = vld [vmem:[#allocation2 + $0x14] sm:$0xf]
    %v123 = vld [vmem:[#allocation2 + $0x18] sm:$0xf]
    %v124 = vld [vmem:[#allocation2 + $0x1c] sm:$0xf]
    %v125 = vld [vmem:[#allocation2 + $0x20] sm:$0xf]
    %v126 = vld [vmem:[#allocation2 + $0x24] sm:$0xf]
    %v127 = vld [vmem:[#allocation2 + $0x28] sm:$0xf]
    %v128 = vld [vmem:[#allocation2 + $0x2c] sm:$0xf]
    %v129 = vld [vmem:[#allocation2 + $0x30] sm:$0xf]
    %v130 = vld [vmem:[#allocation2 + $0x34] sm:$0xf]
    %v131 = vld [vmem:[#allocation2 + $0x38] sm:$0xf]
    %v132 = vld [vmem:[#allocation2 + $0x3c] sm:$0xf]
    %v133 = vld [vmem:[#allocation2 + $0x40] sm:$0xf]
    %v134 = vld [vmem:[#allocation2 + $0x44] sm:$0xf]
    %v135 = vld [vmem:[#allocation2 + $0x48] sm:$0xf]
    %v136 = vld [vmem:[#allocation2 + $0x4c] sm:$0xf]
    %v137 = vld [vmem:[#allocation2 + $0x50] sm:$0xf]
    %v138 = vld [vmem:[#allocation2 + $0x54] sm:$0xf]
    %v139 = vld [vmem:[#allocation2 + $0x58] sm:$0xf]
    %v140 = vld [vmem:[#allocation2 + $0x5c] sm:$0xf]
    %v141 = vld [vmem:[#allocation2 + $0x60] sm:$0xf]
    %v142 = vld [vmem:[#allocation2 + $0x64] sm:$0xf]
    %v143 = vld [vmem:[#allocation2 + $0x68] sm:$0xf]
    %v144 = vld [vmem:[#allocation2 + $0x6c] sm:$0xf]
    %v145 = vld [vmem:[#allocation2 + $0x70] sm:$0xf]
    %v146 = vld [vmem:[#allocation2 + $0x74] sm:$0xf]
    %v147 = vld [vmem:[#allocation2 + $0x78] sm:$0xf]
    %v148 = vld [vmem:[#allocation2 + $0x7c] sm:$0xf]
    %v149 = vld [vmem:[#allocation7] sm:$0xff]
    %v150 = vld [vmem:[#allocation7 + $0x8] sm:$0xf]
    %v151 = vld [vmem:[#allocation7 + $0xc] sm:$0xff]
    %v152 = vld [vmem:[#allocation7 + $0x14] sm:$0xf]
    %v153 = vld [vmem:[#allocation7 + $0x18] sm:$0xff]
    %v154 = vld [vmem:[#allocation7 + $0x20] sm:$0xf]
    %v155 = vld [vmem:[#allocation7 + $0x24] sm:$0xff]
    %v156 = vld [vmem:[#allocation7 + $0x2c] sm:$0xf]
    %v157 = vld [vmem:[#allocation11] sm:$0x7]
    %v159 = vperm.slane %v157, 0
    %v160 = vperm.slane %v157, 1
    %v161 = vperm.slane %v157, 2
    %v197 = vunpack.c.l.b16 %v117
    %v198 = vunpack.c.l.b16 %v118
    %v199 = vunpack.c.l.b16 %v119
    %v200 = vunpack.c.l.b16 %v120
    %v201 = vunpack.c.l.b16 %v121
    %v202 = vunpack.c.l.b16 %v122
    %v203 = vunpack.c.l.b16 %v123
    %v204 = vunpack.c.l.b16 %v124
    %v205 = vunpack.c.l.b16 %v125
    %v206 = vunpack.c.l.b16 %v126
    %v207 = vunpack.c.l.b16 %v127
    %v208 = vunpack.c.l.b16 %v128
    %v209 = vunpack.c.l.b16 %v129
    %v210 = vunpack.c.l.b16 %v130
    %v211 = vunpack.c.l.b16 %v131
    %v212 = vunpack.c.l.b16 %v132
    %v213 = vunpack.c.l.b16 %v133
    %v214 = vunpack.c.l.b16 %v134
    %v215 = vunpack.c.l.b16 %v135
    %v216 = vunpack.c.l.b16 %v136
    %v217 = vunpack.c.l.b16 %v137
    %v218 = vunpack.c.l.b16 %v138
    %v219 = vunpack.c.l.b16 %v139
    %v220 = vunpack.c.l.b16 %v140
    %v221 = vunpack.c.l.b16 %v141
    %v222 = vunpack.c.l.b16 %v142
    %v223 = vunpack.c.l.b16 %v143
    %v224 = vunpack.c.l.b16 %v144
    %v225 = vunpack.c.l.b16 %v145
    %v226 = vunpack.c.l.b16 %v146
    %v227 = vunpack.c.l.b16 %v147
    %v228 = vunpack.c.l.b16 %v148
    %v229 = vpack.c.b16 %v198, %v197
    %v230 = vpack.c.b16 %v200, %v199
    %v231 = vpack.c.b16 %v202, %v201
    %v232 = vpack.c.b16 %v204, %v203
    %v233 = vpack.c.b16 %v206, %v205
    %v234 = vpack.c.b16 %v208, %v207
    %v235 = vpack.c.b16 %v210, %v209
    %v236 = vpack.c.b16 %v212, %v211
    %v237 = vpack.c.b16 %v214, %v213
    %v238 = vpack.c.b16 %v216, %v215
    %v239 = vpack.c.b16 %v218, %v217
    %v240 = vpack.c.b16 %v220, %v219
    %v241 = vpack.c.b16 %v222, %v221
    %v242 = vpack.c.b16 %v224, %v223
    %v243 = vpack.c.b16 %v226, %v225
    %v244 = vpack.c.b16 %v228, %v227
    %v253 = vunpack.c.l.b16 %v149
    %v254 = vunpack.c.h.b16 %v149
    %v255 = vunpack.c.l.b16 %v150
    %v256 = vunpack.c.l.b16 %v151
    %v257 = vunpack.c.h.b16 %v151
    %v258 = vunpack.c.l.b16 %v152
    %v259 = vunpack.c.l.b16 %v153
    %v260 = vunpack.c.h.b16 %v153
    %v261 = vunpack.c.l.b16 %v154
    %v262 = vunpack.c.l.b16 %v155
    %v263 = vunpack.c.h.b16 %v155
    %v264 = vunpack.c.l.b16 %v156
    %v265 = vpack.c.b16 %v256, %v253
    %v266 = vpack.c.b16 %v257, %v254
    %v267 = vpack.c.b16 %v258, %v255
    %v268 = vpack.c.b16 %v262, %v259
    %v269 = vpack.c.b16 %v263, %v260
    %v270 = vpack.c.b16 %v264, %v261
    %vm277 = vcmask 261120
    %v279 = vsel %vm277, %v229, 0
    %v282 = vsel %vm277, %v230, 0
    %v285 = vsel %vm277, %v231, 0
    %v288 = vsel %vm277, %v232, 0
    %v291 = vsel %vm277, %v233, 0
    %v294 = vsel %vm277, %v234, 0
    %v297 = vsel %vm277, %v235, 0
    %v300 = vsel %vm277, %v236, 0
    %v303 = vsel %vm277, %v237, 0
    %v306 = vsel %vm277, %v238, 0
    %v309 = vsel %vm277, %v239, 0
    %v312 = vsel %vm277, %v240, 0
    %v315 = vsel %vm277, %v241, 0
    %v318 = vsel %vm277, %v242, 0
    %v321 = vsel %vm277, %v243, 0
    %v324 = vsel %vm277, %v244, 0
    %326 = vmatpush.bf16.msra.mxu0 0
    %327 = vmatpush.bf16.msra.mxu0 0
    %328 = vmatpush.bf16.msra.mxu0 0
    %329 = vmatpush.bf16.msra.mxu0 0
    %330 = vmatpush.bf16.msra.mxu0 0
    %331 = vmatpush.bf16.msra.mxu0 0
    %332 = vmatpush.bf16.msra.mxu0 %v268
    %333 = vmatpush.bf16.msra.mxu0 %v265
    %334 = vmatmul.bf16.gmra.mxu0 %v279
    %v335 = vpop.f32.mrf.mxu0
    %v336 = vadd.f32 %v159, %v335
    %v337 = vpop.f32.mrf.mxu0
    %v338 = vadd.f32 %v159, %v337
    %339 = vmatmul.bf16.gmra.mxu0 %v282
    %v340 = vpop.f32.mrf.mxu0
    %v341 = vadd.f32 %v159, %v340
    %v342 = vpop.f32.mrf.mxu0
    %v343 = vadd.f32 %v159, %v342
    %344 = vmatmul.bf16.gmra.mxu0 %v285
    %v345 = vpop.f32.mrf.mxu0
    %v346 = vadd.f32 %v159, %v345
    %v347 = vpop.f32.mrf.mxu0
    %v348 = vadd.f32 %v159, %v347
    %349 = vmatmul.bf16.gmra.mxu0 %v288
    %v350 = vpop.f32.mrf.mxu0
    %v351 = vadd.f32 %v159, %v350
    %v352 = vpop.f32.mrf.mxu0
    %v353 = vadd.f32 %v159, %v352
    %354 = vmatmul.bf16.gmra.mxu0 %v291
    %v355 = vpop.f32.mrf.mxu0
    %v356 = vadd.f32 %v159, %v355
    %v357 = vpop.f32.mrf.mxu0
    %v358 = vadd.f32 %v159, %v357
    %359 = vmatmul.bf16.gmra.mxu0 %v294
    %v360 = vpop.f32.mrf.mxu0
    %v361 = vadd.f32 %v159, %v360
    %v362 = vpop.f32.mrf.mxu0
    %v363 = vadd.f32 %v159, %v362
    %364 = vmatmul.bf16.gmra.mxu0 %v297
    %v365 = vpop.f32.mrf.mxu0
    %v366 = vadd.f32 %v159, %v365
    %v367 = vpop.f32.mrf.mxu0
    %v368 = vadd.f32 %v159, %v367
    %369 = vmatmul.bf16.gmra.mxu0 %v300
    %v370 = vpop.f32.mrf.mxu0
    %v371 = vadd.f32 %v159, %v370
    %v372 = vpop.f32.mrf.mxu0
    %v373 = vadd.f32 %v159, %v372
    %374 = vmatmul.bf16.gmra.mxu0 %v303
    %v375 = vpop.f32.mrf.mxu0
    %v376 = vadd.f32 %v159, %v375
    %v377 = vpop.f32.mrf.mxu0
    %v378 = vadd.f32 %v159, %v377
    %379 = vmatmul.bf16.gmra.mxu0 %v306
    %v380 = vpop.f32.mrf.mxu0
    %v381 = vadd.f32 %v159, %v380
    %v382 = vpop.f32.mrf.mxu0
    %v383 = vadd.f32 %v159, %v382
    %384 = vmatmul.bf16.gmra.mxu0 %v309
    %v385 = vpop.f32.mrf.mxu0
    %v386 = vadd.f32 %v159, %v385
    %v387 = vpop.f32.mrf.mxu0
    %v388 = vadd.f32 %v159, %v387
    %389 = vmatmul.bf16.gmra.mxu0 %v312
    %v390 = vpop.f32.mrf.mxu0
    %v391 = vadd.f32 %v159, %v390
    %v392 = vpop.f32.mrf.mxu0
    %v393 = vadd.f32 %v159, %v392
    %394 = vmatmul.bf16.gmra.mxu0 %v315
    %v395 = vpop.f32.mrf.mxu0
    %v396 = vadd.f32 %v159, %v395
    %v397 = vpop.f32.mrf.mxu0
    %v398 = vadd.f32 %v159, %v397
    %399 = vmatmul.bf16.gmra.mxu0 %v318
    %v400 = vpop.f32.mrf.mxu0
    %v401 = vadd.f32 %v159, %v400
    %v402 = vpop.f32.mrf.mxu0
    %v403 = vadd.f32 %v159, %v402
    %404 = vmatmul.bf16.gmra.mxu0 %v321
    %v405 = vpop.f32.mrf.mxu0
    %v406 = vadd.f32 %v159, %v405
    %v407 = vpop.f32.mrf.mxu0
    %v408 = vadd.f32 %v159, %v407
    %409 = vmatmul.bf16.gmra.mxu0 %v324
    %v410 = vpop.f32.mrf.mxu0
    %v411 = vadd.f32 %v159, %v410
    %v412 = vpop.f32.mrf.mxu0
    %v413 = vadd.f32 %v159, %v412
    %414 = vdwg.mxu0
    %415 = vmatpush.bf16.msra.mxu0 0
    %416 = vmatpush.bf16.msra.mxu0 0
    %417 = vmatpush.bf16.msra.mxu0 0
    %418 = vmatpush.bf16.msra.mxu0 0
    %419 = vmatpush.bf16.msra.mxu0 0
    %420 = vmatpush.bf16.msra.mxu0 0
    %421 = vmatpush.bf16.msra.mxu0 %v269
    %422 = vmatpush.bf16.msra.mxu0 %v266
    %423 = vmatmul.bf16.gmra.mxu0 %v279
    %v424 = vpop.f32.mrf.mxu0
    %v425 = vadd.f32 %v160, %v424
    %v426 = vpop.f32.mrf.mxu0
    %v427 = vadd.f32 %v160, %v426
    %428 = vmatmul.bf16.gmra.mxu0 %v282
    %v429 = vpop.f32.mrf.mxu0
    %v430 = vadd.f32 %v160, %v429
    %v431 = vpop.f32.mrf.mxu0
    %v432 = vadd.f32 %v160, %v431
    %433 = vmatmul.bf16.gmra.mxu0 %v285
    %v434 = vpop.f32.mrf.mxu0
    %v435 = vadd.f32 %v160, %v434
    %v436 = vpop.f32.mrf.mxu0
    %v437 = vadd.f32 %v160, %v436
    %438 = vmatmul.bf16.gmra.mxu0 %v288
    %v439 = vpop.f32.mrf.mxu0
    %v440 = vadd.f32 %v160, %v439
    %v441 = vpop.f32.mrf.mxu0
    %v442 = vadd.f32 %v160, %v441
    %443 = vmatmul.bf16.gmra.mxu0 %v291
    %v444 = vpop.f32.mrf.mxu0
    %v445 = vadd.f32 %v160, %v444
    %v446 = vpop.f32.mrf.mxu0
    %v447 = vadd.f32 %v160, %v446
    %448 = vmatmul.bf16.gmra.mxu0 %v294
    %v449 = vpop.f32.mrf.mxu0
    %v450 = vadd.f32 %v160, %v449
    %v451 = vpop.f32.mrf.mxu0
    %v452 = vadd.f32 %v160, %v451
    %453 = vmatmul.bf16.gmra.mxu0 %v297
    %v454 = vpop.f32.mrf.mxu0
    %v455 = vadd.f32 %v160, %v454
    %v456 = vpop.f32.mrf.mxu0
    %v457 = vadd.f32 %v160, %v456
    %458 = vmatmul.bf16.gmra.mxu0 %v300
    %v459 = vpop.f32.mrf.mxu0
    %v460 = vadd.f32 %v160, %v459
    %v461 = vpop.f32.mrf.mxu0
    %v462 = vadd.f32 %v160, %v461
    %463 = vmatmul.bf16.gmra.mxu0 %v303
    %v464 = vpop.f32.mrf.mxu0
    %v465 = vadd.f32 %v160, %v464
    %v466 = vpop.f32.mrf.mxu0
    %v467 = vadd.f32 %v160, %v466
    %468 = vmatmul.bf16.gmra.mxu0 %v306
    %v469 = vpop.f32.mrf.mxu0
    %v470 = vadd.f32 %v160, %v469
    %v471 = vpop.f32.mrf.mxu0
    %v472 = vadd.f32 %v160, %v471
    %473 = vmatmul.bf16.gmra.mxu0 %v309
    %v474 = vpop.f32.mrf.mxu0
    %v475 = vadd.f32 %v160, %v474
    %v476 = vpop.f32.mrf.mxu0
    %v477 = vadd.f32 %v160, %v476
    %478 = vmatmul.bf16.gmra.mxu0 %v312
    %v479 = vpop.f32.mrf.mxu0
    %v480 = vadd.f32 %v160, %v479
    %v481 = vpop.f32.mrf.mxu0
    %v482 = vadd.f32 %v160, %v481
    %483 = vmatmul.bf16.gmra.mxu0 %v315
    %v484 = vpop.f32.mrf.mxu0
    %v485 = vadd.f32 %v160, %v484
    %v486 = vpop.f32.mrf.mxu0
    %v487 = vadd.f32 %v160, %v486
    %488 = vmatmul.bf16.gmra.mxu0 %v318
    %v489 = vpop.f32.mrf.mxu0
    %v490 = vadd.f32 %v160, %v489
    %v491 = vpop.f32.mrf.mxu0
    %v492 = vadd.f32 %v160, %v491
    %493 = vmatmul.bf16.gmra.mxu0 %v321
    %v494 = vpop.f32.mrf.mxu0
    %v495 = vadd.f32 %v160, %v494
    %v496 = vpop.f32.mrf.mxu0
    %v497 = vadd.f32 %v160, %v496
    %498 = vmatmul.bf16.gmra.mxu0 %v324
    %v499 = vpop.f32.mrf.mxu0
    %v500 = vadd.f32 %v160, %v499
    %v501 = vpop.f32.mrf.mxu0
    %v502 = vadd.f32 %v160, %v501
    %503 = vdwg.mxu0
    %504 = vmatpush.bf16.msra.mxu0 0
    %505 = vmatpush.bf16.msra.mxu0 0
    %506 = vmatpush.bf16.msra.mxu0 0
    %507 = vmatpush.bf16.msra.mxu0 0
    %508 = vmatpush.bf16.msra.mxu0 0
    %509 = vmatpush.bf16.msra.mxu0 0
    %510 = vmatpush.bf16.msra.mxu0 %v270
    %511 = vmatpush.bf16.msra.mxu0 %v267
    %512 = vmatmul.bf16.gmra.mxu0 %v279
    %v513 = vpop.f32.mrf.mxu0
    %v514 = vadd.f32 %v161, %v513
    %v515 = vpop.f32.mrf.mxu0
    %v516 = vadd.f32 %v161, %v515
    %517 = vmatmul.bf16.gmra.mxu0 %v282
    %v518 = vpop.f32.mrf.mxu0
    %v519 = vadd.f32 %v161, %v518
    %v520 = vpop.f32.mrf.mxu0
    %v521 = vadd.f32 %v161, %v520
    %522 = vmatmul.bf16.gmra.mxu0 %v285
    %v523 = vpop.f32.mrf.mxu0
    %v524 = vadd.f32 %v161, %v523
    %v525 = vpop.f32.mrf.mxu0
    %v526 = vadd.f32 %v161, %v525
    %527 = vmatmul.bf16.gmra.mxu0 %v288
    %v528 = vpop.f32.mrf.mxu0
    %v529 = vadd.f32 %v161, %v528
    %v530 = vpop.f32.mrf.mxu0
    %v531 = vadd.f32 %v161, %v530
    %532 = vmatmul.bf16.gmra.mxu0 %v291
    %v533 = vpop.f32.mrf.mxu0
    %v534 = vadd.f32 %v161, %v533
    %v535 = vpop.f32.mrf.mxu0
    %v536 = vadd.f32 %v161, %v535
    %537 = vmatmul.bf16.gmra.mxu0 %v294
    %v538 = vpop.f32.mrf.mxu0
    %v539 = vadd.f32 %v161, %v538
    %v540 = vpop.f32.mrf.mxu0
    %v541 = vadd.f32 %v161, %v540
    %542 = vmatmul.bf16.gmra.mxu0 %v297
    %v543 = vpop.f32.mrf.mxu0
    %v544 = vadd.f32 %v161, %v543
    %v545 = vpop.f32.mrf.mxu0
    %v546 = vadd.f32 %v161, %v545
    %547 = vmatmul.bf16.gmra.mxu0 %v300
    %v548 = vpop.f32.mrf.mxu0
    %v549 = vadd.f32 %v161, %v548
    %v550 = vpop.f32.mrf.mxu0
    %v551 = vadd.f32 %v161, %v550
    %552 = vmatmul.bf16.gmra.mxu0 %v303
    %v553 = vpop.f32.mrf.mxu0
    %v554 = vadd.f32 %v161, %v553
    %v555 = vpop.f32.mrf.mxu0
    %v556 = vadd.f32 %v161, %v555
    %557 = vmatmul.bf16.gmra.mxu0 %v306
    %v558 = vpop.f32.mrf.mxu0
    %v559 = vadd.f32 %v161, %v558
    %v560 = vpop.f32.mrf.mxu0
    %v561 = vadd.f32 %v161, %v560
    %562 = vmatmul.bf16.gmra.mxu0 %v309
    %v563 = vpop.f32.mrf.mxu0
    %v564 = vadd.f32 %v161, %v563
    %v565 = vpop.f32.mrf.mxu0
    %v566 = vadd.f32 %v161, %v565
    %567 = vmatmul.bf16.gmra.mxu0 %v312
    %v568 = vpop.f32.mrf.mxu0
    %v569 = vadd.f32 %v161, %v568
    %v570 = vpop.f32.mrf.mxu0
    %v571 = vadd.f32 %v161, %v570
    %572 = vmatmul.bf16.gmra.mxu0 %v315
    %v573 = vpop.f32.mrf.mxu0
    %v574 = vadd.f32 %v161, %v573
    %v575 = vpop.f32.mrf.mxu0
    %v576 = vadd.f32 %v161, %v575
    %577 = vmatmul.bf16.gmra.mxu0 %v318
    %v578 = vpop.f32.mrf.mxu0
    %v579 = vadd.f32 %v161, %v578
    %v580 = vpop.f32.mrf.mxu0
    %v581 = vadd.f32 %v161, %v580
    %582 = vmatmul.bf16.gmra.mxu0 %v321
    %v583 = vpop.f32.mrf.mxu0
    %v584 = vadd.f32 %v161, %v583
    %v585 = vpop.f32.mrf.mxu0
    %v586 = vadd.f32 %v161, %v585
    %587 = vmatmul.bf16.gmra.mxu0 %v324
    %v588 = vpop.f32.mrf.mxu0
    %v589 = vadd.f32 %v161, %v588
    %v590 = vpop.f32.mrf.mxu0
    %v591 = vadd.f32 %v161, %v590
    %592 = vdwg.mxu0
    %v593 = vlaneseq
    %v594 = vshrl.u32 %v593, 7
    %v595 = vlaneseq
    %v596 = vand.u32 %v595, 127
    %v597 = vmul.u32 %v594, 32
    %vm598 = vcmp.ge.s32.totalorder %v596, %v597
    %v599 = vadd.s32 %v594, 1
    %v600 = vmul.u32 %v599, 32
    %vm601 = vcmp.lt.s32.totalorder %v596, %v600
    %vm602 = vmand %vm598, %vm601
    %v603 = vsel %vm602, 1, 0
    %v604 = vcvt.s32.f32 %v603
    %v606 = vrot.slane %v604, 1
    %v607 = vrot.slane %v604, 2
    %v608 = vrot.slane %v604, 3
    %v609 = vperm.slane %v604, 0
    %v610 = vperm.slane %v606, 0
    %v611 = vperm.slane %v607, 0
    %v612 = vperm.slane %v608, 0
    %v617 = vmul.f32 %v336, %v609
    %v618 = vmul.f32 %v336, %v610
    %v619 = vmul.f32 %v336, %v611
    %v620 = vmul.f32 %v336, %v612
    %v621 = vmul.f32 %v338, %v609
    %v622 = vmul.f32 %v338, %v610
    %v623 = vmul.f32 %v338, %v611
    %v624 = vmul.f32 %v338, %v612
    %v625 = vmul.f32 %v341, %v609
    %v626 = vmul.f32 %v341, %v610
    %v627 = vmul.f32 %v341, %v611
    %v628 = vmul.f32 %v341, %v612
    %v629 = vmul.f32 %v343, %v609
    %v630 = vmul.f32 %v343, %v610
    %v631 = vmul.f32 %v343, %v611
    %v632 = vmul.f32 %v343, %v612
    %v633 = vmul.f32 %v346, %v609
    %v634 = vmul.f32 %v346, %v610
    %v635 = vmul.f32 %v346, %v611
    %v636 = vmul.f32 %v346, %v612
    %v637 = vmul.f32 %v348, %v609
    %v638 = vmul.f32 %v348, %v610
    %v639 = vmul.f32 %v348, %v611
    %v640 = vmul.f32 %v348, %v612
    %v641 = vmul.f32 %v351, %v609
    %v642 = vmul.f32 %v351, %v610
    %v643 = vmul.f32 %v351, %v611
    %v644 = vmul.f32 %v351, %v612
    %v645 = vmul.f32 %v353, %v609
    %v646 = vmul.f32 %v353, %v610
    %v647 = vmul.f32 %v353, %v611
    %v648 = vmul.f32 %v353, %v612
    %v649 = vmul.f32 %v356, %v609
    %v650 = vmul.f32 %v356, %v610
    %v651 = vmul.f32 %v356, %v611
    %v652 = vmul.f32 %v356, %v612
    %v653 = vmul.f32 %v358, %v609
    %v654 = vmul.f32 %v358, %v610
    %v655 = vmul.f32 %v358, %v611
    %v656 = vmul.f32 %v358, %v612
    %v657 = vmul.f32 %v361, %v609
    %v658 = vmul.f32 %v361, %v610
    %v659 = vmul.f32 %v361, %v611
    %v660 = vmul.f32 %v361, %v612
    %v661 = vmul.f32 %v363, %v609
    %v662 = vmul.f32 %v363, %v610
    %v663 = vmul.f32 %v363, %v611
    %v664 = vmul.f32 %v363, %v612
    %v665 = vmul.f32 %v366, %v609
    %v666 = vmul.f32 %v366, %v610
    %v667 = vmul.f32 %v366, %v611
    %v668 = vmul.f32 %v366, %v612
    %v669 = vmul.f32 %v368, %v609
    %v670 = vmul.f32 %v368, %v610
    %v671 = vmul.f32 %v368, %v611
    %v672 = vmul.f32 %v368, %v612
    %v673 = vmul.f32 %v371, %v609
    %v674 = vmul.f32 %v371, %v610
    %v675 = vmul.f32 %v371, %v611
    %v676 = vmul.f32 %v371, %v612
    %v677 = vmul.f32 %v373, %v609
    %v678 = vmul.f32 %v373, %v610
    %v679 = vmul.f32 %v373, %v611
    %v680 = vmul.f32 %v373, %v612
    %v681 = vmul.f32 %v376, %v609
    %v682 = vmul.f32 %v376, %v610
    %v683 = vmul.f32 %v376, %v611
    %v684 = vmul.f32 %v376, %v612
    %v685 = vmul.f32 %v378, %v609
    %v686 = vmul.f32 %v378, %v610
    %v687 = vmul.f32 %v378, %v611
    %v688 = vmul.f32 %v378, %v612
    %v689 = vmul.f32 %v381, %v609
    %v690 = vmul.f32 %v381, %v610
    %v691 = vmul.f32 %v381, %v611
    %v692 = vmul.f32 %v381, %v612
    %v693 = vmul.f32 %v383, %v609
    %v694 = vmul.f32 %v383, %v610
    %v695 = vmul.f32 %v383, %v611
    %v696 = vmul.f32 %v383, %v612
    %v697 = vmul.f32 %v386, %v609
    %v698 = vmul.f32 %v386, %v610
    %v699 = vmul.f32 %v386, %v611
    %v700 = vmul.f32 %v386, %v612
    %v701 = vmul.f32 %v388, %v609
    %v702 = vmul.f32 %v388, %v610
    %v703 = vmul.f32 %v388, %v611
    %v704 = vmul.f32 %v388, %v612
    %v705 = vmul.f32 %v391, %v609
    %v706 = vmul.f32 %v391, %v610
    %v707 = vmul.f32 %v391, %v611
    %v708 = vmul.f32 %v391, %v612
    %v709 = vmul.f32 %v393, %v609
    %v710 = vmul.f32 %v393, %v610
    %v711 = vmul.f32 %v393, %v611
    %v712 = vmul.f32 %v393, %v612
    %v713 = vmul.f32 %v396, %v609
    %v714 = vmul.f32 %v396, %v610
    %v715 = vmul.f32 %v396, %v611
    %v716 = vmul.f32 %v396, %v612
    %v717 = vmul.f32 %v398, %v609
    %v718 = vmul.f32 %v398, %v610
    %v719 = vmul.f32 %v398, %v611
    %v720 = vmul.f32 %v398, %v612
    %v721 = vmul.f32 %v401, %v609
    %v722 = vmul.f32 %v401, %v610
    %v723 = vmul.f32 %v401, %v611
    %v724 = vmul.f32 %v401, %v612
    %v725 = vmul.f32 %v403, %v609
    %v726 = vmul.f32 %v403, %v610
    %v727 = vmul.f32 %v403, %v611
    %v728 = vmul.f32 %v403, %v612
    %v729 = vmul.f32 %v406, %v609
    %v730 = vmul.f32 %v406, %v610
    %v731 = vmul.f32 %v406, %v611
    %v732 = vmul.f32 %v406, %v612
    %v733 = vmul.f32 %v408, %v609
    %v734 = vmul.f32 %v408, %v610
    %v735 = vmul.f32 %v408, %v611
    %v736 = vmul.f32 %v408, %v612
    %v737 = vmul.f32 %v411, %v609
    %v738 = vmul.f32 %v411, %v610
    %v739 = vmul.f32 %v411, %v611
    %v740 = vmul.f32 %v411, %v612
    %v741 = vmul.f32 %v413, %v609
    %v742 = vmul.f32 %v413, %v610
    %v743 = vmul.f32 %v413, %v611
    %v744 = vmul.f32 %v413, %v612
    %v745 = vmul.f32 %v425, %v609
    %v746 = vmul.f32 %v425, %v610
    %v747 = vmul.f32 %v425, %v611
    %v748 = vmul.f32 %v425, %v612
    %v749 = vmul.f32 %v427, %v609
    %v750 = vmul.f32 %v427, %v610
    %v751 = vmul.f32 %v427, %v611
    %v752 = vmul.f32 %v427, %v612
    %v753 = vmul.f32 %v430, %v609
    %v754 = vmul.f32 %v430, %v610
    %v755 = vmul.f32 %v430, %v611
    %v756 = vmul.f32 %v430, %v612
    %v757 = vmul.f32 %v432, %v609
    %v758 = vmul.f32 %v432, %v610
    %v759 = vmul.f32 %v432, %v611
    %v760 = vmul.f32 %v432, %v612
    %v761 = vmul.f32 %v435, %v609
    %v762 = vmul.f32 %v435, %v610
    %v763 = vmul.f32 %v435, %v611
    %v764 = vmul.f32 %v435, %v612
    %v765 = vmul.f32 %v437, %v609
    %v766 = vmul.f32 %v437, %v610
    %v767 = vmul.f32 %v437, %v611
    %v768 = vmul.f32 %v437, %v612
    %v769 = vmul.f32 %v440, %v609
    %v770 = vmul.f32 %v440, %v610
    %v771 = vmul.f32 %v440, %v611
    %v772 = vmul.f32 %v440, %v612
    %v773 = vmul.f32 %v442, %v609
    %v774 = vmul.f32 %v442, %v610
    %v775 = vmul.f32 %v442, %v611
    %v776 = vmul.f32 %v442, %v612
    %v777 = vmul.f32 %v445, %v609
    %v778 = vmul.f32 %v445, %v610
    %v779 = vmul.f32 %v445, %v611
    %v780 = vmul.f32 %v445, %v612
    %v781 = vmul.f32 %v447, %v609
    %v782 = vmul.f32 %v447, %v610
    %v783 = vmul.f32 %v447, %v611
    %v784 = vmul.f32 %v447, %v612
    %v785 = vmul.f32 %v450, %v609
    %v786 = vmul.f32 %v450, %v610
    %v787 = vmul.f32 %v450, %v611
    %v788 = vmul.f32 %v450, %v612
    %v789 = vmul.f32 %v452, %v609
    %v790 = vmul.f32 %v452, %v610
    %v791 = vmul.f32 %v452, %v611
    %v792 = vmul.f32 %v452, %v612
    %v793 = vmul.f32 %v455, %v609
    %v794 = vmul.f32 %v455, %v610
    %v795 = vmul.f32 %v455, %v611
    %v796 = vmul.f32 %v455, %v612
    %v797 = vmul.f32 %v457, %v609
    %v798 = vmul.f32 %v457, %v610
    %v799 = vmul.f32 %v457, %v611
    %v800 = vmul.f32 %v457, %v612
    %v801 = vmul.f32 %v460, %v609
    %v802 = vmul.f32 %v460, %v610
    %v803 = vmul.f32 %v460, %v611
    %v804 = vmul.f32 %v460, %v612
    %v805 = vmul.f32 %v462, %v609
    %v806 = vmul.f32 %v462, %v610
    %v807 = vmul.f32 %v462, %v611
    %v808 = vmul.f32 %v462, %v612
    %v809 = vmul.f32 %v465, %v609
    %v810 = vmul.f32 %v465, %v610
    %v811 = vmul.f32 %v465, %v611
    %v812 = vmul.f32 %v465, %v612
    %v813 = vmul.f32 %v467, %v609
    %v814 = vmul.f32 %v467, %v610
    %v815 = vmul.f32 %v467, %v611
    %v816 = vmul.f32 %v467, %v612
    %v817 = vmul.f32 %v470, %v609
    %v818 = vmul.f32 %v470, %v610
    %v819 = vmul.f32 %v470, %v611
    %v820 = vmul.f32 %v470, %v612
    %v821 = vmul.f32 %v472, %v609
    %v822 = vmul.f32 %v472, %v610
    %v823 = vmul.f32 %v472, %v611
    %v824 = vmul.f32 %v472, %v612
    %v825 = vmul.f32 %v475, %v609
    %v826 = vmul.f32 %v475, %v610
    %v827 = vmul.f32 %v475, %v611
    %v828 = vmul.f32 %v475, %v612
    %v829 = vmul.f32 %v477, %v609
    %v830 = vmul.f32 %v477, %v610
    %v831 = vmul.f32 %v477, %v611
    %v832 = vmul.f32 %v477, %v612
    %v833 = vmul.f32 %v480, %v609
    %v834 = vmul.f32 %v480, %v610
    %v835 = vmul.f32 %v480, %v611
    %v836 = vmul.f32 %v480, %v612
    %v837 = vmul.f32 %v482, %v609
    %v838 = vmul.f32 %v482, %v610
    %v839 = vmul.f32 %v482, %v611
    %v840 = vmul.f32 %v482, %v612
    %v841 = vmul.f32 %v485, %v609
    %v842 = vmul.f32 %v485, %v610
    %v843 = vmul.f32 %v485, %v611
    %v844 = vmul.f32 %v485, %v612
    %v845 = vmul.f32 %v487, %v609
    %v846 = vmul.f32 %v487, %v610
    %v847 = vmul.f32 %v487, %v611
    %v848 = vmul.f32 %v487, %v612
    %v849 = vmul.f32 %v490, %v609
    %v850 = vmul.f32 %v490, %v610
    %v851 = vmul.f32 %v490, %v611
    %v852 = vmul.f32 %v490, %v612
    %v853 = vmul.f32 %v492, %v609
    %v854 = vmul.f32 %v492, %v610
    %v855 = vmul.f32 %v492, %v611
    %v856 = vmul.f32 %v492, %v612
    %v857 = vmul.f32 %v495, %v609
    %v858 = vmul.f32 %v495, %v610
    %v859 = vmul.f32 %v495, %v611
    %v860 = vmul.f32 %v495, %v612
    %v861 = vmul.f32 %v497, %v609
    %v862 = vmul.f32 %v497, %v610
    %v863 = vmul.f32 %v497, %v611
    %v864 = vmul.f32 %v497, %v612
    %v865 = vmul.f32 %v500, %v609
    %v866 = vmul.f32 %v500, %v610
    %v867 = vmul.f32 %v500, %v611
    %v868 = vmul.f32 %v500, %v612
    %v869 = vmul.f32 %v502, %v609
    %v870 = vmul.f32 %v502, %v610
    %v871 = vmul.f32 %v502, %v611
    %v872 = vmul.f32 %v502, %v612
    %v873 = vmul.f32 %v514, %v609
    %v874 = vmul.f32 %v514, %v610
    %v875 = vmul.f32 %v514, %v611
    %v876 = vmul.f32 %v514, %v612
    %v877 = vmul.f32 %v516, %v609
    %v878 = vmul.f32 %v516, %v610
    %v879 = vmul.f32 %v516, %v611
    %v880 = vmul.f32 %v516, %v612
    %v881 = vmul.f32 %v519, %v609
    %v882 = vmul.f32 %v519, %v610
    %v883 = vmul.f32 %v519, %v611
    %v884 = vmul.f32 %v519, %v612
    %v885 = vmul.f32 %v521, %v609
    %v886 = vmul.f32 %v521, %v610
    %v887 = vmul.f32 %v521, %v611
    %v888 = vmul.f32 %v521, %v612
    %v889 = vmul.f32 %v524, %v609
    %v890 = vmul.f32 %v524, %v610
    %v891 = vmul.f32 %v524, %v611
    %v892 = vmul.f32 %v524, %v612
    %v893 = vmul.f32 %v526, %v609
    %v894 = vmul.f32 %v526, %v610
    %v895 = vmul.f32 %v526, %v611
    %v896 = vmul.f32 %v526, %v612
    %v897 = vmul.f32 %v529, %v609
    %v898 = vmul.f32 %v529, %v610
    %v899 = vmul.f32 %v529, %v611
    %v900 = vmul.f32 %v529, %v612
    %v901 = vmul.f32 %v531, %v609
    %v902 = vmul.f32 %v531, %v610
    %v903 = vmul.f32 %v531, %v611
    %v904 = vmul.f32 %v531, %v612
    %v905 = vmul.f32 %v534, %v609
    %v906 = vmul.f32 %v534, %v610
    %v907 = vmul.f32 %v534, %v611
    %v908 = vmul.f32 %v534, %v612
    %v909 = vmul.f32 %v536, %v609
    %v910 = vmul.f32 %v536, %v610
    %v911 = vmul.f32 %v536, %v611
    %v912 = vmul.f32 %v536, %v612
    %v913 = vmul.f32 %v539, %v609
    %v914 = vmul.f32 %v539, %v610
    %v915 = vmul.f32 %v539, %v611
    %v916 = vmul.f32 %v539, %v612
    %v917 = vmul.f32 %v541, %v609
    %v918 = vmul.f32 %v541, %v610
    %v919 = vmul.f32 %v541, %v611
    %v920 = vmul.f32 %v541, %v612
    %v921 = vmul.f32 %v544, %v609
    %v922 = vmul.f32 %v544, %v610
    %v923 = vmul.f32 %v544, %v611
    %v924 = vmul.f32 %v544, %v612
    %v925 = vmul.f32 %v546, %v609
    %v926 = vmul.f32 %v546, %v610
    %v927 = vmul.f32 %v546, %v611
    %v928 = vmul.f32 %v546, %v612
    %v929 = vmul.f32 %v549, %v609
    %v930 = vmul.f32 %v549, %v610
    %v931 = vmul.f32 %v549, %v611
    %v932 = vmul.f32 %v549, %v612
    %v933 = vmul.f32 %v551, %v609
    %v934 = vmul.f32 %v551, %v610
    %v935 = vmul.f32 %v551, %v611
    %v936 = vmul.f32 %v551, %v612
    %v937 = vmul.f32 %v554, %v609
    %v938 = vmul.f32 %v554, %v610
    %v939 = vmul.f32 %v554, %v611
    %v940 = vmul.f32 %v554, %v612
    %v941 = vmul.f32 %v556, %v609
    %v942 = vmul.f32 %v556, %v610
    %v943 = vmul.f32 %v556, %v611
    %v944 = vmul.f32 %v556, %v612
    %v945 = vmul.f32 %v559, %v609
    %v946 = vmul.f32 %v559, %v610
    %v947 = vmul.f32 %v559, %v611
    %v948 = vmul.f32 %v559, %v612
    %v949 = vmul.f32 %v561, %v609
    %v950 = vmul.f32 %v561, %v610
    %v951 = vmul.f32 %v561, %v611
    %v952 = vmul.f32 %v561, %v612
    %v953 = vmul.f32 %v564, %v609
    %v954 = vmul.f32 %v564, %v610
    %v955 = vmul.f32 %v564, %v611
    %v956 = vmul.f32 %v564, %v612
    %v957 = vmul.f32 %v566, %v609
    %v958 = vmul.f32 %v566, %v610
    %v959 = vmul.f32 %v566, %v611
    %v960 = vmul.f32 %v566, %v612
    %v961 = vmul.f32 %v569, %v609
    %v962 = vmul.f32 %v569, %v610
    %v963 = vmul.f32 %v569, %v611
    %v964 = vmul.f32 %v569, %v612
    %v965 = vmul.f32 %v571, %v609
    %v966 = vmul.f32 %v571, %v610
    %v967 = vmul.f32 %v571, %v611
    %v968 = vmul.f32 %v571, %v612
    %v969 = vmul.f32 %v574, %v609
    %v970 = vmul.f32 %v574, %v610
    %v971 = vmul.f32 %v574, %v611
    %v972 = vmul.f32 %v574, %v612
    %v973 = vmul.f32 %v576, %v609
    %v974 = vmul.f32 %v576, %v610
    %v975 = vmul.f32 %v576, %v611
    %v976 = vmul.f32 %v576, %v612
    %v977 = vmul.f32 %v579, %v609
    %v978 = vmul.f32 %v579, %v610
    %v979 = vmul.f32 %v579, %v611
    %v980 = vmul.f32 %v579, %v612
    %v981 = vmul.f32 %v581, %v609
    %v982 = vmul.f32 %v581, %v610
    %v983 = vmul.f32 %v581, %v611
    %v984 = vmul.f32 %v581, %v612
    %v985 = vmul.f32 %v584, %v609
    %v986 = vmul.f32 %v584, %v610
    %v987 = vmul.f32 %v584, %v611
    %v988 = vmul.f32 %v584, %v612
    %v989 = vmul.f32 %v586, %v609
    %v990 = vmul.f32 %v586, %v610
    %v991 = vmul.f32 %v586, %v611
    %v992 = vmul.f32 %v586, %v612
    %v993 = vmul.f32 %v589, %v609
    %v994 = vmul.f32 %v589, %v610
    %v995 = vmul.f32 %v589, %v611
    %v996 = vmul.f32 %v589, %v612
    %v997 = vmul.f32 %v591, %v609
    %v998 = vmul.f32 %v591, %v610
    %v999 = vmul.f32 %v591, %v611
    %v1000 = vmul.f32 %v591, %v612
    %1001 = vmatpush.xpose.msra.mxu0 0.0
    %1002 = vmatpush.xpose.msra.mxu0 0.0
    %1003 = vmatpush.xpose.msra.mxu0 0.0
    %1004 = vmatpush.xpose.msra.mxu0 0.0
    %1005 = vmatpush.xpose.msra.mxu0 0.0
    %1006 = vmatpush.xpose.msra.mxu0 0.0
    %1007 = vmatpush.xpose.msra.mxu0 0.0
    %1008 = vmatpush.xpose.msra.mxu0 0.0
    %1009 = vmatpush.xpose.msra.mxu0 0.0
    %1010 = vmatpush.xpose.msra.mxu0 0.0
    %1011 = vmatpush.xpose.msra.mxu0 0.0
    %1012 = vmatpush.xpose.msra.mxu0 0.0
    %1013 = vmatpush.xpose.msra.mxu0 0.0
    %1014 = vmatpush.xpose.msra.mxu0 0.0
    %1015 = vmatpush.xpose.msra.mxu0 0.0
    %1016 = vmatpush.xpose.msra.mxu0 %v745
    %1017 = vmatmul.f32.gmra.mxu0 %v617
    %v1018 = vpop.f32.mrf.mxu0
    %v1019 = vadd.f32 0.0, %v1018
    %1020 = vdwg.mxu0
    %1021 = vmatpush.xpose.msra.mxu0 0.0
    %1022 = vmatpush.xpose.msra.mxu0 0.0
    %1023 = vmatpush.xpose.msra.mxu0 0.0
    %1024 = vmatpush.xpose.msra.mxu0 0.0
    %1025 = vmatpush.xpose.msra.mxu0 0.0
    %1026 = vmatpush.xpose.msra.mxu0 0.0
    %1027 = vmatpush.xpose.msra.mxu0 0.0
    %1028 = vmatpush.xpose.msra.mxu0 0.0
    %1029 = vmatpush.xpose.msra.mxu0 0.0
    %1030 = vmatpush.xpose.msra.mxu0 0.0
    %1031 = vmatpush.xpose.msra.mxu0 0.0
    %1032 = vmatpush.xpose.msra.mxu0 0.0
    %1033 = vmatpush.xpose.msra.mxu0 0.0
    %1034 = vmatpush.xpose.msra.mxu0 0.0
    %1035 = vmatpush.xpose.msra.mxu0 0.0
    %1036 = vmatpush.xpose.msra.mxu0 %v746
    %1037 = vmatmul.f32.gmra.mxu0 %v618
    %v1038 = vpop.f32.mrf.mxu0
    %v1039 = vadd.f32 0.0, %v1038
    %1040 = vdwg.mxu0
    %1041 = vmatpush.xpose.msra.mxu0 0.0
    %1042 = vmatpush.xpose.msra.mxu0 0.0
    %1043 = vmatpush.xpose.msra.mxu0 0.0
    %1044 = vmatpush.xpose.msra.mxu0 0.0
    %1045 = vmatpush.xpose.msra.mxu0 0.0
    %1046 = vmatpush.xpose.msra.mxu0 0.0
    %1047 = vmatpush.xpose.msra.mxu0 0.0
    %1048 = vmatpush.xpose.msra.mxu0 0.0
    %1049 = vmatpush.xpose.msra.mxu0 0.0
    %1050 = vmatpush.xpose.msra.mxu0 0.0
    %1051 = vmatpush.xpose.msra.mxu0 0.0
    %1052 = vmatpush.xpose.msra.mxu0 0.0
    %1053 = vmatpush.xpose.msra.mxu0 0.0
    %1054 = vmatpush.xpose.msra.mxu0 0.0
    %1055 = vmatpush.xpose.msra.mxu0 0.0
    %1056 = vmatpush.xpose.msra.mxu0 %v747
    %1057 = vmatmul.f32.gmra.mxu0 %v619
    %v1058 = vpop.f32.mrf.mxu0
    %v1059 = vadd.f32 0.0, %v1058
    %1060 = vdwg.mxu0
    %1061 = vmatpush.xpose.msra.mxu0 0.0
    %1062 = vmatpush.xpose.msra.mxu0 0.0
    %1063 = vmatpush.xpose.msra.mxu0 0.0
    %1064 = vmatpush.xpose.msra.mxu0 0.0
    %1065 = vmatpush.xpose.msra.mxu0 0.0
    %1066 = vmatpush.xpose.msra.mxu0 0.0
    %1067 = vmatpush.xpose.msra.mxu0 0.0
    %1068 = vmatpush.xpose.msra.mxu0 0.0
    %1069 = vmatpush.xpose.msra.mxu0 0.0
    %1070 = vmatpush.xpose.msra.mxu0 0.0
    %1071 = vmatpush.xpose.msra.mxu0 0.0
    %1072 = vmatpush.xpose.msra.mxu0 0.0
    %1073 = vmatpush.xpose.msra.mxu0 0.0
    %1074 = vmatpush.xpose.msra.mxu0 0.0
    %1075 = vmatpush.xpose.msra.mxu0 0.0
    %1076 = vmatpush.xpose.msra.mxu0 %v748
    %1077 = vmatmul.f32.gmra.mxu0 %v620
    %v1078 = vpop.f32.mrf.mxu0
    %v1079 = vadd.f32 0.0, %v1078
    %1080 = vdwg.mxu0
    %1081 = vmatpush.xpose.msra.mxu0 0.0
    %1082 = vmatpush.xpose.msra.mxu0 0.0
    %1083 = vmatpush.xpose.msra.mxu0 0.0
    %1084 = vmatpush.xpose.msra.mxu0 0.0
    %1085 = vmatpush.xpose.msra.mxu0 0.0
    %1086 = vmatpush.xpose.msra.mxu0 0.0
    %1087 = vmatpush.xpose.msra.mxu0 0.0
    %1088 = vmatpush.xpose.msra.mxu0 0.0
    %1089 = vmatpush.xpose.msra.mxu0 0.0
    %1090 = vmatpush.xpose.msra.mxu0 0.0
    %1091 = vmatpush.xpose.msra.mxu0 0.0
    %1092 = vmatpush.xpose.msra.mxu0 0.0
    %1093 = vmatpush.xpose.msra.mxu0 0.0
    %1094 = vmatpush.xpose.msra.mxu0 0.0
    %1095 = vmatpush.xpose.msra.mxu0 0.0
    %1096 = vmatpush.xpose.msra.mxu0 %v749
    %1097 = vmatmul.f32.gmra.mxu0 %v621
    %v1098 = vpop.f32.mrf.mxu0
    %v1099 = vadd.f32 0.0, %v1098
    %1100 = vdwg.mxu0
    %1101 = vmatpush.xpose.msra.mxu0 0.0
    %1102 = vmatpush.xpose.msra.mxu0 0.0
    %1103 = vmatpush.xpose.msra.mxu0 0.0
    %1104 = vmatpush.xpose.msra.mxu0 0.0
    %1105 = vmatpush.xpose.msra.mxu0 0.0
    %1106 = vmatpush.xpose.msra.mxu0 0.0
    %1107 = vmatpush.xpose.msra.mxu0 0.0
    %1108 = vmatpush.xpose.msra.mxu0 0.0
    %1109 = vmatpush.xpose.msra.mxu0 0.0
    %1110 = vmatpush.xpose.msra.mxu0 0.0
    %1111 = vmatpush.xpose.msra.mxu0 0.0
    %1112 = vmatpush.xpose.msra.mxu0 0.0
    %1113 = vmatpush.xpose.msra.mxu0 0.0
    %1114 = vmatpush.xpose.msra.mxu0 0.0
    %1115 = vmatpush.xpose.msra.mxu0 0.0
    %1116 = vmatpush.xpose.msra.mxu0 %v750
    %1117 = vmatmul.f32.gmra.mxu0 %v622
    %v1118 = vpop.f32.mrf.mxu0
    %v1119 = vadd.f32 0.0, %v1118
    %1120 = vdwg.mxu0
    %1121 = vmatpush.xpose.msra.mxu0 0.0
    %1122 = vmatpush.xpose.msra.mxu0 0.0
    %1123 = vmatpush.xpose.msra.mxu0 0.0
    %1124 = vmatpush.xpose.msra.mxu0 0.0
    %1125 = vmatpush.xpose.msra.mxu0 0.0
    %1126 = vmatpush.xpose.msra.mxu0 0.0
    %1127 = vmatpush.xpose.msra.mxu0 0.0
    %1128 = vmatpush.xpose.msra.mxu0 0.0
    %1129 = vmatpush.xpose.msra.mxu0 0.0
    %1130 = vmatpush.xpose.msra.mxu0 0.0
    %1131 = vmatpush.xpose.msra.mxu0 0.0
    %1132 = vmatpush.xpose.msra.mxu0 0.0
    %1133 = vmatpush.xpose.msra.mxu0 0.0
    %1134 = vmatpush.xpose.msra.mxu0 0.0
    %1135 = vmatpush.xpose.msra.mxu0 0.0
    %1136 = vmatpush.xpose.msra.mxu0 %v751
    %1137 = vmatmul.f32.gmra.mxu0 %v623
    %v1138 = vpop.f32.mrf.mxu0
    %v1139 = vadd.f32 0.0, %v1138
    %1140 = vdwg.mxu0
    %1141 = vmatpush.xpose.msra.mxu0 0.0
    %1142 = vmatpush.xpose.msra.mxu0 0.0
    %1143 = vmatpush.xpose.msra.mxu0 0.0
    %1144 = vmatpush.xpose.msra.mxu0 0.0
    %1145 = vmatpush.xpose.msra.mxu0 0.0
    %1146 = vmatpush.xpose.msra.mxu0 0.0
    %1147 = vmatpush.xpose.msra.mxu0 0.0
    %1148 = vmatpush.xpose.msra.mxu0 0.0
    %1149 = vmatpush.xpose.msra.mxu0 0.0
    %1150 = vmatpush.xpose.msra.mxu0 0.0
    %1151 = vmatpush.xpose.msra.mxu0 0.0
    %1152 = vmatpush.xpose.msra.mxu0 0.0
    %1153 = vmatpush.xpose.msra.mxu0 0.0
    %1154 = vmatpush.xpose.msra.mxu0 0.0
    %1155 = vmatpush.xpose.msra.mxu0 0.0
    %1156 = vmatpush.xpose.msra.mxu0 %v752
    %1157 = vmatmul.f32.gmra.mxu0 %v624
    %v1158 = vpop.f32.mrf.mxu0
    %v1159 = vadd.f32 0.0, %v1158
    %1160 = vdwg.mxu0
    %1161 = vmatpush.xpose.msra.mxu0 0.0
    %1162 = vmatpush.xpose.msra.mxu0 0.0
    %1163 = vmatpush.xpose.msra.mxu0 0.0
    %1164 = vmatpush.xpose.msra.mxu0 0.0
    %1165 = vmatpush.xpose.msra.mxu0 0.0
    %1166 = vmatpush.xpose.msra.mxu0 0.0
    %1167 = vmatpush.xpose.msra.mxu0 0.0
    %1168 = vmatpush.xpose.msra.mxu0 0.0
    %1169 = vmatpush.xpose.msra.mxu0 0.0
    %1170 = vmatpush.xpose.msra.mxu0 0.0
    %1171 = vmatpush.xpose.msra.mxu0 0.0
    %1172 = vmatpush.xpose.msra.mxu0 0.0
    %1173 = vmatpush.xpose.msra.mxu0 0.0
    %1174 = vmatpush.xpose.msra.mxu0 0.0
    %1175 = vmatpush.xpose.msra.mxu0 0.0
    %1176 = vmatpush.xpose.msra.mxu0 %v753
    %1177 = vmatmul.f32.gmra.mxu0 %v625
    %v1178 = vpop.f32.mrf.mxu0
    %v1179 = vadd.f32 0.0, %v1178
    %1180 = vdwg.mxu0
    %1181 = vmatpush.xpose.msra.mxu0 0.0
    %1182 = vmatpush.xpose.msra.mxu0 0.0
    %1183 = vmatpush.xpose.msra.mxu0 0.0
    %1184 = vmatpush.xpose.msra.mxu0 0.0
    %1185 = vmatpush.xpose.msra.mxu0 0.0
    %1186 = vmatpush.xpose.msra.mxu0 0.0
    %1187 = vmatpush.xpose.msra.mxu0 0.0
    %1188 = vmatpush.xpose.msra.mxu0 0.0
    %1189 = vmatpush.xpose.msra.mxu0 0.0
    %1190 = vmatpush.xpose.msra.mxu0 0.0
    %1191 = vmatpush.xpose.msra.mxu0 0.0
    %1192 = vmatpush.xpose.msra.mxu0 0.0
    %1193 = vmatpush.xpose.msra.mxu0 0.0
    %1194 = vmatpush.xpose.msra.mxu0 0.0
    %1195 = vmatpush.xpose.msra.mxu0 0.0
    %1196 = vmatpush.xpose.msra.mxu0 %v754
    %1197 = vmatmul.f32.gmra.mxu0 %v626
    %v1198 = vpop.f32.mrf.mxu0
    %v1199 = vadd.f32 0.0, %v1198
    %1200 = vdwg.mxu0
    %1201 = vmatpush.xpose.msra.mxu0 0.0
    %1202 = vmatpush.xpose.msra.mxu0 0.0
    %1203 = vmatpush.xpose.msra.mxu0 0.0
    %1204 = vmatpush.xpose.msra.mxu0 0.0
    %1205 = vmatpush.xpose.msra.mxu0 0.0
    %1206 = vmatpush.xpose.msra.mxu0 0.0
    %1207 = vmatpush.xpose.msra.mxu0 0.0
    %1208 = vmatpush.xpose.msra.mxu0 0.0
    %1209 = vmatpush.xpose.msra.mxu0 0.0
    %1210 = vmatpush.xpose.msra.mxu0 0.0
    %1211 = vmatpush.xpose.msra.mxu0 0.0
    %1212 = vmatpush.xpose.msra.mxu0 0.0
    %1213 = vmatpush.xpose.msra.mxu0 0.0
    %1214 = vmatpush.xpose.msra.mxu0 0.0
    %1215 = vmatpush.xpose.msra.mxu0 0.0
    %1216 = vmatpush.xpose.msra.mxu0 %v755
    %1217 = vmatmul.f32.gmra.mxu0 %v627
    %v1218 = vpop.f32.mrf.mxu0
    %v1219 = vadd.f32 0.0, %v1218
    %1220 = vdwg.mxu0
    %1221 = vmatpush.xpose.msra.mxu0 0.0
    %1222 = vmatpush.xpose.msra.mxu0 0.0
    %1223 = vmatpush.xpose.msra.mxu0 0.0
    %1224 = vmatpush.xpose.msra.mxu0 0.0
    %1225 = vmatpush.xpose.msra.mxu0 0.0
    %1226 = vmatpush.xpose.msra.mxu0 0.0
    %1227 = vmatpush.xpose.msra.mxu0 0.0
    %1228 = vmatpush.xpose.msra.mxu0 0.0
    %1229 = vmatpush.xpose.msra.mxu0 0.0
    %1230 = vmatpush.xpose.msra.mxu0 0.0
    %1231 = vmatpush.xpose.msra.mxu0 0.0
    %1232 = vmatpush.xpose.msra.mxu0 0.0
    %1233 = vmatpush.xpose.msra.mxu0 0.0
    %1234 = vmatpush.xpose.msra.mxu0 0.0
    %1235 = vmatpush.xpose.msra.mxu0 0.0
    %1236 = vmatpush.xpose.msra.mxu0 %v756
    %1237 = vmatmul.f32.gmra.mxu0 %v628
    %v1238 = vpop.f32.mrf.mxu0
    %v1239 = vadd.f32 0.0, %v1238
    %1240 = vdwg.mxu0
    %1241 = vmatpush.xpose.msra.mxu0 0.0
    %1242 = vmatpush.xpose.msra.mxu0 0.0
    %1243 = vmatpush.xpose.msra.mxu0 0.0
    %1244 = vmatpush.xpose.msra.mxu0 0.0
    %1245 = vmatpush.xpose.msra.mxu0 0.0
    %1246 = vmatpush.xpose.msra.mxu0 0.0
    %1247 = vmatpush.xpose.msra.mxu0 0.0
    %1248 = vmatpush.xpose.msra.mxu0 0.0
    %1249 = vmatpush.xpose.msra.mxu0 0.0
    %1250 = vmatpush.xpose.msra.mxu0 0.0
    %1251 = vmatpush.xpose.msra.mxu0 0.0
    %1252 = vmatpush.xpose.msra.mxu0 0.0
    %1253 = vmatpush.xpose.msra.mxu0 0.0
    %1254 = vmatpush.xpose.msra.mxu0 0.0
    %1255 = vmatpush.xpose.msra.mxu0 0.0
    %1256 = vmatpush.xpose.msra.mxu0 %v757
    %1257 = vmatmul.f32.gmra.mxu0 %v629
    %v1258 = vpop.f32.mrf.mxu0
    %v1259 = vadd.f32 0.0, %v1258
    %1260 = vdwg.mxu0
    %1261 = vmatpush.xpose.msra.mxu0 0.0
    %1262 = vmatpush.xpose.msra.mxu0 0.0
    %1263 = vmatpush.xpose.msra.mxu0 0.0
    %1264 = vmatpush.xpose.msra.mxu0 0.0
    %1265 = vmatpush.xpose.msra.mxu0 0.0
    %1266 = vmatpush.xpose.msra.mxu0 0.0
    %1267 = vmatpush.xpose.msra.mxu0 0.0
    %1268 = vmatpush.xpose.msra.mxu0 0.0
    %1269 = vmatpush.xpose.msra.mxu0 0.0
    %1270 = vmatpush.xpose.msra.mxu0 0.0
    %1271 = vmatpush.xpose.msra.mxu0 0.0
    %1272 = vmatpush.xpose.msra.mxu0 0.0
    %1273 = vmatpush.xpose.msra.mxu0 0.0
    %1274 = vmatpush.xpose.msra.mxu0 0.0
    %1275 = vmatpush.xpose.msra.mxu0 0.0
    %1276 = vmatpush.xpose.msra.mxu0 %v758
    %1277 = vmatmul.f32.gmra.mxu0 %v630
    %v1278 = vpop.f32.mrf.mxu0
    %v1279 = vadd.f32 0.0, %v1278
    %1280 = vdwg.mxu0
    %1281 = vmatpush.xpose.msra.mxu0 0.0
    %1282 = vmatpush.xpose.msra.mxu0 0.0
    %1283 = vmatpush.xpose.msra.mxu0 0.0
    %1284 = vmatpush.xpose.msra.mxu0 0.0
    %1285 = vmatpush.xpose.msra.mxu0 0.0
    %1286 = vmatpush.xpose.msra.mxu0 0.0
    %1287 = vmatpush.xpose.msra.mxu0 0.0
    %1288 = vmatpush.xpose.msra.mxu0 0.0
    %1289 = vmatpush.xpose.msra.mxu0 0.0
    %1290 = vmatpush.xpose.msra.mxu0 0.0
    %1291 = vmatpush.xpose.msra.mxu0 0.0
    %1292 = vmatpush.xpose.msra.mxu0 0.0
    %1293 = vmatpush.xpose.msra.mxu0 0.0
    %1294 = vmatpush.xpose.msra.mxu0 0.0
    %1295 = vmatpush.xpose.msra.mxu0 0.0
    %1296 = vmatpush.xpose.msra.mxu0 %v759
    %1297 = vmatmul.f32.gmra.mxu0 %v631
    %v1298 = vpop.f32.mrf.mxu0
    %v1299 = vadd.f32 0.0, %v1298
    %1300 = vdwg.mxu0
    %1301 = vmatpush.xpose.msra.mxu0 0.0
    %1302 = vmatpush.xpose.msra.mxu0 0.0
    %1303 = vmatpush.xpose.msra.mxu0 0.0
    %1304 = vmatpush.xpose.msra.mxu0 0.0
    %1305 = vmatpush.xpose.msra.mxu0 0.0
    %1306 = vmatpush.xpose.msra.mxu0 0.0
    %1307 = vmatpush.xpose.msra.mxu0 0.0
    %1308 = vmatpush.xpose.msra.mxu0 0.0
    %1309 = vmatpush.xpose.msra.mxu0 0.0
    %1310 = vmatpush.xpose.msra.mxu0 0.0
    %1311 = vmatpush.xpose.msra.mxu0 0.0
    %1312 = vmatpush.xpose.msra.mxu0 0.0
    %1313 = vmatpush.xpose.msra.mxu0 0.0
    %1314 = vmatpush.xpose.msra.mxu0 0.0
    %1315 = vmatpush.xpose.msra.mxu0 0.0
    %1316 = vmatpush.xpose.msra.mxu0 %v760
    %1317 = vmatmul.f32.gmra.mxu0 %v632
    %v1318 = vpop.f32.mrf.mxu0
    %v1319 = vadd.f32 0.0, %v1318
    %1320 = vdwg.mxu0
    %1321 = vmatpush.xpose.msra.mxu0 0.0
    %1322 = vmatpush.xpose.msra.mxu0 0.0
    %1323 = vmatpush.xpose.msra.mxu0 0.0
    %1324 = vmatpush.xpose.msra.mxu0 0.0
    %1325 = vmatpush.xpose.msra.mxu0 0.0
    %1326 = vmatpush.xpose.msra.mxu0 0.0
    %1327 = vmatpush.xpose.msra.mxu0 0.0
    %1328 = vmatpush.xpose.msra.mxu0 0.0
    %1329 = vmatpush.xpose.msra.mxu0 0.0
    %1330 = vmatpush.xpose.msra.mxu0 0.0
    %1331 = vmatpush.xpose.msra.mxu0 0.0
    %1332 = vmatpush.xpose.msra.mxu0 0.0
    %1333 = vmatpush.xpose.msra.mxu0 0.0
    %1334 = vmatpush.xpose.msra.mxu0 0.0
    %1335 = vmatpush.xpose.msra.mxu0 0.0
    %1336 = vmatpush.xpose.msra.mxu0 %v761
    %1337 = vmatmul.f32.gmra.mxu0 %v633
    %v1338 = vpop.f32.mrf.mxu0
    %v1339 = vadd.f32 0.0, %v1338
    %1340 = vdwg.mxu0
    %1341 = vmatpush.xpose.msra.mxu0 0.0
    %1342 = vmatpush.xpose.msra.mxu0 0.0
    %1343 = vmatpush.xpose.msra.mxu0 0.0
    %1344 = vmatpush.xpose.msra.mxu0 0.0
    %1345 = vmatpush.xpose.msra.mxu0 0.0
    %1346 = vmatpush.xpose.msra.mxu0 0.0
    %1347 = vmatpush.xpose.msra.mxu0 0.0
    %1348 = vmatpush.xpose.msra.mxu0 0.0
    %1349 = vmatpush.xpose.msra.mxu0 0.0
    %1350 = vmatpush.xpose.msra.mxu0 0.0
    %1351 = vmatpush.xpose.msra.mxu0 0.0
    %1352 = vmatpush.xpose.msra.mxu0 0.0
    %1353 = vmatpush.xpose.msra.mxu0 0.0
    %1354 = vmatpush.xpose.msra.mxu0 0.0
    %1355 = vmatpush.xpose.msra.mxu0 0.0
    %1356 = vmatpush.xpose.msra.mxu0 %v762
    %1357 = vmatmul.f32.gmra.mxu0 %v634
    %v1358 = vpop.f32.mrf.mxu0
    %v1359 = vadd.f32 0.0, %v1358
    %1360 = vdwg.mxu0
    %1361 = vmatpush.xpose.msra.mxu0 0.0
    %1362 = vmatpush.xpose.msra.mxu0 0.0
    %1363 = vmatpush.xpose.msra.mxu0 0.0
    %1364 = vmatpush.xpose.msra.mxu0 0.0
    %1365 = vmatpush.xpose.msra.mxu0 0.0
    %1366 = vmatpush.xpose.msra.mxu0 0.0
    %1367 = vmatpush.xpose.msra.mxu0 0.0
    %1368 = vmatpush.xpose.msra.mxu0 0.0
    %1369 = vmatpush.xpose.msra.mxu0 0.0
    %1370 = vmatpush.xpose.msra.mxu0 0.0
    %1371 = vmatpush.xpose.msra.mxu0 0.0
    %1372 = vmatpush.xpose.msra.mxu0 0.0
    %1373 = vmatpush.xpose.msra.mxu0 0.0
    %1374 = vmatpush.xpose.msra.mxu0 0.0
    %1375 = vmatpush.xpose.msra.mxu0 0.0
    %1376 = vmatpush.xpose.msra.mxu0 %v763
    %1377 = vmatmul.f32.gmra.mxu0 %v635
    %v1378 = vpop.f32.mrf.mxu0
    %v1379 = vadd.f32 0.0, %v1378
    %1380 = vdwg.mxu0
    %1381 = vmatpush.xpose.msra.mxu0 0.0
    %1382 = vmatpush.xpose.msra.mxu0 0.0
    %1383 = vmatpush.xpose.msra.mxu0 0.0
    %1384 = vmatpush.xpose.msra.mxu0 0.0
    %1385 = vmatpush.xpose.msra.mxu0 0.0
    %1386 = vmatpush.xpose.msra.mxu0 0.0
    %1387 = vmatpush.xpose.msra.mxu0 0.0
    %1388 = vmatpush.xpose.msra.mxu0 0.0
    %1389 = vmatpush.xpose.msra.mxu0 0.0
    %1390 = vmatpush.xpose.msra.mxu0 0.0
    %1391 = vmatpush.xpose.msra.mxu0 0.0
    %1392 = vmatpush.xpose.msra.mxu0 0.0
    %1393 = vmatpush.xpose.msra.mxu0 0.0
    %1394 = vmatpush.xpose.msra.mxu0 0.0
    %1395 = vmatpush.xpose.msra.mxu0 0.0
    %1396 = vmatpush.xpose.msra.mxu0 %v764
    %1397 = vmatmul.f32.gmra.mxu0 %v636
    %v1398 = vpop.f32.mrf.mxu0
    %v1399 = vadd.f32 0.0, %v1398
    %1400 = vdwg.mxu0
    %1401 = vmatpush.xpose.msra.mxu0 0.0
    %1402 = vmatpush.xpose.msra.mxu0 0.0
    %1403 = vmatpush.xpose.msra.mxu0 0.0
    %1404 = vmatpush.xpose.msra.mxu0 0.0
    %1405 = vmatpush.xpose.msra.mxu0 0.0
    %1406 = vmatpush.xpose.msra.mxu0 0.0
    %1407 = vmatpush.xpose.msra.mxu0 0.0
    %1408 = vmatpush.xpose.msra.mxu0 0.0
    %1409 = vmatpush.xpose.msra.mxu0 0.0
    %1410 = vmatpush.xpose.msra.mxu0 0.0
    %1411 = vmatpush.xpose.msra.mxu0 0.0
    %1412 = vmatpush.xpose.msra.mxu0 0.0
    %1413 = vmatpush.xpose.msra.mxu0 0.0
    %1414 = vmatpush.xpose.msra.mxu0 0.0
    %1415 = vmatpush.xpose.msra.mxu0 0.0
    %1416 = vmatpush.xpose.msra.mxu0 %v765
    %1417 = vmatmul.f32.gmra.mxu0 %v637
    %v1418 = vpop.f32.mrf.mxu0
    %v1419 = vadd.f32 0.0, %v1418
    %1420 = vdwg.mxu0
    %1421 = vmatpush.xpose.msra.mxu0 0.0
    %1422 = vmatpush.xpose.msra.mxu0 0.0
    %1423 = vmatpush.xpose.msra.mxu0 0.0
    %1424 = vmatpush.xpose.msra.mxu0 0.0
    %1425 = vmatpush.xpose.msra.mxu0 0.0
    %1426 = vmatpush.xpose.msra.mxu0 0.0
    %1427 = vmatpush.xpose.msra.mxu0 0.0
    %1428 = vmatpush.xpose.msra.mxu0 0.0
    %1429 = vmatpush.xpose.msra.mxu0 0.0
    %1430 = vmatpush.xpose.msra.mxu0 0.0
    %1431 = vmatpush.xpose.msra.mxu0 0.0
    %1432 = vmatpush.xpose.msra.mxu0 0.0
    %1433 = vmatpush.xpose.msra.mxu0 0.0
    %1434 = vmatpush.xpose.msra.mxu0 0.0
    %1435 = vmatpush.xpose.msra.mxu0 0.0
    %1436 = vmatpush.xpose.msra.mxu0 %v766
    %1437 = vmatmul.f32.gmra.mxu0 %v638
    %v1438 = vpop.f32.mrf.mxu0
    %v1439 = vadd.f32 0.0, %v1438
    %1440 = vdwg.mxu0
    %1441 = vmatpush.xpose.msra.mxu0 0.0
    %1442 = vmatpush.xpose.msra.mxu0 0.0
    %1443 = vmatpush.xpose.msra.mxu0 0.0
    %1444 = vmatpush.xpose.msra.mxu0 0.0
    %1445 = vmatpush.xpose.msra.mxu0 0.0
    %1446 = vmatpush.xpose.msra.mxu0 0.0
    %1447 = vmatpush.xpose.msra.mxu0 0.0
    %1448 = vmatpush.xpose.msra.mxu0 0.0
    %1449 = vmatpush.xpose.msra.mxu0 0.0
    %1450 = vmatpush.xpose.msra.mxu0 0.0
    %1451 = vmatpush.xpose.msra.mxu0 0.0
    %1452 = vmatpush.xpose.msra.mxu0 0.0
    %1453 = vmatpush.xpose.msra.mxu0 0.0
    %1454 = vmatpush.xpose.msra.mxu0 0.0
    %1455 = vmatpush.xpose.msra.mxu0 0.0
    %1456 = vmatpush.xpose.msra.mxu0 %v767
    %1457 = vmatmul.f32.gmra.mxu0 %v639
    %v1458 = vpop.f32.mrf.mxu0
    %v1459 = vadd.f32 0.0, %v1458
    %1460 = vdwg.mxu0
    %1461 = vmatpush.xpose.msra.mxu0 0.0
    %1462 = vmatpush.xpose.msra.mxu0 0.0
    %1463 = vmatpush.xpose.msra.mxu0 0.0
    %1464 = vmatpush.xpose.msra.mxu0 0.0
    %1465 = vmatpush.xpose.msra.mxu0 0.0
    %1466 = vmatpush.xpose.msra.mxu0 0.0
    %1467 = vmatpush.xpose.msra.mxu0 0.0
    %1468 = vmatpush.xpose.msra.mxu0 0.0
    %1469 = vmatpush.xpose.msra.mxu0 0.0
    %1470 = vmatpush.xpose.msra.mxu0 0.0
    %1471 = vmatpush.xpose.msra.mxu0 0.0
    %1472 = vmatpush.xpose.msra.mxu0 0.0
    %1473 = vmatpush.xpose.msra.mxu0 0.0
    %1474 = vmatpush.xpose.msra.mxu0 0.0
    %1475 = vmatpush.xpose.msra.mxu0 0.0
    %1476 = vmatpush.xpose.msra.mxu0 %v768
    %1477 = vmatmul.f32.gmra.mxu0 %v640
    %v1478 = vpop.f32.mrf.mxu0
    %v1479 = vadd.f32 0.0, %v1478
    %1480 = vdwg.mxu0
    %1481 = vmatpush.xpose.msra.mxu0 0.0
    %1482 = vmatpush.xpose.msra.mxu0 0.0
    %1483 = vmatpush.xpose.msra.mxu0 0.0
    %1484 = vmatpush.xpose.msra.mxu0 0.0
    %1485 = vmatpush.xpose.msra.mxu0 0.0
    %1486 = vmatpush.xpose.msra.mxu0 0.0
    %1487 = vmatpush.xpose.msra.mxu0 0.0
    %1488 = vmatpush.xpose.msra.mxu0 0.0
    %1489 = vmatpush.xpose.msra.mxu0 0.0
    %1490 = vmatpush.xpose.msra.mxu0 0.0
    %1491 = vmatpush.xpose.msra.mxu0 0.0
    %1492 = vmatpush.xpose.msra.mxu0 0.0
    %1493 = vmatpush.xpose.msra.mxu0 0.0
    %1494 = vmatpush.xpose.msra.mxu0 0.0
    %1495 = vmatpush.xpose.msra.mxu0 0.0
    %1496 = vmatpush.xpose.msra.mxu0 %v769
    %1497 = vmatmul.f32.gmra.mxu0 %v641
    %v1498 = vpop.f32.mrf.mxu0
    %v1499 = vadd.f32 0.0, %v1498
    %1500 = vdwg.mxu0
    %1501 = vmatpush.xpose.msra.mxu0 0.0
    %1502 = vmatpush.xpose.msra.mxu0 0.0
    %1503 = vmatpush.xpose.msra.mxu0 0.0
    %1504 = vmatpush.xpose.msra.mxu0 0.0
    %1505 = vmatpush.xpose.msra.mxu0 0.0
    %1506 = vmatpush.xpose.msra.mxu0 0.0
    %1507 = vmatpush.xpose.msra.mxu0 0.0
    %1508 = vmatpush.xpose.msra.mxu0 0.0
    %1509 = vmatpush.xpose.msra.mxu0 0.0
    %1510 = vmatpush.xpose.msra.mxu0 0.0
    %1511 = vmatpush.xpose.msra.mxu0 0.0
    %1512 = vmatpush.xpose.msra.mxu0 0.0
    %1513 = vmatpush.xpose.msra.mxu0 0.0
    %1514 = vmatpush.xpose.msra.mxu0 0.0
    %1515 = vmatpush.xpose.msra.mxu0 0.0
    %1516 = vmatpush.xpose.msra.mxu0 %v770
    %1517 = vmatmul.f32.gmra.mxu0 %v642
    %v1518 = vpop.f32.mrf.mxu0
    %v1519 = vadd.f32 0.0, %v1518
    %1520 = vdwg.mxu0
    %1521 = vmatpush.xpose.msra.mxu0 0.0
    %1522 = vmatpush.xpose.msra.mxu0 0.0
    %1523 = vmatpush.xpose.msra.mxu0 0.0
    %1524 = vmatpush.xpose.msra.mxu0 0.0
    %1525 = vmatpush.xpose.msra.mxu0 0.0
    %1526 = vmatpush.xpose.msra.mxu0 0.0
    %1527 = vmatpush.xpose.msra.mxu0 0.0
    %1528 = vmatpush.xpose.msra.mxu0 0.0
    %1529 = vmatpush.xpose.msra.mxu0 0.0
    %1530 = vmatpush.xpose.msra.mxu0 0.0
    %1531 = vmatpush.xpose.msra.mxu0 0.0
    %1532 = vmatpush.xpose.msra.mxu0 0.0
    %1533 = vmatpush.xpose.msra.mxu0 0.0
    %1534 = vmatpush.xpose.msra.mxu0 0.0
    %1535 = vmatpush.xpose.msra.mxu0 0.0
    %1536 = vmatpush.xpose.msra.mxu0 %v771
    %1537 = vmatmul.f32.gmra.mxu0 %v643
    %v1538 = vpop.f32.mrf.mxu0
    %v1539 = vadd.f32 0.0, %v1538
    %1540 = vdwg.mxu0
    %1541 = vmatpush.xpose.msra.mxu0 0.0
    %1542 = vmatpush.xpose.msra.mxu0 0.0
    %1543 = vmatpush.xpose.msra.mxu0 0.0
    %1544 = vmatpush.xpose.msra.mxu0 0.0
    %1545 = vmatpush.xpose.msra.mxu0 0.0
    %1546 = vmatpush.xpose.msra.mxu0 0.0
    %1547 = vmatpush.xpose.msra.mxu0 0.0
    %1548 = vmatpush.xpose.msra.mxu0 0.0
    %1549 = vmatpush.xpose.msra.mxu0 0.0
    %1550 = vmatpush.xpose.msra.mxu0 0.0
    %1551 = vmatpush.xpose.msra.mxu0 0.0
    %1552 = vmatpush.xpose.msra.mxu0 0.0
    %1553 = vmatpush.xpose.msra.mxu0 0.0
    %1554 = vmatpush.xpose.msra.mxu0 0.0
    %1555 = vmatpush.xpose.msra.mxu0 0.0
    %1556 = vmatpush.xpose.msra.mxu0 %v772
    %1557 = vmatmul.f32.gmra.mxu0 %v644
    %v1558 = vpop.f32.mrf.mxu0
    %v1559 = vadd.f32 0.0, %v1558
    %1560 = vdwg.mxu0
    %1561 = vmatpush.xpose.msra.mxu0 0.0
    %1562 = vmatpush.xpose.msra.mxu0 0.0
    %1563 = vmatpush.xpose.msra.mxu0 0.0
    %1564 = vmatpush.xpose.msra.mxu0 0.0
    %1565 = vmatpush.xpose.msra.mxu0 0.0
    %1566 = vmatpush.xpose.msra.mxu0 0.0
    %1567 = vmatpush.xpose.msra.mxu0 0.0
    %1568 = vmatpush.xpose.msra.mxu0 0.0
    %1569 = vmatpush.xpose.msra.mxu0 0.0
    %1570 = vmatpush.xpose.msra.mxu0 0.0
    %1571 = vmatpush.xpose.msra.mxu0 0.0
    %1572 = vmatpush.xpose.msra.mxu0 0.0
    %1573 = vmatpush.xpose.msra.mxu0 0.0
    %1574 = vmatpush.xpose.msra.mxu0 0.0
    %1575 = vmatpush.xpose.msra.mxu0 0.0
    %1576 = vmatpush.xpose.msra.mxu0 %v773
    %1577 = vmatmul.f32.gmra.mxu0 %v645
    %v1578 = vpop.f32.mrf.mxu0
    %v1579 = vadd.f32 0.0, %v1578
    %1580 = vdwg.mxu0
    %1581 = vmatpush.xpose.msra.mxu0 0.0
    %1582 = vmatpush.xpose.msra.mxu0 0.0
    %1583 = vmatpush.xpose.msra.mxu0 0.0
    %1584 = vmatpush.xpose.msra.mxu0 0.0
    %1585 = vmatpush.xpose.msra.mxu0 0.0
    %1586 = vmatpush.xpose.msra.mxu0 0.0
    %1587 = vmatpush.xpose.msra.mxu0 0.0
    %1588 = vmatpush.xpose.msra.mxu0 0.0
    %1589 = vmatpush.xpose.msra.mxu0 0.0
    %1590 = vmatpush.xpose.msra.mxu0 0.0
    %1591 = vmatpush.xpose.msra.mxu0 0.0
    %1592 = vmatpush.xpose.msra.mxu0 0.0
    %1593 = vmatpush.xpose.msra.mxu0 0.0
    %1594 = vmatpush.xpose.msra.mxu0 0.0
    %1595 = vmatpush.xpose.msra.mxu0 0.0
    %1596 = vmatpush.xpose.msra.mxu0 %v774
    %1597 = vmatmul.f32.gmra.mxu0 %v646
    %v1598 = vpop.f32.mrf.mxu0
    %v1599 = vadd.f32 0.0, %v1598
    %1600 = vdwg.mxu0
    %1601 = vmatpush.xpose.msra.mxu0 0.0
    %1602 = vmatpush.xpose.msra.mxu0 0.0
    %1603 = vmatpush.xpose.msra.mxu0 0.0
    %1604 = vmatpush.xpose.msra.mxu0 0.0
    %1605 = vmatpush.xpose.msra.mxu0 0.0
    %1606 = vmatpush.xpose.msra.mxu0 0.0
    %1607 = vmatpush.xpose.msra.mxu0 0.0
    %1608 = vmatpush.xpose.msra.mxu0 0.0
    %1609 = vmatpush.xpose.msra.mxu0 0.0
    %1610 = vmatpush.xpose.msra.mxu0 0.0
    %1611 = vmatpush.xpose.msra.mxu0 0.0
    %1612 = vmatpush.xpose.msra.mxu0 0.0
    %1613 = vmatpush.xpose.msra.mxu0 0.0
    %1614 = vmatpush.xpose.msra.mxu0 0.0
    %1615 = vmatpush.xpose.msra.mxu0 0.0
    %1616 = vmatpush.xpose.msra.mxu0 %v775
    %1617 = vmatmul.f32.gmra.mxu0 %v647
    %v1618 = vpop.f32.mrf.mxu0
    %v1619 = vadd.f32 0.0, %v1618
    %1620 = vdwg.mxu0
    %1621 = vmatpush.xpose.msra.mxu0 0.0
    %1622 = vmatpush.xpose.msra.mxu0 0.0
    %1623 = vmatpush.xpose.msra.mxu0 0.0
    %1624 = vmatpush.xpose.msra.mxu0 0.0
    %1625 = vmatpush.xpose.msra.mxu0 0.0
    %1626 = vmatpush.xpose.msra.mxu0 0.0
    %1627 = vmatpush.xpose.msra.mxu0 0.0
    %1628 = vmatpush.xpose.msra.mxu0 0.0
    %1629 = vmatpush.xpose.msra.mxu0 0.0
    %1630 = vmatpush.xpose.msra.mxu0 0.0
    %1631 = vmatpush.xpose.msra.mxu0 0.0
    %1632 = vmatpush.xpose.msra.mxu0 0.0
    %1633 = vmatpush.xpose.msra.mxu0 0.0
    %1634 = vmatpush.xpose.msra.mxu0 0.0
    %1635 = vmatpush.xpose.msra.mxu0 0.0
    %1636 = vmatpush.xpose.msra.mxu0 %v776
    %1637 = vmatmul.f32.gmra.mxu0 %v648
    %v1638 = vpop.f32.mrf.mxu0
    %v1639 = vadd.f32 0.0, %v1638
    %1640 = vdwg.mxu0
    %1641 = vmatpush.xpose.msra.mxu0 0.0
    %1642 = vmatpush.xpose.msra.mxu0 0.0
    %1643 = vmatpush.xpose.msra.mxu0 0.0
    %1644 = vmatpush.xpose.msra.mxu0 0.0
    %1645 = vmatpush.xpose.msra.mxu0 0.0
    %1646 = vmatpush.xpose.msra.mxu0 0.0
    %1647 = vmatpush.xpose.msra.mxu0 0.0
    %1648 = vmatpush.xpose.msra.mxu0 0.0
    %1649 = vmatpush.xpose.msra.mxu0 0.0
    %1650 = vmatpush.xpose.msra.mxu0 0.0
    %1651 = vmatpush.xpose.msra.mxu0 0.0
    %1652 = vmatpush.xpose.msra.mxu0 0.0
    %1653 = vmatpush.xpose.msra.mxu0 0.0
    %1654 = vmatpush.xpose.msra.mxu0 0.0
    %1655 = vmatpush.xpose.msra.mxu0 0.0
    %1656 = vmatpush.xpose.msra.mxu0 %v777
    %1657 = vmatmul.f32.gmra.mxu0 %v649
    %v1658 = vpop.f32.mrf.mxu0
    %v1659 = vadd.f32 0.0, %v1658
    %1660 = vdwg.mxu0
    %1661 = vmatpush.xpose.msra.mxu0 0.0
    %1662 = vmatpush.xpose.msra.mxu0 0.0
    %1663 = vmatpush.xpose.msra.mxu0 0.0
    %1664 = vmatpush.xpose.msra.mxu0 0.0
    %1665 = vmatpush.xpose.msra.mxu0 0.0
    %1666 = vmatpush.xpose.msra.mxu0 0.0
    %1667 = vmatpush.xpose.msra.mxu0 0.0
    %1668 = vmatpush.xpose.msra.mxu0 0.0
    %1669 = vmatpush.xpose.msra.mxu0 0.0
    %1670 = vmatpush.xpose.msra.mxu0 0.0
    %1671 = vmatpush.xpose.msra.mxu0 0.0
    %1672 = vmatpush.xpose.msra.mxu0 0.0
    %1673 = vmatpush.xpose.msra.mxu0 0.0
    %1674 = vmatpush.xpose.msra.mxu0 0.0
    %1675 = vmatpush.xpose.msra.mxu0 0.0
    %1676 = vmatpush.xpose.msra.mxu0 %v778
    %1677 = vmatmul.f32.gmra.mxu0 %v650
    %v1678 = vpop.f32.mrf.mxu0
    %v1679 = vadd.f32 0.0, %v1678
    %1680 = vdwg.mxu0
    %1681 = vmatpush.xpose.msra.mxu0 0.0
    %1682 = vmatpush.xpose.msra.mxu0 0.0
    %1683 = vmatpush.xpose.msra.mxu0 0.0
    %1684 = vmatpush.xpose.msra.mxu0 0.0
    %1685 = vmatpush.xpose.msra.mxu0 0.0
    %1686 = vmatpush.xpose.msra.mxu0 0.0
    %1687 = vmatpush.xpose.msra.mxu0 0.0
    %1688 = vmatpush.xpose.msra.mxu0 0.0
    %1689 = vmatpush.xpose.msra.mxu0 0.0
    %1690 = vmatpush.xpose.msra.mxu0 0.0
    %1691 = vmatpush.xpose.msra.mxu0 0.0
    %1692 = vmatpush.xpose.msra.mxu0 0.0
    %1693 = vmatpush.xpose.msra.mxu0 0.0
    %1694 = vmatpush.xpose.msra.mxu0 0.0
    %1695 = vmatpush.xpose.msra.mxu0 0.0
    %1696 = vmatpush.xpose.msra.mxu0 %v779
    %1697 = vmatmul.f32.gmra.mxu0 %v651
    %v1698 = vpop.f32.mrf.mxu0
    %v1699 = vadd.f32 0.0, %v1698
    %1700 = vdwg.mxu0
    %1701 = vmatpush.xpose.msra.mxu0 0.0
    %1702 = vmatpush.xpose.msra.mxu0 0.0
    %1703 = vmatpush.xpose.msra.mxu0 0.0
    %1704 = vmatpush.xpose.msra.mxu0 0.0
    %1705 = vmatpush.xpose.msra.mxu0 0.0
    %1706 = vmatpush.xpose.msra.mxu0 0.0
    %1707 = vmatpush.xpose.msra.mxu0 0.0
    %1708 = vmatpush.xpose.msra.mxu0 0.0
    %1709 = vmatpush.xpose.msra.mxu0 0.0
    %1710 = vmatpush.xpose.msra.mxu0 0.0
    %1711 = vmatpush.xpose.msra.mxu0 0.0
    %1712 = vmatpush.xpose.msra.mxu0 0.0
    %1713 = vmatpush.xpose.msra.mxu0 0.0
    %1714 = vmatpush.xpose.msra.mxu0 0.0
    %1715 = vmatpush.xpose.msra.mxu0 0.0
    %1716 = vmatpush.xpose.msra.mxu0 %v780
    %1717 = vmatmul.f32.gmra.mxu0 %v652
    %v1718 = vpop.f32.mrf.mxu0
    %v1719 = vadd.f32 0.0, %v1718
    %1720 = vdwg.mxu0
    %1721 = vmatpush.xpose.msra.mxu0 0.0
    %1722 = vmatpush.xpose.msra.mxu0 0.0
    %1723 = vmatpush.xpose.msra.mxu0 0.0
    %1724 = vmatpush.xpose.msra.mxu0 0.0
    %1725 = vmatpush.xpose.msra.mxu0 0.0
    %1726 = vmatpush.xpose.msra.mxu0 0.0
    %1727 = vmatpush.xpose.msra.mxu0 0.0
    %1728 = vmatpush.xpose.msra.mxu0 0.0
    %1729 = vmatpush.xpose.msra.mxu0 0.0
    %1730 = vmatpush.xpose.msra.mxu0 0.0
    %1731 = vmatpush.xpose.msra.mxu0 0.0
    %1732 = vmatpush.xpose.msra.mxu0 0.0
    %1733 = vmatpush.xpose.msra.mxu0 0.0
    %1734 = vmatpush.xpose.msra.mxu0 0.0
    %1735 = vmatpush.xpose.msra.mxu0 0.0
    %1736 = vmatpush.xpose.msra.mxu0 %v781
    %1737 = vmatmul.f32.gmra.mxu0 %v653
    %v1738 = vpop.f32.mrf.mxu0
    %v1739 = vadd.f32 0.0, %v1738
    %1740 = vdwg.mxu0
    %1741 = vmatpush.xpose.msra.mxu0 0.0
    %1742 = vmatpush.xpose.msra.mxu0 0.0
    %1743 = vmatpush.xpose.msra.mxu0 0.0
    %1744 = vmatpush.xpose.msra.mxu0 0.0
    %1745 = vmatpush.xpose.msra.mxu0 0.0
    %1746 = vmatpush.xpose.msra.mxu0 0.0
    %1747 = vmatpush.xpose.msra.mxu0 0.0
    %1748 = vmatpush.xpose.msra.mxu0 0.0
    %1749 = vmatpush.xpose.msra.mxu0 0.0
    %1750 = vmatpush.xpose.msra.mxu0 0.0
    %1751 = vmatpush.xpose.msra.mxu0 0.0
    %1752 = vmatpush.xpose.msra.mxu0 0.0
    %1753 = vmatpush.xpose.msra.mxu0 0.0
    %1754 = vmatpush.xpose.msra.mxu0 0.0
    %1755 = vmatpush.xpose.msra.mxu0 0.0
    %1756 = vmatpush.xpose.msra.mxu0 %v782
    %1757 = vmatmul.f32.gmra.mxu0 %v654
    %v1758 = vpop.f32.mrf.mxu0
    %v1759 = vadd.f32 0.0, %v1758
    %1760 = vdwg.mxu0
    %1761 = vmatpush.xpose.msra.mxu0 0.0
    %1762 = vmatpush.xpose.msra.mxu0 0.0
    %1763 = vmatpush.xpose.msra.mxu0 0.0
    %1764 = vmatpush.xpose.msra.mxu0 0.0
    %1765 = vmatpush.xpose.msra.mxu0 0.0
    %1766 = vmatpush.xpose.msra.mxu0 0.0
    %1767 = vmatpush.xpose.msra.mxu0 0.0
    %1768 = vmatpush.xpose.msra.mxu0 0.0
    %1769 = vmatpush.xpose.msra.mxu0 0.0
    %1770 = vmatpush.xpose.msra.mxu0 0.0
    %1771 = vmatpush.xpose.msra.mxu0 0.0
    %1772 = vmatpush.xpose.msra.mxu0 0.0
    %1773 = vmatpush.xpose.msra.mxu0 0.0
    %1774 = vmatpush.xpose.msra.mxu0 0.0
    %1775 = vmatpush.xpose.msra.mxu0 0.0
    %1776 = vmatpush.xpose.msra.mxu0 %v783
    %1777 = vmatmul.f32.gmra.mxu0 %v655
    %v1778 = vpop.f32.mrf.mxu0
    %v1779 = vadd.f32 0.0, %v1778
    %1780 = vdwg.mxu0
    %1781 = vmatpush.xpose.msra.mxu0 0.0
    %1782 = vmatpush.xpose.msra.mxu0 0.0
    %1783 = vmatpush.xpose.msra.mxu0 0.0
    %1784 = vmatpush.xpose.msra.mxu0 0.0
    %1785 = vmatpush.xpose.msra.mxu0 0.0
    %1786 = vmatpush.xpose.msra.mxu0 0.0
    %1787 = vmatpush.xpose.msra.mxu0 0.0
    %1788 = vmatpush.xpose.msra.mxu0 0.0
    %1789 = vmatpush.xpose.msra.mxu0 0.0
    %1790 = vmatpush.xpose.msra.mxu0 0.0
    %1791 = vmatpush.xpose.msra.mxu0 0.0
    %1792 = vmatpush.xpose.msra.mxu0 0.0
    %1793 = vmatpush.xpose.msra.mxu0 0.0
    %1794 = vmatpush.xpose.msra.mxu0 0.0
    %1795 = vmatpush.xpose.msra.mxu0 0.0
    %1796 = vmatpush.xpose.msra.mxu0 %v784
    %1797 = vmatmul.f32.gmra.mxu0 %v656
    %v1798 = vpop.f32.mrf.mxu0
    %v1799 = vadd.f32 0.0, %v1798
    %1800 = vdwg.mxu0
    %1801 = vmatpush.xpose.msra.mxu0 0.0
    %1802 = vmatpush.xpose.msra.mxu0 0.0
    %1803 = vmatpush.xpose.msra.mxu0 0.0
    %1804 = vmatpush.xpose.msra.mxu0 0.0
    %1805 = vmatpush.xpose.msra.mxu0 0.0
    %1806 = vmatpush.xpose.msra.mxu0 0.0
    %1807 = vmatpush.xpose.msra.mxu0 0.0
    %1808 = vmatpush.xpose.msra.mxu0 0.0
    %1809 = vmatpush.xpose.msra.mxu0 0.0
    %1810 = vmatpush.xpose.msra.mxu0 0.0
    %1811 = vmatpush.xpose.msra.mxu0 0.0
    %1812 = vmatpush.xpose.msra.mxu0 0.0
    %1813 = vmatpush.xpose.msra.mxu0 0.0
    %1814 = vmatpush.xpose.msra.mxu0 0.0
    %1815 = vmatpush.xpose.msra.mxu0 0.0
    %1816 = vmatpush.xpose.msra.mxu0 %v785
    %1817 = vmatmul.f32.gmra.mxu0 %v657
    %v1818 = vpop.f32.mrf.mxu0
    %v1819 = vadd.f32 0.0, %v1818
    %1820 = vdwg.mxu0
    %1821 = vmatpush.xpose.msra.mxu0 0.0
    %1822 = vmatpush.xpose.msra.mxu0 0.0
    %1823 = vmatpush.xpose.msra.mxu0 0.0
    %1824 = vmatpush.xpose.msra.mxu0 0.0
    %1825 = vmatpush.xpose.msra.mxu0 0.0
    %1826 = vmatpush.xpose.msra.mxu0 0.0
    %1827 = vmatpush.xpose.msra.mxu0 0.0
    %1828 = vmatpush.xpose.msra.mxu0 0.0
    %1829 = vmatpush.xpose.msra.mxu0 0.0
    %1830 = vmatpush.xpose.msra.mxu0 0.0
    %1831 = vmatpush.xpose.msra.mxu0 0.0
    %1832 = vmatpush.xpose.msra.mxu0 0.0
    %1833 = vmatpush.xpose.msra.mxu0 0.0
    %1834 = vmatpush.xpose.msra.mxu0 0.0
    %1835 = vmatpush.xpose.msra.mxu0 0.0
    %1836 = vmatpush.xpose.msra.mxu0 %v786
    %1837 = vmatmul.f32.gmra.mxu0 %v658
    %v1838 = vpop.f32.mrf.mxu0
    %v1839 = vadd.f32 0.0, %v1838
    %1840 = vdwg.mxu0
    %1841 = vmatpush.xpose.msra.mxu0 0.0
    %1842 = vmatpush.xpose.msra.mxu0 0.0
    %1843 = vmatpush.xpose.msra.mxu0 0.0
    %1844 = vmatpush.xpose.msra.mxu0 0.0
    %1845 = vmatpush.xpose.msra.mxu0 0.0
    %1846 = vmatpush.xpose.msra.mxu0 0.0
    %1847 = vmatpush.xpose.msra.mxu0 0.0
    %1848 = vmatpush.xpose.msra.mxu0 0.0
    %1849 = vmatpush.xpose.msra.mxu0 0.0
    %1850 = vmatpush.xpose.msra.mxu0 0.0
    %1851 = vmatpush.xpose.msra.mxu0 0.0
    %1852 = vmatpush.xpose.msra.mxu0 0.0
    %1853 = vmatpush.xpose.msra.mxu0 0.0
    %1854 = vmatpush.xpose.msra.mxu0 0.0
    %1855 = vmatpush.xpose.msra.mxu0 0.0
    %1856 = vmatpush.xpose.msra.mxu0 %v787
    %1857 = vmatmul.f32.gmra.mxu0 %v659
    %v1858 = vpop.f32.mrf.mxu0
    %v1859 = vadd.f32 0.0, %v1858
    %1860 = vdwg.mxu0
    %1861 = vmatpush.xpose.msra.mxu0 0.0
    %1862 = vmatpush.xpose.msra.mxu0 0.0
    %1863 = vmatpush.xpose.msra.mxu0 0.0
    %1864 = vmatpush.xpose.msra.mxu0 0.0
    %1865 = vmatpush.xpose.msra.mxu0 0.0
    %1866 = vmatpush.xpose.msra.mxu0 0.0
    %1867 = vmatpush.xpose.msra.mxu0 0.0
    %1868 = vmatpush.xpose.msra.mxu0 0.0
    %1869 = vmatpush.xpose.msra.mxu0 0.0
    %1870 = vmatpush.xpose.msra.mxu0 0.0
    %1871 = vmatpush.xpose.msra.mxu0 0.0
    %1872 = vmatpush.xpose.msra.mxu0 0.0
    %1873 = vmatpush.xpose.msra.mxu0 0.0
    %1874 = vmatpush.xpose.msra.mxu0 0.0
    %1875 = vmatpush.xpose.msra.mxu0 0.0
    %1876 = vmatpush.xpose.msra.mxu0 %v788
    %1877 = vmatmul.f32.gmra.mxu0 %v660
    %v1878 = vpop.f32.mrf.mxu0
    %v1879 = vadd.f32 0.0, %v1878
    %1880 = vdwg.mxu0
    %1881 = vmatpush.xpose.msra.mxu0 0.0
    %1882 = vmatpush.xpose.msra.mxu0 0.0
    %1883 = vmatpush.xpose.msra.mxu0 0.0
    %1884 = vmatpush.xpose.msra.mxu0 0.0
    %1885 = vmatpush.xpose.msra.mxu0 0.0
    %1886 = vmatpush.xpose.msra.mxu0 0.0
    %1887 = vmatpush.xpose.msra.mxu0 0.0
    %1888 = vmatpush.xpose.msra.mxu0 0.0
    %1889 = vmatpush.xpose.msra.mxu0 0.0
    %1890 = vmatpush.xpose.msra.mxu0 0.0
    %1891 = vmatpush.xpose.msra.mxu0 0.0
    %1892 = vmatpush.xpose.msra.mxu0 0.0
    %1893 = vmatpush.xpose.msra.mxu0 0.0
    %1894 = vmatpush.xpose.msra.mxu0 0.0
    %1895 = vmatpush.xpose.msra.mxu0 0.0
    %1896 = vmatpush.xpose.msra.mxu0 %v789
    %1897 = vmatmul.f32.gmra.mxu0 %v661
    %v1898 = vpop.f32.mrf.mxu0
    %v1899 = vadd.f32 0.0, %v1898
    %1900 = vdwg.mxu0
    %1901 = vmatpush.xpose.msra.mxu0 0.0
    %1902 = vmatpush.xpose.msra.mxu0 0.0
    %1903 = vmatpush.xpose.msra.mxu0 0.0
    %1904 = vmatpush.xpose.msra.mxu0 0.0
    %1905 = vmatpush.xpose.msra.mxu0 0.0
    %1906 = vmatpush.xpose.msra.mxu0 0.0
    %1907 = vmatpush.xpose.msra.mxu0 0.0
    %1908 = vmatpush.xpose.msra.mxu0 0.0
    %1909 = vmatpush.xpose.msra.mxu0 0.0
    %1910 = vmatpush.xpose.msra.mxu0 0.0
    %1911 = vmatpush.xpose.msra.mxu0 0.0
    %1912 = vmatpush.xpose.msra.mxu0 0.0
    %1913 = vmatpush.xpose.msra.mxu0 0.0
    %1914 = vmatpush.xpose.msra.mxu0 0.0
    %1915 = vmatpush.xpose.msra.mxu0 0.0
    %1916 = vmatpush.xpose.msra.mxu0 %v790
    %1917 = vmatmul.f32.gmra.mxu0 %v662
    %v1918 = vpop.f32.mrf.mxu0
    %v1919 = vadd.f32 0.0, %v1918
    %1920 = vdwg.mxu0
    %1921 = vmatpush.xpose.msra.mxu0 0.0
    %1922 = vmatpush.xpose.msra.mxu0 0.0
    %1923 = vmatpush.xpose.msra.mxu0 0.0
    %1924 = vmatpush.xpose.msra.mxu0 0.0
    %1925 = vmatpush.xpose.msra.mxu0 0.0
    %1926 = vmatpush.xpose.msra.mxu0 0.0
    %1927 = vmatpush.xpose.msra.mxu0 0.0
    %1928 = vmatpush.xpose.msra.mxu0 0.0
    %1929 = vmatpush.xpose.msra.mxu0 0.0
    %1930 = vmatpush.xpose.msra.mxu0 0.0
    %1931 = vmatpush.xpose.msra.mxu0 0.0
    %1932 = vmatpush.xpose.msra.mxu0 0.0
    %1933 = vmatpush.xpose.msra.mxu0 0.0
    %1934 = vmatpush.xpose.msra.mxu0 0.0
    %1935 = vmatpush.xpose.msra.mxu0 0.0
    %1936 = vmatpush.xpose.msra.mxu0 %v791
    %1937 = vmatmul.f32.gmra.mxu0 %v663
    %v1938 = vpop.f32.mrf.mxu0
    %v1939 = vadd.f32 0.0, %v1938
    %1940 = vdwg.mxu0
    %1941 = vmatpush.xpose.msra.mxu0 0.0
    %1942 = vmatpush.xpose.msra.mxu0 0.0
    %1943 = vmatpush.xpose.msra.mxu0 0.0
    %1944 = vmatpush.xpose.msra.mxu0 0.0
    %1945 = vmatpush.xpose.msra.mxu0 0.0
    %1946 = vmatpush.xpose.msra.mxu0 0.0
    %1947 = vmatpush.xpose.msra.mxu0 0.0
    %1948 = vmatpush.xpose.msra.mxu0 0.0
    %1949 = vmatpush.xpose.msra.mxu0 0.0
    %1950 = vmatpush.xpose.msra.mxu0 0.0
    %1951 = vmatpush.xpose.msra.mxu0 0.0
    %1952 = vmatpush.xpose.msra.mxu0 0.0
    %1953 = vmatpush.xpose.msra.mxu0 0.0
    %1954 = vmatpush.xpose.msra.mxu0 0.0
    %1955 = vmatpush.xpose.msra.mxu0 0.0
    %1956 = vmatpush.xpose.msra.mxu0 %v792
    %1957 = vmatmul.f32.gmra.mxu0 %v664
    %v1958 = vpop.f32.mrf.mxu0
    %v1959 = vadd.f32 0.0, %v1958
    %1960 = vdwg.mxu0
    %1961 = vmatpush.xpose.msra.mxu0 0.0
    %1962 = vmatpush.xpose.msra.mxu0 0.0
    %1963 = vmatpush.xpose.msra.mxu0 0.0
    %1964 = vmatpush.xpose.msra.mxu0 0.0
    %1965 = vmatpush.xpose.msra.mxu0 0.0
    %1966 = vmatpush.xpose.msra.mxu0 0.0
    %1967 = vmatpush.xpose.msra.mxu0 0.0
    %1968 = vmatpush.xpose.msra.mxu0 0.0
    %1969 = vmatpush.xpose.msra.mxu0 0.0
    %1970 = vmatpush.xpose.msra.mxu0 0.0
    %1971 = vmatpush.xpose.msra.mxu0 0.0
    %1972 = vmatpush.xpose.msra.mxu0 0.0
    %1973 = vmatpush.xpose.msra.mxu0 0.0
    %1974 = vmatpush.xpose.msra.mxu0 0.0
    %1975 = vmatpush.xpose.msra.mxu0 0.0
    %1976 = vmatpush.xpose.msra.mxu0 %v793
    %1977 = vmatmul.f32.gmra.mxu0 %v665
    %v1978 = vpop.f32.mrf.mxu0
    %v1979 = vadd.f32 0.0, %v1978
    %1980 = vdwg.mxu0
    %1981 = vmatpush.xpose.msra.mxu0 0.0
    %1982 = vmatpush.xpose.msra.mxu0 0.0
    %1983 = vmatpush.xpose.msra.mxu0 0.0
    %1984 = vmatpush.xpose.msra.mxu0 0.0
    %1985 = vmatpush.xpose.msra.mxu0 0.0
    %1986 = vmatpush.xpose.msra.mxu0 0.0
    %1987 = vmatpush.xpose.msra.mxu0 0.0
    %1988 = vmatpush.xpose.msra.mxu0 0.0
    %1989 = vmatpush.xpose.msra.mxu0 0.0
    %1990 = vmatpush.xpose.msra.mxu0 0.0
    %1991 = vmatpush.xpose.msra.mxu0 0.0
    %1992 = vmatpush.xpose.msra.mxu0 0.0
    %1993 = vmatpush.xpose.msra.mxu0 0.0
    %1994 = vmatpush.xpose.msra.mxu0 0.0
    %1995 = vmatpush.xpose.msra.mxu0 0.0
    %1996 = vmatpush.xpose.msra.mxu0 %v794
    %1997 = vmatmul.f32.gmra.mxu0 %v666
    %v1998 = vpop.f32.mrf.mxu0
    %v1999 = vadd.f32 0.0, %v1998
    %2000 = vdwg.mxu0
    %2001 = vmatpush.xpose.msra.mxu0 0.0
    %2002 = vmatpush.xpose.msra.mxu0 0.0
    %2003 = vmatpush.xpose.msra.mxu0 0.0
    %2004 = vmatpush.xpose.msra.mxu0 0.0
    %2005 = vmatpush.xpose.msra.mxu0 0.0
    %2006 = vmatpush.xpose.msra.mxu0 0.0
    %2007 = vmatpush.xpose.msra.mxu0 0.0
    %2008 = vmatpush.xpose.msra.mxu0 0.0
    %2009 = vmatpush.xpose.msra.mxu0 0.0
    %2010 = vmatpush.xpose.msra.mxu0 0.0
    %2011 = vmatpush.xpose.msra.mxu0 0.0
    %2012 = vmatpush.xpose.msra.mxu0 0.0
    %2013 = vmatpush.xpose.msra.mxu0 0.0
    %2014 = vmatpush.xpose.msra.mxu0 0.0
    %2015 = vmatpush.xpose.msra.mxu0 0.0
    %2016 = vmatpush.xpose.msra.mxu0 %v795
    %2017 = vmatmul.f32.gmra.mxu0 %v667
    %v2018 = vpop.f32.mrf.mxu0
    %v2019 = vadd.f32 0.0, %v2018
    %2020 = vdwg.mxu0
    %2021 = vmatpush.xpose.msra.mxu0 0.0
    %2022 = vmatpush.xpose.msra.mxu0 0.0
    %2023 = vmatpush.xpose.msra.mxu0 0.0
    %2024 = vmatpush.xpose.msra.mxu0 0.0
    %2025 = vmatpush.xpose.msra.mxu0 0.0
    %2026 = vmatpush.xpose.msra.mxu0 0.0
    %2027 = vmatpush.xpose.msra.mxu0 0.0
    %2028 = vmatpush.xpose.msra.mxu0 0.0
    %2029 = vmatpush.xpose.msra.mxu0 0.0
    %2030 = vmatpush.xpose.msra.mxu0 0.0
    %2031 = vmatpush.xpose.msra.mxu0 0.0
    %2032 = vmatpush.xpose.msra.mxu0 0.0
    %2033 = vmatpush.xpose.msra.mxu0 0.0
    %2034 = vmatpush.xpose.msra.mxu0 0.0
    %2035 = vmatpush.xpose.msra.mxu0 0.0
    %2036 = vmatpush.xpose.msra.mxu0 %v796
    %2037 = vmatmul.f32.gmra.mxu0 %v668
    %v2038 = vpop.f32.mrf.mxu0
    %v2039 = vadd.f32 0.0, %v2038
    %2040 = vdwg.mxu0
    %2041 = vmatpush.xpose.msra.mxu0 0.0
    %2042 = vmatpush.xpose.msra.mxu0 0.0
    %2043 = vmatpush.xpose.msra.mxu0 0.0
    %2044 = vmatpush.xpose.msra.mxu0 0.0
    %2045 = vmatpush.xpose.msra.mxu0 0.0
    %2046 = vmatpush.xpose.msra.mxu0 0.0
    %2047 = vmatpush.xpose.msra.mxu0 0.0
    %2048 = vmatpush.xpose.msra.mxu0 0.0
    %2049 = vmatpush.xpose.msra.mxu0 0.0
    %2050 = vmatpush.xpose.msra.mxu0 0.0
    %2051 = vmatpush.xpose.msra.mxu0 0.0
    %2052 = vmatpush.xpose.msra.mxu0 0.0
    %2053 = vmatpush.xpose.msra.mxu0 0.0
    %2054 = vmatpush.xpose.msra.mxu0 0.0
    %2055 = vmatpush.xpose.msra.mxu0 0.0
    %2056 = vmatpush.xpose.msra.mxu0 %v797
    %2057 = vmatmul.f32.gmra.mxu0 %v669
    %v2058 = vpop.f32.mrf.mxu0
    %v2059 = vadd.f32 0.0, %v2058
    %2060 = vdwg.mxu0
    %2061 = vmatpush.xpose.msra.mxu0 0.0
    %2062 = vmatpush.xpose.msra.mxu0 0.0
    %2063 = vmatpush.xpose.msra.mxu0 0.0
    %2064 = vmatpush.xpose.msra.mxu0 0.0
    %2065 = vmatpush.xpose.msra.mxu0 0.0
    %2066 = vmatpush.xpose.msra.mxu0 0.0
    %2067 = vmatpush.xpose.msra.mxu0 0.0
    %2068 = vmatpush.xpose.msra.mxu0 0.0
    %2069 = vmatpush.xpose.msra.mxu0 0.0
    %2070 = vmatpush.xpose.msra.mxu0 0.0
    %2071 = vmatpush.xpose.msra.mxu0 0.0
    %2072 = vmatpush.xpose.msra.mxu0 0.0
    %2073 = vmatpush.xpose.msra.mxu0 0.0
    %2074 = vmatpush.xpose.msra.mxu0 0.0
    %2075 = vmatpush.xpose.msra.mxu0 0.0
    %2076 = vmatpush.xpose.msra.mxu0 %v798
    %2077 = vmatmul.f32.gmra.mxu0 %v670
    %v2078 = vpop.f32.mrf.mxu0
    %v2079 = vadd.f32 0.0, %v2078
    %2080 = vdwg.mxu0
    %2081 = vmatpush.xpose.msra.mxu0 0.0
    %2082 = vmatpush.xpose.msra.mxu0 0.0
    %2083 = vmatpush.xpose.msra.mxu0 0.0
    %2084 = vmatpush.xpose.msra.mxu0 0.0
    %2085 = vmatpush.xpose.msra.mxu0 0.0
    %2086 = vmatpush.xpose.msra.mxu0 0.0
    %2087 = vmatpush.xpose.msra.mxu0 0.0
    %2088 = vmatpush.xpose.msra.mxu0 0.0
    %2089 = vmatpush.xpose.msra.mxu0 0.0
    %2090 = vmatpush.xpose.msra.mxu0 0.0
    %2091 = vmatpush.xpose.msra.mxu0 0.0
    %2092 = vmatpush.xpose.msra.mxu0 0.0
    %2093 = vmatpush.xpose.msra.mxu0 0.0
    %2094 = vmatpush.xpose.msra.mxu0 0.0
    %2095 = vmatpush.xpose.msra.mxu0 0.0
    %2096 = vmatpush.xpose.msra.mxu0 %v799
    %2097 = vmatmul.f32.gmra.mxu0 %v671
    %v2098 = vpop.f32.mrf.mxu0
    %v2099 = vadd.f32 0.0, %v2098
    %2100 = vdwg.mxu0
    %2101 = vmatpush.xpose.msra.mxu0 0.0
    %2102 = vmatpush.xpose.msra.mxu0 0.0
    %2103 = vmatpush.xpose.msra.mxu0 0.0
    %2104 = vmatpush.xpose.msra.mxu0 0.0
    %2105 = vmatpush.xpose.msra.mxu0 0.0
    %2106 = vmatpush.xpose.msra.mxu0 0.0
    %2107 = vmatpush.xpose.msra.mxu0 0.0
    %2108 = vmatpush.xpose.msra.mxu0 0.0
    %2109 = vmatpush.xpose.msra.mxu0 0.0
    %2110 = vmatpush.xpose.msra.mxu0 0.0
    %2111 = vmatpush.xpose.msra.mxu0 0.0
    %2112 = vmatpush.xpose.msra.mxu0 0.0
    %2113 = vmatpush.xpose.msra.mxu0 0.0
    %2114 = vmatpush.xpose.msra.mxu0 0.0
    %2115 = vmatpush.xpose.msra.mxu0 0.0
    %2116 = vmatpush.xpose.msra.mxu0 %v800
    %2117 = vmatmul.f32.gmra.mxu0 %v672
    %v2118 = vpop.f32.mrf.mxu0
    %v2119 = vadd.f32 0.0, %v2118
    %2120 = vdwg.mxu0
    %2121 = vmatpush.xpose.msra.mxu0 0.0
    %2122 = vmatpush.xpose.msra.mxu0 0.0
    %2123 = vmatpush.xpose.msra.mxu0 0.0
    %2124 = vmatpush.xpose.msra.mxu0 0.0
    %2125 = vmatpush.xpose.msra.mxu0 0.0
    %2126 = vmatpush.xpose.msra.mxu0 0.0
    %2127 = vmatpush.xpose.msra.mxu0 0.0
    %2128 = vmatpush.xpose.msra.mxu0 0.0
    %2129 = vmatpush.xpose.msra.mxu0 0.0
    %2130 = vmatpush.xpose.msra.mxu0 0.0
    %2131 = vmatpush.xpose.msra.mxu0 0.0
    %2132 = vmatpush.xpose.msra.mxu0 0.0
    %2133 = vmatpush.xpose.msra.mxu0 0.0
    %2134 = vmatpush.xpose.msra.mxu0 0.0
    %2135 = vmatpush.xpose.msra.mxu0 0.0
    %2136 = vmatpush.xpose.msra.mxu0 %v801
    %2137 = vmatmul.f32.gmra.mxu0 %v673
    %v2138 = vpop.f32.mrf.mxu0
    %v2139 = vadd.f32 0.0, %v2138
    %2140 = vdwg.mxu0
    %2141 = vmatpush.xpose.msra.mxu0 0.0
    %2142 = vmatpush.xpose.msra.mxu0 0.0
    %2143 = vmatpush.xpose.msra.mxu0 0.0
    %2144 = vmatpush.xpose.msra.mxu0 0.0
    %2145 = vmatpush.xpose.msra.mxu0 0.0
    %2146 = vmatpush.xpose.msra.mxu0 0.0
    %2147 = vmatpush.xpose.msra.mxu0 0.0
    %2148 = vmatpush.xpose.msra.mxu0 0.0
    %2149 = vmatpush.xpose.msra.mxu0 0.0
    %2150 = vmatpush.xpose.msra.mxu0 0.0
    %2151 = vmatpush.xpose.msra.mxu0 0.0
    %2152 = vmatpush.xpose.msra.mxu0 0.0
    %2153 = vmatpush.xpose.msra.mxu0 0.0
    %2154 = vmatpush.xpose.msra.mxu0 0.0
    %2155 = vmatpush.xpose.msra.mxu0 0.0
    %2156 = vmatpush.xpose.msra.mxu0 %v802
    %2157 = vmatmul.f32.gmra.mxu0 %v674
    %v2158 = vpop.f32.mrf.mxu0
    %v2159 = vadd.f32 0.0, %v2158
    %2160 = vdwg.mxu0
    %2161 = vmatpush.xpose.msra.mxu0 0.0
    %2162 = vmatpush.xpose.msra.mxu0 0.0
    %2163 = vmatpush.xpose.msra.mxu0 0.0
    %2164 = vmatpush.xpose.msra.mxu0 0.0
    %2165 = vmatpush.xpose.msra.mxu0 0.0
    %2166 = vmatpush.xpose.msra.mxu0 0.0
    %2167 = vmatpush.xpose.msra.mxu0 0.0
    %2168 = vmatpush.xpose.msra.mxu0 0.0
    %2169 = vmatpush.xpose.msra.mxu0 0.0
    %2170 = vmatpush.xpose.msra.mxu0 0.0
    %2171 = vmatpush.xpose.msra.mxu0 0.0
    %2172 = vmatpush.xpose.msra.mxu0 0.0
    %2173 = vmatpush.xpose.msra.mxu0 0.0
    %2174 = vmatpush.xpose.msra.mxu0 0.0
    %2175 = vmatpush.xpose.msra.mxu0 0.0
    %2176 = vmatpush.xpose.msra.mxu0 %v803
    %2177 = vmatmul.f32.gmra.mxu0 %v675
    %v2178 = vpop.f32.mrf.mxu0
    %v2179 = vadd.f32 0.0, %v2178
    %2180 = vdwg.mxu0
    %2181 = vmatpush.xpose.msra.mxu0 0.0
    %2182 = vmatpush.xpose.msra.mxu0 0.0
    %2183 = vmatpush.xpose.msra.mxu0 0.0
    %2184 = vmatpush.xpose.msra.mxu0 0.0
    %2185 = vmatpush.xpose.msra.mxu0 0.0
    %2186 = vmatpush.xpose.msra.mxu0 0.0
    %2187 = vmatpush.xpose.msra.mxu0 0.0
    %2188 = vmatpush.xpose.msra.mxu0 0.0
    %2189 = vmatpush.xpose.msra.mxu0 0.0
    %2190 = vmatpush.xpose.msra.mxu0 0.0
    %2191 = vmatpush.xpose.msra.mxu0 0.0
    %2192 = vmatpush.xpose.msra.mxu0 0.0
    %2193 = vmatpush.xpose.msra.mxu0 0.0
    %2194 = vmatpush.xpose.msra.mxu0 0.0
    %2195 = vmatpush.xpose.msra.mxu0 0.0
    %2196 = vmatpush.xpose.msra.mxu0 %v804
    %2197 = vmatmul.f32.gmra.mxu0 %v676
    %v2198 = vpop.f32.mrf.mxu0
    %v2199 = vadd.f32 0.0, %v2198
    %2200 = vdwg.mxu0
    %2201 = vmatpush.xpose.msra.mxu0 0.0
    %2202 = vmatpush.xpose.msra.mxu0 0.0
    %2203 = vmatpush.xpose.msra.mxu0 0.0
    %2204 = vmatpush.xpose.msra.mxu0 0.0
    %2205 = vmatpush.xpose.msra.mxu0 0.0
    %2206 = vmatpush.xpose.msra.mxu0 0.0
    %2207 = vmatpush.xpose.msra.mxu0 0.0
    %2208 = vmatpush.xpose.msra.mxu0 0.0
    %2209 = vmatpush.xpose.msra.mxu0 0.0
    %2210 = vmatpush.xpose.msra.mxu0 0.0
    %2211 = vmatpush.xpose.msra.mxu0 0.0
    %2212 = vmatpush.xpose.msra.mxu0 0.0
    %2213 = vmatpush.xpose.msra.mxu0 0.0
    %2214 = vmatpush.xpose.msra.mxu0 0.0
    %2215 = vmatpush.xpose.msra.mxu0 0.0
    %2216 = vmatpush.xpose.msra.mxu0 %v805
    %2217 = vmatmul.f32.gmra.mxu0 %v677
    %v2218 = vpop.f32.mrf.mxu0
    %v2219 = vadd.f32 0.0, %v2218
    %2220 = vdwg.mxu0
    %2221 = vmatpush.xpose.msra.mxu0 0.0
    %2222 = vmatpush.xpose.msra.mxu0 0.0
    %2223 = vmatpush.xpose.msra.mxu0 0.0
    %2224 = vmatpush.xpose.msra.mxu0 0.0
    %2225 = vmatpush.xpose.msra.mxu0 0.0
    %2226 = vmatpush.xpose.msra.mxu0 0.0
    %2227 = vmatpush.xpose.msra.mxu0 0.0
    %2228 = vmatpush.xpose.msra.mxu0 0.0
    %2229 = vmatpush.xpose.msra.mxu0 0.0
    %2230 = vmatpush.xpose.msra.mxu0 0.0
    %2231 = vmatpush.xpose.msra.mxu0 0.0
    %2232 = vmatpush.xpose.msra.mxu0 0.0
    %2233 = vmatpush.xpose.msra.mxu0 0.0
    %2234 = vmatpush.xpose.msra.mxu0 0.0
    %2235 = vmatpush.xpose.msra.mxu0 0.0
    %2236 = vmatpush.xpose.msra.mxu0 %v806
    %2237 = vmatmul.f32.gmra.mxu0 %v678
    %v2238 = vpop.f32.mrf.mxu0
    %v2239 = vadd.f32 0.0, %v2238
    %2240 = vdwg.mxu0
    %2241 = vmatpush.xpose.msra.mxu0 0.0
    %2242 = vmatpush.xpose.msra.mxu0 0.0
    %2243 = vmatpush.xpose.msra.mxu0 0.0
    %2244 = vmatpush.xpose.msra.mxu0 0.0
    %2245 = vmatpush.xpose.msra.mxu0 0.0
    %2246 = vmatpush.xpose.msra.mxu0 0.0
    %2247 = vmatpush.xpose.msra.mxu0 0.0
    %2248 = vmatpush.xpose.msra.mxu0 0.0
    %2249 = vmatpush.xpose.msra.mxu0 0.0
    %2250 = vmatpush.xpose.msra.mxu0 0.0
    %2251 = vmatpush.xpose.msra.mxu0 0.0
    %2252 = vmatpush.xpose.msra.mxu0 0.0
    %2253 = vmatpush.xpose.msra.mxu0 0.0
    %2254 = vmatpush.xpose.msra.mxu0 0.0
    %2255 = vmatpush.xpose.msra.mxu0 0.0
    %2256 = vmatpush.xpose.msra.mxu0 %v807
    %2257 = vmatmul.f32.gmra.mxu0 %v679
    %v2258 = vpop.f32.mrf.mxu0
    %v2259 = vadd.f32 0.0, %v2258
    %2260 = vdwg.mxu0
    %2261 = vmatpush.xpose.msra.mxu0 0.0
    %2262 = vmatpush.xpose.msra.mxu0 0.0
    %2263 = vmatpush.xpose.msra.mxu0 0.0
    %2264 = vmatpush.xpose.msra.mxu0 0.0
    %2265 = vmatpush.xpose.msra.mxu0 0.0
    %2266 = vmatpush.xpose.msra.mxu0 0.0
    %2267 = vmatpush.xpose.msra.mxu0 0.0
    %2268 = vmatpush.xpose.msra.mxu0 0.0
    %2269 = vmatpush.xpose.msra.mxu0 0.0
    %2270 = vmatpush.xpose.msra.mxu0 0.0
    %2271 = vmatpush.xpose.msra.mxu0 0.0
    %2272 = vmatpush.xpose.msra.mxu0 0.0
    %2273 = vmatpush.xpose.msra.mxu0 0.0
    %2274 = vmatpush.xpose.msra.mxu0 0.0
    %2275 = vmatpush.xpose.msra.mxu0 0.0
    %2276 = vmatpush.xpose.msra.mxu0 %v808
    %2277 = vmatmul.f32.gmra.mxu0 %v680
    %v2278 = vpop.f32.mrf.mxu0
    %v2279 = vadd.f32 0.0, %v2278
    %2280 = vdwg.mxu0
    %2281 = vmatpush.xpose.msra.mxu0 0.0
    %2282 = vmatpush.xpose.msra.mxu0 0.0
    %2283 = vmatpush.xpose.msra.mxu0 0.0
    %2284 = vmatpush.xpose.msra.mxu0 0.0
    %2285 = vmatpush.xpose.msra.mxu0 0.0
    %2286 = vmatpush.xpose.msra.mxu0 0.0
    %2287 = vmatpush.xpose.msra.mxu0 0.0
    %2288 = vmatpush.xpose.msra.mxu0 0.0
    %2289 = vmatpush.xpose.msra.mxu0 0.0
    %2290 = vmatpush.xpose.msra.mxu0 0.0
    %2291 = vmatpush.xpose.msra.mxu0 0.0
    %2292 = vmatpush.xpose.msra.mxu0 0.0
    %2293 = vmatpush.xpose.msra.mxu0 0.0
    %2294 = vmatpush.xpose.msra.mxu0 0.0
    %2295 = vmatpush.xpose.msra.mxu0 0.0
    %2296 = vmatpush.xpose.msra.mxu0 %v809
    %2297 = vmatmul.f32.gmra.mxu0 %v681
    %v2298 = vpop.f32.mrf.mxu0
    %v2299 = vadd.f32 0.0, %v2298
    %2300 = vdwg.mxu0
    %2301 = vmatpush.xpose.msra.mxu0 0.0
    %2302 = vmatpush.xpose.msra.mxu0 0.0
    %2303 = vmatpush.xpose.msra.mxu0 0.0
    %2304 = vmatpush.xpose.msra.mxu0 0.0
    %2305 = vmatpush.xpose.msra.mxu0 0.0
    %2306 = vmatpush.xpose.msra.mxu0 0.0
    %2307 = vmatpush.xpose.msra.mxu0 0.0
    %2308 = vmatpush.xpose.msra.mxu0 0.0
    %2309 = vmatpush.xpose.msra.mxu0 0.0
    %2310 = vmatpush.xpose.msra.mxu0 0.0
    %2311 = vmatpush.xpose.msra.mxu0 0.0
    %2312 = vmatpush.xpose.msra.mxu0 0.0
    %2313 = vmatpush.xpose.msra.mxu0 0.0
    %2314 = vmatpush.xpose.msra.mxu0 0.0
    %2315 = vmatpush.xpose.msra.mxu0 0.0
    %2316 = vmatpush.xpose.msra.mxu0 %v810
    %2317 = vmatmul.f32.gmra.mxu0 %v682
    %v2318 = vpop.f32.mrf.mxu0
    %v2319 = vadd.f32 0.0, %v2318
    %2320 = vdwg.mxu0
    %2321 = vmatpush.xpose.msra.mxu0 0.0
    %2322 = vmatpush.xpose.msra.mxu0 0.0
    %2323 = vmatpush.xpose.msra.mxu0 0.0
    %2324 = vmatpush.xpose.msra.mxu0 0.0
    %2325 = vmatpush.xpose.msra.mxu0 0.0
    %2326 = vmatpush.xpose.msra.mxu0 0.0
    %2327 = vmatpush.xpose.msra.mxu0 0.0
    %2328 = vmatpush.xpose.msra.mxu0 0.0
    %2329 = vmatpush.xpose.msra.mxu0 0.0
    %2330 = vmatpush.xpose.msra.mxu0 0.0
    %2331 = vmatpush.xpose.msra.mxu0 0.0
    %2332 = vmatpush.xpose.msra.mxu0 0.0
    %2333 = vmatpush.xpose.msra.mxu0 0.0
    %2334 = vmatpush.xpose.msra.mxu0 0.0
    %2335 = vmatpush.xpose.msra.mxu0 0.0
    %2336 = vmatpush.xpose.msra.mxu0 %v811
    %2337 = vmatmul.f32.gmra.mxu0 %v683
    %v2338 = vpop.f32.mrf.mxu0
    %v2339 = vadd.f32 0.0, %v2338
    %2340 = vdwg.mxu0
    %2341 = vmatpush.xpose.msra.mxu0 0.0
    %2342 = vmatpush.xpose.msra.mxu0 0.0
    %2343 = vmatpush.xpose.msra.mxu0 0.0
    %2344 = vmatpush.xpose.msra.mxu0 0.0
    %2345 = vmatpush.xpose.msra.mxu0 0.0
    %2346 = vmatpush.xpose.msra.mxu0 0.0
    %2347 = vmatpush.xpose.msra.mxu0 0.0
    %2348 = vmatpush.xpose.msra.mxu0 0.0
    %2349 = vmatpush.xpose.msra.mxu0 0.0
    %2350 = vmatpush.xpose.msra.mxu0 0.0
    %2351 = vmatpush.xpose.msra.mxu0 0.0
    %2352 = vmatpush.xpose.msra.mxu0 0.0
    %2353 = vmatpush.xpose.msra.mxu0 0.0
    %2354 = vmatpush.xpose.msra.mxu0 0.0
    %2355 = vmatpush.xpose.msra.mxu0 0.0
    %2356 = vmatpush.xpose.msra.mxu0 %v812
    %2357 = vmatmul.f32.gmra.mxu0 %v684
    %v2358 = vpop.f32.mrf.mxu0
    %v2359 = vadd.f32 0.0, %v2358
    %2360 = vdwg.mxu0
    %2361 = vmatpush.xpose.msra.mxu0 0.0
    %2362 = vmatpush.xpose.msra.mxu0 0.0
    %2363 = vmatpush.xpose.msra.mxu0 0.0
    %2364 = vmatpush.xpose.msra.mxu0 0.0
    %2365 = vmatpush.xpose.msra.mxu0 0.0
    %2366 = vmatpush.xpose.msra.mxu0 0.0
    %2367 = vmatpush.xpose.msra.mxu0 0.0
    %2368 = vmatpush.xpose.msra.mxu0 0.0
    %2369 = vmatpush.xpose.msra.mxu0 0.0
    %2370 = vmatpush.xpose.msra.mxu0 0.0
    %2371 = vmatpush.xpose.msra.mxu0 0.0
    %2372 = vmatpush.xpose.msra.mxu0 0.0
    %2373 = vmatpush.xpose.msra.mxu0 0.0
    %2374 = vmatpush.xpose.msra.mxu0 0.0
    %2375 = vmatpush.xpose.msra.mxu0 0.0
    %2376 = vmatpush.xpose.msra.mxu0 %v813
    %2377 = vmatmul.f32.gmra.mxu0 %v685
    %v2378 = vpop.f32.mrf.mxu0
    %v2379 = vadd.f32 0.0, %v2378
    %2380 = vdwg.mxu0
    %2381 = vmatpush.xpose.msra.mxu0 0.0
    %2382 = vmatpush.xpose.msra.mxu0 0.0
    %2383 = vmatpush.xpose.msra.mxu0 0.0
    %2384 = vmatpush.xpose.msra.mxu0 0.0
    %2385 = vmatpush.xpose.msra.mxu0 0.0
    %2386 = vmatpush.xpose.msra.mxu0 0.0
    %2387 = vmatpush.xpose.msra.mxu0 0.0
    %2388 = vmatpush.xpose.msra.mxu0 0.0
    %2389 = vmatpush.xpose.msra.mxu0 0.0
    %2390 = vmatpush.xpose.msra.mxu0 0.0
    %2391 = vmatpush.xpose.msra.mxu0 0.0
    %2392 = vmatpush.xpose.msra.mxu0 0.0
    %2393 = vmatpush.xpose.msra.mxu0 0.0
    %2394 = vmatpush.xpose.msra.mxu0 0.0
    %2395 = vmatpush.xpose.msra.mxu0 0.0
    %2396 = vmatpush.xpose.msra.mxu0 %v814
    %2397 = vmatmul.f32.gmra.mxu0 %v686
    %v2398 = vpop.f32.mrf.mxu0
    %v2399 = vadd.f32 0.0, %v2398
    %2400 = vdwg.mxu0
    %2401 = vmatpush.xpose.msra.mxu0 0.0
    %2402 = vmatpush.xpose.msra.mxu0 0.0
    %2403 = vmatpush.xpose.msra.mxu0 0.0
    %2404 = vmatpush.xpose.msra.mxu0 0.0
    %2405 = vmatpush.xpose.msra.mxu0 0.0
    %2406 = vmatpush.xpose.msra.mxu0 0.0
    %2407 = vmatpush.xpose.msra.mxu0 0.0
    %2408 = vmatpush.xpose.msra.mxu0 0.0
    %2409 = vmatpush.xpose.msra.mxu0 0.0
    %2410 = vmatpush.xpose.msra.mxu0 0.0
    %2411 = vmatpush.xpose.msra.mxu0 0.0
    %2412 = vmatpush.xpose.msra.mxu0 0.0
    %2413 = vmatpush.xpose.msra.mxu0 0.0
    %2414 = vmatpush.xpose.msra.mxu0 0.0
    %2415 = vmatpush.xpose.msra.mxu0 0.0
    %2416 = vmatpush.xpose.msra.mxu0 %v815
    %2417 = vmatmul.f32.gmra.mxu0 %v687
    %v2418 = vpop.f32.mrf.mxu0
    %v2419 = vadd.f32 0.0, %v2418
    %2420 = vdwg.mxu0
    %2421 = vmatpush.xpose.msra.mxu0 0.0
    %2422 = vmatpush.xpose.msra.mxu0 0.0
    %2423 = vmatpush.xpose.msra.mxu0 0.0
    %2424 = vmatpush.xpose.msra.mxu0 0.0
    %2425 = vmatpush.xpose.msra.mxu0 0.0
    %2426 = vmatpush.xpose.msra.mxu0 0.0
    %2427 = vmatpush.xpose.msra.mxu0 0.0
    %2428 = vmatpush.xpose.msra.mxu0 0.0
    %2429 = vmatpush.xpose.msra.mxu0 0.0
    %2430 = vmatpush.xpose.msra.mxu0 0.0
    %2431 = vmatpush.xpose.msra.mxu0 0.0
    %2432 = vmatpush.xpose.msra.mxu0 0.0
    %2433 = vmatpush.xpose.msra.mxu0 0.0
    %2434 = vmatpush.xpose.msra.mxu0 0.0
    %2435 = vmatpush.xpose.msra.mxu0 0.0
    %2436 = vmatpush.xpose.msra.mxu0 %v816
    %2437 = vmatmul.f32.gmra.mxu0 %v688
    %v2438 = vpop.f32.mrf.mxu0
    %v2439 = vadd.f32 0.0, %v2438
    %2440 = vdwg.mxu0
    %2441 = vmatpush.xpose.msra.mxu0 0.0
    %2442 = vmatpush.xpose.msra.mxu0 0.0
    %2443 = vmatpush.xpose.msra.mxu0 0.0
    %2444 = vmatpush.xpose.msra.mxu0 0.0
    %2445 = vmatpush.xpose.msra.mxu0 0.0
    %2446 = vmatpush.xpose.msra.mxu0 0.0
    %2447 = vmatpush.xpose.msra.mxu0 0.0
    %2448 = vmatpush.xpose.msra.mxu0 0.0
    %2449 = vmatpush.xpose.msra.mxu0 0.0
    %2450 = vmatpush.xpose.msra.mxu0 0.0
    %2451 = vmatpush.xpose.msra.mxu0 0.0
    %2452 = vmatpush.xpose.msra.mxu0 0.0
    %2453 = vmatpush.xpose.msra.mxu0 0.0
    %2454 = vmatpush.xpose.msra.mxu0 0.0
    %2455 = vmatpush.xpose.msra.mxu0 0.0
    %2456 = vmatpush.xpose.msra.mxu0 %v817
    %2457 = vmatmul.f32.gmra.mxu0 %v689
    %v2458 = vpop.f32.mrf.mxu0
    %v2459 = vadd.f32 0.0, %v2458
    %2460 = vdwg.mxu0
    %2461 = vmatpush.xpose.msra.mxu0 0.0
    %2462 = vmatpush.xpose.msra.mxu0 0.0
    %2463 = vmatpush.xpose.msra.mxu0 0.0
    %2464 = vmatpush.xpose.msra.mxu0 0.0
    %2465 = vmatpush.xpose.msra.mxu0 0.0
    %2466 = vmatpush.xpose.msra.mxu0 0.0
    %2467 = vmatpush.xpose.msra.mxu0 0.0
    %2468 = vmatpush.xpose.msra.mxu0 0.0
    %2469 = vmatpush.xpose.msra.mxu0 0.0
    %2470 = vmatpush.xpose.msra.mxu0 0.0
    %2471 = vmatpush.xpose.msra.mxu0 0.0
    %2472 = vmatpush.xpose.msra.mxu0 0.0
    %2473 = vmatpush.xpose.msra.mxu0 0.0
    %2474 = vmatpush.xpose.msra.mxu0 0.0
    %2475 = vmatpush.xpose.msra.mxu0 0.0
    %2476 = vmatpush.xpose.msra.mxu0 %v818
    %2477 = vmatmul.f32.gmra.mxu0 %v690
    %v2478 = vpop.f32.mrf.mxu0
    %v2479 = vadd.f32 0.0, %v2478
    %2480 = vdwg.mxu0
    %2481 = vmatpush.xpose.msra.mxu0 0.0
    %2482 = vmatpush.xpose.msra.mxu0 0.0
    %2483 = vmatpush.xpose.msra.mxu0 0.0
    %2484 = vmatpush.xpose.msra.mxu0 0.0
    %2485 = vmatpush.xpose.msra.mxu0 0.0
    %2486 = vmatpush.xpose.msra.mxu0 0.0
    %2487 = vmatpush.xpose.msra.mxu0 0.0
    %2488 = vmatpush.xpose.msra.mxu0 0.0
    %2489 = vmatpush.xpose.msra.mxu0 0.0
    %2490 = vmatpush.xpose.msra.mxu0 0.0
    %2491 = vmatpush.xpose.msra.mxu0 0.0
    %2492 = vmatpush.xpose.msra.mxu0 0.0
    %2493 = vmatpush.xpose.msra.mxu0 0.0
    %2494 = vmatpush.xpose.msra.mxu0 0.0
    %2495 = vmatpush.xpose.msra.mxu0 0.0
    %2496 = vmatpush.xpose.msra.mxu0 %v819
    %2497 = vmatmul.f32.gmra.mxu0 %v691
    %v2498 = vpop.f32.mrf.mxu0
    %v2499 = vadd.f32 0.0, %v2498
    %2500 = vdwg.mxu0
    %2501 = vmatpush.xpose.msra.mxu0 0.0
    %2502 = vmatpush.xpose.msra.mxu0 0.0
    %2503 = vmatpush.xpose.msra.mxu0 0.0
    %2504 = vmatpush.xpose.msra.mxu0 0.0
    %2505 = vmatpush.xpose.msra.mxu0 0.0
    %2506 = vmatpush.xpose.msra.mxu0 0.0
    %2507 = vmatpush.xpose.msra.mxu0 0.0
    %2508 = vmatpush.xpose.msra.mxu0 0.0
    %2509 = vmatpush.xpose.msra.mxu0 0.0
    %2510 = vmatpush.xpose.msra.mxu0 0.0
    %2511 = vmatpush.xpose.msra.mxu0 0.0
    %2512 = vmatpush.xpose.msra.mxu0 0.0
    %2513 = vmatpush.xpose.msra.mxu0 0.0
    %2514 = vmatpush.xpose.msra.mxu0 0.0
    %2515 = vmatpush.xpose.msra.mxu0 0.0
    %2516 = vmatpush.xpose.msra.mxu0 %v820
    %2517 = vmatmul.f32.gmra.mxu0 %v692
    %v2518 = vpop.f32.mrf.mxu0
    %v2519 = vadd.f32 0.0, %v2518
    %2520 = vdwg.mxu0
    %2521 = vmatpush.xpose.msra.mxu0 0.0
    %2522 = vmatpush.xpose.msra.mxu0 0.0
    %2523 = vmatpush.xpose.msra.mxu0 0.0
    %2524 = vmatpush.xpose.msra.mxu0 0.0
    %2525 = vmatpush.xpose.msra.mxu0 0.0
    %2526 = vmatpush.xpose.msra.mxu0 0.0
    %2527 = vmatpush.xpose.msra.mxu0 0.0
    %2528 = vmatpush.xpose.msra.mxu0 0.0
    %2529 = vmatpush.xpose.msra.mxu0 0.0
    %2530 = vmatpush.xpose.msra.mxu0 0.0
    %2531 = vmatpush.xpose.msra.mxu0 0.0
    %2532 = vmatpush.xpose.msra.mxu0 0.0
    %2533 = vmatpush.xpose.msra.mxu0 0.0
    %2534 = vmatpush.xpose.msra.mxu0 0.0
    %2535 = vmatpush.xpose.msra.mxu0 0.0
    %2536 = vmatpush.xpose.msra.mxu0 %v821
    %2537 = vmatmul.f32.gmra.mxu0 %v693
    %v2538 = vpop.f32.mrf.mxu0
    %v2539 = vadd.f32 0.0, %v2538
    %2540 = vdwg.mxu0
    %2541 = vmatpush.xpose.msra.mxu0 0.0
    %2542 = vmatpush.xpose.msra.mxu0 0.0
    %2543 = vmatpush.xpose.msra.mxu0 0.0
    %2544 = vmatpush.xpose.msra.mxu0 0.0
    %2545 = vmatpush.xpose.msra.mxu0 0.0
    %2546 = vmatpush.xpose.msra.mxu0 0.0
    %2547 = vmatpush.xpose.msra.mxu0 0.0
    %2548 = vmatpush.xpose.msra.mxu0 0.0
    %2549 = vmatpush.xpose.msra.mxu0 0.0
    %2550 = vmatpush.xpose.msra.mxu0 0.0
    %2551 = vmatpush.xpose.msra.mxu0 0.0
    %2552 = vmatpush.xpose.msra.mxu0 0.0
    %2553 = vmatpush.xpose.msra.mxu0 0.0
    %2554 = vmatpush.xpose.msra.mxu0 0.0
    %2555 = vmatpush.xpose.msra.mxu0 0.0
    %2556 = vmatpush.xpose.msra.mxu0 %v822
    %2557 = vmatmul.f32.gmra.mxu0 %v694
    %v2558 = vpop.f32.mrf.mxu0
    %v2559 = vadd.f32 0.0, %v2558
    %2560 = vdwg.mxu0
    %2561 = vmatpush.xpose.msra.mxu0 0.0
    %2562 = vmatpush.xpose.msra.mxu0 0.0
    %2563 = vmatpush.xpose.msra.mxu0 0.0
    %2564 = vmatpush.xpose.msra.mxu0 0.0
    %2565 = vmatpush.xpose.msra.mxu0 0.0
    %2566 = vmatpush.xpose.msra.mxu0 0.0
    %2567 = vmatpush.xpose.msra.mxu0 0.0
    %2568 = vmatpush.xpose.msra.mxu0 0.0
    %2569 = vmatpush.xpose.msra.mxu0 0.0
    %2570 = vmatpush.xpose.msra.mxu0 0.0
    %2571 = vmatpush.xpose.msra.mxu0 0.0
    %2572 = vmatpush.xpose.msra.mxu0 0.0
    %2573 = vmatpush.xpose.msra.mxu0 0.0
    %2574 = vmatpush.xpose.msra.mxu0 0.0
    %2575 = vmatpush.xpose.msra.mxu0 0.0
    %2576 = vmatpush.xpose.msra.mxu0 %v823
    %2577 = vmatmul.f32.gmra.mxu0 %v695
    %v2578 = vpop.f32.mrf.mxu0
    %v2579 = vadd.f32 0.0, %v2578
    %2580 = vdwg.mxu0
    %2581 = vmatpush.xpose.msra.mxu0 0.0
    %2582 = vmatpush.xpose.msra.mxu0 0.0
    %2583 = vmatpush.xpose.msra.mxu0 0.0
    %2584 = vmatpush.xpose.msra.mxu0 0.0
    %2585 = vmatpush.xpose.msra.mxu0 0.0
    %2586 = vmatpush.xpose.msra.mxu0 0.0
    %2587 = vmatpush.xpose.msra.mxu0 0.0
    %2588 = vmatpush.xpose.msra.mxu0 0.0
    %2589 = vmatpush.xpose.msra.mxu0 0.0
    %2590 = vmatpush.xpose.msra.mxu0 0.0
    %2591 = vmatpush.xpose.msra.mxu0 0.0
    %2592 = vmatpush.xpose.msra.mxu0 0.0
    %2593 = vmatpush.xpose.msra.mxu0 0.0
    %2594 = vmatpush.xpose.msra.mxu0 0.0
    %2595 = vmatpush.xpose.msra.mxu0 0.0
    %2596 = vmatpush.xpose.msra.mxu0 %v824
    %2597 = vmatmul.f32.gmra.mxu0 %v696
    %v2598 = vpop.f32.mrf.mxu0
    %v2599 = vadd.f32 0.0, %v2598
    %2600 = vdwg.mxu0
    %2601 = vmatpush.xpose.msra.mxu0 0.0
    %2602 = vmatpush.xpose.msra.mxu0 0.0
    %2603 = vmatpush.xpose.msra.mxu0 0.0
    %2604 = vmatpush.xpose.msra.mxu0 0.0
    %2605 = vmatpush.xpose.msra.mxu0 0.0
    %2606 = vmatpush.xpose.msra.mxu0 0.0
    %2607 = vmatpush.xpose.msra.mxu0 0.0
    %2608 = vmatpush.xpose.msra.mxu0 0.0
    %2609 = vmatpush.xpose.msra.mxu0 0.0
    %2610 = vmatpush.xpose.msra.mxu0 0.0
    %2611 = vmatpush.xpose.msra.mxu0 0.0
    %2612 = vmatpush.xpose.msra.mxu0 0.0
    %2613 = vmatpush.xpose.msra.mxu0 0.0
    %2614 = vmatpush.xpose.msra.mxu0 0.0
    %2615 = vmatpush.xpose.msra.mxu0 0.0
    %2616 = vmatpush.xpose.msra.mxu0 %v825
    %2617 = vmatmul.f32.gmra.mxu0 %v697
    %v2618 = vpop.f32.mrf.mxu0
    %v2619 = vadd.f32 0.0, %v2618
    %2620 = vdwg.mxu0
    %2621 = vmatpush.xpose.msra.mxu0 0.0
    %2622 = vmatpush.xpose.msra.mxu0 0.0
    %2623 = vmatpush.xpose.msra.mxu0 0.0
    %2624 = vmatpush.xpose.msra.mxu0 0.0
    %2625 = vmatpush.xpose.msra.mxu0 0.0
    %2626 = vmatpush.xpose.msra.mxu0 0.0
    %2627 = vmatpush.xpose.msra.mxu0 0.0
    %2628 = vmatpush.xpose.msra.mxu0 0.0
    %2629 = vmatpush.xpose.msra.mxu0 0.0
    %2630 = vmatpush.xpose.msra.mxu0 0.0
    %2631 = vmatpush.xpose.msra.mxu0 0.0
    %2632 = vmatpush.xpose.msra.mxu0 0.0
    %2633 = vmatpush.xpose.msra.mxu0 0.0
    %2634 = vmatpush.xpose.msra.mxu0 0.0
    %2635 = vmatpush.xpose.msra.mxu0 0.0
    %2636 = vmatpush.xpose.msra.mxu0 %v826
    %2637 = vmatmul.f32.gmra.mxu0 %v698
    %v2638 = vpop.f32.mrf.mxu0
    %v2639 = vadd.f32 0.0, %v2638
    %2640 = vdwg.mxu0
    %2641 = vmatpush.xpose.msra.mxu0 0.0
    %2642 = vmatpush.xpose.msra.mxu0 0.0
    %2643 = vmatpush.xpose.msra.mxu0 0.0
    %2644 = vmatpush.xpose.msra.mxu0 0.0
    %2645 = vmatpush.xpose.msra.mxu0 0.0
    %2646 = vmatpush.xpose.msra.mxu0 0.0
    %2647 = vmatpush.xpose.msra.mxu0 0.0
    %2648 = vmatpush.xpose.msra.mxu0 0.0
    %2649 = vmatpush.xpose.msra.mxu0 0.0
    %2650 = vmatpush.xpose.msra.mxu0 0.0
    %2651 = vmatpush.xpose.msra.mxu0 0.0
    %2652 = vmatpush.xpose.msra.mxu0 0.0
    %2653 = vmatpush.xpose.msra.mxu0 0.0
    %2654 = vmatpush.xpose.msra.mxu0 0.0
    %2655 = vmatpush.xpose.msra.mxu0 0.0
    %2656 = vmatpush.xpose.msra.mxu0 %v827
    %2657 = vmatmul.f32.gmra.mxu0 %v699
    %v2658 = vpop.f32.mrf.mxu0
    %v2659 = vadd.f32 0.0, %v2658
    %2660 = vdwg.mxu0
    %2661 = vmatpush.xpose.msra.mxu0 0.0
    %2662 = vmatpush.xpose.msra.mxu0 0.0
    %2663 = vmatpush.xpose.msra.mxu0 0.0
    %2664 = vmatpush.xpose.msra.mxu0 0.0
    %2665 = vmatpush.xpose.msra.mxu0 0.0
    %2666 = vmatpush.xpose.msra.mxu0 0.0
    %2667 = vmatpush.xpose.msra.mxu0 0.0
    %2668 = vmatpush.xpose.msra.mxu0 0.0
    %2669 = vmatpush.xpose.msra.mxu0 0.0
    %2670 = vmatpush.xpose.msra.mxu0 0.0
    %2671 = vmatpush.xpose.msra.mxu0 0.0
    %2672 = vmatpush.xpose.msra.mxu0 0.0
    %2673 = vmatpush.xpose.msra.mxu0 0.0
    %2674 = vmatpush.xpose.msra.mxu0 0.0
    %2675 = vmatpush.xpose.msra.mxu0 0.0
    %2676 = vmatpush.xpose.msra.mxu0 %v828
    %2677 = vmatmul.f32.gmra.mxu0 %v700
    %v2678 = vpop.f32.mrf.mxu0
    %v2679 = vadd.f32 0.0, %v2678
    %2680 = vdwg.mxu0
    %2681 = vmatpush.xpose.msra.mxu0 0.0
    %2682 = vmatpush.xpose.msra.mxu0 0.0
    %2683 = vmatpush.xpose.msra.mxu0 0.0
    %2684 = vmatpush.xpose.msra.mxu0 0.0
    %2685 = vmatpush.xpose.msra.mxu0 0.0
    %2686 = vmatpush.xpose.msra.mxu0 0.0
    %2687 = vmatpush.xpose.msra.mxu0 0.0
    %2688 = vmatpush.xpose.msra.mxu0 0.0
    %2689 = vmatpush.xpose.msra.mxu0 0.0
    %2690 = vmatpush.xpose.msra.mxu0 0.0
    %2691 = vmatpush.xpose.msra.mxu0 0.0
    %2692 = vmatpush.xpose.msra.mxu0 0.0
    %2693 = vmatpush.xpose.msra.mxu0 0.0
    %2694 = vmatpush.xpose.msra.mxu0 0.0
    %2695 = vmatpush.xpose.msra.mxu0 0.0
    %2696 = vmatpush.xpose.msra.mxu0 %v829
    %2697 = vmatmul.f32.gmra.mxu0 %v701
    %v2698 = vpop.f32.mrf.mxu0
    %v2699 = vadd.f32 0.0, %v2698
    %2700 = vdwg.mxu0
    %2701 = vmatpush.xpose.msra.mxu0 0.0
    %2702 = vmatpush.xpose.msra.mxu0 0.0
    %2703 = vmatpush.xpose.msra.mxu0 0.0
    %2704 = vmatpush.xpose.msra.mxu0 0.0
    %2705 = vmatpush.xpose.msra.mxu0 0.0
    %2706 = vmatpush.xpose.msra.mxu0 0.0
    %2707 = vmatpush.xpose.msra.mxu0 0.0
    %2708 = vmatpush.xpose.msra.mxu0 0.0
    %2709 = vmatpush.xpose.msra.mxu0 0.0
    %2710 = vmatpush.xpose.msra.mxu0 0.0
    %2711 = vmatpush.xpose.msra.mxu0 0.0
    %2712 = vmatpush.xpose.msra.mxu0 0.0
    %2713 = vmatpush.xpose.msra.mxu0 0.0
    %2714 = vmatpush.xpose.msra.mxu0 0.0
    %2715 = vmatpush.xpose.msra.mxu0 0.0
    %2716 = vmatpush.xpose.msra.mxu0 %v830
    %2717 = vmatmul.f32.gmra.mxu0 %v702
    %v2718 = vpop.f32.mrf.mxu0
    %v2719 = vadd.f32 0.0, %v2718
    %2720 = vdwg.mxu0
    %2721 = vmatpush.xpose.msra.mxu0 0.0
    %2722 = vmatpush.xpose.msra.mxu0 0.0
    %2723 = vmatpush.xpose.msra.mxu0 0.0
    %2724 = vmatpush.xpose.msra.mxu0 0.0
    %2725 = vmatpush.xpose.msra.mxu0 0.0
    %2726 = vmatpush.xpose.msra.mxu0 0.0
    %2727 = vmatpush.xpose.msra.mxu0 0.0
    %2728 = vmatpush.xpose.msra.mxu0 0.0
    %2729 = vmatpush.xpose.msra.mxu0 0.0
    %2730 = vmatpush.xpose.msra.mxu0 0.0
    %2731 = vmatpush.xpose.msra.mxu0 0.0
    %2732 = vmatpush.xpose.msra.mxu0 0.0
    %2733 = vmatpush.xpose.msra.mxu0 0.0
    %2734 = vmatpush.xpose.msra.mxu0 0.0
    %2735 = vmatpush.xpose.msra.mxu0 0.0
    %2736 = vmatpush.xpose.msra.mxu0 %v831
    %2737 = vmatmul.f32.gmra.mxu0 %v703
    %v2738 = vpop.f32.mrf.mxu0
    %v2739 = vadd.f32 0.0, %v2738
    %2740 = vdwg.mxu0
    %2741 = vmatpush.xpose.msra.mxu0 0.0
    %2742 = vmatpush.xpose.msra.mxu0 0.0
    %2743 = vmatpush.xpose.msra.mxu0 0.0
    %2744 = vmatpush.xpose.msra.mxu0 0.0
    %2745 = vmatpush.xpose.msra.mxu0 0.0
    %2746 = vmatpush.xpose.msra.mxu0 0.0
    %2747 = vmatpush.xpose.msra.mxu0 0.0
    %2748 = vmatpush.xpose.msra.mxu0 0.0
    %2749 = vmatpush.xpose.msra.mxu0 0.0
    %2750 = vmatpush.xpose.msra.mxu0 0.0
    %2751 = vmatpush.xpose.msra.mxu0 0.0
    %2752 = vmatpush.xpose.msra.mxu0 0.0
    %2753 = vmatpush.xpose.msra.mxu0 0.0
    %2754 = vmatpush.xpose.msra.mxu0 0.0
    %2755 = vmatpush.xpose.msra.mxu0 0.0
    %2756 = vmatpush.xpose.msra.mxu0 %v832
    %2757 = vmatmul.f32.gmra.mxu0 %v704
    %v2758 = vpop.f32.mrf.mxu0
    %v2759 = vadd.f32 0.0, %v2758
    %2760 = vdwg.mxu0
    %2761 = vmatpush.xpose.msra.mxu0 0.0
    %2762 = vmatpush.xpose.msra.mxu0 0.0
    %2763 = vmatpush.xpose.msra.mxu0 0.0
    %2764 = vmatpush.xpose.msra.mxu0 0.0
    %2765 = vmatpush.xpose.msra.mxu0 0.0
    %2766 = vmatpush.xpose.msra.mxu0 0.0
    %2767 = vmatpush.xpose.msra.mxu0 0.0
    %2768 = vmatpush.xpose.msra.mxu0 0.0
    %2769 = vmatpush.xpose.msra.mxu0 0.0
    %2770 = vmatpush.xpose.msra.mxu0 0.0
    %2771 = vmatpush.xpose.msra.mxu0 0.0
    %2772 = vmatpush.xpose.msra.mxu0 0.0
    %2773 = vmatpush.xpose.msra.mxu0 0.0
    %2774 = vmatpush.xpose.msra.mxu0 0.0
    %2775 = vmatpush.xpose.msra.mxu0 0.0
    %2776 = vmatpush.xpose.msra.mxu0 %v833
    %2777 = vmatmul.f32.gmra.mxu0 %v705
    %v2778 = vpop.f32.mrf.mxu0
    %v2779 = vadd.f32 0.0, %v2778
    %2780 = vdwg.mxu0
    %2781 = vmatpush.xpose.msra.mxu0 0.0
    %2782 = vmatpush.xpose.msra.mxu0 0.0
    %2783 = vmatpush.xpose.msra.mxu0 0.0
    %2784 = vmatpush.xpose.msra.mxu0 0.0
    %2785 = vmatpush.xpose.msra.mxu0 0.0
    %2786 = vmatpush.xpose.msra.mxu0 0.0
    %2787 = vmatpush.xpose.msra.mxu0 0.0
    %2788 = vmatpush.xpose.msra.mxu0 0.0
    %2789 = vmatpush.xpose.msra.mxu0 0.0
    %2790 = vmatpush.xpose.msra.mxu0 0.0
    %2791 = vmatpush.xpose.msra.mxu0 0.0
    %2792 = vmatpush.xpose.msra.mxu0 0.0
    %2793 = vmatpush.xpose.msra.mxu0 0.0
    %2794 = vmatpush.xpose.msra.mxu0 0.0
    %2795 = vmatpush.xpose.msra.mxu0 0.0
    %2796 = vmatpush.xpose.msra.mxu0 %v834
    %2797 = vmatmul.f32.gmra.mxu0 %v706
    %v2798 = vpop.f32.mrf.mxu0
    %v2799 = vadd.f32 0.0, %v2798
    %2800 = vdwg.mxu0
    %2801 = vmatpush.xpose.msra.mxu0 0.0
    %2802 = vmatpush.xpose.msra.mxu0 0.0
    %2803 = vmatpush.xpose.msra.mxu0 0.0
    %2804 = vmatpush.xpose.msra.mxu0 0.0
    %2805 = vmatpush.xpose.msra.mxu0 0.0
    %2806 = vmatpush.xpose.msra.mxu0 0.0
    %2807 = vmatpush.xpose.msra.mxu0 0.0
    %2808 = vmatpush.xpose.msra.mxu0 0.0
    %2809 = vmatpush.xpose.msra.mxu0 0.0
    %2810 = vmatpush.xpose.msra.mxu0 0.0
    %2811 = vmatpush.xpose.msra.mxu0 0.0
    %2812 = vmatpush.xpose.msra.mxu0 0.0
    %2813 = vmatpush.xpose.msra.mxu0 0.0
    %2814 = vmatpush.xpose.msra.mxu0 0.0
    %2815 = vmatpush.xpose.msra.mxu0 0.0
    %2816 = vmatpush.xpose.msra.mxu0 %v835
    %2817 = vmatmul.f32.gmra.mxu0 %v707
    %v2818 = vpop.f32.mrf.mxu0
    %v2819 = vadd.f32 0.0, %v2818
    %2820 = vdwg.mxu0
    %2821 = vmatpush.xpose.msra.mxu0 0.0
    %2822 = vmatpush.xpose.msra.mxu0 0.0
    %2823 = vmatpush.xpose.msra.mxu0 0.0
    %2824 = vmatpush.xpose.msra.mxu0 0.0
    %2825 = vmatpush.xpose.msra.mxu0 0.0
    %2826 = vmatpush.xpose.msra.mxu0 0.0
    %2827 = vmatpush.xpose.msra.mxu0 0.0
    %2828 = vmatpush.xpose.msra.mxu0 0.0
    %2829 = vmatpush.xpose.msra.mxu0 0.0
    %2830 = vmatpush.xpose.msra.mxu0 0.0
    %2831 = vmatpush.xpose.msra.mxu0 0.0
    %2832 = vmatpush.xpose.msra.mxu0 0.0
    %2833 = vmatpush.xpose.msra.mxu0 0.0
    %2834 = vmatpush.xpose.msra.mxu0 0.0
    %2835 = vmatpush.xpose.msra.mxu0 0.0
    %2836 = vmatpush.xpose.msra.mxu0 %v836
    %2837 = vmatmul.f32.gmra.mxu0 %v708
    %v2838 = vpop.f32.mrf.mxu0
    %v2839 = vadd.f32 0.0, %v2838
    %2840 = vdwg.mxu0
    %2841 = vmatpush.xpose.msra.mxu0 0.0
    %2842 = vmatpush.xpose.msra.mxu0 0.0
    %2843 = vmatpush.xpose.msra.mxu0 0.0
    %2844 = vmatpush.xpose.msra.mxu0 0.0
    %2845 = vmatpush.xpose.msra.mxu0 0.0
    %2846 = vmatpush.xpose.msra.mxu0 0.0
    %2847 = vmatpush.xpose.msra.mxu0 0.0
    %2848 = vmatpush.xpose.msra.mxu0 0.0
    %2849 = vmatpush.xpose.msra.mxu0 0.0
    %2850 = vmatpush.xpose.msra.mxu0 0.0
    %2851 = vmatpush.xpose.msra.mxu0 0.0
    %2852 = vmatpush.xpose.msra.mxu0 0.0
    %2853 = vmatpush.xpose.msra.mxu0 0.0
    %2854 = vmatpush.xpose.msra.mxu0 0.0
    %2855 = vmatpush.xpose.msra.mxu0 0.0
    %2856 = vmatpush.xpose.msra.mxu0 %v837
    %2857 = vmatmul.f32.gmra.mxu0 %v709
    %v2858 = vpop.f32.mrf.mxu0
    %v2859 = vadd.f32 0.0, %v2858
    %2860 = vdwg.mxu0
    %2861 = vmatpush.xpose.msra.mxu0 0.0
    %2862 = vmatpush.xpose.msra.mxu0 0.0
    %2863 = vmatpush.xpose.msra.mxu0 0.0
    %2864 = vmatpush.xpose.msra.mxu0 0.0
    %2865 = vmatpush.xpose.msra.mxu0 0.0
    %2866 = vmatpush.xpose.msra.mxu0 0.0
    %2867 = vmatpush.xpose.msra.mxu0 0.0
    %2868 = vmatpush.xpose.msra.mxu0 0.0
    %2869 = vmatpush.xpose.msra.mxu0 0.0
    %2870 = vmatpush.xpose.msra.mxu0 0.0
    %2871 = vmatpush.xpose.msra.mxu0 0.0
    %2872 = vmatpush.xpose.msra.mxu0 0.0
    %2873 = vmatpush.xpose.msra.mxu0 0.0
    %2874 = vmatpush.xpose.msra.mxu0 0.0
    %2875 = vmatpush.xpose.msra.mxu0 0.0
    %2876 = vmatpush.xpose.msra.mxu0 %v838
    %2877 = vmatmul.f32.gmra.mxu0 %v710
    %v2878 = vpop.f32.mrf.mxu0
    %v2879 = vadd.f32 0.0, %v2878
    %2880 = vdwg.mxu0
    %2881 = vmatpush.xpose.msra.mxu0 0.0
    %2882 = vmatpush.xpose.msra.mxu0 0.0
    %2883 = vmatpush.xpose.msra.mxu0 0.0
    %2884 = vmatpush.xpose.msra.mxu0 0.0
    %2885 = vmatpush.xpose.msra.mxu0 0.0
    %2886 = vmatpush.xpose.msra.mxu0 0.0
    %2887 = vmatpush.xpose.msra.mxu0 0.0
    %2888 = vmatpush.xpose.msra.mxu0 0.0
    %2889 = vmatpush.xpose.msra.mxu0 0.0
    %2890 = vmatpush.xpose.msra.mxu0 0.0
    %2891 = vmatpush.xpose.msra.mxu0 0.0
    %2892 = vmatpush.xpose.msra.mxu0 0.0
    %2893 = vmatpush.xpose.msra.mxu0 0.0
    %2894 = vmatpush.xpose.msra.mxu0 0.0
    %2895 = vmatpush.xpose.msra.mxu0 0.0
    %2896 = vmatpush.xpose.msra.mxu0 %v839
    %2897 = vmatmul.f32.gmra.mxu0 %v711
    %v2898 = vpop.f32.mrf.mxu0
    %v2899 = vadd.f32 0.0, %v2898
    %2900 = vdwg.mxu0
    %2901 = vmatpush.xpose.msra.mxu0 0.0
    %2902 = vmatpush.xpose.msra.mxu0 0.0
    %2903 = vmatpush.xpose.msra.mxu0 0.0
    %2904 = vmatpush.xpose.msra.mxu0 0.0
    %2905 = vmatpush.xpose.msra.mxu0 0.0
    %2906 = vmatpush.xpose.msra.mxu0 0.0
    %2907 = vmatpush.xpose.msra.mxu0 0.0
    %2908 = vmatpush.xpose.msra.mxu0 0.0
    %2909 = vmatpush.xpose.msra.mxu0 0.0
    %2910 = vmatpush.xpose.msra.mxu0 0.0
    %2911 = vmatpush.xpose.msra.mxu0 0.0
    %2912 = vmatpush.xpose.msra.mxu0 0.0
    %2913 = vmatpush.xpose.msra.mxu0 0.0
    %2914 = vmatpush.xpose.msra.mxu0 0.0
    %2915 = vmatpush.xpose.msra.mxu0 0.0
    %2916 = vmatpush.xpose.msra.mxu0 %v840
    %2917 = vmatmul.f32.gmra.mxu0 %v712
    %v2918 = vpop.f32.mrf.mxu0
    %v2919 = vadd.f32 0.0, %v2918
    %2920 = vdwg.mxu0
    %2921 = vmatpush.xpose.msra.mxu0 0.0
    %2922 = vmatpush.xpose.msra.mxu0 0.0
    %2923 = vmatpush.xpose.msra.mxu0 0.0
    %2924 = vmatpush.xpose.msra.mxu0 0.0
    %2925 = vmatpush.xpose.msra.mxu0 0.0
    %2926 = vmatpush.xpose.msra.mxu0 0.0
    %2927 = vmatpush.xpose.msra.mxu0 0.0
    %2928 = vmatpush.xpose.msra.mxu0 0.0
    %2929 = vmatpush.xpose.msra.mxu0 0.0
    %2930 = vmatpush.xpose.msra.mxu0 0.0
    %2931 = vmatpush.xpose.msra.mxu0 0.0
    %2932 = vmatpush.xpose.msra.mxu0 0.0
    %2933 = vmatpush.xpose.msra.mxu0 0.0
    %2934 = vmatpush.xpose.msra.mxu0 0.0
    %2935 = vmatpush.xpose.msra.mxu0 0.0
    %2936 = vmatpush.xpose.msra.mxu0 %v841
    %2937 = vmatmul.f32.gmra.mxu0 %v713
    %v2938 = vpop.f32.mrf.mxu0
    %v2939 = vadd.f32 0.0, %v2938
    %2940 = vdwg.mxu0
    %2941 = vmatpush.xpose.msra.mxu0 0.0
    %2942 = vmatpush.xpose.msra.mxu0 0.0
    %2943 = vmatpush.xpose.msra.mxu0 0.0
    %2944 = vmatpush.xpose.msra.mxu0 0.0
    %2945 = vmatpush.xpose.msra.mxu0 0.0
    %2946 = vmatpush.xpose.msra.mxu0 0.0
    %2947 = vmatpush.xpose.msra.mxu0 0.0
    %2948 = vmatpush.xpose.msra.mxu0 0.0
    %2949 = vmatpush.xpose.msra.mxu0 0.0
    %2950 = vmatpush.xpose.msra.mxu0 0.0
    %2951 = vmatpush.xpose.msra.mxu0 0.0
    %2952 = vmatpush.xpose.msra.mxu0 0.0
    %2953 = vmatpush.xpose.msra.mxu0 0.0
    %2954 = vmatpush.xpose.msra.mxu0 0.0
    %2955 = vmatpush.xpose.msra.mxu0 0.0
    %2956 = vmatpush.xpose.msra.mxu0 %v842
    %2957 = vmatmul.f32.gmra.mxu0 %v714
    %v2958 = vpop.f32.mrf.mxu0
    %v2959 = vadd.f32 0.0, %v2958
    %2960 = vdwg.mxu0
    %2961 = vmatpush.xpose.msra.mxu0 0.0
    %2962 = vmatpush.xpose.msra.mxu0 0.0
    %2963 = vmatpush.xpose.msra.mxu0 0.0
    %2964 = vmatpush.xpose.msra.mxu0 0.0
    %2965 = vmatpush.xpose.msra.mxu0 0.0
    %2966 = vmatpush.xpose.msra.mxu0 0.0
    %2967 = vmatpush.xpose.msra.mxu0 0.0
    %2968 = vmatpush.xpose.msra.mxu0 0.0
    %2969 = vmatpush.xpose.msra.mxu0 0.0
    %2970 = vmatpush.xpose.msra.mxu0 0.0
    %2971 = vmatpush.xpose.msra.mxu0 0.0
    %2972 = vmatpush.xpose.msra.mxu0 0.0
    %2973 = vmatpush.xpose.msra.mxu0 0.0
    %2974 = vmatpush.xpose.msra.mxu0 0.0
    %2975 = vmatpush.xpose.msra.mxu0 0.0
    %2976 = vmatpush.xpose.msra.mxu0 %v843
    %2977 = vmatmul.f32.gmra.mxu0 %v715
    %v2978 = vpop.f32.mrf.mxu0
    %v2979 = vadd.f32 0.0, %v2978
    %2980 = vdwg.mxu0
    %2981 = vmatpush.xpose.msra.mxu0 0.0
    %2982 = vmatpush.xpose.msra.mxu0 0.0
    %2983 = vmatpush.xpose.msra.mxu0 0.0
    %2984 = vmatpush.xpose.msra.mxu0 0.0
    %2985 = vmatpush.xpose.msra.mxu0 0.0
    %2986 = vmatpush.xpose.msra.mxu0 0.0
    %2987 = vmatpush.xpose.msra.mxu0 0.0
    %2988 = vmatpush.xpose.msra.mxu0 0.0
    %2989 = vmatpush.xpose.msra.mxu0 0.0
    %2990 = vmatpush.xpose.msra.mxu0 0.0
    %2991 = vmatpush.xpose.msra.mxu0 0.0
    %2992 = vmatpush.xpose.msra.mxu0 0.0
    %2993 = vmatpush.xpose.msra.mxu0 0.0
    %2994 = vmatpush.xpose.msra.mxu0 0.0
    %2995 = vmatpush.xpose.msra.mxu0 0.0
    %2996 = vmatpush.xpose.msra.mxu0 %v844
    %2997 = vmatmul.f32.gmra.mxu0 %v716
    %v2998 = vpop.f32.mrf.mxu0
    %v2999 = vadd.f32 0.0, %v2998
    %3000 = vdwg.mxu0
    %3001 = vmatpush.xpose.msra.mxu0 0.0
    %3002 = vmatpush.xpose.msra.mxu0 0.0
    %3003 = vmatpush.xpose.msra.mxu0 0.0
    %3004 = vmatpush.xpose.msra.mxu0 0.0
    %3005 = vmatpush.xpose.msra.mxu0 0.0
    %3006 = vmatpush.xpose.msra.mxu0 0.0
    %3007 = vmatpush.xpose.msra.mxu0 0.0
    %3008 = vmatpush.xpose.msra.mxu0 0.0
    %3009 = vmatpush.xpose.msra.mxu0 0.0
    %3010 = vmatpush.xpose.msra.mxu0 0.0
    %3011 = vmatpush.xpose.msra.mxu0 0.0
    %3012 = vmatpush.xpose.msra.mxu0 0.0
    %3013 = vmatpush.xpose.msra.mxu0 0.0
    %3014 = vmatpush.xpose.msra.mxu0 0.0
    %3015 = vmatpush.xpose.msra.mxu0 0.0
    %3016 = vmatpush.xpose.msra.mxu0 %v845
    %3017 = vmatmul.f32.gmra.mxu0 %v717
    %v3018 = vpop.f32.mrf.mxu0
    %v3019 = vadd.f32 0.0, %v3018
    %3020 = vdwg.mxu0
    %3021 = vmatpush.xpose.msra.mxu0 0.0
    %3022 = vmatpush.xpose.msra.mxu0 0.0
    %3023 = vmatpush.xpose.msra.mxu0 0.0
    %3024 = vmatpush.xpose.msra.mxu0 0.0
    %3025 = vmatpush.xpose.msra.mxu0 0.0
    %3026 = vmatpush.xpose.msra.mxu0 0.0
    %3027 = vmatpush.xpose.msra.mxu0 0.0
    %3028 = vmatpush.xpose.msra.mxu0 0.0
    %3029 = vmatpush.xpose.msra.mxu0 0.0
    %3030 = vmatpush.xpose.msra.mxu0 0.0
    %3031 = vmatpush.xpose.msra.mxu0 0.0
    %3032 = vmatpush.xpose.msra.mxu0 0.0
    %3033 = vmatpush.xpose.msra.mxu0 0.0
    %3034 = vmatpush.xpose.msra.mxu0 0.0
    %3035 = vmatpush.xpose.msra.mxu0 0.0
    %3036 = vmatpush.xpose.msra.mxu0 %v846
    %3037 = vmatmul.f32.gmra.mxu0 %v718
    %v3038 = vpop.f32.mrf.mxu0
    %v3039 = vadd.f32 0.0, %v3038
    %3040 = vdwg.mxu0
    %3041 = vmatpush.xpose.msra.mxu0 0.0
    %3042 = vmatpush.xpose.msra.mxu0 0.0
    %3043 = vmatpush.xpose.msra.mxu0 0.0
    %3044 = vmatpush.xpose.msra.mxu0 0.0
    %3045 = vmatpush.xpose.msra.mxu0 0.0
    %3046 = vmatpush.xpose.msra.mxu0 0.0
    %3047 = vmatpush.xpose.msra.mxu0 0.0
    %3048 = vmatpush.xpose.msra.mxu0 0.0
    %3049 = vmatpush.xpose.msra.mxu0 0.0
    %3050 = vmatpush.xpose.msra.mxu0 0.0
    %3051 = vmatpush.xpose.msra.mxu0 0.0
    %3052 = vmatpush.xpose.msra.mxu0 0.0
    %3053 = vmatpush.xpose.msra.mxu0 0.0
    %3054 = vmatpush.xpose.msra.mxu0 0.0
    %3055 = vmatpush.xpose.msra.mxu0 0.0
    %3056 = vmatpush.xpose.msra.mxu0 %v847
    %3057 = vmatmul.f32.gmra.mxu0 %v719
    %v3058 = vpop.f32.mrf.mxu0
    %v3059 = vadd.f32 0.0, %v3058
    %3060 = vdwg.mxu0
    %3061 = vmatpush.xpose.msra.mxu0 0.0
    %3062 = vmatpush.xpose.msra.mxu0 0.0
    %3063 = vmatpush.xpose.msra.mxu0 0.0
    %3064 = vmatpush.xpose.msra.mxu0 0.0
    %3065 = vmatpush.xpose.msra.mxu0 0.0
    %3066 = vmatpush.xpose.msra.mxu0 0.0
    %3067 = vmatpush.xpose.msra.mxu0 0.0
    %3068 = vmatpush.xpose.msra.mxu0 0.0
    %3069 = vmatpush.xpose.msra.mxu0 0.0
    %3070 = vmatpush.xpose.msra.mxu0 0.0
    %3071 = vmatpush.xpose.msra.mxu0 0.0
    %3072 = vmatpush.xpose.msra.mxu0 0.0
    %3073 = vmatpush.xpose.msra.mxu0 0.0
    %3074 = vmatpush.xpose.msra.mxu0 0.0
    %3075 = vmatpush.xpose.msra.mxu0 0.0
    %3076 = vmatpush.xpose.msra.mxu0 %v848
    %3077 = vmatmul.f32.gmra.mxu0 %v720
    %v3078 = vpop.f32.mrf.mxu0
    %v3079 = vadd.f32 0.0, %v3078
    %3080 = vdwg.mxu0
    %3081 = vmatpush.xpose.msra.mxu0 0.0
    %3082 = vmatpush.xpose.msra.mxu0 0.0
    %3083 = vmatpush.xpose.msra.mxu0 0.0
    %3084 = vmatpush.xpose.msra.mxu0 0.0
    %3085 = vmatpush.xpose.msra.mxu0 0.0
    %3086 = vmatpush.xpose.msra.mxu0 0.0
    %3087 = vmatpush.xpose.msra.mxu0 0.0
    %3088 = vmatpush.xpose.msra.mxu0 0.0
    %3089 = vmatpush.xpose.msra.mxu0 0.0
    %3090 = vmatpush.xpose.msra.mxu0 0.0
    %3091 = vmatpush.xpose.msra.mxu0 0.0
    %3092 = vmatpush.xpose.msra.mxu0 0.0
    %3093 = vmatpush.xpose.msra.mxu0 0.0
    %3094 = vmatpush.xpose.msra.mxu0 0.0
    %3095 = vmatpush.xpose.msra.mxu0 0.0
    %3096 = vmatpush.xpose.msra.mxu0 %v849
    %3097 = vmatmul.f32.gmra.mxu0 %v721
    %v3098 = vpop.f32.mrf.mxu0
    %v3099 = vadd.f32 0.0, %v3098
    %3100 = vdwg.mxu0
    %3101 = vmatpush.xpose.msra.mxu0 0.0
    %3102 = vmatpush.xpose.msra.mxu0 0.0
    %3103 = vmatpush.xpose.msra.mxu0 0.0
    %3104 = vmatpush.xpose.msra.mxu0 0.0
    %3105 = vmatpush.xpose.msra.mxu0 0.0
    %3106 = vmatpush.xpose.msra.mxu0 0.0
    %3107 = vmatpush.xpose.msra.mxu0 0.0
    %3108 = vmatpush.xpose.msra.mxu0 0.0
    %3109 = vmatpush.xpose.msra.mxu0 0.0
    %3110 = vmatpush.xpose.msra.mxu0 0.0
    %3111 = vmatpush.xpose.msra.mxu0 0.0
    %3112 = vmatpush.xpose.msra.mxu0 0.0
    %3113 = vmatpush.xpose.msra.mxu0 0.0
    %3114 = vmatpush.xpose.msra.mxu0 0.0
    %3115 = vmatpush.xpose.msra.mxu0 0.0
    %3116 = vmatpush.xpose.msra.mxu0 %v850
    %3117 = vmatmul.f32.gmra.mxu0 %v722
    %v3118 = vpop.f32.mrf.mxu0
    %v3119 = vadd.f32 0.0, %v3118
    %3120 = vdwg.mxu0
    %3121 = vmatpush.xpose.msra.mxu0 0.0
    %3122 = vmatpush.xpose.msra.mxu0 0.0
    %3123 = vmatpush.xpose.msra.mxu0 0.0
    %3124 = vmatpush.xpose.msra.mxu0 0.0
    %3125 = vmatpush.xpose.msra.mxu0 0.0
    %3126 = vmatpush.xpose.msra.mxu0 0.0
    %3127 = vmatpush.xpose.msra.mxu0 0.0
    %3128 = vmatpush.xpose.msra.mxu0 0.0
    %3129 = vmatpush.xpose.msra.mxu0 0.0
    %3130 = vmatpush.xpose.msra.mxu0 0.0
    %3131 = vmatpush.xpose.msra.mxu0 0.0
    %3132 = vmatpush.xpose.msra.mxu0 0.0
    %3133 = vmatpush.xpose.msra.mxu0 0.0
    %3134 = vmatpush.xpose.msra.mxu0 0.0
    %3135 = vmatpush.xpose.msra.mxu0 0.0
    %3136 = vmatpush.xpose.msra.mxu0 %v851
    %3137 = vmatmul.f32.gmra.mxu0 %v723
    %v3138 = vpop.f32.mrf.mxu0
    %v3139 = vadd.f32 0.0, %v3138
    %3140 = vdwg.mxu0
    %3141 = vmatpush.xpose.msra.mxu0 0.0
    %3142 = vmatpush.xpose.msra.mxu0 0.0
    %3143 = vmatpush.xpose.msra.mxu0 0.0
    %3144 = vmatpush.xpose.msra.mxu0 0.0
    %3145 = vmatpush.xpose.msra.mxu0 0.0
    %3146 = vmatpush.xpose.msra.mxu0 0.0
    %3147 = vmatpush.xpose.msra.mxu0 0.0
    %3148 = vmatpush.xpose.msra.mxu0 0.0
    %3149 = vmatpush.xpose.msra.mxu0 0.0
    %3150 = vmatpush.xpose.msra.mxu0 0.0
    %3151 = vmatpush.xpose.msra.mxu0 0.0
    %3152 = vmatpush.xpose.msra.mxu0 0.0
    %3153 = vmatpush.xpose.msra.mxu0 0.0
    %3154 = vmatpush.xpose.msra.mxu0 0.0
    %3155 = vmatpush.xpose.msra.mxu0 0.0
    %3156 = vmatpush.xpose.msra.mxu0 %v852
    %3157 = vmatmul.f32.gmra.mxu0 %v724
    %v3158 = vpop.f32.mrf.mxu0
    %v3159 = vadd.f32 0.0, %v3158
    %3160 = vdwg.mxu0
    %3161 = vmatpush.xpose.msra.mxu0 0.0
    %3162 = vmatpush.xpose.msra.mxu0 0.0
    %3163 = vmatpush.xpose.msra.mxu0 0.0
    %3164 = vmatpush.xpose.msra.mxu0 0.0
    %3165 = vmatpush.xpose.msra.mxu0 0.0
    %3166 = vmatpush.xpose.msra.mxu0 0.0
    %3167 = vmatpush.xpose.msra.mxu0 0.0
    %3168 = vmatpush.xpose.msra.mxu0 0.0
    %3169 = vmatpush.xpose.msra.mxu0 0.0
    %3170 = vmatpush.xpose.msra.mxu0 0.0
    %3171 = vmatpush.xpose.msra.mxu0 0.0
    %3172 = vmatpush.xpose.msra.mxu0 0.0
    %3173 = vmatpush.xpose.msra.mxu0 0.0
    %3174 = vmatpush.xpose.msra.mxu0 0.0
    %3175 = vmatpush.xpose.msra.mxu0 0.0
    %3176 = vmatpush.xpose.msra.mxu0 %v853
    %3177 = vmatmul.f32.gmra.mxu0 %v725
    %v3178 = vpop.f32.mrf.mxu0
    %v3179 = vadd.f32 0.0, %v3178
    %3180 = vdwg.mxu0
    %3181 = vmatpush.xpose.msra.mxu0 0.0
    %3182 = vmatpush.xpose.msra.mxu0 0.0
    %3183 = vmatpush.xpose.msra.mxu0 0.0
    %3184 = vmatpush.xpose.msra.mxu0 0.0
    %3185 = vmatpush.xpose.msra.mxu0 0.0
    %3186 = vmatpush.xpose.msra.mxu0 0.0
    %3187 = vmatpush.xpose.msra.mxu0 0.0
    %3188 = vmatpush.xpose.msra.mxu0 0.0
    %3189 = vmatpush.xpose.msra.mxu0 0.0
    %3190 = vmatpush.xpose.msra.mxu0 0.0
    %3191 = vmatpush.xpose.msra.mxu0 0.0
    %3192 = vmatpush.xpose.msra.mxu0 0.0
    %3193 = vmatpush.xpose.msra.mxu0 0.0
    %3194 = vmatpush.xpose.msra.mxu0 0.0
    %3195 = vmatpush.xpose.msra.mxu0 0.0
    %3196 = vmatpush.xpose.msra.mxu0 %v854
    %3197 = vmatmul.f32.gmra.mxu0 %v726
    %v3198 = vpop.f32.mrf.mxu0
    %v3199 = vadd.f32 0.0, %v3198
    %3200 = vdwg.mxu0
    %3201 = vmatpush.xpose.msra.mxu0 0.0
    %3202 = vmatpush.xpose.msra.mxu0 0.0
    %3203 = vmatpush.xpose.msra.mxu0 0.0
    %3204 = vmatpush.xpose.msra.mxu0 0.0
    %3205 = vmatpush.xpose.msra.mxu0 0.0
    %3206 = vmatpush.xpose.msra.mxu0 0.0
    %3207 = vmatpush.xpose.msra.mxu0 0.0
    %3208 = vmatpush.xpose.msra.mxu0 0.0
    %3209 = vmatpush.xpose.msra.mxu0 0.0
    %3210 = vmatpush.xpose.msra.mxu0 0.0
    %3211 = vmatpush.xpose.msra.mxu0 0.0
    %3212 = vmatpush.xpose.msra.mxu0 0.0
    %3213 = vmatpush.xpose.msra.mxu0 0.0
    %3214 = vmatpush.xpose.msra.mxu0 0.0
    %3215 = vmatpush.xpose.msra.mxu0 0.0
    %3216 = vmatpush.xpose.msra.mxu0 %v855
    %3217 = vmatmul.f32.gmra.mxu0 %v727
    %v3218 = vpop.f32.mrf.mxu0
    %v3219 = vadd.f32 0.0, %v3218
    %3220 = vdwg.mxu0
    %3221 = vmatpush.xpose.msra.mxu0 0.0
    %3222 = vmatpush.xpose.msra.mxu0 0.0
    %3223 = vmatpush.xpose.msra.mxu0 0.0
    %3224 = vmatpush.xpose.msra.mxu0 0.0
    %3225 = vmatpush.xpose.msra.mxu0 0.0
    %3226 = vmatpush.xpose.msra.mxu0 0.0
    %3227 = vmatpush.xpose.msra.mxu0 0.0
    %3228 = vmatpush.xpose.msra.mxu0 0.0
    %3229 = vmatpush.xpose.msra.mxu0 0.0
    %3230 = vmatpush.xpose.msra.mxu0 0.0
    %3231 = vmatpush.xpose.msra.mxu0 0.0
    %3232 = vmatpush.xpose.msra.mxu0 0.0
    %3233 = vmatpush.xpose.msra.mxu0 0.0
    %3234 = vmatpush.xpose.msra.mxu0 0.0
    %3235 = vmatpush.xpose.msra.mxu0 0.0
    %3236 = vmatpush.xpose.msra.mxu0 %v856
    %3237 = vmatmul.f32.gmra.mxu0 %v728
    %v3238 = vpop.f32.mrf.mxu0
    %v3239 = vadd.f32 0.0, %v3238
    %3240 = vdwg.mxu0
    %3241 = vmatpush.xpose.msra.mxu0 0.0
    %3242 = vmatpush.xpose.msra.mxu0 0.0
    %3243 = vmatpush.xpose.msra.mxu0 0.0
    %3244 = vmatpush.xpose.msra.mxu0 0.0
    %3245 = vmatpush.xpose.msra.mxu0 0.0
    %3246 = vmatpush.xpose.msra.mxu0 0.0
    %3247 = vmatpush.xpose.msra.mxu0 0.0
    %3248 = vmatpush.xpose.msra.mxu0 0.0
    %3249 = vmatpush.xpose.msra.mxu0 0.0
    %3250 = vmatpush.xpose.msra.mxu0 0.0
    %3251 = vmatpush.xpose.msra.mxu0 0.0
    %3252 = vmatpush.xpose.msra.mxu0 0.0
    %3253 = vmatpush.xpose.msra.mxu0 0.0
    %3254 = vmatpush.xpose.msra.mxu0 0.0
    %3255 = vmatpush.xpose.msra.mxu0 0.0
    %3256 = vmatpush.xpose.msra.mxu0 %v857
    %3257 = vmatmul.f32.gmra.mxu0 %v729
    %v3258 = vpop.f32.mrf.mxu0
    %v3259 = vadd.f32 0.0, %v3258
    %3260 = vdwg.mxu0
    %3261 = vmatpush.xpose.msra.mxu0 0.0
    %3262 = vmatpush.xpose.msra.mxu0 0.0
    %3263 = vmatpush.xpose.msra.mxu0 0.0
    %3264 = vmatpush.xpose.msra.mxu0 0.0
    %3265 = vmatpush.xpose.msra.mxu0 0.0
    %3266 = vmatpush.xpose.msra.mxu0 0.0
    %3267 = vmatpush.xpose.msra.mxu0 0.0
    %3268 = vmatpush.xpose.msra.mxu0 0.0
    %3269 = vmatpush.xpose.msra.mxu0 0.0
    %3270 = vmatpush.xpose.msra.mxu0 0.0
    %3271 = vmatpush.xpose.msra.mxu0 0.0
    %3272 = vmatpush.xpose.msra.mxu0 0.0
    %3273 = vmatpush.xpose.msra.mxu0 0.0
    %3274 = vmatpush.xpose.msra.mxu0 0.0
    %3275 = vmatpush.xpose.msra.mxu0 0.0
    %3276 = vmatpush.xpose.msra.mxu0 %v858
    %3277 = vmatmul.f32.gmra.mxu0 %v730
    %v3278 = vpop.f32.mrf.mxu0
    %v3279 = vadd.f32 0.0, %v3278
    %3280 = vdwg.mxu0
    %3281 = vmatpush.xpose.msra.mxu0 0.0
    %3282 = vmatpush.xpose.msra.mxu0 0.0
    %3283 = vmatpush.xpose.msra.mxu0 0.0
    %3284 = vmatpush.xpose.msra.mxu0 0.0
    %3285 = vmatpush.xpose.msra.mxu0 0.0
    %3286 = vmatpush.xpose.msra.mxu0 0.0
    %3287 = vmatpush.xpose.msra.mxu0 0.0
    %3288 = vmatpush.xpose.msra.mxu0 0.0
    %3289 = vmatpush.xpose.msra.mxu0 0.0
    %3290 = vmatpush.xpose.msra.mxu0 0.0
    %3291 = vmatpush.xpose.msra.mxu0 0.0
    %3292 = vmatpush.xpose.msra.mxu0 0.0
    %3293 = vmatpush.xpose.msra.mxu0 0.0
    %3294 = vmatpush.xpose.msra.mxu0 0.0
    %3295 = vmatpush.xpose.msra.mxu0 0.0
    %3296 = vmatpush.xpose.msra.mxu0 %v859
    %3297 = vmatmul.f32.gmra.mxu0 %v731
    %v3298 = vpop.f32.mrf.mxu0
    %v3299 = vadd.f32 0.0, %v3298
    %3300 = vdwg.mxu0
    %3301 = vmatpush.xpose.msra.mxu0 0.0
    %3302 = vmatpush.xpose.msra.mxu0 0.0
    %3303 = vmatpush.xpose.msra.mxu0 0.0
    %3304 = vmatpush.xpose.msra.mxu0 0.0
    %3305 = vmatpush.xpose.msra.mxu0 0.0
    %3306 = vmatpush.xpose.msra.mxu0 0.0
    %3307 = vmatpush.xpose.msra.mxu0 0.0
    %3308 = vmatpush.xpose.msra.mxu0 0.0
    %3309 = vmatpush.xpose.msra.mxu0 0.0
    %3310 = vmatpush.xpose.msra.mxu0 0.0
    %3311 = vmatpush.xpose.msra.mxu0 0.0
    %3312 = vmatpush.xpose.msra.mxu0 0.0
    %3313 = vmatpush.xpose.msra.mxu0 0.0
    %3314 = vmatpush.xpose.msra.mxu0 0.0
    %3315 = vmatpush.xpose.msra.mxu0 0.0
    %3316 = vmatpush.xpose.msra.mxu0 %v860
    %3317 = vmatmul.f32.gmra.mxu0 %v732
    %v3318 = vpop.f32.mrf.mxu0
    %v3319 = vadd.f32 0.0, %v3318
    %3320 = vdwg.mxu0
    %3321 = vmatpush.xpose.msra.mxu0 0.0
    %3322 = vmatpush.xpose.msra.mxu0 0.0
    %3323 = vmatpush.xpose.msra.mxu0 0.0
    %3324 = vmatpush.xpose.msra.mxu0 0.0
    %3325 = vmatpush.xpose.msra.mxu0 0.0
    %3326 = vmatpush.xpose.msra.mxu0 0.0
    %3327 = vmatpush.xpose.msra.mxu0 0.0
    %3328 = vmatpush.xpose.msra.mxu0 0.0
    %3329 = vmatpush.xpose.msra.mxu0 0.0
    %3330 = vmatpush.xpose.msra.mxu0 0.0
    %3331 = vmatpush.xpose.msra.mxu0 0.0
    %3332 = vmatpush.xpose.msra.mxu0 0.0
    %3333 = vmatpush.xpose.msra.mxu0 0.0
    %3334 = vmatpush.xpose.msra.mxu0 0.0
    %3335 = vmatpush.xpose.msra.mxu0 0.0
    %3336 = vmatpush.xpose.msra.mxu0 %v861
    %3337 = vmatmul.f32.gmra.mxu0 %v733
    %v3338 = vpop.f32.mrf.mxu0
    %v3339 = vadd.f32 0.0, %v3338
    %3340 = vdwg.mxu0
    %3341 = vmatpush.xpose.msra.mxu0 0.0
    %3342 = vmatpush.xpose.msra.mxu0 0.0
    %3343 = vmatpush.xpose.msra.mxu0 0.0
    %3344 = vmatpush.xpose.msra.mxu0 0.0
    %3345 = vmatpush.xpose.msra.mxu0 0.0
    %3346 = vmatpush.xpose.msra.mxu0 0.0
    %3347 = vmatpush.xpose.msra.mxu0 0.0
    %3348 = vmatpush.xpose.msra.mxu0 0.0
    %3349 = vmatpush.xpose.msra.mxu0 0.0
    %3350 = vmatpush.xpose.msra.mxu0 0.0
    %3351 = vmatpush.xpose.msra.mxu0 0.0
    %3352 = vmatpush.xpose.msra.mxu0 0.0
    %3353 = vmatpush.xpose.msra.mxu0 0.0
    %3354 = vmatpush.xpose.msra.mxu0 0.0
    %3355 = vmatpush.xpose.msra.mxu0 0.0
    %3356 = vmatpush.xpose.msra.mxu0 %v862
    %3357 = vmatmul.f32.gmra.mxu0 %v734
    %v3358 = vpop.f32.mrf.mxu0
    %v3359 = vadd.f32 0.0, %v3358
    %3360 = vdwg.mxu0
    %3361 = vmatpush.xpose.msra.mxu0 0.0
    %3362 = vmatpush.xpose.msra.mxu0 0.0
    %3363 = vmatpush.xpose.msra.mxu0 0.0
    %3364 = vmatpush.xpose.msra.mxu0 0.0
    %3365 = vmatpush.xpose.msra.mxu0 0.0
    %3366 = vmatpush.xpose.msra.mxu0 0.0
    %3367 = vmatpush.xpose.msra.mxu0 0.0
    %3368 = vmatpush.xpose.msra.mxu0 0.0
    %3369 = vmatpush.xpose.msra.mxu0 0.0
    %3370 = vmatpush.xpose.msra.mxu0 0.0
    %3371 = vmatpush.xpose.msra.mxu0 0.0
    %3372 = vmatpush.xpose.msra.mxu0 0.0
    %3373 = vmatpush.xpose.msra.mxu0 0.0
    %3374 = vmatpush.xpose.msra.mxu0 0.0
    %3375 = vmatpush.xpose.msra.mxu0 0.0
    %3376 = vmatpush.xpose.msra.mxu0 %v863
    %3377 = vmatmul.f32.gmra.mxu0 %v735
    %v3378 = vpop.f32.mrf.mxu0
    %v3379 = vadd.f32 0.0, %v3378
    %3380 = vdwg.mxu0
    %3381 = vmatpush.xpose.msra.mxu0 0.0
    %3382 = vmatpush.xpose.msra.mxu0 0.0
    %3383 = vmatpush.xpose.msra.mxu0 0.0
    %3384 = vmatpush.xpose.msra.mxu0 0.0
    %3385 = vmatpush.xpose.msra.mxu0 0.0
    %3386 = vmatpush.xpose.msra.mxu0 0.0
    %3387 = vmatpush.xpose.msra.mxu0 0.0
    %3388 = vmatpush.xpose.msra.mxu0 0.0
    %3389 = vmatpush.xpose.msra.mxu0 0.0
    %3390 = vmatpush.xpose.msra.mxu0 0.0
    %3391 = vmatpush.xpose.msra.mxu0 0.0
    %3392 = vmatpush.xpose.msra.mxu0 0.0
    %3393 = vmatpush.xpose.msra.mxu0 0.0
    %3394 = vmatpush.xpose.msra.mxu0 0.0
    %3395 = vmatpush.xpose.msra.mxu0 0.0
    %3396 = vmatpush.xpose.msra.mxu0 %v864
    %3397 = vmatmul.f32.gmra.mxu0 %v736
    %v3398 = vpop.f32.mrf.mxu0
    %v3399 = vadd.f32 0.0, %v3398
    %3400 = vdwg.mxu0
    %3401 = vmatpush.xpose.msra.mxu0 0.0
    %3402 = vmatpush.xpose.msra.mxu0 0.0
    %3403 = vmatpush.xpose.msra.mxu0 0.0
    %3404 = vmatpush.xpose.msra.mxu0 0.0
    %3405 = vmatpush.xpose.msra.mxu0 0.0
    %3406 = vmatpush.xpose.msra.mxu0 0.0
    %3407 = vmatpush.xpose.msra.mxu0 0.0
    %3408 = vmatpush.xpose.msra.mxu0 0.0
    %3409 = vmatpush.xpose.msra.mxu0 0.0
    %3410 = vmatpush.xpose.msra.mxu0 0.0
    %3411 = vmatpush.xpose.msra.mxu0 0.0
    %3412 = vmatpush.xpose.msra.mxu0 0.0
    %3413 = vmatpush.xpose.msra.mxu0 0.0
    %3414 = vmatpush.xpose.msra.mxu0 0.0
    %3415 = vmatpush.xpose.msra.mxu0 0.0
    %3416 = vmatpush.xpose.msra.mxu0 %v865
    %3417 = vmatmul.f32.gmra.mxu0 %v737
    %v3418 = vpop.f32.mrf.mxu0
    %v3419 = vadd.f32 0.0, %v3418
    %3420 = vdwg.mxu0
    %3421 = vmatpush.xpose.msra.mxu0 0.0
    %3422 = vmatpush.xpose.msra.mxu0 0.0
    %3423 = vmatpush.xpose.msra.mxu0 0.0
    %3424 = vmatpush.xpose.msra.mxu0 0.0
    %3425 = vmatpush.xpose.msra.mxu0 0.0
    %3426 = vmatpush.xpose.msra.mxu0 0.0
    %3427 = vmatpush.xpose.msra.mxu0 0.0
    %3428 = vmatpush.xpose.msra.mxu0 0.0
    %3429 = vmatpush.xpose.msra.mxu0 0.0
    %3430 = vmatpush.xpose.msra.mxu0 0.0
    %3431 = vmatpush.xpose.msra.mxu0 0.0
    %3432 = vmatpush.xpose.msra.mxu0 0.0
    %3433 = vmatpush.xpose.msra.mxu0 0.0
    %3434 = vmatpush.xpose.msra.mxu0 0.0
    %3435 = vmatpush.xpose.msra.mxu0 0.0
    %3436 = vmatpush.xpose.msra.mxu0 %v866
    %3437 = vmatmul.f32.gmra.mxu0 %v738
    %v3438 = vpop.f32.mrf.mxu0
    %v3439 = vadd.f32 0.0, %v3438
    %3440 = vdwg.mxu0
    %3441 = vmatpush.xpose.msra.mxu0 0.0
    %3442 = vmatpush.xpose.msra.mxu0 0.0
    %3443 = vmatpush.xpose.msra.mxu0 0.0
    %3444 = vmatpush.xpose.msra.mxu0 0.0
    %3445 = vmatpush.xpose.msra.mxu0 0.0
    %3446 = vmatpush.xpose.msra.mxu0 0.0
    %3447 = vmatpush.xpose.msra.mxu0 0.0
    %3448 = vmatpush.xpose.msra.mxu0 0.0
    %3449 = vmatpush.xpose.msra.mxu0 0.0
    %3450 = vmatpush.xpose.msra.mxu0 0.0
    %3451 = vmatpush.xpose.msra.mxu0 0.0
    %3452 = vmatpush.xpose.msra.mxu0 0.0
    %3453 = vmatpush.xpose.msra.mxu0 0.0
    %3454 = vmatpush.xpose.msra.mxu0 0.0
    %3455 = vmatpush.xpose.msra.mxu0 0.0
    %3456 = vmatpush.xpose.msra.mxu0 %v867
    %3457 = vmatmul.f32.gmra.mxu0 %v739
    %v3458 = vpop.f32.mrf.mxu0
    %v3459 = vadd.f32 0.0, %v3458
    %3460 = vdwg.mxu0
    %3461 = vmatpush.xpose.msra.mxu0 0.0
    %3462 = vmatpush.xpose.msra.mxu0 0.0
    %3463 = vmatpush.xpose.msra.mxu0 0.0
    %3464 = vmatpush.xpose.msra.mxu0 0.0
    %3465 = vmatpush.xpose.msra.mxu0 0.0
    %3466 = vmatpush.xpose.msra.mxu0 0.0
    %3467 = vmatpush.xpose.msra.mxu0 0.0
    %3468 = vmatpush.xpose.msra.mxu0 0.0
    %3469 = vmatpush.xpose.msra.mxu0 0.0
    %3470 = vmatpush.xpose.msra.mxu0 0.0
    %3471 = vmatpush.xpose.msra.mxu0 0.0
    %3472 = vmatpush.xpose.msra.mxu0 0.0
    %3473 = vmatpush.xpose.msra.mxu0 0.0
    %3474 = vmatpush.xpose.msra.mxu0 0.0
    %3475 = vmatpush.xpose.msra.mxu0 0.0
    %3476 = vmatpush.xpose.msra.mxu0 %v868
    %3477 = vmatmul.f32.gmra.mxu0 %v740
    %v3478 = vpop.f32.mrf.mxu0
    %v3479 = vadd.f32 0.0, %v3478
    %3480 = vdwg.mxu0
    %3481 = vmatpush.xpose.msra.mxu0 0.0
    %3482 = vmatpush.xpose.msra.mxu0 0.0
    %3483 = vmatpush.xpose.msra.mxu0 0.0
    %3484 = vmatpush.xpose.msra.mxu0 0.0
    %3485 = vmatpush.xpose.msra.mxu0 0.0
    %3486 = vmatpush.xpose.msra.mxu0 0.0
    %3487 = vmatpush.xpose.msra.mxu0 0.0
    %3488 = vmatpush.xpose.msra.mxu0 0.0
    %3489 = vmatpush.xpose.msra.mxu0 0.0
    %3490 = vmatpush.xpose.msra.mxu0 0.0
    %3491 = vmatpush.xpose.msra.mxu0 0.0
    %3492 = vmatpush.xpose.msra.mxu0 0.0
    %3493 = vmatpush.xpose.msra.mxu0 0.0
    %3494 = vmatpush.xpose.msra.mxu0 0.0
    %3495 = vmatpush.xpose.msra.mxu0 0.0
    %3496 = vmatpush.xpose.msra.mxu0 %v869
    %3497 = vmatmul.f32.gmra.mxu0 %v741
    %v3498 = vpop.f32.mrf.mxu0
    %v3499 = vadd.f32 0.0, %v3498
    %3500 = vdwg.mxu0
    %3501 = vmatpush.xpose.msra.mxu0 0.0
    %3502 = vmatpush.xpose.msra.mxu0 0.0
    %3503 = vmatpush.xpose.msra.mxu0 0.0
    %3504 = vmatpush.xpose.msra.mxu0 0.0
    %3505 = vmatpush.xpose.msra.mxu0 0.0
    %3506 = vmatpush.xpose.msra.mxu0 0.0
    %3507 = vmatpush.xpose.msra.mxu0 0.0
    %3508 = vmatpush.xpose.msra.mxu0 0.0
    %3509 = vmatpush.xpose.msra.mxu0 0.0
    %3510 = vmatpush.xpose.msra.mxu0 0.0
    %3511 = vmatpush.xpose.msra.mxu0 0.0
    %3512 = vmatpush.xpose.msra.mxu0 0.0
    %3513 = vmatpush.xpose.msra.mxu0 0.0
    %3514 = vmatpush.xpose.msra.mxu0 0.0
    %3515 = vmatpush.xpose.msra.mxu0 0.0
    %3516 = vmatpush.xpose.msra.mxu0 %v870
    %3517 = vmatmul.f32.gmra.mxu0 %v742
    %v3518 = vpop.f32.mrf.mxu0
    %v3519 = vadd.f32 0.0, %v3518
    %3520 = vdwg.mxu0
    %3521 = vmatpush.xpose.msra.mxu0 0.0
    %3522 = vmatpush.xpose.msra.mxu0 0.0
    %3523 = vmatpush.xpose.msra.mxu0 0.0
    %3524 = vmatpush.xpose.msra.mxu0 0.0
    %3525 = vmatpush.xpose.msra.mxu0 0.0
    %3526 = vmatpush.xpose.msra.mxu0 0.0
    %3527 = vmatpush.xpose.msra.mxu0 0.0
    %3528 = vmatpush.xpose.msra.mxu0 0.0
    %3529 = vmatpush.xpose.msra.mxu0 0.0
    %3530 = vmatpush.xpose.msra.mxu0 0.0
    %3531 = vmatpush.xpose.msra.mxu0 0.0
    %3532 = vmatpush.xpose.msra.mxu0 0.0
    %3533 = vmatpush.xpose.msra.mxu0 0.0
    %3534 = vmatpush.xpose.msra.mxu0 0.0
    %3535 = vmatpush.xpose.msra.mxu0 0.0
    %3536 = vmatpush.xpose.msra.mxu0 %v871
    %3537 = vmatmul.f32.gmra.mxu0 %v743
    %v3538 = vpop.f32.mrf.mxu0
    %v3539 = vadd.f32 0.0, %v3538
    %3540 = vdwg.mxu0
    %3541 = vmatpush.xpose.msra.mxu0 0.0
    %3542 = vmatpush.xpose.msra.mxu0 0.0
    %3543 = vmatpush.xpose.msra.mxu0 0.0
    %3544 = vmatpush.xpose.msra.mxu0 0.0
    %3545 = vmatpush.xpose.msra.mxu0 0.0
    %3546 = vmatpush.xpose.msra.mxu0 0.0
    %3547 = vmatpush.xpose.msra.mxu0 0.0
    %3548 = vmatpush.xpose.msra.mxu0 0.0
    %3549 = vmatpush.xpose.msra.mxu0 0.0
    %3550 = vmatpush.xpose.msra.mxu0 0.0
    %3551 = vmatpush.xpose.msra.mxu0 0.0
    %3552 = vmatpush.xpose.msra.mxu0 0.0
    %3553 = vmatpush.xpose.msra.mxu0 0.0
    %3554 = vmatpush.xpose.msra.mxu0 0.0
    %3555 = vmatpush.xpose.msra.mxu0 0.0
    %3556 = vmatpush.xpose.msra.mxu0 %v872
    %3557 = vmatmul.f32.gmra.mxu0 %v744
    %v3558 = vpop.f32.mrf.mxu0
    %v3559 = vadd.f32 0.0, %v3558
    %3560 = vdwg.mxu0
    %v3561 = vmul.f32 %v1019, 0.2236068
    %v3562 = vmul.f32 %v1039, 0.2236068
    %v3563 = vmul.f32 %v1059, 0.2236068
    %v3564 = vmul.f32 %v1079, 0.2236068
    %v3565 = vmul.f32 %v1099, 0.2236068
    %v3566 = vmul.f32 %v1119, 0.2236068
    %v3567 = vmul.f32 %v1139, 0.2236068
    %v3568 = vmul.f32 %v1159, 0.2236068
    %v3569 = vmul.f32 %v1179, 0.2236068
    %v3570 = vmul.f32 %v1199, 0.2236068
    %v3571 = vmul.f32 %v1219, 0.2236068
    %v3572 = vmul.f32 %v1239, 0.2236068
    %v3573 = vmul.f32 %v1259, 0.2236068
    %v3574 = vmul.f32 %v1279, 0.2236068
    %v3575 = vmul.f32 %v1299, 0.2236068
    %v3576 = vmul.f32 %v1319, 0.2236068
    %v3577 = vmul.f32 %v1339, 0.2236068
    %v3578 = vmul.f32 %v1359, 0.2236068
    %v3579 = vmul.f32 %v1379, 0.2236068
    %v3580 = vmul.f32 %v1399, 0.2236068
    %v3581 = vmul.f32 %v1419, 0.2236068
    %v3582 = vmul.f32 %v1439, 0.2236068
    %v3583 = vmul.f32 %v1459, 0.2236068
    %v3584 = vmul.f32 %v1479, 0.2236068
    %v3585 = vmul.f32 %v1499, 0.2236068
    %v3586 = vmul.f32 %v1519, 0.2236068
    %v3587 = vmul.f32 %v1539, 0.2236068
    %v3588 = vmul.f32 %v1559, 0.2236068
    %v3589 = vmul.f32 %v1579, 0.2236068
    %v3590 = vmul.f32 %v1599, 0.2236068
    %v3591 = vmul.f32 %v1619, 0.2236068
    %v3592 = vmul.f32 %v1639, 0.2236068
    %v3593 = vmul.f32 %v1659, 0.2236068
    %v3594 = vmul.f32 %v1679, 0.2236068
    %v3595 = vmul.f32 %v1699, 0.2236068
    %v3596 = vmul.f32 %v1719, 0.2236068
    %v3597 = vmul.f32 %v1739, 0.2236068
    %v3598 = vmul.f32 %v1759, 0.2236068
    %v3599 = vmul.f32 %v1779, 0.2236068
    %v3600 = vmul.f32 %v1799, 0.2236068
    %v3601 = vmul.f32 %v1819, 0.2236068
    %v3602 = vmul.f32 %v1839, 0.2236068
    %v3603 = vmul.f32 %v1859, 0.2236068
    %v3604 = vmul.f32 %v1879, 0.2236068
    %v3605 = vmul.f32 %v1899, 0.2236068
    %v3606 = vmul.f32 %v1919, 0.2236068
    %v3607 = vmul.f32 %v1939, 0.2236068
    %v3608 = vmul.f32 %v1959, 0.2236068
    %v3609 = vmul.f32 %v1979, 0.2236068
    %v3610 = vmul.f32 %v1999, 0.2236068
    %v3611 = vmul.f32 %v2019, 0.2236068
    %v3612 = vmul.f32 %v2039, 0.2236068
    %v3613 = vmul.f32 %v2059, 0.2236068
    %v3614 = vmul.f32 %v2079, 0.2236068
    %v3615 = vmul.f32 %v2099, 0.2236068
    %v3616 = vmul.f32 %v2119, 0.2236068
    %v3617 = vmul.f32 %v2139, 0.2236068
    %v3618 = vmul.f32 %v2159, 0.2236068
    %v3619 = vmul.f32 %v2179, 0.2236068
    %v3620 = vmul.f32 %v2199, 0.2236068
    %v3621 = vmul.f32 %v2219, 0.2236068
    %v3622 = vmul.f32 %v2239, 0.2236068
    %v3623 = vmul.f32 %v2259, 0.2236068
    %v3624 = vmul.f32 %v2279, 0.2236068
    %v3625 = vmul.f32 %v2299, 0.2236068
    %v3626 = vmul.f32 %v2319, 0.2236068
    %v3627 = vmul.f32 %v2339, 0.2236068
    %v3628 = vmul.f32 %v2359, 0.2236068
    %v3629 = vmul.f32 %v2379, 0.2236068
    %v3630 = vmul.f32 %v2399, 0.2236068
    %v3631 = vmul.f32 %v2419, 0.2236068
    %v3632 = vmul.f32 %v2439, 0.2236068
    %v3633 = vmul.f32 %v2459, 0.2236068
    %v3634 = vmul.f32 %v2479, 0.2236068
    %v3635 = vmul.f32 %v2499, 0.2236068
    %v3636 = vmul.f32 %v2519, 0.2236068
    %v3637 = vmul.f32 %v2539, 0.2236068
    %v3638 = vmul.f32 %v2559, 0.2236068
    %v3639 = vmul.f32 %v2579, 0.2236068
    %v3640 = vmul.f32 %v2599, 0.2236068
    %v3641 = vmul.f32 %v2619, 0.2236068
    %v3642 = vmul.f32 %v2639, 0.2236068
    %v3643 = vmul.f32 %v2659, 0.2236068
    %v3644 = vmul.f32 %v2679, 0.2236068
    %v3645 = vmul.f32 %v2699, 0.2236068
    %v3646 = vmul.f32 %v2719, 0.2236068
    %v3647 = vmul.f32 %v2739, 0.2236068
    %v3648 = vmul.f32 %v2759, 0.2236068
    %v3649 = vmul.f32 %v2779, 0.2236068
    %v3650 = vmul.f32 %v2799, 0.2236068
    %v3651 = vmul.f32 %v2819, 0.2236068
    %v3652 = vmul.f32 %v2839, 0.2236068
    %v3653 = vmul.f32 %v2859, 0.2236068
    %v3654 = vmul.f32 %v2879, 0.2236068
    %v3655 = vmul.f32 %v2899, 0.2236068
    %v3656 = vmul.f32 %v2919, 0.2236068
    %v3657 = vmul.f32 %v2939, 0.2236068
    %v3658 = vmul.f32 %v2959, 0.2236068
    %v3659 = vmul.f32 %v2979, 0.2236068
    %v3660 = vmul.f32 %v2999, 0.2236068
    %v3661 = vmul.f32 %v3019, 0.2236068
    %v3662 = vmul.f32 %v3039, 0.2236068
    %v3663 = vmul.f32 %v3059, 0.2236068
    %v3664 = vmul.f32 %v3079, 0.2236068
    %v3665 = vmul.f32 %v3099, 0.2236068
    %v3666 = vmul.f32 %v3119, 0.2236068
    %v3667 = vmul.f32 %v3139, 0.2236068
    %v3668 = vmul.f32 %v3159, 0.2236068
    %v3669 = vmul.f32 %v3179, 0.2236068
    %v3670 = vmul.f32 %v3199, 0.2236068
    %v3671 = vmul.f32 %v3219, 0.2236068
    %v3672 = vmul.f32 %v3239, 0.2236068
    %v3673 = vmul.f32 %v3259, 0.2236068
    %v3674 = vmul.f32 %v3279, 0.2236068
    %v3675 = vmul.f32 %v3299, 0.2236068
    %v3676 = vmul.f32 %v3319, 0.2236068
    %v3677 = vmul.f32 %v3339, 0.2236068
    %v3678 = vmul.f32 %v3359, 0.2236068
    %v3679 = vmul.f32 %v3379, 0.2236068
    %v3680 = vmul.f32 %v3399, 0.2236068
    %v3681 = vmul.f32 %v3419, 0.2236068
    %v3682 = vmul.f32 %v3439, 0.2236068
    %v3683 = vmul.f32 %v3459, 0.2236068
    %v3684 = vmul.f32 %v3479, 0.2236068
    %v3685 = vmul.f32 %v3499, 0.2236068
    %v3686 = vmul.f32 %v3519, 0.2236068
    %v3687 = vmul.f32 %v3539, 0.2236068
    %v3688 = vmul.f32 %v3559, 0.2236068
    %v3689 = vmul.f32 %v3561, 1.442695
    %v3690 = vpow.pop %v3689
    %v3691 = vmul.f32 %v3562, 1.442695
    %v3692 = vpow.pop %v3691
    %v3693 = vmul.f32 %v3563, 1.442695
    %v3694 = vpow.pop %v3693
    %v3695 = vmul.f32 %v3564, 1.442695
    %v3696 = vpow.pop %v3695
    %v3697 = vmul.f32 %v3565, 1.442695
    %v3698 = vpow.pop %v3697
    %v3699 = vmul.f32 %v3566, 1.442695
    %v3700 = vpow.pop %v3699
    %v3701 = vmul.f32 %v3567, 1.442695
    %v3702 = vpow.pop %v3701
    %v3703 = vmul.f32 %v3568, 1.442695
    %v3704 = vpow.pop %v3703
    %v3705 = vmul.f32 %v3569, 1.442695
    %v3706 = vpow.pop %v3705
    %v3707 = vmul.f32 %v3570, 1.442695
    %v3708 = vpow.pop %v3707
    %v3709 = vmul.f32 %v3571, 1.442695
    %v3710 = vpow.pop %v3709
    %v3711 = vmul.f32 %v3572, 1.442695
    %v3712 = vpow.pop %v3711
    %v3713 = vmul.f32 %v3573, 1.442695
    %v3714 = vpow.pop %v3713
    %v3715 = vmul.f32 %v3574, 1.442695
    %v3716 = vpow.pop %v3715
    %v3717 = vmul.f32 %v3575, 1.442695
    %v3718 = vpow.pop %v3717
    %v3719 = vmul.f32 %v3576, 1.442695
    %v3720 = vpow.pop %v3719
    %v3721 = vmul.f32 %v3577, 1.442695
    %v3722 = vpow.pop %v3721
    %v3723 = vmul.f32 %v3578, 1.442695
    %v3724 = vpow.pop %v3723
    %v3725 = vmul.f32 %v3579, 1.442695
    %v3726 = vpow.pop %v3725
    %v3727 = vmul.f32 %v3580, 1.442695
    %v3728 = vpow.pop %v3727
    %v3729 = vmul.f32 %v3581, 1.442695
    %v3730 = vpow.pop %v3729
    %v3731 = vmul.f32 %v3582, 1.442695
    %v3732 = vpow.pop %v3731
    %v3733 = vmul.f32 %v3583, 1.442695
    %v3734 = vpow.pop %v3733
    %v3735 = vmul.f32 %v3584, 1.442695
    %v3736 = vpow.pop %v3735
    %v3737 = vmul.f32 %v3585, 1.442695
    %v3738 = vpow.pop %v3737
    %v3739 = vmul.f32 %v3586, 1.442695
    %v3740 = vpow.pop %v3739
    %v3741 = vmul.f32 %v3587, 1.442695
    %v3742 = vpow.pop %v3741
    %v3743 = vmul.f32 %v3588, 1.442695
    %v3744 = vpow.pop %v3743
    %v3745 = vmul.f32 %v3589, 1.442695
    %v3746 = vpow.pop %v3745
    %v3747 = vmul.f32 %v3590, 1.442695
    %v3748 = vpow.pop %v3747
    %v3749 = vmul.f32 %v3591, 1.442695
    %v3750 = vpow.pop %v3749
    %v3751 = vmul.f32 %v3592, 1.442695
    %v3752 = vpow.pop %v3751
    %v3753 = vmul.f32 %v3593, 1.442695
    %v3754 = vpow.pop %v3753
    %v3755 = vmul.f32 %v3594, 1.442695
    %v3756 = vpow.pop %v3755
    %v3757 = vmul.f32 %v3595, 1.442695
    %v3758 = vpow.pop %v3757
    %v3759 = vmul.f32 %v3596, 1.442695
    %v3760 = vpow.pop %v3759
    %v3761 = vmul.f32 %v3597, 1.442695
    %v3762 = vpow.pop %v3761
    %v3763 = vmul.f32 %v3598, 1.442695
    %v3764 = vpow.pop %v3763
    %v3765 = vmul.f32 %v3599, 1.442695
    %v3766 = vpow.pop %v3765
    %v3767 = vmul.f32 %v3600, 1.442695
    %v3768 = vpow.pop %v3767
    %v3769 = vmul.f32 %v3601, 1.442695
    %v3770 = vpow.pop %v3769
    %v3771 = vmul.f32 %v3602, 1.442695
    %v3772 = vpow.pop %v3771
    %v3773 = vmul.f32 %v3603, 1.442695
    %v3774 = vpow.pop %v3773
    %v3775 = vmul.f32 %v3604, 1.442695
    %v3776 = vpow.pop %v3775
    %v3777 = vmul.f32 %v3605, 1.442695
    %v3778 = vpow.pop %v3777
    %v3779 = vmul.f32 %v3606, 1.442695
    %v3780 = vpow.pop %v3779
    %v3781 = vmul.f32 %v3607, 1.442695
    %v3782 = vpow.pop %v3781
    %v3783 = vmul.f32 %v3608, 1.442695
    %v3784 = vpow.pop %v3783
    %v3785 = vmul.f32 %v3609, 1.442695
    %v3786 = vpow.pop %v3785
    %v3787 = vmul.f32 %v3610, 1.442695
    %v3788 = vpow.pop %v3787
    %v3789 = vmul.f32 %v3611, 1.442695
    %v3790 = vpow.pop %v3789
    %v3791 = vmul.f32 %v3612, 1.442695
    %v3792 = vpow.pop %v3791
    %v3793 = vmul.f32 %v3613, 1.442695
    %v3794 = vpow.pop %v3793
    %v3795 = vmul.f32 %v3614, 1.442695
    %v3796 = vpow.pop %v3795
    %v3797 = vmul.f32 %v3615, 1.442695
    %v3798 = vpow.pop %v3797
    %v3799 = vmul.f32 %v3616, 1.442695
    %v3800 = vpow.pop %v3799
    %v3801 = vmul.f32 %v3617, 1.442695
    %v3802 = vpow.pop %v3801
    %v3803 = vmul.f32 %v3618, 1.442695
    %v3804 = vpow.pop %v3803
    %v3805 = vmul.f32 %v3619, 1.442695
    %v3806 = vpow.pop %v3805
    %v3807 = vmul.f32 %v3620, 1.442695
    %v3808 = vpow.pop %v3807
    %v3809 = vmul.f32 %v3621, 1.442695
    %v3810 = vpow.pop %v3809
    %v3811 = vmul.f32 %v3622, 1.442695
    %v3812 = vpow.pop %v3811
    %v3813 = vmul.f32 %v3623, 1.442695
    %v3814 = vpow.pop %v3813
    %v3815 = vmul.f32 %v3624, 1.442695
    %v3816 = vpow.pop %v3815
    %v3817 = vmul.f32 %v3625, 1.442695
    %v3818 = vpow.pop %v3817
    %v3819 = vmul.f32 %v3626, 1.442695
    %v3820 = vpow.pop %v3819
    %v3821 = vmul.f32 %v3627, 1.442695
    %v3822 = vpow.pop %v3821
    %v3823 = vmul.f32 %v3628, 1.442695
    %v3824 = vpow.pop %v3823
    %v3825 = vmul.f32 %v3629, 1.442695
    %v3826 = vpow.pop %v3825
    %v3827 = vmul.f32 %v3630, 1.442695
    %v3828 = vpow.pop %v3827
    %v3829 = vmul.f32 %v3631, 1.442695
    %v3830 = vpow.pop %v3829
    %v3831 = vmul.f32 %v3632, 1.442695
    %v3832 = vpow.pop %v3831
    %v3833 = vmul.f32 %v3633, 1.442695
    %v3834 = vpow.pop %v3833
    %v3835 = vmul.f32 %v3634, 1.442695
    %v3836 = vpow.pop %v3835
    %v3837 = vmul.f32 %v3635, 1.442695
    %v3838 = vpow.pop %v3837
    %v3839 = vmul.f32 %v3636, 1.442695
    %v3840 = vpow.pop %v3839
    %v3841 = vmul.f32 %v3637, 1.442695
    %v3842 = vpow.pop %v3841
    %v3843 = vmul.f32 %v3638, 1.442695
    %v3844 = vpow.pop %v3843
    %v3845 = vmul.f32 %v3639, 1.442695
    %v3846 = vpow.pop %v3845
    %v3847 = vmul.f32 %v3640, 1.442695
    %v3848 = vpow.pop %v3847
    %v3849 = vmul.f32 %v3641, 1.442695
    %v3850 = vpow.pop %v3849
    %v3851 = vmul.f32 %v3642, 1.442695
    %v3852 = vpow.pop %v3851
    %v3853 = vmul.f32 %v3643, 1.442695
    %v3854 = vpow.pop %v3853
    %v3855 = vmul.f32 %v3644, 1.442695
    %v3856 = vpow.pop %v3855
    %v3857 = vmul.f32 %v3645, 1.442695
    %v3858 = vpow.pop %v3857
    %v3859 = vmul.f32 %v3646, 1.442695
    %v3860 = vpow.pop %v3859
    %v3861 = vmul.f32 %v3647, 1.442695
    %v3862 = vpow.pop %v3861
    %v3863 = vmul.f32 %v3648, 1.442695
    %v3864 = vpow.pop %v3863
    %v3865 = vmul.f32 %v3649, 1.442695
    %v3866 = vpow.pop %v3865
    %v3867 = vmul.f32 %v3650, 1.442695
    %v3868 = vpow.pop %v3867
    %v3869 = vmul.f32 %v3651, 1.442695
    %v3870 = vpow.pop %v3869
    %v3871 = vmul.f32 %v3652, 1.442695
    %v3872 = vpow.pop %v3871
    %v3873 = vmul.f32 %v3653, 1.442695
    %v3874 = vpow.pop %v3873
    %v3875 = vmul.f32 %v3654, 1.442695
    %v3876 = vpow.pop %v3875
    %v3877 = vmul.f32 %v3655, 1.442695
    %v3878 = vpow.pop %v3877
    %v3879 = vmul.f32 %v3656, 1.442695
    %v3880 = vpow.pop %v3879
    %v3881 = vmul.f32 %v3657, 1.442695
    %v3882 = vpow.pop %v3881
    %v3883 = vmul.f32 %v3658, 1.442695
    %v3884 = vpow.pop %v3883
    %v3885 = vmul.f32 %v3659, 1.442695
    %v3886 = vpow.pop %v3885
    %v3887 = vmul.f32 %v3660, 1.442695
    %v3888 = vpow.pop %v3887
    %v3889 = vmul.f32 %v3661, 1.442695
    %v3890 = vpow.pop %v3889
    %v3891 = vmul.f32 %v3662, 1.442695
    %v3892 = vpow.pop %v3891
    %v3893 = vmul.f32 %v3663, 1.442695
    %v3894 = vpow.pop %v3893
    %v3895 = vmul.f32 %v3664, 1.442695
    %v3896 = vpow.pop %v3895
    %v3897 = vmul.f32 %v3665, 1.442695
    %v3898 = vpow.pop %v3897
    %v3899 = vmul.f32 %v3666, 1.442695
    %v3900 = vpow.pop %v3899
    %v3901 = vmul.f32 %v3667, 1.442695
    %v3902 = vpow.pop %v3901
    %v3903 = vmul.f32 %v3668, 1.442695
    %v3904 = vpow.pop %v3903
    %v3905 = vmul.f32 %v3669, 1.442695
    %v3906 = vpow.pop %v3905
    %v3907 = vmul.f32 %v3670, 1.442695
    %v3908 = vpow.pop %v3907
    %v3909 = vmul.f32 %v3671, 1.442695
    %v3910 = vpow.pop %v3909
    %v3911 = vmul.f32 %v3672, 1.442695
    %v3912 = vpow.pop %v3911
    %v3913 = vmul.f32 %v3673, 1.442695
    %v3914 = vpow.pop %v3913
    %v3915 = vmul.f32 %v3674, 1.442695
    %v3916 = vpow.pop %v3915
    %v3917 = vmul.f32 %v3675, 1.442695
    %v3918 = vpow.pop %v3917
    %v3919 = vmul.f32 %v3676, 1.442695
    %v3920 = vpow.pop %v3919
    %v3921 = vmul.f32 %v3677, 1.442695
    %v3922 = vpow.pop %v3921
    %v3923 = vmul.f32 %v3678, 1.442695
    %v3924 = vpow.pop %v3923
    %v3925 = vmul.f32 %v3679, 1.442695
    %v3926 = vpow.pop %v3925
    %v3927 = vmul.f32 %v3680, 1.442695
    %v3928 = vpow.pop %v3927
    %v3929 = vmul.f32 %v3681, 1.442695
    %v3930 = vpow.pop %v3929
    %v3931 = vmul.f32 %v3682, 1.442695
    %v3932 = vpow.pop %v3931
    %v3933 = vmul.f32 %v3683, 1.442695
    %v3934 = vpow.pop %v3933
    %v3935 = vmul.f32 %v3684, 1.442695
    %v3936 = vpow.pop %v3935
    %v3937 = vmul.f32 %v3685, 1.442695
    %v3938 = vpow.pop %v3937
    %v3939 = vmul.f32 %v3686, 1.442695
    %v3940 = vpow.pop %v3939
    %v3941 = vmul.f32 %v3687, 1.442695
    %v3942 = vpow.pop %v3941
    %v3943 = vmul.f32 %v3688, 1.442695
    %v3944 = vpow.pop %v3943
    %vm3945 = vcmask 64512
    %v3946 = vsel %vm3945, %v3690, 0.0
    %3947 = vadd.xlane.f32.xlu0 %v3946
    %v3948 = vpop.xlane.xlu0 %3947
    %v3949 = vsel %vm3945, %v3692, 0.0
    %3950 = vadd.xlane.f32.xlu0 %v3949
    %v3951 = vpop.xlane.xlu0 %3950
    %v3952 = vsel %vm3945, %v3694, 0.0
    %3953 = vadd.xlane.f32.xlu0 %v3952
    %v3954 = vpop.xlane.xlu0 %3953
    %v3955 = vsel %vm3945, %v3696, 0.0
    %3956 = vadd.xlane.f32.xlu0 %v3955
    %v3957 = vpop.xlane.xlu0 %3956
    %v3958 = vsel %vm3945, %v3698, 0.0
    %3959 = vadd.xlane.f32.xlu0 %v3958
    %v3960 = vpop.xlane.xlu0 %3959
    %v3961 = vsel %vm3945, %v3700, 0.0
    %3962 = vadd.xlane.f32.xlu0 %v3961
    %v3963 = vpop.xlane.xlu0 %3962
    %v3964 = vsel %vm3945, %v3702, 0.0
    %3965 = vadd.xlane.f32.xlu0 %v3964
    %v3966 = vpop.xlane.xlu0 %3965
    %v3967 = vsel %vm3945, %v3704, 0.0
    %3968 = vadd.xlane.f32.xlu0 %v3967
    %v3969 = vpop.xlane.xlu0 %3968
    %v3970 = vsel %vm3945, %v3706, 0.0
    %3971 = vadd.xlane.f32.xlu0 %v3970
    %v3972 = vpop.xlane.xlu0 %3971
    %v3973 = vsel %vm3945, %v3708, 0.0
    %3974 = vadd.xlane.f32.xlu0 %v3973
    %v3975 = vpop.xlane.xlu0 %3974
    %v3976 = vsel %vm3945, %v3710, 0.0
    %3977 = vadd.xlane.f32.xlu0 %v3976
    %v3978 = vpop.xlane.xlu0 %3977
    %v3979 = vsel %vm3945, %v3712, 0.0
    %3980 = vadd.xlane.f32.xlu0 %v3979
    %v3981 = vpop.xlane.xlu0 %3980
    %v3982 = vsel %vm3945, %v3714, 0.0
    %3983 = vadd.xlane.f32.xlu0 %v3982
    %v3984 = vpop.xlane.xlu0 %3983
    %v3985 = vsel %vm3945, %v3716, 0.0
    %3986 = vadd.xlane.f32.xlu0 %v3985
    %v3987 = vpop.xlane.xlu0 %3986
    %v3988 = vsel %vm3945, %v3718, 0.0
    %3989 = vadd.xlane.f32.xlu0 %v3988
    %v3990 = vpop.xlane.xlu0 %3989
    %v3991 = vsel %vm3945, %v3720, 0.0
    %3992 = vadd.xlane.f32.xlu0 %v3991
    %v3993 = vpop.xlane.xlu0 %3992
    %v3994 = vsel %vm3945, %v3722, 0.0
    %3995 = vadd.xlane.f32.xlu0 %v3994
    %v3996 = vpop.xlane.xlu0 %3995
    %v3997 = vsel %vm3945, %v3724, 0.0
    %3998 = vadd.xlane.f32.xlu0 %v3997
    %v3999 = vpop.xlane.xlu0 %3998
    %v4000 = vsel %vm3945, %v3726, 0.0
    %4001 = vadd.xlane.f32.xlu0 %v4000
    %v4002 = vpop.xlane.xlu0 %4001
    %v4003 = vsel %vm3945, %v3728, 0.0
    %4004 = vadd.xlane.f32.xlu0 %v4003
    %v4005 = vpop.xlane.xlu0 %4004
    %v4006 = vsel %vm3945, %v3730, 0.0
    %4007 = vadd.xlane.f32.xlu0 %v4006
    %v4008 = vpop.xlane.xlu0 %4007
    %v4009 = vsel %vm3945, %v3732, 0.0
    %4010 = vadd.xlane.f32.xlu0 %v4009
    %v4011 = vpop.xlane.xlu0 %4010
    %v4012 = vsel %vm3945, %v3734, 0.0
    %4013 = vadd.xlane.f32.xlu0 %v4012
    %v4014 = vpop.xlane.xlu0 %4013
    %v4015 = vsel %vm3945, %v3736, 0.0
    %4016 = vadd.xlane.f32.xlu0 %v4015
    %v4017 = vpop.xlane.xlu0 %4016
    %v4018 = vsel %vm3945, %v3738, 0.0
    %4019 = vadd.xlane.f32.xlu0 %v4018
    %v4020 = vpop.xlane.xlu0 %4019
    %v4021 = vsel %vm3945, %v3740, 0.0
    %4022 = vadd.xlane.f32.xlu0 %v4021
    %v4023 = vpop.xlane.xlu0 %4022
    %v4024 = vsel %vm3945, %v3742, 0.0
    %4025 = vadd.xlane.f32.xlu0 %v4024
    %v4026 = vpop.xlane.xlu0 %4025
    %v4027 = vsel %vm3945, %v3744, 0.0
    %4028 = vadd.xlane.f32.xlu0 %v4027
    %v4029 = vpop.xlane.xlu0 %4028
    %v4030 = vsel %vm3945, %v3746, 0.0
    %4031 = vadd.xlane.f32.xlu0 %v4030
    %v4032 = vpop.xlane.xlu0 %4031
    %v4033 = vsel %vm3945, %v3748, 0.0
    %4034 = vadd.xlane.f32.xlu0 %v4033
    %v4035 = vpop.xlane.xlu0 %4034
    %v4036 = vsel %vm3945, %v3750, 0.0
    %4037 = vadd.xlane.f32.xlu0 %v4036
    %v4038 = vpop.xlane.xlu0 %4037
    %v4039 = vsel %vm3945, %v3752, 0.0
    %4040 = vadd.xlane.f32.xlu0 %v4039
    %v4041 = vpop.xlane.xlu0 %4040
    %v4042 = vsel %vm3945, %v3754, 0.0
    %4043 = vadd.xlane.f32.xlu0 %v4042
    %v4044 = vpop.xlane.xlu0 %4043
    %v4045 = vsel %vm3945, %v3756, 0.0
    %4046 = vadd.xlane.f32.xlu0 %v4045
    %v4047 = vpop.xlane.xlu0 %4046
    %v4048 = vsel %vm3945, %v3758, 0.0
    %4049 = vadd.xlane.f32.xlu0 %v4048
    %v4050 = vpop.xlane.xlu0 %4049
    %v4051 = vsel %vm3945, %v3760, 0.0
    %4052 = vadd.xlane.f32.xlu0 %v4051
    %v4053 = vpop.xlane.xlu0 %4052
    %v4054 = vsel %vm3945, %v3762, 0.0
    %4055 = vadd.xlane.f32.xlu0 %v4054
    %v4056 = vpop.xlane.xlu0 %4055
    %v4057 = vsel %vm3945, %v3764, 0.0
    %4058 = vadd.xlane.f32.xlu0 %v4057
    %v4059 = vpop.xlane.xlu0 %4058
    %v4060 = vsel %vm3945, %v3766, 0.0
    %4061 = vadd.xlane.f32.xlu0 %v4060
    %v4062 = vpop.xlane.xlu0 %4061
    %v4063 = vsel %vm3945, %v3768, 0.0
    %4064 = vadd.xlane.f32.xlu0 %v4063
    %v4065 = vpop.xlane.xlu0 %4064
    %v4066 = vsel %vm3945, %v3770, 0.0
    %4067 = vadd.xlane.f32.xlu0 %v4066
    %v4068 = vpop.xlane.xlu0 %4067
    %v4069 = vsel %vm3945, %v3772, 0.0
    %4070 = vadd.xlane.f32.xlu0 %v4069
    %v4071 = vpop.xlane.xlu0 %4070
    %v4072 = vsel %vm3945, %v3774, 0.0
    %4073 = vadd.xlane.f32.xlu0 %v4072
    %v4074 = vpop.xlane.xlu0 %4073
    %v4075 = vsel %vm3945, %v3776, 0.0
    %4076 = vadd.xlane.f32.xlu0 %v4075
    %v4077 = vpop.xlane.xlu0 %4076
    %v4078 = vsel %vm3945, %v3778, 0.0
    %4079 = vadd.xlane.f32.xlu0 %v4078
    %v4080 = vpop.xlane.xlu0 %4079
    %v4081 = vsel %vm3945, %v3780, 0.0
    %4082 = vadd.xlane.f32.xlu0 %v4081
    %v4083 = vpop.xlane.xlu0 %4082
    %v4084 = vsel %vm3945, %v3782, 0.0
    %4085 = vadd.xlane.f32.xlu0 %v4084
    %v4086 = vpop.xlane.xlu0 %4085
    %v4087 = vsel %vm3945, %v3784, 0.0
    %4088 = vadd.xlane.f32.xlu0 %v4087
    %v4089 = vpop.xlane.xlu0 %4088
    %v4090 = vsel %vm3945, %v3786, 0.0
    %4091 = vadd.xlane.f32.xlu0 %v4090
    %v4092 = vpop.xlane.xlu0 %4091
    %v4093 = vsel %vm3945, %v3788, 0.0
    %4094 = vadd.xlane.f32.xlu0 %v4093
    %v4095 = vpop.xlane.xlu0 %4094
    %v4096 = vsel %vm3945, %v3790, 0.0
    %4097 = vadd.xlane.f32.xlu0 %v4096
    %v4098 = vpop.xlane.xlu0 %4097
    %v4099 = vsel %vm3945, %v3792, 0.0
    %4100 = vadd.xlane.f32.xlu0 %v4099
    %v4101 = vpop.xlane.xlu0 %4100
    %v4102 = vsel %vm3945, %v3794, 0.0
    %4103 = vadd.xlane.f32.xlu0 %v4102
    %v4104 = vpop.xlane.xlu0 %4103
    %v4105 = vsel %vm3945, %v3796, 0.0
    %4106 = vadd.xlane.f32.xlu0 %v4105
    %v4107 = vpop.xlane.xlu0 %4106
    %v4108 = vsel %vm3945, %v3798, 0.0
    %4109 = vadd.xlane.f32.xlu0 %v4108
    %v4110 = vpop.xlane.xlu0 %4109
    %v4111 = vsel %vm3945, %v3800, 0.0
    %4112 = vadd.xlane.f32.xlu0 %v4111
    %v4113 = vpop.xlane.xlu0 %4112
    %v4114 = vsel %vm3945, %v3802, 0.0
    %4115 = vadd.xlane.f32.xlu0 %v4114
    %v4116 = vpop.xlane.xlu0 %4115
    %v4117 = vsel %vm3945, %v3804, 0.0
    %4118 = vadd.xlane.f32.xlu0 %v4117
    %v4119 = vpop.xlane.xlu0 %4118
    %v4120 = vsel %vm3945, %v3806, 0.0
    %4121 = vadd.xlane.f32.xlu0 %v4120
    %v4122 = vpop.xlane.xlu0 %4121
    %v4123 = vsel %vm3945, %v3808, 0.0
    %4124 = vadd.xlane.f32.xlu0 %v4123
    %v4125 = vpop.xlane.xlu0 %4124
    %v4126 = vsel %vm3945, %v3810, 0.0
    %4127 = vadd.xlane.f32.xlu0 %v4126
    %v4128 = vpop.xlane.xlu0 %4127
    %v4129 = vsel %vm3945, %v3812, 0.0
    %4130 = vadd.xlane.f32.xlu0 %v4129
    %v4131 = vpop.xlane.xlu0 %4130
    %v4132 = vsel %vm3945, %v3814, 0.0
    %4133 = vadd.xlane.f32.xlu0 %v4132
    %v4134 = vpop.xlane.xlu0 %4133
    %v4135 = vsel %vm3945, %v3816, 0.0
    %4136 = vadd.xlane.f32.xlu0 %v4135
    %v4137 = vpop.xlane.xlu0 %4136
    %v4138 = vsel %vm3945, %v3818, 0.0
    %4139 = vadd.xlane.f32.xlu0 %v4138
    %v4140 = vpop.xlane.xlu0 %4139
    %v4141 = vsel %vm3945, %v3820, 0.0
    %4142 = vadd.xlane.f32.xlu0 %v4141
    %v4143 = vpop.xlane.xlu0 %4142
    %v4144 = vsel %vm3945, %v3822, 0.0
    %4145 = vadd.xlane.f32.xlu0 %v4144
    %v4146 = vpop.xlane.xlu0 %4145
    %v4147 = vsel %vm3945, %v3824, 0.0
    %4148 = vadd.xlane.f32.xlu0 %v4147
    %v4149 = vpop.xlane.xlu0 %4148
    %v4150 = vsel %vm3945, %v3826, 0.0
    %4151 = vadd.xlane.f32.xlu0 %v4150
    %v4152 = vpop.xlane.xlu0 %4151
    %v4153 = vsel %vm3945, %v3828, 0.0
    %4154 = vadd.xlane.f32.xlu0 %v4153
    %v4155 = vpop.xlane.xlu0 %4154
    %v4156 = vsel %vm3945, %v3830, 0.0
    %4157 = vadd.xlane.f32.xlu0 %v4156
    %v4158 = vpop.xlane.xlu0 %4157
    %v4159 = vsel %vm3945, %v3832, 0.0
    %4160 = vadd.xlane.f32.xlu0 %v4159
    %v4161 = vpop.xlane.xlu0 %4160
    %v4162 = vsel %vm3945, %v3834, 0.0
    %4163 = vadd.xlane.f32.xlu0 %v4162
    %v4164 = vpop.xlane.xlu0 %4163
    %v4165 = vsel %vm3945, %v3836, 0.0
    %4166 = vadd.xlane.f32.xlu0 %v4165
    %v4167 = vpop.xlane.xlu0 %4166
    %v4168 = vsel %vm3945, %v3838, 0.0
    %4169 = vadd.xlane.f32.xlu0 %v4168
    %v4170 = vpop.xlane.xlu0 %4169
    %v4171 = vsel %vm3945, %v3840, 0.0
    %4172 = vadd.xlane.f32.xlu0 %v4171
    %v4173 = vpop.xlane.xlu0 %4172
    %v4174 = vsel %vm3945, %v3842, 0.0
    %4175 = vadd.xlane.f32.xlu0 %v4174
    %v4176 = vpop.xlane.xlu0 %4175
    %v4177 = vsel %vm3945, %v3844, 0.0
    %4178 = vadd.xlane.f32.xlu0 %v4177
    %v4179 = vpop.xlane.xlu0 %4178
    %v4180 = vsel %vm3945, %v3846, 0.0
    %4181 = vadd.xlane.f32.xlu0 %v4180
    %v4182 = vpop.xlane.xlu0 %4181
    %v4183 = vsel %vm3945, %v3848, 0.0
    %4184 = vadd.xlane.f32.xlu0 %v4183
    %v4185 = vpop.xlane.xlu0 %4184
    %v4186 = vsel %vm3945, %v3850, 0.0
    %4187 = vadd.xlane.f32.xlu0 %v4186
    %v4188 = vpop.xlane.xlu0 %4187
    %v4189 = vsel %vm3945, %v3852, 0.0
    %4190 = vadd.xlane.f32.xlu0 %v4189
    %v4191 = vpop.xlane.xlu0 %4190
    %v4192 = vsel %vm3945, %v3854, 0.0
    %4193 = vadd.xlane.f32.xlu0 %v4192
    %v4194 = vpop.xlane.xlu0 %4193
    %v4195 = vsel %vm3945, %v3856, 0.0
    %4196 = vadd.xlane.f32.xlu0 %v4195
    %v4197 = vpop.xlane.xlu0 %4196
    %v4198 = vsel %vm3945, %v3858, 0.0
    %4199 = vadd.xlane.f32.xlu0 %v4198
    %v4200 = vpop.xlane.xlu0 %4199
    %v4201 = vsel %vm3945, %v3860, 0.0
    %4202 = vadd.xlane.f32.xlu0 %v4201
    %v4203 = vpop.xlane.xlu0 %4202
    %v4204 = vsel %vm3945, %v3862, 0.0
    %4205 = vadd.xlane.f32.xlu0 %v4204
    %v4206 = vpop.xlane.xlu0 %4205
    %v4207 = vsel %vm3945, %v3864, 0.0
    %4208 = vadd.xlane.f32.xlu0 %v4207
    %v4209 = vpop.xlane.xlu0 %4208
    %v4210 = vsel %vm3945, %v3866, 0.0
    %4211 = vadd.xlane.f32.xlu0 %v4210
    %v4212 = vpop.xlane.xlu0 %4211
    %v4213 = vsel %vm3945, %v3868, 0.0
    %4214 = vadd.xlane.f32.xlu0 %v4213
    %v4215 = vpop.xlane.xlu0 %4214
    %v4216 = vsel %vm3945, %v3870, 0.0
    %4217 = vadd.xlane.f32.xlu0 %v4216
    %v4218 = vpop.xlane.xlu0 %4217
    %v4219 = vsel %vm3945, %v3872, 0.0
    %4220 = vadd.xlane.f32.xlu0 %v4219
    %v4221 = vpop.xlane.xlu0 %4220
    %v4222 = vsel %vm3945, %v3874, 0.0
    %4223 = vadd.xlane.f32.xlu0 %v4222
    %v4224 = vpop.xlane.xlu0 %4223
    %v4225 = vsel %vm3945, %v3876, 0.0
    %4226 = vadd.xlane.f32.xlu0 %v4225
    %v4227 = vpop.xlane.xlu0 %4226
    %v4228 = vsel %vm3945, %v3878, 0.0
    %4229 = vadd.xlane.f32.xlu0 %v4228
    %v4230 = vpop.xlane.xlu0 %4229
    %v4231 = vsel %vm3945, %v3880, 0.0
    %4232 = vadd.xlane.f32.xlu0 %v4231
    %v4233 = vpop.xlane.xlu0 %4232
    %v4234 = vsel %vm3945, %v3882, 0.0
    %4235 = vadd.xlane.f32.xlu0 %v4234
    %v4236 = vpop.xlane.xlu0 %4235
    %v4237 = vsel %vm3945, %v3884, 0.0
    %4238 = vadd.xlane.f32.xlu0 %v4237
    %v4239 = vpop.xlane.xlu0 %4238
    %v4240 = vsel %vm3945, %v3886, 0.0
    %4241 = vadd.xlane.f32.xlu0 %v4240
    %v4242 = vpop.xlane.xlu0 %4241
    %v4243 = vsel %vm3945, %v3888, 0.0
    %4244 = vadd.xlane.f32.xlu0 %v4243
    %v4245 = vpop.xlane.xlu0 %4244
    %v4246 = vsel %vm3945, %v3890, 0.0
    %4247 = vadd.xlane.f32.xlu0 %v4246
    %v4248 = vpop.xlane.xlu0 %4247
    %v4249 = vsel %vm3945, %v3892, 0.0
    %4250 = vadd.xlane.f32.xlu0 %v4249
    %v4251 = vpop.xlane.xlu0 %4250
    %v4252 = vsel %vm3945, %v3894, 0.0
    %4253 = vadd.xlane.f32.xlu0 %v4252
    %v4254 = vpop.xlane.xlu0 %4253
    %v4255 = vsel %vm3945, %v3896, 0.0
    %4256 = vadd.xlane.f32.xlu0 %v4255
    %v4257 = vpop.xlane.xlu0 %4256
    %v4258 = vsel %vm3945, %v3898, 0.0
    %4259 = vadd.xlane.f32.xlu0 %v4258
    %v4260 = vpop.xlane.xlu0 %4259
    %v4261 = vsel %vm3945, %v3900, 0.0
    %4262 = vadd.xlane.f32.xlu0 %v4261
    %v4263 = vpop.xlane.xlu0 %4262
    %v4264 = vsel %vm3945, %v3902, 0.0
    %4265 = vadd.xlane.f32.xlu0 %v4264
    %v4266 = vpop.xlane.xlu0 %4265
    %v4267 = vsel %vm3945, %v3904, 0.0
    %4268 = vadd.xlane.f32.xlu0 %v4267
    %v4269 = vpop.xlane.xlu0 %4268
    %v4270 = vsel %vm3945, %v3906, 0.0
    %4271 = vadd.xlane.f32.xlu0 %v4270
    %v4272 = vpop.xlane.xlu0 %4271
    %v4273 = vsel %vm3945, %v3908, 0.0
    %4274 = vadd.xlane.f32.xlu0 %v4273
    %v4275 = vpop.xlane.xlu0 %4274
    %v4276 = vsel %vm3945, %v3910, 0.0
    %4277 = vadd.xlane.f32.xlu0 %v4276
    %v4278 = vpop.xlane.xlu0 %4277
    %v4279 = vsel %vm3945, %v3912, 0.0
    %4280 = vadd.xlane.f32.xlu0 %v4279
    %v4281 = vpop.xlane.xlu0 %4280
    %v4282 = vsel %vm3945, %v3914, 0.0
    %4283 = vadd.xlane.f32.xlu0 %v4282
    %v4284 = vpop.xlane.xlu0 %4283
    %v4285 = vsel %vm3945, %v3916, 0.0
    %4286 = vadd.xlane.f32.xlu0 %v4285
    %v4287 = vpop.xlane.xlu0 %4286
    %v4288 = vsel %vm3945, %v3918, 0.0
    %4289 = vadd.xlane.f32.xlu0 %v4288
    %v4290 = vpop.xlane.xlu0 %4289
    %v4291 = vsel %vm3945, %v3920, 0.0
    %4292 = vadd.xlane.f32.xlu0 %v4291
    %v4293 = vpop.xlane.xlu0 %4292
    %v4294 = vsel %vm3945, %v3922, 0.0
    %4295 = vadd.xlane.f32.xlu0 %v4294
    %v4296 = vpop.xlane.xlu0 %4295
    %v4297 = vsel %vm3945, %v3924, 0.0
    %4298 = vadd.xlane.f32.xlu0 %v4297
    %v4299 = vpop.xlane.xlu0 %4298
    %v4300 = vsel %vm3945, %v3926, 0.0
    %4301 = vadd.xlane.f32.xlu0 %v4300
    %v4302 = vpop.xlane.xlu0 %4301
    %v4303 = vsel %vm3945, %v3928, 0.0
    %4304 = vadd.xlane.f32.xlu0 %v4303
    %v4305 = vpop.xlane.xlu0 %4304
    %v4306 = vsel %vm3945, %v3930, 0.0
    %4307 = vadd.xlane.f32.xlu0 %v4306
    %v4308 = vpop.xlane.xlu0 %4307
    %v4309 = vsel %vm3945, %v3932, 0.0
    %4310 = vadd.xlane.f32.xlu0 %v4309
    %v4311 = vpop.xlane.xlu0 %4310
    %v4312 = vsel %vm3945, %v3934, 0.0
    %4313 = vadd.xlane.f32.xlu0 %v4312
    %v4314 = vpop.xlane.xlu0 %4313
    %v4315 = vsel %vm3945, %v3936, 0.0
    %4316 = vadd.xlane.f32.xlu0 %v4315
    %v4317 = vpop.xlane.xlu0 %4316
    %v4318 = vsel %vm3945, %v3938, 0.0
    %4319 = vadd.xlane.f32.xlu0 %v4318
    %v4320 = vpop.xlane.xlu0 %4319
    %v4321 = vsel %vm3945, %v3940, 0.0
    %4322 = vadd.xlane.f32.xlu0 %v4321
    %v4323 = vpop.xlane.xlu0 %4322
    %v4324 = vsel %vm3945, %v3942, 0.0
    %4325 = vadd.xlane.f32.xlu0 %v4324
    %v4326 = vpop.xlane.xlu0 %4325
    %v4327 = vsel %vm3945, %v3944, 0.0
    %4328 = vadd.xlane.f32.xlu0 %v4327
    %v4329 = vpop.xlane.xlu0 %4328
    %v4330 = vadd.f32 %v3948, 1e-08
    %v4331 = vadd.f32 %v3951, 1e-08
    %v4332 = vadd.f32 %v3954, 1e-08
    %v4333 = vadd.f32 %v3957, 1e-08
    %v4334 = vadd.f32 %v3960, 1e-08
    %v4335 = vadd.f32 %v3963, 1e-08
    %v4336 = vadd.f32 %v3966, 1e-08
    %v4337 = vadd.f32 %v3969, 1e-08
    %v4338 = vadd.f32 %v3972, 1e-08
    %v4339 = vadd.f32 %v3975, 1e-08
    %v4340 = vadd.f32 %v3978, 1e-08
    %v4341 = vadd.f32 %v3981, 1e-08
    %v4342 = vadd.f32 %v3984, 1e-08
    %v4343 = vadd.f32 %v3987, 1e-08
    %v4344 = vadd.f32 %v3990, 1e-08
    %v4345 = vadd.f32 %v3993, 1e-08
    %v4346 = vadd.f32 %v3996, 1e-08
    %v4347 = vadd.f32 %v3999, 1e-08
    %v4348 = vadd.f32 %v4002, 1e-08
    %v4349 = vadd.f32 %v4005, 1e-08
    %v4350 = vadd.f32 %v4008, 1e-08
    %v4351 = vadd.f32 %v4011, 1e-08
    %v4352 = vadd.f32 %v4014, 1e-08
    %v4353 = vadd.f32 %v4017, 1e-08
    %v4354 = vadd.f32 %v4020, 1e-08
    %v4355 = vadd.f32 %v4023, 1e-08
    %v4356 = vadd.f32 %v4026, 1e-08
    %v4357 = vadd.f32 %v4029, 1e-08
    %v4358 = vadd.f32 %v4032, 1e-08
    %v4359 = vadd.f32 %v4035, 1e-08
    %v4360 = vadd.f32 %v4038, 1e-08
    %v4361 = vadd.f32 %v4041, 1e-08
    %v4362 = vadd.f32 %v4044, 1e-08
    %v4363 = vadd.f32 %v4047, 1e-08
    %v4364 = vadd.f32 %v4050, 1e-08
    %v4365 = vadd.f32 %v4053, 1e-08
    %v4366 = vadd.f32 %v4056, 1e-08
    %v4367 = vadd.f32 %v4059, 1e-08
    %v4368 = vadd.f32 %v4062, 1e-08
    %v4369 = vadd.f32 %v4065, 1e-08
    %v4370 = vadd.f32 %v4068, 1e-08
    %v4371 = vadd.f32 %v4071, 1e-08
    %v4372 = vadd.f32 %v4074, 1e-08
    %v4373 = vadd.f32 %v4077, 1e-08
    %v4374 = vadd.f32 %v4080, 1e-08
    %v4375 = vadd.f32 %v4083, 1e-08
    %v4376 = vadd.f32 %v4086, 1e-08
    %v4377 = vadd.f32 %v4089, 1e-08
    %v4378 = vadd.f32 %v4092, 1e-08
    %v4379 = vadd.f32 %v4095, 1e-08
    %v4380 = vadd.f32 %v4098, 1e-08
    %v4381 = vadd.f32 %v4101, 1e-08
    %v4382 = vadd.f32 %v4104, 1e-08
    %v4383 = vadd.f32 %v4107, 1e-08
    %v4384 = vadd.f32 %v4110, 1e-08
    %v4385 = vadd.f32 %v4113, 1e-08
    %v4386 = vadd.f32 %v4116, 1e-08
    %v4387 = vadd.f32 %v4119, 1e-08
    %v4388 = vadd.f32 %v4122, 1e-08
    %v4389 = vadd.f32 %v4125, 1e-08
    %v4390 = vadd.f32 %v4128, 1e-08
    %v4391 = vadd.f32 %v4131, 1e-08
    %v4392 = vadd.f32 %v4134, 1e-08
    %v4393 = vadd.f32 %v4137, 1e-08
    %v4394 = vadd.f32 %v4140, 1e-08
    %v4395 = vadd.f32 %v4143, 1e-08
    %v4396 = vadd.f32 %v4146, 1e-08
    %v4397 = vadd.f32 %v4149, 1e-08
    %v4398 = vadd.f32 %v4152, 1e-08
    %v4399 = vadd.f32 %v4155, 1e-08
    %v4400 = vadd.f32 %v4158, 1e-08
    %v4401 = vadd.f32 %v4161, 1e-08
    %v4402 = vadd.f32 %v4164, 1e-08
    %v4403 = vadd.f32 %v4167, 1e-08
    %v4404 = vadd.f32 %v4170, 1e-08
    %v4405 = vadd.f32 %v4173, 1e-08
    %v4406 = vadd.f32 %v4176, 1e-08
    %v4407 = vadd.f32 %v4179, 1e-08
    %v4408 = vadd.f32 %v4182, 1e-08
    %v4409 = vadd.f32 %v4185, 1e-08
    %v4410 = vadd.f32 %v4188, 1e-08
    %v4411 = vadd.f32 %v4191, 1e-08
    %v4412 = vadd.f32 %v4194, 1e-08
    %v4413 = vadd.f32 %v4197, 1e-08
    %v4414 = vadd.f32 %v4200, 1e-08
    %v4415 = vadd.f32 %v4203, 1e-08
    %v4416 = vadd.f32 %v4206, 1e-08
    %v4417 = vadd.f32 %v4209, 1e-08
    %v4418 = vadd.f32 %v4212, 1e-08
    %v4419 = vadd.f32 %v4215, 1e-08
    %v4420 = vadd.f32 %v4218, 1e-08
    %v4421 = vadd.f32 %v4221, 1e-08
    %v4422 = vadd.f32 %v4224, 1e-08
    %v4423 = vadd.f32 %v4227, 1e-08
    %v4424 = vadd.f32 %v4230, 1e-08
    %v4425 = vadd.f32 %v4233, 1e-08
    %v4426 = vadd.f32 %v4236, 1e-08
    %v4427 = vadd.f32 %v4239, 1e-08
    %v4428 = vadd.f32 %v4242, 1e-08
    %v4429 = vadd.f32 %v4245, 1e-08
    %v4430 = vadd.f32 %v4248, 1e-08
    %v4431 = vadd.f32 %v4251, 1e-08
    %v4432 = vadd.f32 %v4254, 1e-08
    %v4433 = vadd.f32 %v4257, 1e-08
    %v4434 = vadd.f32 %v4260, 1e-08
    %v4435 = vadd.f32 %v4263, 1e-08
    %v4436 = vadd.f32 %v4266, 1e-08
    %v4437 = vadd.f32 %v4269, 1e-08
    %v4438 = vadd.f32 %v4272, 1e-08
    %v4439 = vadd.f32 %v4275, 1e-08
    %v4440 = vadd.f32 %v4278, 1e-08
    %v4441 = vadd.f32 %v4281, 1e-08
    %v4442 = vadd.f32 %v4284, 1e-08
    %v4443 = vadd.f32 %v4287, 1e-08
    %v4444 = vadd.f32 %v4290, 1e-08
    %v4445 = vadd.f32 %v4293, 1e-08
    %v4446 = vadd.f32 %v4296, 1e-08
    %v4447 = vadd.f32 %v4299, 1e-08
    %v4448 = vadd.f32 %v4302, 1e-08
    %v4449 = vadd.f32 %v4305, 1e-08
    %v4450 = vadd.f32 %v4308, 1e-08
    %v4451 = vadd.f32 %v4311, 1e-08
    %v4452 = vadd.f32 %v4314, 1e-08
    %v4453 = vadd.f32 %v4317, 1e-08
    %v4454 = vadd.f32 %v4320, 1e-08
    %v4455 = vadd.f32 %v4323, 1e-08
    %v4456 = vadd.f32 %v4326, 1e-08
    %v4457 = vadd.f32 %v4329, 1e-08
    %v4458 = vrcp.pop %v4330
    %v4459 = vrcp.pop %v4331
    %v4460 = vrcp.pop %v4332
    %v4461 = vrcp.pop %v4333
    %v4462 = vrcp.pop %v4334
    %v4463 = vrcp.pop %v4335
    %v4464 = vrcp.pop %v4336
    %v4465 = vrcp.pop %v4337
    %v4466 = vrcp.pop %v4338
    %v4467 = vrcp.pop %v4339
    %v4468 = vrcp.pop %v4340
    %v4469 = vrcp.pop %v4341
    %v4470 = vrcp.pop %v4342
    %v4471 = vrcp.pop %v4343
    %v4472 = vrcp.pop %v4344
    %v4473 = vrcp.pop %v4345
    %v4474 = vrcp.pop %v4346
    %v4475 = vrcp.pop %v4347
    %v4476 = vrcp.pop %v4348
    %v4477 = vrcp.pop %v4349
    %v4478 = vrcp.pop %v4350
    %v4479 = vrcp.pop %v4351
    %v4480 = vrcp.pop %v4352
    %v4481 = vrcp.pop %v4353
    %v4482 = vrcp.pop %v4354
    %v4483 = vrcp.pop %v4355
    %v4484 = vrcp.pop %v4356
    %v4485 = vrcp.pop %v4357
    %v4486 = vrcp.pop %v4358
    %v4487 = vrcp.pop %v4359
    %v4488 = vrcp.pop %v4360
    %v4489 = vrcp.pop %v4361
    %v4490 = vrcp.pop %v4362
    %v4491 = vrcp.pop %v4363
    %v4492 = vrcp.pop %v4364
    %v4493 = vrcp.pop %v4365
    %v4494 = vrcp.pop %v4366
    %v4495 = vrcp.pop %v4367
    %v4496 = vrcp.pop %v4368
    %v4497 = vrcp.pop %v4369
    %v4498 = vrcp.pop %v4370
    %v4499 = vrcp.pop %v4371
    %v4500 = vrcp.pop %v4372
    %v4501 = vrcp.pop %v4373
    %v4502 = vrcp.pop %v4374
    %v4503 = vrcp.pop %v4375
    %v4504 = vrcp.pop %v4376
    %v4505 = vrcp.pop %v4377
    %v4506 = vrcp.pop %v4378
    %v4507 = vrcp.pop %v4379
    %v4508 = vrcp.pop %v4380
    %v4509 = vrcp.pop %v4381
    %v4510 = vrcp.pop %v4382
    %v4511 = vrcp.pop %v4383
    %v4512 = vrcp.pop %v4384
    %v4513 = vrcp.pop %v4385
    %v4514 = vrcp.pop %v4386
    %v4515 = vrcp.pop %v4387
    %v4516 = vrcp.pop %v4388
    %v4517 = vrcp.pop %v4389
    %v4518 = vrcp.pop %v4390
    %v4519 = vrcp.pop %v4391
    %v4520 = vrcp.pop %v4392
    %v4521 = vrcp.pop %v4393
    %v4522 = vrcp.pop %v4394
    %v4523 = vrcp.pop %v4395
    %v4524 = vrcp.pop %v4396
    %v4525 = vrcp.pop %v4397
    %v4526 = vrcp.pop %v4398
    %v4527 = vrcp.pop %v4399
    %v4528 = vrcp.pop %v4400
    %v4529 = vrcp.pop %v4401
    %v4530 = vrcp.pop %v4402
    %v4531 = vrcp.pop %v4403
    %v4532 = vrcp.pop %v4404
    %v4533 = vrcp.pop %v4405
    %v4534 = vrcp.pop %v4406
    %v4535 = vrcp.pop %v4407
    %v4536 = vrcp.pop %v4408
    %v4537 = vrcp.pop %v4409
    %v4538 = vrcp.pop %v4410
    %v4539 = vrcp.pop %v4411
    %v4540 = vrcp.pop %v4412
    %v4541 = vrcp.pop %v4413
    %v4542 = vrcp.pop %v4414
    %v4543 = vrcp.pop %v4415
    %v4544 = vrcp.pop %v4416
    %v4545 = vrcp.pop %v4417
    %v4546 = vrcp.pop %v4418
    %v4547 = vrcp.pop %v4419
    %v4548 = vrcp.pop %v4420
    %v4549 = vrcp.pop %v4421
    %v4550 = vrcp.pop %v4422
    %v4551 = vrcp.pop %v4423
    %v4552 = vrcp.pop %v4424
    %v4553 = vrcp.pop %v4425
    %v4554 = vrcp.pop %v4426
    %v4555 = vrcp.pop %v4427
    %v4556 = vrcp.pop %v4428
    %v4557 = vrcp.pop %v4429
    %v4558 = vrcp.pop %v4430
    %v4559 = vrcp.pop %v4431
    %v4560 = vrcp.pop %v4432
    %v4561 = vrcp.pop %v4433
    %v4562 = vrcp.pop %v4434
    %v4563 = vrcp.pop %v4435
    %v4564 = vrcp.pop %v4436
    %v4565 = vrcp.pop %v4437
    %v4566 = vrcp.pop %v4438
    %v4567 = vrcp.pop %v4439
    %v4568 = vrcp.pop %v4440
    %v4569 = vrcp.pop %v4441
    %v4570 = vrcp.pop %v4442
    %v4571 = vrcp.pop %v4443
    %v4572 = vrcp.pop %v4444
    %v4573 = vrcp.pop %v4445
    %v4574 = vrcp.pop %v4446
    %v4575 = vrcp.pop %v4447
    %v4576 = vrcp.pop %v4448
    %v4577 = vrcp.pop %v4449
    %v4578 = vrcp.pop %v4450
    %v4579 = vrcp.pop %v4451
    %v4580 = vrcp.pop %v4452
    %v4581 = vrcp.pop %v4453
    %v4582 = vrcp.pop %v4454
    %v4583 = vrcp.pop %v4455
    %v4584 = vrcp.pop %v4456
    %v4585 = vrcp.pop %v4457
    %v4586 = vmul.f32 %v3690, %v4458
    %v4587 = vmul.f32 %v3692, %v4459
    %v4588 = vmul.f32 %v3694, %v4460
    %v4589 = vmul.f32 %v3696, %v4461
    %v4590 = vmul.f32 %v3698, %v4462
    %v4591 = vmul.f32 %v3700, %v4463
    %v4592 = vmul.f32 %v3702, %v4464
    %v4593 = vmul.f32 %v3704, %v4465
    %v4594 = vmul.f32 %v3706, %v4466
    %v4595 = vmul.f32 %v3708, %v4467
    %v4596 = vmul.f32 %v3710, %v4468
    %v4597 = vmul.f32 %v3712, %v4469
    %v4598 = vmul.f32 %v3714, %v4470
    %v4599 = vmul.f32 %v3716, %v4471
    %v4600 = vmul.f32 %v3718, %v4472
    %v4601 = vmul.f32 %v3720, %v4473
    %v4602 = vmul.f32 %v3722, %v4474
    %v4603 = vmul.f32 %v3724, %v4475
    %v4604 = vmul.f32 %v3726, %v4476
    %v4605 = vmul.f32 %v3728, %v4477
    %v4606 = vmul.f32 %v3730, %v4478
    %v4607 = vmul.f32 %v3732, %v4479
    %v4608 = vmul.f32 %v3734, %v4480
    %v4609 = vmul.f32 %v3736, %v4481
    %v4610 = vmul.f32 %v3738, %v4482
    %v4611 = vmul.f32 %v3740, %v4483
    %v4612 = vmul.f32 %v3742, %v4484
    %v4613 = vmul.f32 %v3744, %v4485
    %v4614 = vmul.f32 %v3746, %v4486
    %v4615 = vmul.f32 %v3748, %v4487
    %v4616 = vmul.f32 %v3750, %v4488
    %v4617 = vmul.f32 %v3752, %v4489
    %v4618 = vmul.f32 %v3754, %v4490
    %v4619 = vmul.f32 %v3756, %v4491
    %v4620 = vmul.f32 %v3758, %v4492
    %v4621 = vmul.f32 %v3760, %v4493
    %v4622 = vmul.f32 %v3762, %v4494
    %v4623 = vmul.f32 %v3764, %v4495
    %v4624 = vmul.f32 %v3766, %v4496
    %v4625 = vmul.f32 %v3768, %v4497
    %v4626 = vmul.f32 %v3770, %v4498
    %v4627 = vmul.f32 %v3772, %v4499
    %v4628 = vmul.f32 %v3774, %v4500
    %v4629 = vmul.f32 %v3776, %v4501
    %v4630 = vmul.f32 %v3778, %v4502
    %v4631 = vmul.f32 %v3780, %v4503
    %v4632 = vmul.f32 %v3782, %v4504
    %v4633 = vmul.f32 %v3784, %v4505
    %v4634 = vmul.f32 %v3786, %v4506
    %v4635 = vmul.f32 %v3788, %v4507
    %v4636 = vmul.f32 %v3790, %v4508
    %v4637 = vmul.f32 %v3792, %v4509
    %v4638 = vmul.f32 %v3794, %v4510
    %v4639 = vmul.f32 %v3796, %v4511
    %v4640 = vmul.f32 %v3798, %v4512
    %v4641 = vmul.f32 %v3800, %v4513
    %v4642 = vmul.f32 %v3802, %v4514
    %v4643 = vmul.f32 %v3804, %v4515
    %v4644 = vmul.f32 %v3806, %v4516
    %v4645 = vmul.f32 %v3808, %v4517
    %v4646 = vmul.f32 %v3810, %v4518
    %v4647 = vmul.f32 %v3812, %v4519
    %v4648 = vmul.f32 %v3814, %v4520
    %v4649 = vmul.f32 %v3816, %v4521
    %v4650 = vmul.f32 %v3818, %v4522
    %v4651 = vmul.f32 %v3820, %v4523
    %v4652 = vmul.f32 %v3822, %v4524
    %v4653 = vmul.f32 %v3824, %v4525
    %v4654 = vmul.f32 %v3826, %v4526
    %v4655 = vmul.f32 %v3828, %v4527
    %v4656 = vmul.f32 %v3830, %v4528
    %v4657 = vmul.f32 %v3832, %v4529
    %v4658 = vmul.f32 %v3834, %v4530
    %v4659 = vmul.f32 %v3836, %v4531
    %v4660 = vmul.f32 %v3838, %v4532
    %v4661 = vmul.f32 %v3840, %v4533
    %v4662 = vmul.f32 %v3842, %v4534
    %v4663 = vmul.f32 %v3844, %v4535
    %v4664 = vmul.f32 %v3846, %v4536
    %v4665 = vmul.f32 %v3848, %v4537
    %v4666 = vmul.f32 %v3850, %v4538
    %v4667 = vmul.f32 %v3852, %v4539
    %v4668 = vmul.f32 %v3854, %v4540
    %v4669 = vmul.f32 %v3856, %v4541
    %v4670 = vmul.f32 %v3858, %v4542
    %v4671 = vmul.f32 %v3860, %v4543
    %v4672 = vmul.f32 %v3862, %v4544
    %v4673 = vmul.f32 %v3864, %v4545
    %v4674 = vmul.f32 %v3866, %v4546
    %v4675 = vmul.f32 %v3868, %v4547
    %v4676 = vmul.f32 %v3870, %v4548
    %v4677 = vmul.f32 %v3872, %v4549
    %v4678 = vmul.f32 %v3874, %v4550
    %v4679 = vmul.f32 %v3876, %v4551
    %v4680 = vmul.f32 %v3878, %v4552
    %v4681 = vmul.f32 %v3880, %v4553
    %v4682 = vmul.f32 %v3882, %v4554
    %v4683 = vmul.f32 %v3884, %v4555
    %v4684 = vmul.f32 %v3886, %v4556
    %v4685 = vmul.f32 %v3888, %v4557
    %v4686 = vmul.f32 %v3890, %v4558
    %v4687 = vmul.f32 %v3892, %v4559
    %v4688 = vmul.f32 %v3894, %v4560
    %v4689 = vmul.f32 %v3896, %v4561
    %v4690 = vmul.f32 %v3898, %v4562
    %v4691 = vmul.f32 %v3900, %v4563
    %v4692 = vmul.f32 %v3902, %v4564
    %v4693 = vmul.f32 %v3904, %v4565
    %v4694 = vmul.f32 %v3906, %v4566
    %v4695 = vmul.f32 %v3908, %v4567
    %v4696 = vmul.f32 %v3910, %v4568
    %v4697 = vmul.f32 %v3912, %v4569
    %v4698 = vmul.f32 %v3914, %v4570
    %v4699 = vmul.f32 %v3916, %v4571
    %v4700 = vmul.f32 %v3918, %v4572
    %v4701 = vmul.f32 %v3920, %v4573
    %v4702 = vmul.f32 %v3922, %v4574
    %v4703 = vmul.f32 %v3924, %v4575
    %v4704 = vmul.f32 %v3926, %v4576
    %v4705 = vmul.f32 %v3928, %v4577
    %v4706 = vmul.f32 %v3930, %v4578
    %v4707 = vmul.f32 %v3932, %v4579
    %v4708 = vmul.f32 %v3934, %v4580
    %v4709 = vmul.f32 %v3936, %v4581
    %v4710 = vmul.f32 %v3938, %v4582
    %v4711 = vmul.f32 %v3940, %v4583
    %v4712 = vmul.f32 %v3942, %v4584
    %v4713 = vmul.f32 %v3944, %v4585
    %v4715 = vsel %vm3945, %v4586, 0
    %4717 = vmatpush.msra.mxu0 0.0
    %4718 = vmatpush.msra.mxu0 0.0
    %4719 = vmatpush.msra.mxu0 0.0
    %4720 = vmatpush.msra.mxu0 0.0
    %4721 = vmatpush.msra.mxu0 0.0
    %4722 = vmatpush.msra.mxu0 0.0
    %4723 = vmatpush.msra.mxu0 0.0
    %4724 = vmatpush.msra.mxu0 0.0
    %4725 = vmatpush.msra.mxu0 0.0
    %4726 = vmatpush.msra.mxu0 0.0
    %4727 = vmatpush.msra.mxu0 0.0
    %4728 = vmatpush.msra.mxu0 0.0
    %4729 = vmatpush.msra.mxu0 0.0
    %4730 = vmatpush.msra.mxu0 0.0
    %4731 = vmatpush.msra.mxu0 0.0
    %4732 = vmatpush.msra.mxu0 %v873
    %4733 = vmatmul.f32.gmra.mxu0 %v4715
    %v4734 = vpop.f32.mrf.mxu0
    %v4735 = vadd.f32 0.0, %v4734
    %4736 = vdwg.mxu0
    %v4738 = vsel %vm3945, %v4587, 0
    %4740 = vmatpush.msra.mxu0 0.0
    %4741 = vmatpush.msra.mxu0 0.0
    %4742 = vmatpush.msra.mxu0 0.0
    %4743 = vmatpush.msra.mxu0 0.0
    %4744 = vmatpush.msra.mxu0 0.0
    %4745 = vmatpush.msra.mxu0 0.0
    %4746 = vmatpush.msra.mxu0 0.0
    %4747 = vmatpush.msra.mxu0 0.0
    %4748 = vmatpush.msra.mxu0 0.0
    %4749 = vmatpush.msra.mxu0 0.0
    %4750 = vmatpush.msra.mxu0 0.0
    %4751 = vmatpush.msra.mxu0 0.0
    %4752 = vmatpush.msra.mxu0 0.0
    %4753 = vmatpush.msra.mxu0 0.0
    %4754 = vmatpush.msra.mxu0 0.0
    %4755 = vmatpush.msra.mxu0 %v874
    %4756 = vmatmul.f32.gmra.mxu0 %v4738
    %v4757 = vpop.f32.mrf.mxu0
    %v4758 = vadd.f32 0.0, %v4757
    %4759 = vdwg.mxu0
    %v4761 = vsel %vm3945, %v4588, 0
    %4763 = vmatpush.msra.mxu0 0.0
    %4764 = vmatpush.msra.mxu0 0.0
    %4765 = vmatpush.msra.mxu0 0.0
    %4766 = vmatpush.msra.mxu0 0.0
    %4767 = vmatpush.msra.mxu0 0.0
    %4768 = vmatpush.msra.mxu0 0.0
    %4769 = vmatpush.msra.mxu0 0.0
    %4770 = vmatpush.msra.mxu0 0.0
    %4771 = vmatpush.msra.mxu0 0.0
    %4772 = vmatpush.msra.mxu0 0.0
    %4773 = vmatpush.msra.mxu0 0.0
    %4774 = vmatpush.msra.mxu0 0.0
    %4775 = vmatpush.msra.mxu0 0.0
    %4776 = vmatpush.msra.mxu0 0.0
    %4777 = vmatpush.msra.mxu0 0.0
    %4778 = vmatpush.msra.mxu0 %v875
    %4779 = vmatmul.f32.gmra.mxu0 %v4761
    %v4780 = vpop.f32.mrf.mxu0
    %v4781 = vadd.f32 0.0, %v4780
    %4782 = vdwg.mxu0
    %v4784 = vsel %vm3945, %v4589, 0
    %4786 = vmatpush.msra.mxu0 0.0
    %4787 = vmatpush.msra.mxu0 0.0
    %4788 = vmatpush.msra.mxu0 0.0
    %4789 = vmatpush.msra.mxu0 0.0
    %4790 = vmatpush.msra.mxu0 0.0
    %4791 = vmatpush.msra.mxu0 0.0
    %4792 = vmatpush.msra.mxu0 0.0
    %4793 = vmatpush.msra.mxu0 0.0
    %4794 = vmatpush.msra.mxu0 0.0
    %4795 = vmatpush.msra.mxu0 0.0
    %4796 = vmatpush.msra.mxu0 0.0
    %4797 = vmatpush.msra.mxu0 0.0
    %4798 = vmatpush.msra.mxu0 0.0
    %4799 = vmatpush.msra.mxu0 0.0
    %4800 = vmatpush.msra.mxu0 0.0
    %4801 = vmatpush.msra.mxu0 %v876
    %4802 = vmatmul.f32.gmra.mxu0 %v4784
    %v4803 = vpop.f32.mrf.mxu0
    %v4804 = vadd.f32 0.0, %v4803
    %4805 = vdwg.mxu0
    %v4807 = vsel %vm3945, %v4590, 0
    %4809 = vmatpush.msra.mxu0 0.0
    %4810 = vmatpush.msra.mxu0 0.0
    %4811 = vmatpush.msra.mxu0 0.0
    %4812 = vmatpush.msra.mxu0 0.0
    %4813 = vmatpush.msra.mxu0 0.0
    %4814 = vmatpush.msra.mxu0 0.0
    %4815 = vmatpush.msra.mxu0 0.0
    %4816 = vmatpush.msra.mxu0 0.0
    %4817 = vmatpush.msra.mxu0 0.0
    %4818 = vmatpush.msra.mxu0 0.0
    %4819 = vmatpush.msra.mxu0 0.0
    %4820 = vmatpush.msra.mxu0 0.0
    %4821 = vmatpush.msra.mxu0 0.0
    %4822 = vmatpush.msra.mxu0 0.0
    %4823 = vmatpush.msra.mxu0 0.0
    %4824 = vmatpush.msra.mxu0 %v877
    %4825 = vmatmul.f32.gmra.mxu0 %v4807
    %v4826 = vpop.f32.mrf.mxu0
    %v4827 = vadd.f32 0.0, %v4826
    %4828 = vdwg.mxu0
    %v4830 = vsel %vm3945, %v4591, 0
    %4832 = vmatpush.msra.mxu0 0.0
    %4833 = vmatpush.msra.mxu0 0.0
    %4834 = vmatpush.msra.mxu0 0.0
    %4835 = vmatpush.msra.mxu0 0.0
    %4836 = vmatpush.msra.mxu0 0.0
    %4837 = vmatpush.msra.mxu0 0.0
    %4838 = vmatpush.msra.mxu0 0.0
    %4839 = vmatpush.msra.mxu0 0.0
    %4840 = vmatpush.msra.mxu0 0.0
    %4841 = vmatpush.msra.mxu0 0.0
    %4842 = vmatpush.msra.mxu0 0.0
    %4843 = vmatpush.msra.mxu0 0.0
    %4844 = vmatpush.msra.mxu0 0.0
    %4845 = vmatpush.msra.mxu0 0.0
    %4846 = vmatpush.msra.mxu0 0.0
    %4847 = vmatpush.msra.mxu0 %v878
    %4848 = vmatmul.f32.gmra.mxu0 %v4830
    %v4849 = vpop.f32.mrf.mxu0
    %v4850 = vadd.f32 0.0, %v4849
    %4851 = vdwg.mxu0
    %v4853 = vsel %vm3945, %v4592, 0
    %4855 = vmatpush.msra.mxu0 0.0
    %4856 = vmatpush.msra.mxu0 0.0
    %4857 = vmatpush.msra.mxu0 0.0
    %4858 = vmatpush.msra.mxu0 0.0
    %4859 = vmatpush.msra.mxu0 0.0
    %4860 = vmatpush.msra.mxu0 0.0
    %4861 = vmatpush.msra.mxu0 0.0
    %4862 = vmatpush.msra.mxu0 0.0
    %4863 = vmatpush.msra.mxu0 0.0
    %4864 = vmatpush.msra.mxu0 0.0
    %4865 = vmatpush.msra.mxu0 0.0
    %4866 = vmatpush.msra.mxu0 0.0
    %4867 = vmatpush.msra.mxu0 0.0
    %4868 = vmatpush.msra.mxu0 0.0
    %4869 = vmatpush.msra.mxu0 0.0
    %4870 = vmatpush.msra.mxu0 %v879
    %4871 = vmatmul.f32.gmra.mxu0 %v4853
    %v4872 = vpop.f32.mrf.mxu0
    %v4873 = vadd.f32 0.0, %v4872
    %4874 = vdwg.mxu0
    %v4876 = vsel %vm3945, %v4593, 0
    %4878 = vmatpush.msra.mxu0 0.0
    %4879 = vmatpush.msra.mxu0 0.0
    %4880 = vmatpush.msra.mxu0 0.0
    %4881 = vmatpush.msra.mxu0 0.0
    %4882 = vmatpush.msra.mxu0 0.0
    %4883 = vmatpush.msra.mxu0 0.0
    %4884 = vmatpush.msra.mxu0 0.0
    %4885 = vmatpush.msra.mxu0 0.0
    %4886 = vmatpush.msra.mxu0 0.0
    %4887 = vmatpush.msra.mxu0 0.0
    %4888 = vmatpush.msra.mxu0 0.0
    %4889 = vmatpush.msra.mxu0 0.0
    %4890 = vmatpush.msra.mxu0 0.0
    %4891 = vmatpush.msra.mxu0 0.0
    %4892 = vmatpush.msra.mxu0 0.0
    %4893 = vmatpush.msra.mxu0 %v880
    %4894 = vmatmul.f32.gmra.mxu0 %v4876
    %v4895 = vpop.f32.mrf.mxu0
    %v4896 = vadd.f32 0.0, %v4895
    %4897 = vdwg.mxu0
    %v4899 = vsel %vm3945, %v4594, 0
    %4901 = vmatpush.msra.mxu0 0.0
    %4902 = vmatpush.msra.mxu0 0.0
    %4903 = vmatpush.msra.mxu0 0.0
    %4904 = vmatpush.msra.mxu0 0.0
    %4905 = vmatpush.msra.mxu0 0.0
    %4906 = vmatpush.msra.mxu0 0.0
    %4907 = vmatpush.msra.mxu0 0.0
    %4908 = vmatpush.msra.mxu0 0.0
    %4909 = vmatpush.msra.mxu0 0.0
    %4910 = vmatpush.msra.mxu0 0.0
    %4911 = vmatpush.msra.mxu0 0.0
    %4912 = vmatpush.msra.mxu0 0.0
    %4913 = vmatpush.msra.mxu0 0.0
    %4914 = vmatpush.msra.mxu0 0.0
    %4915 = vmatpush.msra.mxu0 0.0
    %4916 = vmatpush.msra.mxu0 %v881
    %4917 = vmatmul.f32.gmra.mxu0 %v4899
    %v4918 = vpop.f32.mrf.mxu0
    %v4919 = vadd.f32 0.0, %v4918
    %4920 = vdwg.mxu0
    %v4922 = vsel %vm3945, %v4595, 0
    %4924 = vmatpush.msra.mxu0 0.0
    %4925 = vmatpush.msra.mxu0 0.0
    %4926 = vmatpush.msra.mxu0 0.0
    %4927 = vmatpush.msra.mxu0 0.0
    %4928 = vmatpush.msra.mxu0 0.0
    %4929 = vmatpush.msra.mxu0 0.0
    %4930 = vmatpush.msra.mxu0 0.0
    %4931 = vmatpush.msra.mxu0 0.0
    %4932 = vmatpush.msra.mxu0 0.0
    %4933 = vmatpush.msra.mxu0 0.0
    %4934 = vmatpush.msra.mxu0 0.0
    %4935 = vmatpush.msra.mxu0 0.0
    %4936 = vmatpush.msra.mxu0 0.0
    %4937 = vmatpush.msra.mxu0 0.0
    %4938 = vmatpush.msra.mxu0 0.0
    %4939 = vmatpush.msra.mxu0 %v882
    %4940 = vmatmul.f32.gmra.mxu0 %v4922
    %v4941 = vpop.f32.mrf.mxu0
    %v4942 = vadd.f32 0.0, %v4941
    %4943 = vdwg.mxu0
    %v4945 = vsel %vm3945, %v4596, 0
    %4947 = vmatpush.msra.mxu0 0.0
    %4948 = vmatpush.msra.mxu0 0.0
    %4949 = vmatpush.msra.mxu0 0.0
    %4950 = vmatpush.msra.mxu0 0.0
    %4951 = vmatpush.msra.mxu0 0.0
    %4952 = vmatpush.msra.mxu0 0.0
    %4953 = vmatpush.msra.mxu0 0.0
    %4954 = vmatpush.msra.mxu0 0.0
    %4955 = vmatpush.msra.mxu0 0.0
    %4956 = vmatpush.msra.mxu0 0.0
    %4957 = vmatpush.msra.mxu0 0.0
    %4958 = vmatpush.msra.mxu0 0.0
    %4959 = vmatpush.msra.mxu0 0.0
    %4960 = vmatpush.msra.mxu0 0.0
    %4961 = vmatpush.msra.mxu0 0.0
    %4962 = vmatpush.msra.mxu0 %v883
    %4963 = vmatmul.f32.gmra.mxu0 %v4945
    %v4964 = vpop.f32.mrf.mxu0
    %v4965 = vadd.f32 0.0, %v4964
    %4966 = vdwg.mxu0
    %v4968 = vsel %vm3945, %v4597, 0
    %4970 = vmatpush.msra.mxu0 0.0
    %4971 = vmatpush.msra.mxu0 0.0
    %4972 = vmatpush.msra.mxu0 0.0
    %4973 = vmatpush.msra.mxu0 0.0
    %4974 = vmatpush.msra.mxu0 0.0
    %4975 = vmatpush.msra.mxu0 0.0
    %4976 = vmatpush.msra.mxu0 0.0
    %4977 = vmatpush.msra.mxu0 0.0
    %4978 = vmatpush.msra.mxu0 0.0
    %4979 = vmatpush.msra.mxu0 0.0
    %4980 = vmatpush.msra.mxu0 0.0
    %4981 = vmatpush.msra.mxu0 0.0
    %4982 = vmatpush.msra.mxu0 0.0
    %4983 = vmatpush.msra.mxu0 0.0
    %4984 = vmatpush.msra.mxu0 0.0
    %4985 = vmatpush.msra.mxu0 %v884
    %4986 = vmatmul.f32.gmra.mxu0 %v4968
    %v4987 = vpop.f32.mrf.mxu0
    %v4988 = vadd.f32 0.0, %v4987
    %4989 = vdwg.mxu0
    %v4991 = vsel %vm3945, %v4598, 0
    %4993 = vmatpush.msra.mxu0 0.0
    %4994 = vmatpush.msra.mxu0 0.0
    %4995 = vmatpush.msra.mxu0 0.0
    %4996 = vmatpush.msra.mxu0 0.0
    %4997 = vmatpush.msra.mxu0 0.0
    %4998 = vmatpush.msra.mxu0 0.0
    %4999 = vmatpush.msra.mxu0 0.0
    %5000 = vmatpush.msra.mxu0 0.0
    %5001 = vmatpush.msra.mxu0 0.0
    %5002 = vmatpush.msra.mxu0 0.0
    %5003 = vmatpush.msra.mxu0 0.0
    %5004 = vmatpush.msra.mxu0 0.0
    %5005 = vmatpush.msra.mxu0 0.0
    %5006 = vmatpush.msra.mxu0 0.0
    %5007 = vmatpush.msra.mxu0 0.0
    %5008 = vmatpush.msra.mxu0 %v885
    %5009 = vmatmul.f32.gmra.mxu0 %v4991
    %v5010 = vpop.f32.mrf.mxu0
    %v5011 = vadd.f32 0.0, %v5010
    %5012 = vdwg.mxu0
    %v5014 = vsel %vm3945, %v4599, 0
    %5016 = vmatpush.msra.mxu0 0.0
    %5017 = vmatpush.msra.mxu0 0.0
    %5018 = vmatpush.msra.mxu0 0.0
    %5019 = vmatpush.msra.mxu0 0.0
    %5020 = vmatpush.msra.mxu0 0.0
    %5021 = vmatpush.msra.mxu0 0.0
    %5022 = vmatpush.msra.mxu0 0.0
    %5023 = vmatpush.msra.mxu0 0.0
    %5024 = vmatpush.msra.mxu0 0.0
    %5025 = vmatpush.msra.mxu0 0.0
    %5026 = vmatpush.msra.mxu0 0.0
    %5027 = vmatpush.msra.mxu0 0.0
    %5028 = vmatpush.msra.mxu0 0.0
    %5029 = vmatpush.msra.mxu0 0.0
    %5030 = vmatpush.msra.mxu0 0.0
    %5031 = vmatpush.msra.mxu0 %v886
    %5032 = vmatmul.f32.gmra.mxu0 %v5014
    %v5033 = vpop.f32.mrf.mxu0
    %v5034 = vadd.f32 0.0, %v5033
    %5035 = vdwg.mxu0
    %v5037 = vsel %vm3945, %v4600, 0
    %5039 = vmatpush.msra.mxu0 0.0
    %5040 = vmatpush.msra.mxu0 0.0
    %5041 = vmatpush.msra.mxu0 0.0
    %5042 = vmatpush.msra.mxu0 0.0
    %5043 = vmatpush.msra.mxu0 0.0
    %5044 = vmatpush.msra.mxu0 0.0
    %5045 = vmatpush.msra.mxu0 0.0
    %5046 = vmatpush.msra.mxu0 0.0
    %5047 = vmatpush.msra.mxu0 0.0
    %5048 = vmatpush.msra.mxu0 0.0
    %5049 = vmatpush.msra.mxu0 0.0
    %5050 = vmatpush.msra.mxu0 0.0
    %5051 = vmatpush.msra.mxu0 0.0
    %5052 = vmatpush.msra.mxu0 0.0
    %5053 = vmatpush.msra.mxu0 0.0
    %5054 = vmatpush.msra.mxu0 %v887
    %5055 = vmatmul.f32.gmra.mxu0 %v5037
    %v5056 = vpop.f32.mrf.mxu0
    %v5057 = vadd.f32 0.0, %v5056
    %5058 = vdwg.mxu0
    %v5060 = vsel %vm3945, %v4601, 0
    %5062 = vmatpush.msra.mxu0 0.0
    %5063 = vmatpush.msra.mxu0 0.0
    %5064 = vmatpush.msra.mxu0 0.0
    %5065 = vmatpush.msra.mxu0 0.0
    %5066 = vmatpush.msra.mxu0 0.0
    %5067 = vmatpush.msra.mxu0 0.0
    %5068 = vmatpush.msra.mxu0 0.0
    %5069 = vmatpush.msra.mxu0 0.0
    %5070 = vmatpush.msra.mxu0 0.0
    %5071 = vmatpush.msra.mxu0 0.0
    %5072 = vmatpush.msra.mxu0 0.0
    %5073 = vmatpush.msra.mxu0 0.0
    %5074 = vmatpush.msra.mxu0 0.0
    %5075 = vmatpush.msra.mxu0 0.0
    %5076 = vmatpush.msra.mxu0 0.0
    %5077 = vmatpush.msra.mxu0 %v888
    %5078 = vmatmul.f32.gmra.mxu0 %v5060
    %v5079 = vpop.f32.mrf.mxu0
    %v5080 = vadd.f32 0.0, %v5079
    %5081 = vdwg.mxu0
    %v5083 = vsel %vm3945, %v4602, 0
    %5085 = vmatpush.msra.mxu0 0.0
    %5086 = vmatpush.msra.mxu0 0.0
    %5087 = vmatpush.msra.mxu0 0.0
    %5088 = vmatpush.msra.mxu0 0.0
    %5089 = vmatpush.msra.mxu0 0.0
    %5090 = vmatpush.msra.mxu0 0.0
    %5091 = vmatpush.msra.mxu0 0.0
    %5092 = vmatpush.msra.mxu0 0.0
    %5093 = vmatpush.msra.mxu0 0.0
    %5094 = vmatpush.msra.mxu0 0.0
    %5095 = vmatpush.msra.mxu0 0.0
    %5096 = vmatpush.msra.mxu0 0.0
    %5097 = vmatpush.msra.mxu0 0.0
    %5098 = vmatpush.msra.mxu0 0.0
    %5099 = vmatpush.msra.mxu0 0.0
    %5100 = vmatpush.msra.mxu0 %v889
    %5101 = vmatmul.f32.gmra.mxu0 %v5083
    %v5102 = vpop.f32.mrf.mxu0
    %v5103 = vadd.f32 0.0, %v5102
    %5104 = vdwg.mxu0
    %v5106 = vsel %vm3945, %v4603, 0
    %5108 = vmatpush.msra.mxu0 0.0
    %5109 = vmatpush.msra.mxu0 0.0
    %5110 = vmatpush.msra.mxu0 0.0
    %5111 = vmatpush.msra.mxu0 0.0
    %5112 = vmatpush.msra.mxu0 0.0
    %5113 = vmatpush.msra.mxu0 0.0
    %5114 = vmatpush.msra.mxu0 0.0
    %5115 = vmatpush.msra.mxu0 0.0
    %5116 = vmatpush.msra.mxu0 0.0
    %5117 = vmatpush.msra.mxu0 0.0
    %5118 = vmatpush.msra.mxu0 0.0
    %5119 = vmatpush.msra.mxu0 0.0
    %5120 = vmatpush.msra.mxu0 0.0
    %5121 = vmatpush.msra.mxu0 0.0
    %5122 = vmatpush.msra.mxu0 0.0
    %5123 = vmatpush.msra.mxu0 %v890
    %5124 = vmatmul.f32.gmra.mxu0 %v5106
    %v5125 = vpop.f32.mrf.mxu0
    %v5126 = vadd.f32 0.0, %v5125
    %5127 = vdwg.mxu0
    %v5129 = vsel %vm3945, %v4604, 0
    %5131 = vmatpush.msra.mxu0 0.0
    %5132 = vmatpush.msra.mxu0 0.0
    %5133 = vmatpush.msra.mxu0 0.0
    %5134 = vmatpush.msra.mxu0 0.0
    %5135 = vmatpush.msra.mxu0 0.0
    %5136 = vmatpush.msra.mxu0 0.0
    %5137 = vmatpush.msra.mxu0 0.0
    %5138 = vmatpush.msra.mxu0 0.0
    %5139 = vmatpush.msra.mxu0 0.0
    %5140 = vmatpush.msra.mxu0 0.0
    %5141 = vmatpush.msra.mxu0 0.0
    %5142 = vmatpush.msra.mxu0 0.0
    %5143 = vmatpush.msra.mxu0 0.0
    %5144 = vmatpush.msra.mxu0 0.0
    %5145 = vmatpush.msra.mxu0 0.0
    %5146 = vmatpush.msra.mxu0 %v891
    %5147 = vmatmul.f32.gmra.mxu0 %v5129
    %v5148 = vpop.f32.mrf.mxu0
    %v5149 = vadd.f32 0.0, %v5148
    %5150 = vdwg.mxu0
    %v5152 = vsel %vm3945, %v4605, 0
    %5154 = vmatpush.msra.mxu0 0.0
    %5155 = vmatpush.msra.mxu0 0.0
    %5156 = vmatpush.msra.mxu0 0.0
    %5157 = vmatpush.msra.mxu0 0.0
    %5158 = vmatpush.msra.mxu0 0.0
    %5159 = vmatpush.msra.mxu0 0.0
    %5160 = vmatpush.msra.mxu0 0.0
    %5161 = vmatpush.msra.mxu0 0.0
    %5162 = vmatpush.msra.mxu0 0.0
    %5163 = vmatpush.msra.mxu0 0.0
    %5164 = vmatpush.msra.mxu0 0.0
    %5165 = vmatpush.msra.mxu0 0.0
    %5166 = vmatpush.msra.mxu0 0.0
    %5167 = vmatpush.msra.mxu0 0.0
    %5168 = vmatpush.msra.mxu0 0.0
    %5169 = vmatpush.msra.mxu0 %v892
    %5170 = vmatmul.f32.gmra.mxu0 %v5152
    %v5171 = vpop.f32.mrf.mxu0
    %v5172 = vadd.f32 0.0, %v5171
    %5173 = vdwg.mxu0
    %v5175 = vsel %vm3945, %v4606, 0
    %5177 = vmatpush.msra.mxu0 0.0
    %5178 = vmatpush.msra.mxu0 0.0
    %5179 = vmatpush.msra.mxu0 0.0
    %5180 = vmatpush.msra.mxu0 0.0
    %5181 = vmatpush.msra.mxu0 0.0
    %5182 = vmatpush.msra.mxu0 0.0
    %5183 = vmatpush.msra.mxu0 0.0
    %5184 = vmatpush.msra.mxu0 0.0
    %5185 = vmatpush.msra.mxu0 0.0
    %5186 = vmatpush.msra.mxu0 0.0
    %5187 = vmatpush.msra.mxu0 0.0
    %5188 = vmatpush.msra.mxu0 0.0
    %5189 = vmatpush.msra.mxu0 0.0
    %5190 = vmatpush.msra.mxu0 0.0
    %5191 = vmatpush.msra.mxu0 0.0
    %5192 = vmatpush.msra.mxu0 %v893
    %5193 = vmatmul.f32.gmra.mxu0 %v5175
    %v5194 = vpop.f32.mrf.mxu0
    %v5195 = vadd.f32 0.0, %v5194
    %5196 = vdwg.mxu0
    %v5198 = vsel %vm3945, %v4607, 0
    %5200 = vmatpush.msra.mxu0 0.0
    %5201 = vmatpush.msra.mxu0 0.0
    %5202 = vmatpush.msra.mxu0 0.0
    %5203 = vmatpush.msra.mxu0 0.0
    %5204 = vmatpush.msra.mxu0 0.0
    %5205 = vmatpush.msra.mxu0 0.0
    %5206 = vmatpush.msra.mxu0 0.0
    %5207 = vmatpush.msra.mxu0 0.0
    %5208 = vmatpush.msra.mxu0 0.0
    %5209 = vmatpush.msra.mxu0 0.0
    %5210 = vmatpush.msra.mxu0 0.0
    %5211 = vmatpush.msra.mxu0 0.0
    %5212 = vmatpush.msra.mxu0 0.0
    %5213 = vmatpush.msra.mxu0 0.0
    %5214 = vmatpush.msra.mxu0 0.0
    %5215 = vmatpush.msra.mxu0 %v894
    %5216 = vmatmul.f32.gmra.mxu0 %v5198
    %v5217 = vpop.f32.mrf.mxu0
    %v5218 = vadd.f32 0.0, %v5217
    %5219 = vdwg.mxu0
    %v5221 = vsel %vm3945, %v4608, 0
    %5223 = vmatpush.msra.mxu0 0.0
    %5224 = vmatpush.msra.mxu0 0.0
    %5225 = vmatpush.msra.mxu0 0.0
    %5226 = vmatpush.msra.mxu0 0.0
    %5227 = vmatpush.msra.mxu0 0.0
    %5228 = vmatpush.msra.mxu0 0.0
    %5229 = vmatpush.msra.mxu0 0.0
    %5230 = vmatpush.msra.mxu0 0.0
    %5231 = vmatpush.msra.mxu0 0.0
    %5232 = vmatpush.msra.mxu0 0.0
    %5233 = vmatpush.msra.mxu0 0.0
    %5234 = vmatpush.msra.mxu0 0.0
    %5235 = vmatpush.msra.mxu0 0.0
    %5236 = vmatpush.msra.mxu0 0.0
    %5237 = vmatpush.msra.mxu0 0.0
    %5238 = vmatpush.msra.mxu0 %v895
    %5239 = vmatmul.f32.gmra.mxu0 %v5221
    %v5240 = vpop.f32.mrf.mxu0
    %v5241 = vadd.f32 0.0, %v5240
    %5242 = vdwg.mxu0
    %v5244 = vsel %vm3945, %v4609, 0
    %5246 = vmatpush.msra.mxu0 0.0
    %5247 = vmatpush.msra.mxu0 0.0
    %5248 = vmatpush.msra.mxu0 0.0
    %5249 = vmatpush.msra.mxu0 0.0
    %5250 = vmatpush.msra.mxu0 0.0
    %5251 = vmatpush.msra.mxu0 0.0
    %5252 = vmatpush.msra.mxu0 0.0
    %5253 = vmatpush.msra.mxu0 0.0
    %5254 = vmatpush.msra.mxu0 0.0
    %5255 = vmatpush.msra.mxu0 0.0
    %5256 = vmatpush.msra.mxu0 0.0
    %5257 = vmatpush.msra.mxu0 0.0
    %5258 = vmatpush.msra.mxu0 0.0
    %5259 = vmatpush.msra.mxu0 0.0
    %5260 = vmatpush.msra.mxu0 0.0
    %5261 = vmatpush.msra.mxu0 %v896
    %5262 = vmatmul.f32.gmra.mxu0 %v5244
    %v5263 = vpop.f32.mrf.mxu0
    %v5264 = vadd.f32 0.0, %v5263
    %5265 = vdwg.mxu0
    %v5267 = vsel %vm3945, %v4610, 0
    %5269 = vmatpush.msra.mxu0 0.0
    %5270 = vmatpush.msra.mxu0 0.0
    %5271 = vmatpush.msra.mxu0 0.0
    %5272 = vmatpush.msra.mxu0 0.0
    %5273 = vmatpush.msra.mxu0 0.0
    %5274 = vmatpush.msra.mxu0 0.0
    %5275 = vmatpush.msra.mxu0 0.0
    %5276 = vmatpush.msra.mxu0 0.0
    %5277 = vmatpush.msra.mxu0 0.0
    %5278 = vmatpush.msra.mxu0 0.0
    %5279 = vmatpush.msra.mxu0 0.0
    %5280 = vmatpush.msra.mxu0 0.0
    %5281 = vmatpush.msra.mxu0 0.0
    %5282 = vmatpush.msra.mxu0 0.0
    %5283 = vmatpush.msra.mxu0 0.0
    %5284 = vmatpush.msra.mxu0 %v897
    %5285 = vmatmul.f32.gmra.mxu0 %v5267
    %v5286 = vpop.f32.mrf.mxu0
    %v5287 = vadd.f32 0.0, %v5286
    %5288 = vdwg.mxu0
    %v5290 = vsel %vm3945, %v4611, 0
    %5292 = vmatpush.msra.mxu0 0.0
    %5293 = vmatpush.msra.mxu0 0.0
    %5294 = vmatpush.msra.mxu0 0.0
    %5295 = vmatpush.msra.mxu0 0.0
    %5296 = vmatpush.msra.mxu0 0.0
    %5297 = vmatpush.msra.mxu0 0.0
    %5298 = vmatpush.msra.mxu0 0.0
    %5299 = vmatpush.msra.mxu0 0.0
    %5300 = vmatpush.msra.mxu0 0.0
    %5301 = vmatpush.msra.mxu0 0.0
    %5302 = vmatpush.msra.mxu0 0.0
    %5303 = vmatpush.msra.mxu0 0.0
    %5304 = vmatpush.msra.mxu0 0.0
    %5305 = vmatpush.msra.mxu0 0.0
    %5306 = vmatpush.msra.mxu0 0.0
    %5307 = vmatpush.msra.mxu0 %v898
    %5308 = vmatmul.f32.gmra.mxu0 %v5290
    %v5309 = vpop.f32.mrf.mxu0
    %v5310 = vadd.f32 0.0, %v5309
    %5311 = vdwg.mxu0
    %v5313 = vsel %vm3945, %v4612, 0
    %5315 = vmatpush.msra.mxu0 0.0
    %5316 = vmatpush.msra.mxu0 0.0
    %5317 = vmatpush.msra.mxu0 0.0
    %5318 = vmatpush.msra.mxu0 0.0
    %5319 = vmatpush.msra.mxu0 0.0
    %5320 = vmatpush.msra.mxu0 0.0
    %5321 = vmatpush.msra.mxu0 0.0
    %5322 = vmatpush.msra.mxu0 0.0
    %5323 = vmatpush.msra.mxu0 0.0
    %5324 = vmatpush.msra.mxu0 0.0
    %5325 = vmatpush.msra.mxu0 0.0
    %5326 = vmatpush.msra.mxu0 0.0
    %5327 = vmatpush.msra.mxu0 0.0
    %5328 = vmatpush.msra.mxu0 0.0
    %5329 = vmatpush.msra.mxu0 0.0
    %5330 = vmatpush.msra.mxu0 %v899
    %5331 = vmatmul.f32.gmra.mxu0 %v5313
    %v5332 = vpop.f32.mrf.mxu0
    %v5333 = vadd.f32 0.0, %v5332
    %5334 = vdwg.mxu0
    %v5336 = vsel %vm3945, %v4613, 0
    %5338 = vmatpush.msra.mxu0 0.0
    %5339 = vmatpush.msra.mxu0 0.0
    %5340 = vmatpush.msra.mxu0 0.0
    %5341 = vmatpush.msra.mxu0 0.0
    %5342 = vmatpush.msra.mxu0 0.0
    %5343 = vmatpush.msra.mxu0 0.0
    %5344 = vmatpush.msra.mxu0 0.0
    %5345 = vmatpush.msra.mxu0 0.0
    %5346 = vmatpush.msra.mxu0 0.0
    %5347 = vmatpush.msra.mxu0 0.0
    %5348 = vmatpush.msra.mxu0 0.0
    %5349 = vmatpush.msra.mxu0 0.0
    %5350 = vmatpush.msra.mxu0 0.0
    %5351 = vmatpush.msra.mxu0 0.0
    %5352 = vmatpush.msra.mxu0 0.0
    %5353 = vmatpush.msra.mxu0 %v900
    %5354 = vmatmul.f32.gmra.mxu0 %v5336
    %v5355 = vpop.f32.mrf.mxu0
    %v5356 = vadd.f32 0.0, %v5355
    %5357 = vdwg.mxu0
    %v5359 = vsel %vm3945, %v4614, 0
    %5361 = vmatpush.msra.mxu0 0.0
    %5362 = vmatpush.msra.mxu0 0.0
    %5363 = vmatpush.msra.mxu0 0.0
    %5364 = vmatpush.msra.mxu0 0.0
    %5365 = vmatpush.msra.mxu0 0.0
    %5366 = vmatpush.msra.mxu0 0.0
    %5367 = vmatpush.msra.mxu0 0.0
    %5368 = vmatpush.msra.mxu0 0.0
    %5369 = vmatpush.msra.mxu0 0.0
    %5370 = vmatpush.msra.mxu0 0.0
    %5371 = vmatpush.msra.mxu0 0.0
    %5372 = vmatpush.msra.mxu0 0.0
    %5373 = vmatpush.msra.mxu0 0.0
    %5374 = vmatpush.msra.mxu0 0.0
    %5375 = vmatpush.msra.mxu0 0.0
    %5376 = vmatpush.msra.mxu0 %v901
    %5377 = vmatmul.f32.gmra.mxu0 %v5359
    %v5378 = vpop.f32.mrf.mxu0
    %v5379 = vadd.f32 0.0, %v5378
    %5380 = vdwg.mxu0
    %v5382 = vsel %vm3945, %v4615, 0
    %5384 = vmatpush.msra.mxu0 0.0
    %5385 = vmatpush.msra.mxu0 0.0
    %5386 = vmatpush.msra.mxu0 0.0
    %5387 = vmatpush.msra.mxu0 0.0
    %5388 = vmatpush.msra.mxu0 0.0
    %5389 = vmatpush.msra.mxu0 0.0
    %5390 = vmatpush.msra.mxu0 0.0
    %5391 = vmatpush.msra.mxu0 0.0
    %5392 = vmatpush.msra.mxu0 0.0
    %5393 = vmatpush.msra.mxu0 0.0
    %5394 = vmatpush.msra.mxu0 0.0
    %5395 = vmatpush.msra.mxu0 0.0
    %5396 = vmatpush.msra.mxu0 0.0
    %5397 = vmatpush.msra.mxu0 0.0
    %5398 = vmatpush.msra.mxu0 0.0
    %5399 = vmatpush.msra.mxu0 %v902
    %5400 = vmatmul.f32.gmra.mxu0 %v5382
    %v5401 = vpop.f32.mrf.mxu0
    %v5402 = vadd.f32 0.0, %v5401
    %5403 = vdwg.mxu0
    %v5405 = vsel %vm3945, %v4616, 0
    %5407 = vmatpush.msra.mxu0 0.0
    %5408 = vmatpush.msra.mxu0 0.0
    %5409 = vmatpush.msra.mxu0 0.0
    %5410 = vmatpush.msra.mxu0 0.0
    %5411 = vmatpush.msra.mxu0 0.0
    %5412 = vmatpush.msra.mxu0 0.0
    %5413 = vmatpush.msra.mxu0 0.0
    %5414 = vmatpush.msra.mxu0 0.0
    %5415 = vmatpush.msra.mxu0 0.0
    %5416 = vmatpush.msra.mxu0 0.0
    %5417 = vmatpush.msra.mxu0 0.0
    %5418 = vmatpush.msra.mxu0 0.0
    %5419 = vmatpush.msra.mxu0 0.0
    %5420 = vmatpush.msra.mxu0 0.0
    %5421 = vmatpush.msra.mxu0 0.0
    %5422 = vmatpush.msra.mxu0 %v903
    %5423 = vmatmul.f32.gmra.mxu0 %v5405
    %v5424 = vpop.f32.mrf.mxu0
    %v5425 = vadd.f32 0.0, %v5424
    %5426 = vdwg.mxu0
    %v5428 = vsel %vm3945, %v4617, 0
    %5430 = vmatpush.msra.mxu0 0.0
    %5431 = vmatpush.msra.mxu0 0.0
    %5432 = vmatpush.msra.mxu0 0.0
    %5433 = vmatpush.msra.mxu0 0.0
    %5434 = vmatpush.msra.mxu0 0.0
    %5435 = vmatpush.msra.mxu0 0.0
    %5436 = vmatpush.msra.mxu0 0.0
    %5437 = vmatpush.msra.mxu0 0.0
    %5438 = vmatpush.msra.mxu0 0.0
    %5439 = vmatpush.msra.mxu0 0.0
    %5440 = vmatpush.msra.mxu0 0.0
    %5441 = vmatpush.msra.mxu0 0.0
    %5442 = vmatpush.msra.mxu0 0.0
    %5443 = vmatpush.msra.mxu0 0.0
    %5444 = vmatpush.msra.mxu0 0.0
    %5445 = vmatpush.msra.mxu0 %v904
    %5446 = vmatmul.f32.gmra.mxu0 %v5428
    %v5447 = vpop.f32.mrf.mxu0
    %v5448 = vadd.f32 0.0, %v5447
    %5449 = vdwg.mxu0
    %v5451 = vsel %vm3945, %v4618, 0
    %5453 = vmatpush.msra.mxu0 0.0
    %5454 = vmatpush.msra.mxu0 0.0
    %5455 = vmatpush.msra.mxu0 0.0
    %5456 = vmatpush.msra.mxu0 0.0
    %5457 = vmatpush.msra.mxu0 0.0
    %5458 = vmatpush.msra.mxu0 0.0
    %5459 = vmatpush.msra.mxu0 0.0
    %5460 = vmatpush.msra.mxu0 0.0
    %5461 = vmatpush.msra.mxu0 0.0
    %5462 = vmatpush.msra.mxu0 0.0
    %5463 = vmatpush.msra.mxu0 0.0
    %5464 = vmatpush.msra.mxu0 0.0
    %5465 = vmatpush.msra.mxu0 0.0
    %5466 = vmatpush.msra.mxu0 0.0
    %5467 = vmatpush.msra.mxu0 0.0
    %5468 = vmatpush.msra.mxu0 %v905
    %5469 = vmatmul.f32.gmra.mxu0 %v5451
    %v5470 = vpop.f32.mrf.mxu0
    %v5471 = vadd.f32 0.0, %v5470
    %5472 = vdwg.mxu0
    %v5474 = vsel %vm3945, %v4619, 0
    %5476 = vmatpush.msra.mxu0 0.0
    %5477 = vmatpush.msra.mxu0 0.0
    %5478 = vmatpush.msra.mxu0 0.0
    %5479 = vmatpush.msra.mxu0 0.0
    %5480 = vmatpush.msra.mxu0 0.0
    %5481 = vmatpush.msra.mxu0 0.0
    %5482 = vmatpush.msra.mxu0 0.0
    %5483 = vmatpush.msra.mxu0 0.0
    %5484 = vmatpush.msra.mxu0 0.0
    %5485 = vmatpush.msra.mxu0 0.0
    %5486 = vmatpush.msra.mxu0 0.0
    %5487 = vmatpush.msra.mxu0 0.0
    %5488 = vmatpush.msra.mxu0 0.0
    %5489 = vmatpush.msra.mxu0 0.0
    %5490 = vmatpush.msra.mxu0 0.0
    %5491 = vmatpush.msra.mxu0 %v906
    %5492 = vmatmul.f32.gmra.mxu0 %v5474
    %v5493 = vpop.f32.mrf.mxu0
    %v5494 = vadd.f32 0.0, %v5493
    %5495 = vdwg.mxu0
    %v5497 = vsel %vm3945, %v4620, 0
    %5499 = vmatpush.msra.mxu0 0.0
    %5500 = vmatpush.msra.mxu0 0.0
    %5501 = vmatpush.msra.mxu0 0.0
    %5502 = vmatpush.msra.mxu0 0.0
    %5503 = vmatpush.msra.mxu0 0.0
    %5504 = vmatpush.msra.mxu0 0.0
    %5505 = vmatpush.msra.mxu0 0.0
    %5506 = vmatpush.msra.mxu0 0.0
    %5507 = vmatpush.msra.mxu0 0.0
    %5508 = vmatpush.msra.mxu0 0.0
    %5509 = vmatpush.msra.mxu0 0.0
    %5510 = vmatpush.msra.mxu0 0.0
    %5511 = vmatpush.msra.mxu0 0.0
    %5512 = vmatpush.msra.mxu0 0.0
    %5513 = vmatpush.msra.mxu0 0.0
    %5514 = vmatpush.msra.mxu0 %v907
    %5515 = vmatmul.f32.gmra.mxu0 %v5497
    %v5516 = vpop.f32.mrf.mxu0
    %v5517 = vadd.f32 0.0, %v5516
    %5518 = vdwg.mxu0
    %v5520 = vsel %vm3945, %v4621, 0
    %5522 = vmatpush.msra.mxu0 0.0
    %5523 = vmatpush.msra.mxu0 0.0
    %5524 = vmatpush.msra.mxu0 0.0
    %5525 = vmatpush.msra.mxu0 0.0
    %5526 = vmatpush.msra.mxu0 0.0
    %5527 = vmatpush.msra.mxu0 0.0
    %5528 = vmatpush.msra.mxu0 0.0
    %5529 = vmatpush.msra.mxu0 0.0
    %5530 = vmatpush.msra.mxu0 0.0
    %5531 = vmatpush.msra.mxu0 0.0
    %5532 = vmatpush.msra.mxu0 0.0
    %5533 = vmatpush.msra.mxu0 0.0
    %5534 = vmatpush.msra.mxu0 0.0
    %5535 = vmatpush.msra.mxu0 0.0
    %5536 = vmatpush.msra.mxu0 0.0
    %5537 = vmatpush.msra.mxu0 %v908
    %5538 = vmatmul.f32.gmra.mxu0 %v5520
    %v5539 = vpop.f32.mrf.mxu0
    %v5540 = vadd.f32 0.0, %v5539
    %5541 = vdwg.mxu0
    %v5543 = vsel %vm3945, %v4622, 0
    %5545 = vmatpush.msra.mxu0 0.0
    %5546 = vmatpush.msra.mxu0 0.0
    %5547 = vmatpush.msra.mxu0 0.0
    %5548 = vmatpush.msra.mxu0 0.0
    %5549 = vmatpush.msra.mxu0 0.0
    %5550 = vmatpush.msra.mxu0 0.0
    %5551 = vmatpush.msra.mxu0 0.0
    %5552 = vmatpush.msra.mxu0 0.0
    %5553 = vmatpush.msra.mxu0 0.0
    %5554 = vmatpush.msra.mxu0 0.0
    %5555 = vmatpush.msra.mxu0 0.0
    %5556 = vmatpush.msra.mxu0 0.0
    %5557 = vmatpush.msra.mxu0 0.0
    %5558 = vmatpush.msra.mxu0 0.0
    %5559 = vmatpush.msra.mxu0 0.0
    %5560 = vmatpush.msra.mxu0 %v909
    %5561 = vmatmul.f32.gmra.mxu0 %v5543
    %v5562 = vpop.f32.mrf.mxu0
    %v5563 = vadd.f32 0.0, %v5562
    %5564 = vdwg.mxu0
    %v5566 = vsel %vm3945, %v4623, 0
    %5568 = vmatpush.msra.mxu0 0.0
    %5569 = vmatpush.msra.mxu0 0.0
    %5570 = vmatpush.msra.mxu0 0.0
    %5571 = vmatpush.msra.mxu0 0.0
    %5572 = vmatpush.msra.mxu0 0.0
    %5573 = vmatpush.msra.mxu0 0.0
    %5574 = vmatpush.msra.mxu0 0.0
    %5575 = vmatpush.msra.mxu0 0.0
    %5576 = vmatpush.msra.mxu0 0.0
    %5577 = vmatpush.msra.mxu0 0.0
    %5578 = vmatpush.msra.mxu0 0.0
    %5579 = vmatpush.msra.mxu0 0.0
    %5580 = vmatpush.msra.mxu0 0.0
    %5581 = vmatpush.msra.mxu0 0.0
    %5582 = vmatpush.msra.mxu0 0.0
    %5583 = vmatpush.msra.mxu0 %v910
    %5584 = vmatmul.f32.gmra.mxu0 %v5566
    %v5585 = vpop.f32.mrf.mxu0
    %v5586 = vadd.f32 0.0, %v5585
    %5587 = vdwg.mxu0
    %v5589 = vsel %vm3945, %v4624, 0
    %5591 = vmatpush.msra.mxu0 0.0
    %5592 = vmatpush.msra.mxu0 0.0
    %5593 = vmatpush.msra.mxu0 0.0
    %5594 = vmatpush.msra.mxu0 0.0
    %5595 = vmatpush.msra.mxu0 0.0
    %5596 = vmatpush.msra.mxu0 0.0
    %5597 = vmatpush.msra.mxu0 0.0
    %5598 = vmatpush.msra.mxu0 0.0
    %5599 = vmatpush.msra.mxu0 0.0
    %5600 = vmatpush.msra.mxu0 0.0
    %5601 = vmatpush.msra.mxu0 0.0
    %5602 = vmatpush.msra.mxu0 0.0
    %5603 = vmatpush.msra.mxu0 0.0
    %5604 = vmatpush.msra.mxu0 0.0
    %5605 = vmatpush.msra.mxu0 0.0
    %5606 = vmatpush.msra.mxu0 %v911
    %5607 = vmatmul.f32.gmra.mxu0 %v5589
    %v5608 = vpop.f32.mrf.mxu0
    %v5609 = vadd.f32 0.0, %v5608
    %5610 = vdwg.mxu0
    %v5612 = vsel %vm3945, %v4625, 0
    %5614 = vmatpush.msra.mxu0 0.0
    %5615 = vmatpush.msra.mxu0 0.0
    %5616 = vmatpush.msra.mxu0 0.0
    %5617 = vmatpush.msra.mxu0 0.0
    %5618 = vmatpush.msra.mxu0 0.0
    %5619 = vmatpush.msra.mxu0 0.0
    %5620 = vmatpush.msra.mxu0 0.0
    %5621 = vmatpush.msra.mxu0 0.0
    %5622 = vmatpush.msra.mxu0 0.0
    %5623 = vmatpush.msra.mxu0 0.0
    %5624 = vmatpush.msra.mxu0 0.0
    %5625 = vmatpush.msra.mxu0 0.0
    %5626 = vmatpush.msra.mxu0 0.0
    %5627 = vmatpush.msra.mxu0 0.0
    %5628 = vmatpush.msra.mxu0 0.0
    %5629 = vmatpush.msra.mxu0 %v912
    %5630 = vmatmul.f32.gmra.mxu0 %v5612
    %v5631 = vpop.f32.mrf.mxu0
    %v5632 = vadd.f32 0.0, %v5631
    %5633 = vdwg.mxu0
    %v5635 = vsel %vm3945, %v4626, 0
    %5637 = vmatpush.msra.mxu0 0.0
    %5638 = vmatpush.msra.mxu0 0.0
    %5639 = vmatpush.msra.mxu0 0.0
    %5640 = vmatpush.msra.mxu0 0.0
    %5641 = vmatpush.msra.mxu0 0.0
    %5642 = vmatpush.msra.mxu0 0.0
    %5643 = vmatpush.msra.mxu0 0.0
    %5644 = vmatpush.msra.mxu0 0.0
    %5645 = vmatpush.msra.mxu0 0.0
    %5646 = vmatpush.msra.mxu0 0.0
    %5647 = vmatpush.msra.mxu0 0.0
    %5648 = vmatpush.msra.mxu0 0.0
    %5649 = vmatpush.msra.mxu0 0.0
    %5650 = vmatpush.msra.mxu0 0.0
    %5651 = vmatpush.msra.mxu0 0.0
    %5652 = vmatpush.msra.mxu0 %v913
    %5653 = vmatmul.f32.gmra.mxu0 %v5635
    %v5654 = vpop.f32.mrf.mxu0
    %v5655 = vadd.f32 0.0, %v5654
    %5656 = vdwg.mxu0
    %v5658 = vsel %vm3945, %v4627, 0
    %5660 = vmatpush.msra.mxu0 0.0
    %5661 = vmatpush.msra.mxu0 0.0
    %5662 = vmatpush.msra.mxu0 0.0
    %5663 = vmatpush.msra.mxu0 0.0
    %5664 = vmatpush.msra.mxu0 0.0
    %5665 = vmatpush.msra.mxu0 0.0
    %5666 = vmatpush.msra.mxu0 0.0
    %5667 = vmatpush.msra.mxu0 0.0
    %5668 = vmatpush.msra.mxu0 0.0
    %5669 = vmatpush.msra.mxu0 0.0
    %5670 = vmatpush.msra.mxu0 0.0
    %5671 = vmatpush.msra.mxu0 0.0
    %5672 = vmatpush.msra.mxu0 0.0
    %5673 = vmatpush.msra.mxu0 0.0
    %5674 = vmatpush.msra.mxu0 0.0
    %5675 = vmatpush.msra.mxu0 %v914
    %5676 = vmatmul.f32.gmra.mxu0 %v5658
    %v5677 = vpop.f32.mrf.mxu0
    %v5678 = vadd.f32 0.0, %v5677
    %5679 = vdwg.mxu0
    %v5681 = vsel %vm3945, %v4628, 0
    %5683 = vmatpush.msra.mxu0 0.0
    %5684 = vmatpush.msra.mxu0 0.0
    %5685 = vmatpush.msra.mxu0 0.0
    %5686 = vmatpush.msra.mxu0 0.0
    %5687 = vmatpush.msra.mxu0 0.0
    %5688 = vmatpush.msra.mxu0 0.0
    %5689 = vmatpush.msra.mxu0 0.0
    %5690 = vmatpush.msra.mxu0 0.0
    %5691 = vmatpush.msra.mxu0 0.0
    %5692 = vmatpush.msra.mxu0 0.0
    %5693 = vmatpush.msra.mxu0 0.0
    %5694 = vmatpush.msra.mxu0 0.0
    %5695 = vmatpush.msra.mxu0 0.0
    %5696 = vmatpush.msra.mxu0 0.0
    %5697 = vmatpush.msra.mxu0 0.0
    %5698 = vmatpush.msra.mxu0 %v915
    %5699 = vmatmul.f32.gmra.mxu0 %v5681
    %v5700 = vpop.f32.mrf.mxu0
    %v5701 = vadd.f32 0.0, %v5700
    %5702 = vdwg.mxu0
    %v5704 = vsel %vm3945, %v4629, 0
    %5706 = vmatpush.msra.mxu0 0.0
    %5707 = vmatpush.msra.mxu0 0.0
    %5708 = vmatpush.msra.mxu0 0.0
    %5709 = vmatpush.msra.mxu0 0.0
    %5710 = vmatpush.msra.mxu0 0.0
    %5711 = vmatpush.msra.mxu0 0.0
    %5712 = vmatpush.msra.mxu0 0.0
    %5713 = vmatpush.msra.mxu0 0.0
    %5714 = vmatpush.msra.mxu0 0.0
    %5715 = vmatpush.msra.mxu0 0.0
    %5716 = vmatpush.msra.mxu0 0.0
    %5717 = vmatpush.msra.mxu0 0.0
    %5718 = vmatpush.msra.mxu0 0.0
    %5719 = vmatpush.msra.mxu0 0.0
    %5720 = vmatpush.msra.mxu0 0.0
    %5721 = vmatpush.msra.mxu0 %v916
    %5722 = vmatmul.f32.gmra.mxu0 %v5704
    %v5723 = vpop.f32.mrf.mxu0
    %v5724 = vadd.f32 0.0, %v5723
    %5725 = vdwg.mxu0
    %v5727 = vsel %vm3945, %v4630, 0
    %5729 = vmatpush.msra.mxu0 0.0
    %5730 = vmatpush.msra.mxu0 0.0
    %5731 = vmatpush.msra.mxu0 0.0
    %5732 = vmatpush.msra.mxu0 0.0
    %5733 = vmatpush.msra.mxu0 0.0
    %5734 = vmatpush.msra.mxu0 0.0
    %5735 = vmatpush.msra.mxu0 0.0
    %5736 = vmatpush.msra.mxu0 0.0
    %5737 = vmatpush.msra.mxu0 0.0
    %5738 = vmatpush.msra.mxu0 0.0
    %5739 = vmatpush.msra.mxu0 0.0
    %5740 = vmatpush.msra.mxu0 0.0
    %5741 = vmatpush.msra.mxu0 0.0
    %5742 = vmatpush.msra.mxu0 0.0
    %5743 = vmatpush.msra.mxu0 0.0
    %5744 = vmatpush.msra.mxu0 %v917
    %5745 = vmatmul.f32.gmra.mxu0 %v5727
    %v5746 = vpop.f32.mrf.mxu0
    %v5747 = vadd.f32 0.0, %v5746
    %5748 = vdwg.mxu0
    %v5750 = vsel %vm3945, %v4631, 0
    %5752 = vmatpush.msra.mxu0 0.0
    %5753 = vmatpush.msra.mxu0 0.0
    %5754 = vmatpush.msra.mxu0 0.0
    %5755 = vmatpush.msra.mxu0 0.0
    %5756 = vmatpush.msra.mxu0 0.0
    %5757 = vmatpush.msra.mxu0 0.0
    %5758 = vmatpush.msra.mxu0 0.0
    %5759 = vmatpush.msra.mxu0 0.0
    %5760 = vmatpush.msra.mxu0 0.0
    %5761 = vmatpush.msra.mxu0 0.0
    %5762 = vmatpush.msra.mxu0 0.0
    %5763 = vmatpush.msra.mxu0 0.0
    %5764 = vmatpush.msra.mxu0 0.0
    %5765 = vmatpush.msra.mxu0 0.0
    %5766 = vmatpush.msra.mxu0 0.0
    %5767 = vmatpush.msra.mxu0 %v918
    %5768 = vmatmul.f32.gmra.mxu0 %v5750
    %v5769 = vpop.f32.mrf.mxu0
    %v5770 = vadd.f32 0.0, %v5769
    %5771 = vdwg.mxu0
    %v5773 = vsel %vm3945, %v4632, 0
    %5775 = vmatpush.msra.mxu0 0.0
    %5776 = vmatpush.msra.mxu0 0.0
    %5777 = vmatpush.msra.mxu0 0.0
    %5778 = vmatpush.msra.mxu0 0.0
    %5779 = vmatpush.msra.mxu0 0.0
    %5780 = vmatpush.msra.mxu0 0.0
    %5781 = vmatpush.msra.mxu0 0.0
    %5782 = vmatpush.msra.mxu0 0.0
    %5783 = vmatpush.msra.mxu0 0.0
    %5784 = vmatpush.msra.mxu0 0.0
    %5785 = vmatpush.msra.mxu0 0.0
    %5786 = vmatpush.msra.mxu0 0.0
    %5787 = vmatpush.msra.mxu0 0.0
    %5788 = vmatpush.msra.mxu0 0.0
    %5789 = vmatpush.msra.mxu0 0.0
    %5790 = vmatpush.msra.mxu0 %v919
    %5791 = vmatmul.f32.gmra.mxu0 %v5773
    %v5792 = vpop.f32.mrf.mxu0
    %v5793 = vadd.f32 0.0, %v5792
    %5794 = vdwg.mxu0
    %v5796 = vsel %vm3945, %v4633, 0
    %5798 = vmatpush.msra.mxu0 0.0
    %5799 = vmatpush.msra.mxu0 0.0
    %5800 = vmatpush.msra.mxu0 0.0
    %5801 = vmatpush.msra.mxu0 0.0
    %5802 = vmatpush.msra.mxu0 0.0
    %5803 = vmatpush.msra.mxu0 0.0
    %5804 = vmatpush.msra.mxu0 0.0
    %5805 = vmatpush.msra.mxu0 0.0
    %5806 = vmatpush.msra.mxu0 0.0
    %5807 = vmatpush.msra.mxu0 0.0
    %5808 = vmatpush.msra.mxu0 0.0
    %5809 = vmatpush.msra.mxu0 0.0
    %5810 = vmatpush.msra.mxu0 0.0
    %5811 = vmatpush.msra.mxu0 0.0
    %5812 = vmatpush.msra.mxu0 0.0
    %5813 = vmatpush.msra.mxu0 %v920
    %5814 = vmatmul.f32.gmra.mxu0 %v5796
    %v5815 = vpop.f32.mrf.mxu0
    %v5816 = vadd.f32 0.0, %v5815
    %5817 = vdwg.mxu0
    %v5819 = vsel %vm3945, %v4634, 0
    %5821 = vmatpush.msra.mxu0 0.0
    %5822 = vmatpush.msra.mxu0 0.0
    %5823 = vmatpush.msra.mxu0 0.0
    %5824 = vmatpush.msra.mxu0 0.0
    %5825 = vmatpush.msra.mxu0 0.0
    %5826 = vmatpush.msra.mxu0 0.0
    %5827 = vmatpush.msra.mxu0 0.0
    %5828 = vmatpush.msra.mxu0 0.0
    %5829 = vmatpush.msra.mxu0 0.0
    %5830 = vmatpush.msra.mxu0 0.0
    %5831 = vmatpush.msra.mxu0 0.0
    %5832 = vmatpush.msra.mxu0 0.0
    %5833 = vmatpush.msra.mxu0 0.0
    %5834 = vmatpush.msra.mxu0 0.0
    %5835 = vmatpush.msra.mxu0 0.0
    %5836 = vmatpush.msra.mxu0 %v921
    %5837 = vmatmul.f32.gmra.mxu0 %v5819
    %v5838 = vpop.f32.mrf.mxu0
    %v5839 = vadd.f32 0.0, %v5838
    %5840 = vdwg.mxu0
    %v5842 = vsel %vm3945, %v4635, 0
    %5844 = vmatpush.msra.mxu0 0.0
    %5845 = vmatpush.msra.mxu0 0.0
    %5846 = vmatpush.msra.mxu0 0.0
    %5847 = vmatpush.msra.mxu0 0.0
    %5848 = vmatpush.msra.mxu0 0.0
    %5849 = vmatpush.msra.mxu0 0.0
    %5850 = vmatpush.msra.mxu0 0.0
    %5851 = vmatpush.msra.mxu0 0.0
    %5852 = vmatpush.msra.mxu0 0.0
    %5853 = vmatpush.msra.mxu0 0.0
    %5854 = vmatpush.msra.mxu0 0.0
    %5855 = vmatpush.msra.mxu0 0.0
    %5856 = vmatpush.msra.mxu0 0.0
    %5857 = vmatpush.msra.mxu0 0.0
    %5858 = vmatpush.msra.mxu0 0.0
    %5859 = vmatpush.msra.mxu0 %v922
    %5860 = vmatmul.f32.gmra.mxu0 %v5842
    %v5861 = vpop.f32.mrf.mxu0
    %v5862 = vadd.f32 0.0, %v5861
    %5863 = vdwg.mxu0
    %v5865 = vsel %vm3945, %v4636, 0
    %5867 = vmatpush.msra.mxu0 0.0
    %5868 = vmatpush.msra.mxu0 0.0
    %5869 = vmatpush.msra.mxu0 0.0
    %5870 = vmatpush.msra.mxu0 0.0
    %5871 = vmatpush.msra.mxu0 0.0
    %5872 = vmatpush.msra.mxu0 0.0
    %5873 = vmatpush.msra.mxu0 0.0
    %5874 = vmatpush.msra.mxu0 0.0
    %5875 = vmatpush.msra.mxu0 0.0
    %5876 = vmatpush.msra.mxu0 0.0
    %5877 = vmatpush.msra.mxu0 0.0
    %5878 = vmatpush.msra.mxu0 0.0
    %5879 = vmatpush.msra.mxu0 0.0
    %5880 = vmatpush.msra.mxu0 0.0
    %5881 = vmatpush.msra.mxu0 0.0
    %5882 = vmatpush.msra.mxu0 %v923
    %5883 = vmatmul.f32.gmra.mxu0 %v5865
    %v5884 = vpop.f32.mrf.mxu0
    %v5885 = vadd.f32 0.0, %v5884
    %5886 = vdwg.mxu0
    %v5888 = vsel %vm3945, %v4637, 0
    %5890 = vmatpush.msra.mxu0 0.0
    %5891 = vmatpush.msra.mxu0 0.0
    %5892 = vmatpush.msra.mxu0 0.0
    %5893 = vmatpush.msra.mxu0 0.0
    %5894 = vmatpush.msra.mxu0 0.0
    %5895 = vmatpush.msra.mxu0 0.0
    %5896 = vmatpush.msra.mxu0 0.0
    %5897 = vmatpush.msra.mxu0 0.0
    %5898 = vmatpush.msra.mxu0 0.0
    %5899 = vmatpush.msra.mxu0 0.0
    %5900 = vmatpush.msra.mxu0 0.0
    %5901 = vmatpush.msra.mxu0 0.0
    %5902 = vmatpush.msra.mxu0 0.0
    %5903 = vmatpush.msra.mxu0 0.0
    %5904 = vmatpush.msra.mxu0 0.0
    %5905 = vmatpush.msra.mxu0 %v924
    %5906 = vmatmul.f32.gmra.mxu0 %v5888
    %v5907 = vpop.f32.mrf.mxu0
    %v5908 = vadd.f32 0.0, %v5907
    %5909 = vdwg.mxu0
    %v5911 = vsel %vm3945, %v4638, 0
    %5913 = vmatpush.msra.mxu0 0.0
    %5914 = vmatpush.msra.mxu0 0.0
    %5915 = vmatpush.msra.mxu0 0.0
    %5916 = vmatpush.msra.mxu0 0.0
    %5917 = vmatpush.msra.mxu0 0.0
    %5918 = vmatpush.msra.mxu0 0.0
    %5919 = vmatpush.msra.mxu0 0.0
    %5920 = vmatpush.msra.mxu0 0.0
    %5921 = vmatpush.msra.mxu0 0.0
    %5922 = vmatpush.msra.mxu0 0.0
    %5923 = vmatpush.msra.mxu0 0.0
    %5924 = vmatpush.msra.mxu0 0.0
    %5925 = vmatpush.msra.mxu0 0.0
    %5926 = vmatpush.msra.mxu0 0.0
    %5927 = vmatpush.msra.mxu0 0.0
    %5928 = vmatpush.msra.mxu0 %v925
    %5929 = vmatmul.f32.gmra.mxu0 %v5911
    %v5930 = vpop.f32.mrf.mxu0
    %v5931 = vadd.f32 0.0, %v5930
    %5932 = vdwg.mxu0
    %v5934 = vsel %vm3945, %v4639, 0
    %5936 = vmatpush.msra.mxu0 0.0
    %5937 = vmatpush.msra.mxu0 0.0
    %5938 = vmatpush.msra.mxu0 0.0
    %5939 = vmatpush.msra.mxu0 0.0
    %5940 = vmatpush.msra.mxu0 0.0
    %5941 = vmatpush.msra.mxu0 0.0
    %5942 = vmatpush.msra.mxu0 0.0
    %5943 = vmatpush.msra.mxu0 0.0
    %5944 = vmatpush.msra.mxu0 0.0
    %5945 = vmatpush.msra.mxu0 0.0
    %5946 = vmatpush.msra.mxu0 0.0
    %5947 = vmatpush.msra.mxu0 0.0
    %5948 = vmatpush.msra.mxu0 0.0
    %5949 = vmatpush.msra.mxu0 0.0
    %5950 = vmatpush.msra.mxu0 0.0
    %5951 = vmatpush.msra.mxu0 %v926
    %5952 = vmatmul.f32.gmra.mxu0 %v5934
    %v5953 = vpop.f32.mrf.mxu0
    %v5954 = vadd.f32 0.0, %v5953
    %5955 = vdwg.mxu0
    %v5957 = vsel %vm3945, %v4640, 0
    %5959 = vmatpush.msra.mxu0 0.0
    %5960 = vmatpush.msra.mxu0 0.0
    %5961 = vmatpush.msra.mxu0 0.0
    %5962 = vmatpush.msra.mxu0 0.0
    %5963 = vmatpush.msra.mxu0 0.0
    %5964 = vmatpush.msra.mxu0 0.0
    %5965 = vmatpush.msra.mxu0 0.0
    %5966 = vmatpush.msra.mxu0 0.0
    %5967 = vmatpush.msra.mxu0 0.0
    %5968 = vmatpush.msra.mxu0 0.0
    %5969 = vmatpush.msra.mxu0 0.0
    %5970 = vmatpush.msra.mxu0 0.0
    %5971 = vmatpush.msra.mxu0 0.0
    %5972 = vmatpush.msra.mxu0 0.0
    %5973 = vmatpush.msra.mxu0 0.0
    %5974 = vmatpush.msra.mxu0 %v927
    %5975 = vmatmul.f32.gmra.mxu0 %v5957
    %v5976 = vpop.f32.mrf.mxu0
    %v5977 = vadd.f32 0.0, %v5976
    %5978 = vdwg.mxu0
    %v5980 = vsel %vm3945, %v4641, 0
    %5982 = vmatpush.msra.mxu0 0.0
    %5983 = vmatpush.msra.mxu0 0.0
    %5984 = vmatpush.msra.mxu0 0.0
    %5985 = vmatpush.msra.mxu0 0.0
    %5986 = vmatpush.msra.mxu0 0.0
    %5987 = vmatpush.msra.mxu0 0.0
    %5988 = vmatpush.msra.mxu0 0.0
    %5989 = vmatpush.msra.mxu0 0.0
    %5990 = vmatpush.msra.mxu0 0.0
    %5991 = vmatpush.msra.mxu0 0.0
    %5992 = vmatpush.msra.mxu0 0.0
    %5993 = vmatpush.msra.mxu0 0.0
    %5994 = vmatpush.msra.mxu0 0.0
    %5995 = vmatpush.msra.mxu0 0.0
    %5996 = vmatpush.msra.mxu0 0.0
    %5997 = vmatpush.msra.mxu0 %v928
    %5998 = vmatmul.f32.gmra.mxu0 %v5980
    %v5999 = vpop.f32.mrf.mxu0
    %v6000 = vadd.f32 0.0, %v5999
    %6001 = vdwg.mxu0
    %v6003 = vsel %vm3945, %v4642, 0
    %6005 = vmatpush.msra.mxu0 0.0
    %6006 = vmatpush.msra.mxu0 0.0
    %6007 = vmatpush.msra.mxu0 0.0
    %6008 = vmatpush.msra.mxu0 0.0
    %6009 = vmatpush.msra.mxu0 0.0
    %6010 = vmatpush.msra.mxu0 0.0
    %6011 = vmatpush.msra.mxu0 0.0
    %6012 = vmatpush.msra.mxu0 0.0
    %6013 = vmatpush.msra.mxu0 0.0
    %6014 = vmatpush.msra.mxu0 0.0
    %6015 = vmatpush.msra.mxu0 0.0
    %6016 = vmatpush.msra.mxu0 0.0
    %6017 = vmatpush.msra.mxu0 0.0
    %6018 = vmatpush.msra.mxu0 0.0
    %6019 = vmatpush.msra.mxu0 0.0
    %6020 = vmatpush.msra.mxu0 %v929
    %6021 = vmatmul.f32.gmra.mxu0 %v6003
    %v6022 = vpop.f32.mrf.mxu0
    %v6023 = vadd.f32 0.0, %v6022
    %6024 = vdwg.mxu0
    %v6026 = vsel %vm3945, %v4643, 0
    %6028 = vmatpush.msra.mxu0 0.0
    %6029 = vmatpush.msra.mxu0 0.0
    %6030 = vmatpush.msra.mxu0 0.0
    %6031 = vmatpush.msra.mxu0 0.0
    %6032 = vmatpush.msra.mxu0 0.0
    %6033 = vmatpush.msra.mxu0 0.0
    %6034 = vmatpush.msra.mxu0 0.0
    %6035 = vmatpush.msra.mxu0 0.0
    %6036 = vmatpush.msra.mxu0 0.0
    %6037 = vmatpush.msra.mxu0 0.0
    %6038 = vmatpush.msra.mxu0 0.0
    %6039 = vmatpush.msra.mxu0 0.0
    %6040 = vmatpush.msra.mxu0 0.0
    %6041 = vmatpush.msra.mxu0 0.0
    %6042 = vmatpush.msra.mxu0 0.0
    %6043 = vmatpush.msra.mxu0 %v930
    %6044 = vmatmul.f32.gmra.mxu0 %v6026
    %v6045 = vpop.f32.mrf.mxu0
    %v6046 = vadd.f32 0.0, %v6045
    %6047 = vdwg.mxu0
    %v6049 = vsel %vm3945, %v4644, 0
    %6051 = vmatpush.msra.mxu0 0.0
    %6052 = vmatpush.msra.mxu0 0.0
    %6053 = vmatpush.msra.mxu0 0.0
    %6054 = vmatpush.msra.mxu0 0.0
    %6055 = vmatpush.msra.mxu0 0.0
    %6056 = vmatpush.msra.mxu0 0.0
    %6057 = vmatpush.msra.mxu0 0.0
    %6058 = vmatpush.msra.mxu0 0.0
    %6059 = vmatpush.msra.mxu0 0.0
    %6060 = vmatpush.msra.mxu0 0.0
    %6061 = vmatpush.msra.mxu0 0.0
    %6062 = vmatpush.msra.mxu0 0.0
    %6063 = vmatpush.msra.mxu0 0.0
    %6064 = vmatpush.msra.mxu0 0.0
    %6065 = vmatpush.msra.mxu0 0.0
    %6066 = vmatpush.msra.mxu0 %v931
    %6067 = vmatmul.f32.gmra.mxu0 %v6049
    %v6068 = vpop.f32.mrf.mxu0
    %v6069 = vadd.f32 0.0, %v6068
    %6070 = vdwg.mxu0
    %v6072 = vsel %vm3945, %v4645, 0
    %6074 = vmatpush.msra.mxu0 0.0
    %6075 = vmatpush.msra.mxu0 0.0
    %6076 = vmatpush.msra.mxu0 0.0
    %6077 = vmatpush.msra.mxu0 0.0
    %6078 = vmatpush.msra.mxu0 0.0
    %6079 = vmatpush.msra.mxu0 0.0
    %6080 = vmatpush.msra.mxu0 0.0
    %6081 = vmatpush.msra.mxu0 0.0
    %6082 = vmatpush.msra.mxu0 0.0
    %6083 = vmatpush.msra.mxu0 0.0
    %6084 = vmatpush.msra.mxu0 0.0
    %6085 = vmatpush.msra.mxu0 0.0
    %6086 = vmatpush.msra.mxu0 0.0
    %6087 = vmatpush.msra.mxu0 0.0
    %6088 = vmatpush.msra.mxu0 0.0
    %6089 = vmatpush.msra.mxu0 %v932
    %6090 = vmatmul.f32.gmra.mxu0 %v6072
    %v6091 = vpop.f32.mrf.mxu0
    %v6092 = vadd.f32 0.0, %v6091
    %6093 = vdwg.mxu0
    %v6095 = vsel %vm3945, %v4646, 0
    %6097 = vmatpush.msra.mxu0 0.0
    %6098 = vmatpush.msra.mxu0 0.0
    %6099 = vmatpush.msra.mxu0 0.0
    %6100 = vmatpush.msra.mxu0 0.0
    %6101 = vmatpush.msra.mxu0 0.0
    %6102 = vmatpush.msra.mxu0 0.0
    %6103 = vmatpush.msra.mxu0 0.0
    %6104 = vmatpush.msra.mxu0 0.0
    %6105 = vmatpush.msra.mxu0 0.0
    %6106 = vmatpush.msra.mxu0 0.0
    %6107 = vmatpush.msra.mxu0 0.0
    %6108 = vmatpush.msra.mxu0 0.0
    %6109 = vmatpush.msra.mxu0 0.0
    %6110 = vmatpush.msra.mxu0 0.0
    %6111 = vmatpush.msra.mxu0 0.0
    %6112 = vmatpush.msra.mxu0 %v933
    %6113 = vmatmul.f32.gmra.mxu0 %v6095
    %v6114 = vpop.f32.mrf.mxu0
    %v6115 = vadd.f32 0.0, %v6114
    %6116 = vdwg.mxu0
    %v6118 = vsel %vm3945, %v4647, 0
    %6120 = vmatpush.msra.mxu0 0.0
    %6121 = vmatpush.msra.mxu0 0.0
    %6122 = vmatpush.msra.mxu0 0.0
    %6123 = vmatpush.msra.mxu0 0.0
    %6124 = vmatpush.msra.mxu0 0.0
    %6125 = vmatpush.msra.mxu0 0.0
    %6126 = vmatpush.msra.mxu0 0.0
    %6127 = vmatpush.msra.mxu0 0.0
    %6128 = vmatpush.msra.mxu0 0.0
    %6129 = vmatpush.msra.mxu0 0.0
    %6130 = vmatpush.msra.mxu0 0.0
    %6131 = vmatpush.msra.mxu0 0.0
    %6132 = vmatpush.msra.mxu0 0.0
    %6133 = vmatpush.msra.mxu0 0.0
    %6134 = vmatpush.msra.mxu0 0.0
    %6135 = vmatpush.msra.mxu0 %v934
    %6136 = vmatmul.f32.gmra.mxu0 %v6118
    %v6137 = vpop.f32.mrf.mxu0
    %v6138 = vadd.f32 0.0, %v6137
    %6139 = vdwg.mxu0
    %v6141 = vsel %vm3945, %v4648, 0
    %6143 = vmatpush.msra.mxu0 0.0
    %6144 = vmatpush.msra.mxu0 0.0
    %6145 = vmatpush.msra.mxu0 0.0
    %6146 = vmatpush.msra.mxu0 0.0
    %6147 = vmatpush.msra.mxu0 0.0
    %6148 = vmatpush.msra.mxu0 0.0
    %6149 = vmatpush.msra.mxu0 0.0
    %6150 = vmatpush.msra.mxu0 0.0
    %6151 = vmatpush.msra.mxu0 0.0
    %6152 = vmatpush.msra.mxu0 0.0
    %6153 = vmatpush.msra.mxu0 0.0
    %6154 = vmatpush.msra.mxu0 0.0
    %6155 = vmatpush.msra.mxu0 0.0
    %6156 = vmatpush.msra.mxu0 0.0
    %6157 = vmatpush.msra.mxu0 0.0
    %6158 = vmatpush.msra.mxu0 %v935
    %6159 = vmatmul.f32.gmra.mxu0 %v6141
    %v6160 = vpop.f32.mrf.mxu0
    %v6161 = vadd.f32 0.0, %v6160
    %6162 = vdwg.mxu0
    %v6164 = vsel %vm3945, %v4649, 0
    %6166 = vmatpush.msra.mxu0 0.0
    %6167 = vmatpush.msra.mxu0 0.0
    %6168 = vmatpush.msra.mxu0 0.0
    %6169 = vmatpush.msra.mxu0 0.0
    %6170 = vmatpush.msra.mxu0 0.0
    %6171 = vmatpush.msra.mxu0 0.0
    %6172 = vmatpush.msra.mxu0 0.0
    %6173 = vmatpush.msra.mxu0 0.0
    %6174 = vmatpush.msra.mxu0 0.0
    %6175 = vmatpush.msra.mxu0 0.0
    %6176 = vmatpush.msra.mxu0 0.0
    %6177 = vmatpush.msra.mxu0 0.0
    %6178 = vmatpush.msra.mxu0 0.0
    %6179 = vmatpush.msra.mxu0 0.0
    %6180 = vmatpush.msra.mxu0 0.0
    %6181 = vmatpush.msra.mxu0 %v936
    %6182 = vmatmul.f32.gmra.mxu0 %v6164
    %v6183 = vpop.f32.mrf.mxu0
    %v6184 = vadd.f32 0.0, %v6183
    %6185 = vdwg.mxu0
    %v6187 = vsel %vm3945, %v4650, 0
    %6189 = vmatpush.msra.mxu0 0.0
    %6190 = vmatpush.msra.mxu0 0.0
    %6191 = vmatpush.msra.mxu0 0.0
    %6192 = vmatpush.msra.mxu0 0.0
    %6193 = vmatpush.msra.mxu0 0.0
    %6194 = vmatpush.msra.mxu0 0.0
    %6195 = vmatpush.msra.mxu0 0.0
    %6196 = vmatpush.msra.mxu0 0.0
    %6197 = vmatpush.msra.mxu0 0.0
    %6198 = vmatpush.msra.mxu0 0.0
    %6199 = vmatpush.msra.mxu0 0.0
    %6200 = vmatpush.msra.mxu0 0.0
    %6201 = vmatpush.msra.mxu0 0.0
    %6202 = vmatpush.msra.mxu0 0.0
    %6203 = vmatpush.msra.mxu0 0.0
    %6204 = vmatpush.msra.mxu0 %v937
    %6205 = vmatmul.f32.gmra.mxu0 %v6187
    %v6206 = vpop.f32.mrf.mxu0
    %v6207 = vadd.f32 0.0, %v6206
    %6208 = vdwg.mxu0
    %v6210 = vsel %vm3945, %v4651, 0
    %6212 = vmatpush.msra.mxu0 0.0
    %6213 = vmatpush.msra.mxu0 0.0
    %6214 = vmatpush.msra.mxu0 0.0
    %6215 = vmatpush.msra.mxu0 0.0
    %6216 = vmatpush.msra.mxu0 0.0
    %6217 = vmatpush.msra.mxu0 0.0
    %6218 = vmatpush.msra.mxu0 0.0
    %6219 = vmatpush.msra.mxu0 0.0
    %6220 = vmatpush.msra.mxu0 0.0
    %6221 = vmatpush.msra.mxu0 0.0
    %6222 = vmatpush.msra.mxu0 0.0
    %6223 = vmatpush.msra.mxu0 0.0
    %6224 = vmatpush.msra.mxu0 0.0
    %6225 = vmatpush.msra.mxu0 0.0
    %6226 = vmatpush.msra.mxu0 0.0
    %6227 = vmatpush.msra.mxu0 %v938
    %6228 = vmatmul.f32.gmra.mxu0 %v6210
    %v6229 = vpop.f32.mrf.mxu0
    %v6230 = vadd.f32 0.0, %v6229
    %6231 = vdwg.mxu0
    %v6233 = vsel %vm3945, %v4652, 0
    %6235 = vmatpush.msra.mxu0 0.0
    %6236 = vmatpush.msra.mxu0 0.0
    %6237 = vmatpush.msra.mxu0 0.0
    %6238 = vmatpush.msra.mxu0 0.0
    %6239 = vmatpush.msra.mxu0 0.0
    %6240 = vmatpush.msra.mxu0 0.0
    %6241 = vmatpush.msra.mxu0 0.0
    %6242 = vmatpush.msra.mxu0 0.0
    %6243 = vmatpush.msra.mxu0 0.0
    %6244 = vmatpush.msra.mxu0 0.0
    %6245 = vmatpush.msra.mxu0 0.0
    %6246 = vmatpush.msra.mxu0 0.0
    %6247 = vmatpush.msra.mxu0 0.0
    %6248 = vmatpush.msra.mxu0 0.0
    %6249 = vmatpush.msra.mxu0 0.0
    %6250 = vmatpush.msra.mxu0 %v939
    %6251 = vmatmul.f32.gmra.mxu0 %v6233
    %v6252 = vpop.f32.mrf.mxu0
    %v6253 = vadd.f32 0.0, %v6252
    %6254 = vdwg.mxu0
    %v6256 = vsel %vm3945, %v4653, 0
    %6258 = vmatpush.msra.mxu0 0.0
    %6259 = vmatpush.msra.mxu0 0.0
    %6260 = vmatpush.msra.mxu0 0.0
    %6261 = vmatpush.msra.mxu0 0.0
    %6262 = vmatpush.msra.mxu0 0.0
    %6263 = vmatpush.msra.mxu0 0.0
    %6264 = vmatpush.msra.mxu0 0.0
    %6265 = vmatpush.msra.mxu0 0.0
    %6266 = vmatpush.msra.mxu0 0.0
    %6267 = vmatpush.msra.mxu0 0.0
    %6268 = vmatpush.msra.mxu0 0.0
    %6269 = vmatpush.msra.mxu0 0.0
    %6270 = vmatpush.msra.mxu0 0.0
    %6271 = vmatpush.msra.mxu0 0.0
    %6272 = vmatpush.msra.mxu0 0.0
    %6273 = vmatpush.msra.mxu0 %v940
    %6274 = vmatmul.f32.gmra.mxu0 %v6256
    %v6275 = vpop.f32.mrf.mxu0
    %v6276 = vadd.f32 0.0, %v6275
    %6277 = vdwg.mxu0
    %v6279 = vsel %vm3945, %v4654, 0
    %6281 = vmatpush.msra.mxu0 0.0
    %6282 = vmatpush.msra.mxu0 0.0
    %6283 = vmatpush.msra.mxu0 0.0
    %6284 = vmatpush.msra.mxu0 0.0
    %6285 = vmatpush.msra.mxu0 0.0
    %6286 = vmatpush.msra.mxu0 0.0
    %6287 = vmatpush.msra.mxu0 0.0
    %6288 = vmatpush.msra.mxu0 0.0
    %6289 = vmatpush.msra.mxu0 0.0
    %6290 = vmatpush.msra.mxu0 0.0
    %6291 = vmatpush.msra.mxu0 0.0
    %6292 = vmatpush.msra.mxu0 0.0
    %6293 = vmatpush.msra.mxu0 0.0
    %6294 = vmatpush.msra.mxu0 0.0
    %6295 = vmatpush.msra.mxu0 0.0
    %6296 = vmatpush.msra.mxu0 %v941
    %6297 = vmatmul.f32.gmra.mxu0 %v6279
    %v6298 = vpop.f32.mrf.mxu0
    %v6299 = vadd.f32 0.0, %v6298
    %6300 = vdwg.mxu0
    %v6302 = vsel %vm3945, %v4655, 0
    %6304 = vmatpush.msra.mxu0 0.0
    %6305 = vmatpush.msra.mxu0 0.0
    %6306 = vmatpush.msra.mxu0 0.0
    %6307 = vmatpush.msra.mxu0 0.0
    %6308 = vmatpush.msra.mxu0 0.0
    %6309 = vmatpush.msra.mxu0 0.0
    %6310 = vmatpush.msra.mxu0 0.0
    %6311 = vmatpush.msra.mxu0 0.0
    %6312 = vmatpush.msra.mxu0 0.0
    %6313 = vmatpush.msra.mxu0 0.0
    %6314 = vmatpush.msra.mxu0 0.0
    %6315 = vmatpush.msra.mxu0 0.0
    %6316 = vmatpush.msra.mxu0 0.0
    %6317 = vmatpush.msra.mxu0 0.0
    %6318 = vmatpush.msra.mxu0 0.0
    %6319 = vmatpush.msra.mxu0 %v942
    %6320 = vmatmul.f32.gmra.mxu0 %v6302
    %v6321 = vpop.f32.mrf.mxu0
    %v6322 = vadd.f32 0.0, %v6321
    %6323 = vdwg.mxu0
    %v6325 = vsel %vm3945, %v4656, 0
    %6327 = vmatpush.msra.mxu0 0.0
    %6328 = vmatpush.msra.mxu0 0.0
    %6329 = vmatpush.msra.mxu0 0.0
    %6330 = vmatpush.msra.mxu0 0.0
    %6331 = vmatpush.msra.mxu0 0.0
    %6332 = vmatpush.msra.mxu0 0.0
    %6333 = vmatpush.msra.mxu0 0.0
    %6334 = vmatpush.msra.mxu0 0.0
    %6335 = vmatpush.msra.mxu0 0.0
    %6336 = vmatpush.msra.mxu0 0.0
    %6337 = vmatpush.msra.mxu0 0.0
    %6338 = vmatpush.msra.mxu0 0.0
    %6339 = vmatpush.msra.mxu0 0.0
    %6340 = vmatpush.msra.mxu0 0.0
    %6341 = vmatpush.msra.mxu0 0.0
    %6342 = vmatpush.msra.mxu0 %v943
    %6343 = vmatmul.f32.gmra.mxu0 %v6325
    %v6344 = vpop.f32.mrf.mxu0
    %v6345 = vadd.f32 0.0, %v6344
    %6346 = vdwg.mxu0
    %v6348 = vsel %vm3945, %v4657, 0
    %6350 = vmatpush.msra.mxu0 0.0
    %6351 = vmatpush.msra.mxu0 0.0
    %6352 = vmatpush.msra.mxu0 0.0
    %6353 = vmatpush.msra.mxu0 0.0
    %6354 = vmatpush.msra.mxu0 0.0
    %6355 = vmatpush.msra.mxu0 0.0
    %6356 = vmatpush.msra.mxu0 0.0
    %6357 = vmatpush.msra.mxu0 0.0
    %6358 = vmatpush.msra.mxu0 0.0
    %6359 = vmatpush.msra.mxu0 0.0
    %6360 = vmatpush.msra.mxu0 0.0
    %6361 = vmatpush.msra.mxu0 0.0
    %6362 = vmatpush.msra.mxu0 0.0
    %6363 = vmatpush.msra.mxu0 0.0
    %6364 = vmatpush.msra.mxu0 0.0
    %6365 = vmatpush.msra.mxu0 %v944
    %6366 = vmatmul.f32.gmra.mxu0 %v6348
    %v6367 = vpop.f32.mrf.mxu0
    %v6368 = vadd.f32 0.0, %v6367
    %6369 = vdwg.mxu0
    %v6371 = vsel %vm3945, %v4658, 0
    %6373 = vmatpush.msra.mxu0 0.0
    %6374 = vmatpush.msra.mxu0 0.0
    %6375 = vmatpush.msra.mxu0 0.0
    %6376 = vmatpush.msra.mxu0 0.0
    %6377 = vmatpush.msra.mxu0 0.0
    %6378 = vmatpush.msra.mxu0 0.0
    %6379 = vmatpush.msra.mxu0 0.0
    %6380 = vmatpush.msra.mxu0 0.0
    %6381 = vmatpush.msra.mxu0 0.0
    %6382 = vmatpush.msra.mxu0 0.0
    %6383 = vmatpush.msra.mxu0 0.0
    %6384 = vmatpush.msra.mxu0 0.0
    %6385 = vmatpush.msra.mxu0 0.0
    %6386 = vmatpush.msra.mxu0 0.0
    %6387 = vmatpush.msra.mxu0 0.0
    %6388 = vmatpush.msra.mxu0 %v945
    %6389 = vmatmul.f32.gmra.mxu0 %v6371
    %v6390 = vpop.f32.mrf.mxu0
    %v6391 = vadd.f32 0.0, %v6390
    %6392 = vdwg.mxu0
    %v6394 = vsel %vm3945, %v4659, 0
    %6396 = vmatpush.msra.mxu0 0.0
    %6397 = vmatpush.msra.mxu0 0.0
    %6398 = vmatpush.msra.mxu0 0.0
    %6399 = vmatpush.msra.mxu0 0.0
    %6400 = vmatpush.msra.mxu0 0.0
    %6401 = vmatpush.msra.mxu0 0.0
    %6402 = vmatpush.msra.mxu0 0.0
    %6403 = vmatpush.msra.mxu0 0.0
    %6404 = vmatpush.msra.mxu0 0.0
    %6405 = vmatpush.msra.mxu0 0.0
    %6406 = vmatpush.msra.mxu0 0.0
    %6407 = vmatpush.msra.mxu0 0.0
    %6408 = vmatpush.msra.mxu0 0.0
    %6409 = vmatpush.msra.mxu0 0.0
    %6410 = vmatpush.msra.mxu0 0.0
    %6411 = vmatpush.msra.mxu0 %v946
    %6412 = vmatmul.f32.gmra.mxu0 %v6394
    %v6413 = vpop.f32.mrf.mxu0
    %v6414 = vadd.f32 0.0, %v6413
    %6415 = vdwg.mxu0
    %v6417 = vsel %vm3945, %v4660, 0
    %6419 = vmatpush.msra.mxu0 0.0
    %6420 = vmatpush.msra.mxu0 0.0
    %6421 = vmatpush.msra.mxu0 0.0
    %6422 = vmatpush.msra.mxu0 0.0
    %6423 = vmatpush.msra.mxu0 0.0
    %6424 = vmatpush.msra.mxu0 0.0
    %6425 = vmatpush.msra.mxu0 0.0
    %6426 = vmatpush.msra.mxu0 0.0
    %6427 = vmatpush.msra.mxu0 0.0
    %6428 = vmatpush.msra.mxu0 0.0
    %6429 = vmatpush.msra.mxu0 0.0
    %6430 = vmatpush.msra.mxu0 0.0
    %6431 = vmatpush.msra.mxu0 0.0
    %6432 = vmatpush.msra.mxu0 0.0
    %6433 = vmatpush.msra.mxu0 0.0
    %6434 = vmatpush.msra.mxu0 %v947
    %6435 = vmatmul.f32.gmra.mxu0 %v6417
    %v6436 = vpop.f32.mrf.mxu0
    %v6437 = vadd.f32 0.0, %v6436
    %6438 = vdwg.mxu0
    %v6440 = vsel %vm3945, %v4661, 0
    %6442 = vmatpush.msra.mxu0 0.0
    %6443 = vmatpush.msra.mxu0 0.0
    %6444 = vmatpush.msra.mxu0 0.0
    %6445 = vmatpush.msra.mxu0 0.0
    %6446 = vmatpush.msra.mxu0 0.0
    %6447 = vmatpush.msra.mxu0 0.0
    %6448 = vmatpush.msra.mxu0 0.0
    %6449 = vmatpush.msra.mxu0 0.0
    %6450 = vmatpush.msra.mxu0 0.0
    %6451 = vmatpush.msra.mxu0 0.0
    %6452 = vmatpush.msra.mxu0 0.0
    %6453 = vmatpush.msra.mxu0 0.0
    %6454 = vmatpush.msra.mxu0 0.0
    %6455 = vmatpush.msra.mxu0 0.0
    %6456 = vmatpush.msra.mxu0 0.0
    %6457 = vmatpush.msra.mxu0 %v948
    %6458 = vmatmul.f32.gmra.mxu0 %v6440
    %v6459 = vpop.f32.mrf.mxu0
    %v6460 = vadd.f32 0.0, %v6459
    %6461 = vdwg.mxu0
    %v6463 = vsel %vm3945, %v4662, 0
    %6465 = vmatpush.msra.mxu0 0.0
    %6466 = vmatpush.msra.mxu0 0.0
    %6467 = vmatpush.msra.mxu0 0.0
    %6468 = vmatpush.msra.mxu0 0.0
    %6469 = vmatpush.msra.mxu0 0.0
    %6470 = vmatpush.msra.mxu0 0.0
    %6471 = vmatpush.msra.mxu0 0.0
    %6472 = vmatpush.msra.mxu0 0.0
    %6473 = vmatpush.msra.mxu0 0.0
    %6474 = vmatpush.msra.mxu0 0.0
    %6475 = vmatpush.msra.mxu0 0.0
    %6476 = vmatpush.msra.mxu0 0.0
    %6477 = vmatpush.msra.mxu0 0.0
    %6478 = vmatpush.msra.mxu0 0.0
    %6479 = vmatpush.msra.mxu0 0.0
    %6480 = vmatpush.msra.mxu0 %v949
    %6481 = vmatmul.f32.gmra.mxu0 %v6463
    %v6482 = vpop.f32.mrf.mxu0
    %v6483 = vadd.f32 0.0, %v6482
    %6484 = vdwg.mxu0
    %v6486 = vsel %vm3945, %v4663, 0
    %6488 = vmatpush.msra.mxu0 0.0
    %6489 = vmatpush.msra.mxu0 0.0
    %6490 = vmatpush.msra.mxu0 0.0
    %6491 = vmatpush.msra.mxu0 0.0
    %6492 = vmatpush.msra.mxu0 0.0
    %6493 = vmatpush.msra.mxu0 0.0
    %6494 = vmatpush.msra.mxu0 0.0
    %6495 = vmatpush.msra.mxu0 0.0
    %6496 = vmatpush.msra.mxu0 0.0
    %6497 = vmatpush.msra.mxu0 0.0
    %6498 = vmatpush.msra.mxu0 0.0
    %6499 = vmatpush.msra.mxu0 0.0
    %6500 = vmatpush.msra.mxu0 0.0
    %6501 = vmatpush.msra.mxu0 0.0
    %6502 = vmatpush.msra.mxu0 0.0
    %6503 = vmatpush.msra.mxu0 %v950
    %6504 = vmatmul.f32.gmra.mxu0 %v6486
    %v6505 = vpop.f32.mrf.mxu0
    %v6506 = vadd.f32 0.0, %v6505
    %6507 = vdwg.mxu0
    %v6509 = vsel %vm3945, %v4664, 0
    %6511 = vmatpush.msra.mxu0 0.0
    %6512 = vmatpush.msra.mxu0 0.0
    %6513 = vmatpush.msra.mxu0 0.0
    %6514 = vmatpush.msra.mxu0 0.0
    %6515 = vmatpush.msra.mxu0 0.0
    %6516 = vmatpush.msra.mxu0 0.0
    %6517 = vmatpush.msra.mxu0 0.0
    %6518 = vmatpush.msra.mxu0 0.0
    %6519 = vmatpush.msra.mxu0 0.0
    %6520 = vmatpush.msra.mxu0 0.0
    %6521 = vmatpush.msra.mxu0 0.0
    %6522 = vmatpush.msra.mxu0 0.0
    %6523 = vmatpush.msra.mxu0 0.0
    %6524 = vmatpush.msra.mxu0 0.0
    %6525 = vmatpush.msra.mxu0 0.0
    %6526 = vmatpush.msra.mxu0 %v951
    %6527 = vmatmul.f32.gmra.mxu0 %v6509
    %v6528 = vpop.f32.mrf.mxu0
    %v6529 = vadd.f32 0.0, %v6528
    %6530 = vdwg.mxu0
    %v6532 = vsel %vm3945, %v4665, 0
    %6534 = vmatpush.msra.mxu0 0.0
    %6535 = vmatpush.msra.mxu0 0.0
    %6536 = vmatpush.msra.mxu0 0.0
    %6537 = vmatpush.msra.mxu0 0.0
    %6538 = vmatpush.msra.mxu0 0.0
    %6539 = vmatpush.msra.mxu0 0.0
    %6540 = vmatpush.msra.mxu0 0.0
    %6541 = vmatpush.msra.mxu0 0.0
    %6542 = vmatpush.msra.mxu0 0.0
    %6543 = vmatpush.msra.mxu0 0.0
    %6544 = vmatpush.msra.mxu0 0.0
    %6545 = vmatpush.msra.mxu0 0.0
    %6546 = vmatpush.msra.mxu0 0.0
    %6547 = vmatpush.msra.mxu0 0.0
    %6548 = vmatpush.msra.mxu0 0.0
    %6549 = vmatpush.msra.mxu0 %v952
    %6550 = vmatmul.f32.gmra.mxu0 %v6532
    %v6551 = vpop.f32.mrf.mxu0
    %v6552 = vadd.f32 0.0, %v6551
    %6553 = vdwg.mxu0
    %v6555 = vsel %vm3945, %v4666, 0
    %6557 = vmatpush.msra.mxu0 0.0
    %6558 = vmatpush.msra.mxu0 0.0
    %6559 = vmatpush.msra.mxu0 0.0
    %6560 = vmatpush.msra.mxu0 0.0
    %6561 = vmatpush.msra.mxu0 0.0
    %6562 = vmatpush.msra.mxu0 0.0
    %6563 = vmatpush.msra.mxu0 0.0
    %6564 = vmatpush.msra.mxu0 0.0
    %6565 = vmatpush.msra.mxu0 0.0
    %6566 = vmatpush.msra.mxu0 0.0
    %6567 = vmatpush.msra.mxu0 0.0
    %6568 = vmatpush.msra.mxu0 0.0
    %6569 = vmatpush.msra.mxu0 0.0
    %6570 = vmatpush.msra.mxu0 0.0
    %6571 = vmatpush.msra.mxu0 0.0
    %6572 = vmatpush.msra.mxu0 %v953
    %6573 = vmatmul.f32.gmra.mxu0 %v6555
    %v6574 = vpop.f32.mrf.mxu0
    %v6575 = vadd.f32 0.0, %v6574
    %6576 = vdwg.mxu0
    %v6578 = vsel %vm3945, %v4667, 0
    %6580 = vmatpush.msra.mxu0 0.0
    %6581 = vmatpush.msra.mxu0 0.0
    %6582 = vmatpush.msra.mxu0 0.0
    %6583 = vmatpush.msra.mxu0 0.0
    %6584 = vmatpush.msra.mxu0 0.0
    %6585 = vmatpush.msra.mxu0 0.0
    %6586 = vmatpush.msra.mxu0 0.0
    %6587 = vmatpush.msra.mxu0 0.0
    %6588 = vmatpush.msra.mxu0 0.0
    %6589 = vmatpush.msra.mxu0 0.0
    %6590 = vmatpush.msra.mxu0 0.0
    %6591 = vmatpush.msra.mxu0 0.0
    %6592 = vmatpush.msra.mxu0 0.0
    %6593 = vmatpush.msra.mxu0 0.0
    %6594 = vmatpush.msra.mxu0 0.0
    %6595 = vmatpush.msra.mxu0 %v954
    %6596 = vmatmul.f32.gmra.mxu0 %v6578
    %v6597 = vpop.f32.mrf.mxu0
    %v6598 = vadd.f32 0.0, %v6597
    %6599 = vdwg.mxu0
    %v6601 = vsel %vm3945, %v4668, 0
    %6603 = vmatpush.msra.mxu0 0.0
    %6604 = vmatpush.msra.mxu0 0.0
    %6605 = vmatpush.msra.mxu0 0.0
    %6606 = vmatpush.msra.mxu0 0.0
    %6607 = vmatpush.msra.mxu0 0.0
    %6608 = vmatpush.msra.mxu0 0.0
    %6609 = vmatpush.msra.mxu0 0.0
    %6610 = vmatpush.msra.mxu0 0.0
    %6611 = vmatpush.msra.mxu0 0.0
    %6612 = vmatpush.msra.mxu0 0.0
    %6613 = vmatpush.msra.mxu0 0.0
    %6614 = vmatpush.msra.mxu0 0.0
    %6615 = vmatpush.msra.mxu0 0.0
    %6616 = vmatpush.msra.mxu0 0.0
    %6617 = vmatpush.msra.mxu0 0.0
    %6618 = vmatpush.msra.mxu0 %v955
    %6619 = vmatmul.f32.gmra.mxu0 %v6601
    %v6620 = vpop.f32.mrf.mxu0
    %v6621 = vadd.f32 0.0, %v6620
    %6622 = vdwg.mxu0
    %v6624 = vsel %vm3945, %v4669, 0
    %6626 = vmatpush.msra.mxu0 0.0
    %6627 = vmatpush.msra.mxu0 0.0
    %6628 = vmatpush.msra.mxu0 0.0
    %6629 = vmatpush.msra.mxu0 0.0
    %6630 = vmatpush.msra.mxu0 0.0
    %6631 = vmatpush.msra.mxu0 0.0
    %6632 = vmatpush.msra.mxu0 0.0
    %6633 = vmatpush.msra.mxu0 0.0
    %6634 = vmatpush.msra.mxu0 0.0
    %6635 = vmatpush.msra.mxu0 0.0
    %6636 = vmatpush.msra.mxu0 0.0
    %6637 = vmatpush.msra.mxu0 0.0
    %6638 = vmatpush.msra.mxu0 0.0
    %6639 = vmatpush.msra.mxu0 0.0
    %6640 = vmatpush.msra.mxu0 0.0
    %6641 = vmatpush.msra.mxu0 %v956
    %6642 = vmatmul.f32.gmra.mxu0 %v6624
    %v6643 = vpop.f32.mrf.mxu0
    %v6644 = vadd.f32 0.0, %v6643
    %6645 = vdwg.mxu0
    %v6647 = vsel %vm3945, %v4670, 0
    %6649 = vmatpush.msra.mxu0 0.0
    %6650 = vmatpush.msra.mxu0 0.0
    %6651 = vmatpush.msra.mxu0 0.0
    %6652 = vmatpush.msra.mxu0 0.0
    %6653 = vmatpush.msra.mxu0 0.0
    %6654 = vmatpush.msra.mxu0 0.0
    %6655 = vmatpush.msra.mxu0 0.0
    %6656 = vmatpush.msra.mxu0 0.0
    %6657 = vmatpush.msra.mxu0 0.0
    %6658 = vmatpush.msra.mxu0 0.0
    %6659 = vmatpush.msra.mxu0 0.0
    %6660 = vmatpush.msra.mxu0 0.0
    %6661 = vmatpush.msra.mxu0 0.0
    %6662 = vmatpush.msra.mxu0 0.0
    %6663 = vmatpush.msra.mxu0 0.0
    %6664 = vmatpush.msra.mxu0 %v957
    %6665 = vmatmul.f32.gmra.mxu0 %v6647
    %v6666 = vpop.f32.mrf.mxu0
    %v6667 = vadd.f32 0.0, %v6666
    %6668 = vdwg.mxu0
    %v6670 = vsel %vm3945, %v4671, 0
    %6672 = vmatpush.msra.mxu0 0.0
    %6673 = vmatpush.msra.mxu0 0.0
    %6674 = vmatpush.msra.mxu0 0.0
    %6675 = vmatpush.msra.mxu0 0.0
    %6676 = vmatpush.msra.mxu0 0.0
    %6677 = vmatpush.msra.mxu0 0.0
    %6678 = vmatpush.msra.mxu0 0.0
    %6679 = vmatpush.msra.mxu0 0.0
    %6680 = vmatpush.msra.mxu0 0.0
    %6681 = vmatpush.msra.mxu0 0.0
    %6682 = vmatpush.msra.mxu0 0.0
    %6683 = vmatpush.msra.mxu0 0.0
    %6684 = vmatpush.msra.mxu0 0.0
    %6685 = vmatpush.msra.mxu0 0.0
    %6686 = vmatpush.msra.mxu0 0.0
    %6687 = vmatpush.msra.mxu0 %v958
    %6688 = vmatmul.f32.gmra.mxu0 %v6670
    %v6689 = vpop.f32.mrf.mxu0
    %v6690 = vadd.f32 0.0, %v6689
    %6691 = vdwg.mxu0
    %v6693 = vsel %vm3945, %v4672, 0
    %6695 = vmatpush.msra.mxu0 0.0
    %6696 = vmatpush.msra.mxu0 0.0
    %6697 = vmatpush.msra.mxu0 0.0
    %6698 = vmatpush.msra.mxu0 0.0
    %6699 = vmatpush.msra.mxu0 0.0
    %6700 = vmatpush.msra.mxu0 0.0
    %6701 = vmatpush.msra.mxu0 0.0
    %6702 = vmatpush.msra.mxu0 0.0
    %6703 = vmatpush.msra.mxu0 0.0
    %6704 = vmatpush.msra.mxu0 0.0
    %6705 = vmatpush.msra.mxu0 0.0
    %6706 = vmatpush.msra.mxu0 0.0
    %6707 = vmatpush.msra.mxu0 0.0
    %6708 = vmatpush.msra.mxu0 0.0
    %6709 = vmatpush.msra.mxu0 0.0
    %6710 = vmatpush.msra.mxu0 %v959
    %6711 = vmatmul.f32.gmra.mxu0 %v6693
    %v6712 = vpop.f32.mrf.mxu0
    %v6713 = vadd.f32 0.0, %v6712
    %6714 = vdwg.mxu0
    %v6716 = vsel %vm3945, %v4673, 0
    %6718 = vmatpush.msra.mxu0 0.0
    %6719 = vmatpush.msra.mxu0 0.0
    %6720 = vmatpush.msra.mxu0 0.0
    %6721 = vmatpush.msra.mxu0 0.0
    %6722 = vmatpush.msra.mxu0 0.0
    %6723 = vmatpush.msra.mxu0 0.0
    %6724 = vmatpush.msra.mxu0 0.0
    %6725 = vmatpush.msra.mxu0 0.0
    %6726 = vmatpush.msra.mxu0 0.0
    %6727 = vmatpush.msra.mxu0 0.0
    %6728 = vmatpush.msra.mxu0 0.0
    %6729 = vmatpush.msra.mxu0 0.0
    %6730 = vmatpush.msra.mxu0 0.0
    %6731 = vmatpush.msra.mxu0 0.0
    %6732 = vmatpush.msra.mxu0 0.0
    %6733 = vmatpush.msra.mxu0 %v960
    %6734 = vmatmul.f32.gmra.mxu0 %v6716
    %v6735 = vpop.f32.mrf.mxu0
    %v6736 = vadd.f32 0.0, %v6735
    %6737 = vdwg.mxu0
    %v6739 = vsel %vm3945, %v4674, 0
    %6741 = vmatpush.msra.mxu0 0.0
    %6742 = vmatpush.msra.mxu0 0.0
    %6743 = vmatpush.msra.mxu0 0.0
    %6744 = vmatpush.msra.mxu0 0.0
    %6745 = vmatpush.msra.mxu0 0.0
    %6746 = vmatpush.msra.mxu0 0.0
    %6747 = vmatpush.msra.mxu0 0.0
    %6748 = vmatpush.msra.mxu0 0.0
    %6749 = vmatpush.msra.mxu0 0.0
    %6750 = vmatpush.msra.mxu0 0.0
    %6751 = vmatpush.msra.mxu0 0.0
    %6752 = vmatpush.msra.mxu0 0.0
    %6753 = vmatpush.msra.mxu0 0.0
    %6754 = vmatpush.msra.mxu0 0.0
    %6755 = vmatpush.msra.mxu0 0.0
    %6756 = vmatpush.msra.mxu0 %v961
    %6757 = vmatmul.f32.gmra.mxu0 %v6739
    %v6758 = vpop.f32.mrf.mxu0
    %v6759 = vadd.f32 0.0, %v6758
    %6760 = vdwg.mxu0
    %v6762 = vsel %vm3945, %v4675, 0
    %6764 = vmatpush.msra.mxu0 0.0
    %6765 = vmatpush.msra.mxu0 0.0
    %6766 = vmatpush.msra.mxu0 0.0
    %6767 = vmatpush.msra.mxu0 0.0
    %6768 = vmatpush.msra.mxu0 0.0
    %6769 = vmatpush.msra.mxu0 0.0
    %6770 = vmatpush.msra.mxu0 0.0
    %6771 = vmatpush.msra.mxu0 0.0
    %6772 = vmatpush.msra.mxu0 0.0
    %6773 = vmatpush.msra.mxu0 0.0
    %6774 = vmatpush.msra.mxu0 0.0
    %6775 = vmatpush.msra.mxu0 0.0
    %6776 = vmatpush.msra.mxu0 0.0
    %6777 = vmatpush.msra.mxu0 0.0
    %6778 = vmatpush.msra.mxu0 0.0
    %6779 = vmatpush.msra.mxu0 %v962
    %6780 = vmatmul.f32.gmra.mxu0 %v6762
    %v6781 = vpop.f32.mrf.mxu0
    %v6782 = vadd.f32 0.0, %v6781
    %6783 = vdwg.mxu0
    %v6785 = vsel %vm3945, %v4676, 0
    %6787 = vmatpush.msra.mxu0 0.0
    %6788 = vmatpush.msra.mxu0 0.0
    %6789 = vmatpush.msra.mxu0 0.0
    %6790 = vmatpush.msra.mxu0 0.0
    %6791 = vmatpush.msra.mxu0 0.0
    %6792 = vmatpush.msra.mxu0 0.0
    %6793 = vmatpush.msra.mxu0 0.0
    %6794 = vmatpush.msra.mxu0 0.0
    %6795 = vmatpush.msra.mxu0 0.0
    %6796 = vmatpush.msra.mxu0 0.0
    %6797 = vmatpush.msra.mxu0 0.0
    %6798 = vmatpush.msra.mxu0 0.0
    %6799 = vmatpush.msra.mxu0 0.0
    %6800 = vmatpush.msra.mxu0 0.0
    %6801 = vmatpush.msra.mxu0 0.0
    %6802 = vmatpush.msra.mxu0 %v963
    %6803 = vmatmul.f32.gmra.mxu0 %v6785
    %v6804 = vpop.f32.mrf.mxu0
    %v6805 = vadd.f32 0.0, %v6804
    %6806 = vdwg.mxu0
    %v6808 = vsel %vm3945, %v4677, 0
    %6810 = vmatpush.msra.mxu0 0.0
    %6811 = vmatpush.msra.mxu0 0.0
    %6812 = vmatpush.msra.mxu0 0.0
    %6813 = vmatpush.msra.mxu0 0.0
    %6814 = vmatpush.msra.mxu0 0.0
    %6815 = vmatpush.msra.mxu0 0.0
    %6816 = vmatpush.msra.mxu0 0.0
    %6817 = vmatpush.msra.mxu0 0.0
    %6818 = vmatpush.msra.mxu0 0.0
    %6819 = vmatpush.msra.mxu0 0.0
    %6820 = vmatpush.msra.mxu0 0.0
    %6821 = vmatpush.msra.mxu0 0.0
    %6822 = vmatpush.msra.mxu0 0.0
    %6823 = vmatpush.msra.mxu0 0.0
    %6824 = vmatpush.msra.mxu0 0.0
    %6825 = vmatpush.msra.mxu0 %v964
    %6826 = vmatmul.f32.gmra.mxu0 %v6808
    %v6827 = vpop.f32.mrf.mxu0
    %v6828 = vadd.f32 0.0, %v6827
    %6829 = vdwg.mxu0
    %v6831 = vsel %vm3945, %v4678, 0
    %6833 = vmatpush.msra.mxu0 0.0
    %6834 = vmatpush.msra.mxu0 0.0
    %6835 = vmatpush.msra.mxu0 0.0
    %6836 = vmatpush.msra.mxu0 0.0
    %6837 = vmatpush.msra.mxu0 0.0
    %6838 = vmatpush.msra.mxu0 0.0
    %6839 = vmatpush.msra.mxu0 0.0
    %6840 = vmatpush.msra.mxu0 0.0
    %6841 = vmatpush.msra.mxu0 0.0
    %6842 = vmatpush.msra.mxu0 0.0
    %6843 = vmatpush.msra.mxu0 0.0
    %6844 = vmatpush.msra.mxu0 0.0
    %6845 = vmatpush.msra.mxu0 0.0
    %6846 = vmatpush.msra.mxu0 0.0
    %6847 = vmatpush.msra.mxu0 0.0
    %6848 = vmatpush.msra.mxu0 %v965
    %6849 = vmatmul.f32.gmra.mxu0 %v6831
    %v6850 = vpop.f32.mrf.mxu0
    %v6851 = vadd.f32 0.0, %v6850
    %6852 = vdwg.mxu0
    %v6854 = vsel %vm3945, %v4679, 0
    %6856 = vmatpush.msra.mxu0 0.0
    %6857 = vmatpush.msra.mxu0 0.0
    %6858 = vmatpush.msra.mxu0 0.0
    %6859 = vmatpush.msra.mxu0 0.0
    %6860 = vmatpush.msra.mxu0 0.0
    %6861 = vmatpush.msra.mxu0 0.0
    %6862 = vmatpush.msra.mxu0 0.0
    %6863 = vmatpush.msra.mxu0 0.0
    %6864 = vmatpush.msra.mxu0 0.0
    %6865 = vmatpush.msra.mxu0 0.0
    %6866 = vmatpush.msra.mxu0 0.0
    %6867 = vmatpush.msra.mxu0 0.0
    %6868 = vmatpush.msra.mxu0 0.0
    %6869 = vmatpush.msra.mxu0 0.0
    %6870 = vmatpush.msra.mxu0 0.0
    %6871 = vmatpush.msra.mxu0 %v966
    %6872 = vmatmul.f32.gmra.mxu0 %v6854
    %v6873 = vpop.f32.mrf.mxu0
    %v6874 = vadd.f32 0.0, %v6873
    %6875 = vdwg.mxu0
    %v6877 = vsel %vm3945, %v4680, 0
    %6879 = vmatpush.msra.mxu0 0.0
    %6880 = vmatpush.msra.mxu0 0.0
    %6881 = vmatpush.msra.mxu0 0.0
    %6882 = vmatpush.msra.mxu0 0.0
    %6883 = vmatpush.msra.mxu0 0.0
    %6884 = vmatpush.msra.mxu0 0.0
    %6885 = vmatpush.msra.mxu0 0.0
    %6886 = vmatpush.msra.mxu0 0.0
    %6887 = vmatpush.msra.mxu0 0.0
    %6888 = vmatpush.msra.mxu0 0.0
    %6889 = vmatpush.msra.mxu0 0.0
    %6890 = vmatpush.msra.mxu0 0.0
    %6891 = vmatpush.msra.mxu0 0.0
    %6892 = vmatpush.msra.mxu0 0.0
    %6893 = vmatpush.msra.mxu0 0.0
    %6894 = vmatpush.msra.mxu0 %v967
    %6895 = vmatmul.f32.gmra.mxu0 %v6877
    %v6896 = vpop.f32.mrf.mxu0
    %v6897 = vadd.f32 0.0, %v6896
    %6898 = vdwg.mxu0
    %v6900 = vsel %vm3945, %v4681, 0
    %6902 = vmatpush.msra.mxu0 0.0
    %6903 = vmatpush.msra.mxu0 0.0
    %6904 = vmatpush.msra.mxu0 0.0
    %6905 = vmatpush.msra.mxu0 0.0
    %6906 = vmatpush.msra.mxu0 0.0
    %6907 = vmatpush.msra.mxu0 0.0
    %6908 = vmatpush.msra.mxu0 0.0
    %6909 = vmatpush.msra.mxu0 0.0
    %6910 = vmatpush.msra.mxu0 0.0
    %6911 = vmatpush.msra.mxu0 0.0
    %6912 = vmatpush.msra.mxu0 0.0
    %6913 = vmatpush.msra.mxu0 0.0
    %6914 = vmatpush.msra.mxu0 0.0
    %6915 = vmatpush.msra.mxu0 0.0
    %6916 = vmatpush.msra.mxu0 0.0
    %6917 = vmatpush.msra.mxu0 %v968
    %6918 = vmatmul.f32.gmra.mxu0 %v6900
    %v6919 = vpop.f32.mrf.mxu0
    %v6920 = vadd.f32 0.0, %v6919
    %6921 = vdwg.mxu0
    %v6923 = vsel %vm3945, %v4682, 0
    %6925 = vmatpush.msra.mxu0 0.0
    %6926 = vmatpush.msra.mxu0 0.0
    %6927 = vmatpush.msra.mxu0 0.0
    %6928 = vmatpush.msra.mxu0 0.0
    %6929 = vmatpush.msra.mxu0 0.0
    %6930 = vmatpush.msra.mxu0 0.0
    %6931 = vmatpush.msra.mxu0 0.0
    %6932 = vmatpush.msra.mxu0 0.0
    %6933 = vmatpush.msra.mxu0 0.0
    %6934 = vmatpush.msra.mxu0 0.0
    %6935 = vmatpush.msra.mxu0 0.0
    %6936 = vmatpush.msra.mxu0 0.0
    %6937 = vmatpush.msra.mxu0 0.0
    %6938 = vmatpush.msra.mxu0 0.0
    %6939 = vmatpush.msra.mxu0 0.0
    %6940 = vmatpush.msra.mxu0 %v969
    %6941 = vmatmul.f32.gmra.mxu0 %v6923
    %v6942 = vpop.f32.mrf.mxu0
    %v6943 = vadd.f32 0.0, %v6942
    %6944 = vdwg.mxu0
    %v6946 = vsel %vm3945, %v4683, 0
    %6948 = vmatpush.msra.mxu0 0.0
    %6949 = vmatpush.msra.mxu0 0.0
    %6950 = vmatpush.msra.mxu0 0.0
    %6951 = vmatpush.msra.mxu0 0.0
    %6952 = vmatpush.msra.mxu0 0.0
    %6953 = vmatpush.msra.mxu0 0.0
    %6954 = vmatpush.msra.mxu0 0.0
    %6955 = vmatpush.msra.mxu0 0.0
    %6956 = vmatpush.msra.mxu0 0.0
    %6957 = vmatpush.msra.mxu0 0.0
    %6958 = vmatpush.msra.mxu0 0.0
    %6959 = vmatpush.msra.mxu0 0.0
    %6960 = vmatpush.msra.mxu0 0.0
    %6961 = vmatpush.msra.mxu0 0.0
    %6962 = vmatpush.msra.mxu0 0.0
    %6963 = vmatpush.msra.mxu0 %v970
    %6964 = vmatmul.f32.gmra.mxu0 %v6946
    %v6965 = vpop.f32.mrf.mxu0
    %v6966 = vadd.f32 0.0, %v6965
    %6967 = vdwg.mxu0
    %v6969 = vsel %vm3945, %v4684, 0
    %6971 = vmatpush.msra.mxu0 0.0
    %6972 = vmatpush.msra.mxu0 0.0
    %6973 = vmatpush.msra.mxu0 0.0
    %6974 = vmatpush.msra.mxu0 0.0
    %6975 = vmatpush.msra.mxu0 0.0
    %6976 = vmatpush.msra.mxu0 0.0
    %6977 = vmatpush.msra.mxu0 0.0
    %6978 = vmatpush.msra.mxu0 0.0
    %6979 = vmatpush.msra.mxu0 0.0
    %6980 = vmatpush.msra.mxu0 0.0
    %6981 = vmatpush.msra.mxu0 0.0
    %6982 = vmatpush.msra.mxu0 0.0
    %6983 = vmatpush.msra.mxu0 0.0
    %6984 = vmatpush.msra.mxu0 0.0
    %6985 = vmatpush.msra.mxu0 0.0
    %6986 = vmatpush.msra.mxu0 %v971
    %6987 = vmatmul.f32.gmra.mxu0 %v6969
    %v6988 = vpop.f32.mrf.mxu0
    %v6989 = vadd.f32 0.0, %v6988
    %6990 = vdwg.mxu0
    %v6992 = vsel %vm3945, %v4685, 0
    %6994 = vmatpush.msra.mxu0 0.0
    %6995 = vmatpush.msra.mxu0 0.0
    %6996 = vmatpush.msra.mxu0 0.0
    %6997 = vmatpush.msra.mxu0 0.0
    %6998 = vmatpush.msra.mxu0 0.0
    %6999 = vmatpush.msra.mxu0 0.0
    %7000 = vmatpush.msra.mxu0 0.0
    %7001 = vmatpush.msra.mxu0 0.0
    %7002 = vmatpush.msra.mxu0 0.0
    %7003 = vmatpush.msra.mxu0 0.0
    %7004 = vmatpush.msra.mxu0 0.0
    %7005 = vmatpush.msra.mxu0 0.0
    %7006 = vmatpush.msra.mxu0 0.0
    %7007 = vmatpush.msra.mxu0 0.0
    %7008 = vmatpush.msra.mxu0 0.0
    %7009 = vmatpush.msra.mxu0 %v972
    %7010 = vmatmul.f32.gmra.mxu0 %v6992
    %v7011 = vpop.f32.mrf.mxu0
    %v7012 = vadd.f32 0.0, %v7011
    %7013 = vdwg.mxu0
    %v7015 = vsel %vm3945, %v4686, 0
    %7017 = vmatpush.msra.mxu0 0.0
    %7018 = vmatpush.msra.mxu0 0.0
    %7019 = vmatpush.msra.mxu0 0.0
    %7020 = vmatpush.msra.mxu0 0.0
    %7021 = vmatpush.msra.mxu0 0.0
    %7022 = vmatpush.msra.mxu0 0.0
    %7023 = vmatpush.msra.mxu0 0.0
    %7024 = vmatpush.msra.mxu0 0.0
    %7025 = vmatpush.msra.mxu0 0.0
    %7026 = vmatpush.msra.mxu0 0.0
    %7027 = vmatpush.msra.mxu0 0.0
    %7028 = vmatpush.msra.mxu0 0.0
    %7029 = vmatpush.msra.mxu0 0.0
    %7030 = vmatpush.msra.mxu0 0.0
    %7031 = vmatpush.msra.mxu0 0.0
    %7032 = vmatpush.msra.mxu0 %v973
    %7033 = vmatmul.f32.gmra.mxu0 %v7015
    %v7034 = vpop.f32.mrf.mxu0
    %v7035 = vadd.f32 0.0, %v7034
    %7036 = vdwg.mxu0
    %v7038 = vsel %vm3945, %v4687, 0
    %7040 = vmatpush.msra.mxu0 0.0
    %7041 = vmatpush.msra.mxu0 0.0
    %7042 = vmatpush.msra.mxu0 0.0
    %7043 = vmatpush.msra.mxu0 0.0
    %7044 = vmatpush.msra.mxu0 0.0
    %7045 = vmatpush.msra.mxu0 0.0
    %7046 = vmatpush.msra.mxu0 0.0
    %7047 = vmatpush.msra.mxu0 0.0
    %7048 = vmatpush.msra.mxu0 0.0
    %7049 = vmatpush.msra.mxu0 0.0
    %7050 = vmatpush.msra.mxu0 0.0
    %7051 = vmatpush.msra.mxu0 0.0
    %7052 = vmatpush.msra.mxu0 0.0
    %7053 = vmatpush.msra.mxu0 0.0
    %7054 = vmatpush.msra.mxu0 0.0
    %7055 = vmatpush.msra.mxu0 %v974
    %7056 = vmatmul.f32.gmra.mxu0 %v7038
    %v7057 = vpop.f32.mrf.mxu0
    %v7058 = vadd.f32 0.0, %v7057
    %7059 = vdwg.mxu0
    %v7061 = vsel %vm3945, %v4688, 0
    %7063 = vmatpush.msra.mxu0 0.0
    %7064 = vmatpush.msra.mxu0 0.0
    %7065 = vmatpush.msra.mxu0 0.0
    %7066 = vmatpush.msra.mxu0 0.0
    %7067 = vmatpush.msra.mxu0 0.0
    %7068 = vmatpush.msra.mxu0 0.0
    %7069 = vmatpush.msra.mxu0 0.0
    %7070 = vmatpush.msra.mxu0 0.0
    %7071 = vmatpush.msra.mxu0 0.0
    %7072 = vmatpush.msra.mxu0 0.0
    %7073 = vmatpush.msra.mxu0 0.0
    %7074 = vmatpush.msra.mxu0 0.0
    %7075 = vmatpush.msra.mxu0 0.0
    %7076 = vmatpush.msra.mxu0 0.0
    %7077 = vmatpush.msra.mxu0 0.0
    %7078 = vmatpush.msra.mxu0 %v975
    %7079 = vmatmul.f32.gmra.mxu0 %v7061
    %v7080 = vpop.f32.mrf.mxu0
    %v7081 = vadd.f32 0.0, %v7080
    %7082 = vdwg.mxu0
    %v7084 = vsel %vm3945, %v4689, 0
    %7086 = vmatpush.msra.mxu0 0.0
    %7087 = vmatpush.msra.mxu0 0.0
    %7088 = vmatpush.msra.mxu0 0.0
    %7089 = vmatpush.msra.mxu0 0.0
    %7090 = vmatpush.msra.mxu0 0.0
    %7091 = vmatpush.msra.mxu0 0.0
    %7092 = vmatpush.msra.mxu0 0.0
    %7093 = vmatpush.msra.mxu0 0.0
    %7094 = vmatpush.msra.mxu0 0.0
    %7095 = vmatpush.msra.mxu0 0.0
    %7096 = vmatpush.msra.mxu0 0.0
    %7097 = vmatpush.msra.mxu0 0.0
    %7098 = vmatpush.msra.mxu0 0.0
    %7099 = vmatpush.msra.mxu0 0.0
    %7100 = vmatpush.msra.mxu0 0.0
    %7101 = vmatpush.msra.mxu0 %v976
    %7102 = vmatmul.f32.gmra.mxu0 %v7084
    %v7103 = vpop.f32.mrf.mxu0
    %v7104 = vadd.f32 0.0, %v7103
    %7105 = vdwg.mxu0
    %v7107 = vsel %vm3945, %v4690, 0
    %7109 = vmatpush.msra.mxu0 0.0
    %7110 = vmatpush.msra.mxu0 0.0
    %7111 = vmatpush.msra.mxu0 0.0
    %7112 = vmatpush.msra.mxu0 0.0
    %7113 = vmatpush.msra.mxu0 0.0
    %7114 = vmatpush.msra.mxu0 0.0
    %7115 = vmatpush.msra.mxu0 0.0
    %7116 = vmatpush.msra.mxu0 0.0
    %7117 = vmatpush.msra.mxu0 0.0
    %7118 = vmatpush.msra.mxu0 0.0
    %7119 = vmatpush.msra.mxu0 0.0
    %7120 = vmatpush.msra.mxu0 0.0
    %7121 = vmatpush.msra.mxu0 0.0
    %7122 = vmatpush.msra.mxu0 0.0
    %7123 = vmatpush.msra.mxu0 0.0
    %7124 = vmatpush.msra.mxu0 %v977
    %7125 = vmatmul.f32.gmra.mxu0 %v7107
    %v7126 = vpop.f32.mrf.mxu0
    %v7127 = vadd.f32 0.0, %v7126
    %7128 = vdwg.mxu0
    %v7130 = vsel %vm3945, %v4691, 0
    %7132 = vmatpush.msra.mxu0 0.0
    %7133 = vmatpush.msra.mxu0 0.0
    %7134 = vmatpush.msra.mxu0 0.0
    %7135 = vmatpush.msra.mxu0 0.0
    %7136 = vmatpush.msra.mxu0 0.0
    %7137 = vmatpush.msra.mxu0 0.0
    %7138 = vmatpush.msra.mxu0 0.0
    %7139 = vmatpush.msra.mxu0 0.0
    %7140 = vmatpush.msra.mxu0 0.0
    %7141 = vmatpush.msra.mxu0 0.0
    %7142 = vmatpush.msra.mxu0 0.0
    %7143 = vmatpush.msra.mxu0 0.0
    %7144 = vmatpush.msra.mxu0 0.0
    %7145 = vmatpush.msra.mxu0 0.0
    %7146 = vmatpush.msra.mxu0 0.0
    %7147 = vmatpush.msra.mxu0 %v978
    %7148 = vmatmul.f32.gmra.mxu0 %v7130
    %v7149 = vpop.f32.mrf.mxu0
    %v7150 = vadd.f32 0.0, %v7149
    %7151 = vdwg.mxu0
    %v7153 = vsel %vm3945, %v4692, 0
    %7155 = vmatpush.msra.mxu0 0.0
    %7156 = vmatpush.msra.mxu0 0.0
    %7157 = vmatpush.msra.mxu0 0.0
    %7158 = vmatpush.msra.mxu0 0.0
    %7159 = vmatpush.msra.mxu0 0.0
    %7160 = vmatpush.msra.mxu0 0.0
    %7161 = vmatpush.msra.mxu0 0.0
    %7162 = vmatpush.msra.mxu0 0.0
    %7163 = vmatpush.msra.mxu0 0.0
    %7164 = vmatpush.msra.mxu0 0.0
    %7165 = vmatpush.msra.mxu0 0.0
    %7166 = vmatpush.msra.mxu0 0.0
    %7167 = vmatpush.msra.mxu0 0.0
    %7168 = vmatpush.msra.mxu0 0.0
    %7169 = vmatpush.msra.mxu0 0.0
    %7170 = vmatpush.msra.mxu0 %v979
    %7171 = vmatmul.f32.gmra.mxu0 %v7153
    %v7172 = vpop.f32.mrf.mxu0
    %v7173 = vadd.f32 0.0, %v7172
    %7174 = vdwg.mxu0
    %v7176 = vsel %vm3945, %v4693, 0
    %7178 = vmatpush.msra.mxu0 0.0
    %7179 = vmatpush.msra.mxu0 0.0
    %7180 = vmatpush.msra.mxu0 0.0
    %7181 = vmatpush.msra.mxu0 0.0
    %7182 = vmatpush.msra.mxu0 0.0
    %7183 = vmatpush.msra.mxu0 0.0
    %7184 = vmatpush.msra.mxu0 0.0
    %7185 = vmatpush.msra.mxu0 0.0
    %7186 = vmatpush.msra.mxu0 0.0
    %7187 = vmatpush.msra.mxu0 0.0
    %7188 = vmatpush.msra.mxu0 0.0
    %7189 = vmatpush.msra.mxu0 0.0
    %7190 = vmatpush.msra.mxu0 0.0
    %7191 = vmatpush.msra.mxu0 0.0
    %7192 = vmatpush.msra.mxu0 0.0
    %7193 = vmatpush.msra.mxu0 %v980
    %7194 = vmatmul.f32.gmra.mxu0 %v7176
    %v7195 = vpop.f32.mrf.mxu0
    %v7196 = vadd.f32 0.0, %v7195
    %7197 = vdwg.mxu0
    %v7199 = vsel %vm3945, %v4694, 0
    %7201 = vmatpush.msra.mxu0 0.0
    %7202 = vmatpush.msra.mxu0 0.0
    %7203 = vmatpush.msra.mxu0 0.0
    %7204 = vmatpush.msra.mxu0 0.0
    %7205 = vmatpush.msra.mxu0 0.0
    %7206 = vmatpush.msra.mxu0 0.0
    %7207 = vmatpush.msra.mxu0 0.0
    %7208 = vmatpush.msra.mxu0 0.0
    %7209 = vmatpush.msra.mxu0 0.0
    %7210 = vmatpush.msra.mxu0 0.0
    %7211 = vmatpush.msra.mxu0 0.0
    %7212 = vmatpush.msra.mxu0 0.0
    %7213 = vmatpush.msra.mxu0 0.0
    %7214 = vmatpush.msra.mxu0 0.0
    %7215 = vmatpush.msra.mxu0 0.0
    %7216 = vmatpush.msra.mxu0 %v981
    %7217 = vmatmul.f32.gmra.mxu0 %v7199
    %v7218 = vpop.f32.mrf.mxu0
    %v7219 = vadd.f32 0.0, %v7218
    %7220 = vdwg.mxu0
    %v7222 = vsel %vm3945, %v4695, 0
    %7224 = vmatpush.msra.mxu0 0.0
    %7225 = vmatpush.msra.mxu0 0.0
    %7226 = vmatpush.msra.mxu0 0.0
    %7227 = vmatpush.msra.mxu0 0.0
    %7228 = vmatpush.msra.mxu0 0.0
    %7229 = vmatpush.msra.mxu0 0.0
    %7230 = vmatpush.msra.mxu0 0.0
    %7231 = vmatpush.msra.mxu0 0.0
    %7232 = vmatpush.msra.mxu0 0.0
    %7233 = vmatpush.msra.mxu0 0.0
    %7234 = vmatpush.msra.mxu0 0.0
    %7235 = vmatpush.msra.mxu0 0.0
    %7236 = vmatpush.msra.mxu0 0.0
    %7237 = vmatpush.msra.mxu0 0.0
    %7238 = vmatpush.msra.mxu0 0.0
    %7239 = vmatpush.msra.mxu0 %v982
    %7240 = vmatmul.f32.gmra.mxu0 %v7222
    %v7241 = vpop.f32.mrf.mxu0
    %v7242 = vadd.f32 0.0, %v7241
    %7243 = vdwg.mxu0
    %v7245 = vsel %vm3945, %v4696, 0
    %7247 = vmatpush.msra.mxu0 0.0
    %7248 = vmatpush.msra.mxu0 0.0
    %7249 = vmatpush.msra.mxu0 0.0
    %7250 = vmatpush.msra.mxu0 0.0
    %7251 = vmatpush.msra.mxu0 0.0
    %7252 = vmatpush.msra.mxu0 0.0
    %7253 = vmatpush.msra.mxu0 0.0
    %7254 = vmatpush.msra.mxu0 0.0
    %7255 = vmatpush.msra.mxu0 0.0
    %7256 = vmatpush.msra.mxu0 0.0
    %7257 = vmatpush.msra.mxu0 0.0
    %7258 = vmatpush.msra.mxu0 0.0
    %7259 = vmatpush.msra.mxu0 0.0
    %7260 = vmatpush.msra.mxu0 0.0
    %7261 = vmatpush.msra.mxu0 0.0
    %7262 = vmatpush.msra.mxu0 %v983
    %7263 = vmatmul.f32.gmra.mxu0 %v7245
    %v7264 = vpop.f32.mrf.mxu0
    %v7265 = vadd.f32 0.0, %v7264
    %7266 = vdwg.mxu0
    %v7268 = vsel %vm3945, %v4697, 0
    %7270 = vmatpush.msra.mxu0 0.0
    %7271 = vmatpush.msra.mxu0 0.0
    %7272 = vmatpush.msra.mxu0 0.0
    %7273 = vmatpush.msra.mxu0 0.0
    %7274 = vmatpush.msra.mxu0 0.0
    %7275 = vmatpush.msra.mxu0 0.0
    %7276 = vmatpush.msra.mxu0 0.0
    %7277 = vmatpush.msra.mxu0 0.0
    %7278 = vmatpush.msra.mxu0 0.0
    %7279 = vmatpush.msra.mxu0 0.0
    %7280 = vmatpush.msra.mxu0 0.0
    %7281 = vmatpush.msra.mxu0 0.0
    %7282 = vmatpush.msra.mxu0 0.0
    %7283 = vmatpush.msra.mxu0 0.0
    %7284 = vmatpush.msra.mxu0 0.0
    %7285 = vmatpush.msra.mxu0 %v984
    %7286 = vmatmul.f32.gmra.mxu0 %v7268
    %v7287 = vpop.f32.mrf.mxu0
    %v7288 = vadd.f32 0.0, %v7287
    %7289 = vdwg.mxu0
    %v7291 = vsel %vm3945, %v4698, 0
    %7293 = vmatpush.msra.mxu0 0.0
    %7294 = vmatpush.msra.mxu0 0.0
    %7295 = vmatpush.msra.mxu0 0.0
    %7296 = vmatpush.msra.mxu0 0.0
    %7297 = vmatpush.msra.mxu0 0.0
    %7298 = vmatpush.msra.mxu0 0.0
    %7299 = vmatpush.msra.mxu0 0.0
    %7300 = vmatpush.msra.mxu0 0.0
    %7301 = vmatpush.msra.mxu0 0.0
    %7302 = vmatpush.msra.mxu0 0.0
    %7303 = vmatpush.msra.mxu0 0.0
    %7304 = vmatpush.msra.mxu0 0.0
    %7305 = vmatpush.msra.mxu0 0.0
    %7306 = vmatpush.msra.mxu0 0.0
    %7307 = vmatpush.msra.mxu0 0.0
    %7308 = vmatpush.msra.mxu0 %v985
    %7309 = vmatmul.f32.gmra.mxu0 %v7291
    %v7310 = vpop.f32.mrf.mxu0
    %v7311 = vadd.f32 0.0, %v7310
    %7312 = vdwg.mxu0
    %v7314 = vsel %vm3945, %v4699, 0
    %7316 = vmatpush.msra.mxu0 0.0
    %7317 = vmatpush.msra.mxu0 0.0
    %7318 = vmatpush.msra.mxu0 0.0
    %7319 = vmatpush.msra.mxu0 0.0
    %7320 = vmatpush.msra.mxu0 0.0
    %7321 = vmatpush.msra.mxu0 0.0
    %7322 = vmatpush.msra.mxu0 0.0
    %7323 = vmatpush.msra.mxu0 0.0
    %7324 = vmatpush.msra.mxu0 0.0
    %7325 = vmatpush.msra.mxu0 0.0
    %7326 = vmatpush.msra.mxu0 0.0
    %7327 = vmatpush.msra.mxu0 0.0
    %7328 = vmatpush.msra.mxu0 0.0
    %7329 = vmatpush.msra.mxu0 0.0
    %7330 = vmatpush.msra.mxu0 0.0
    %7331 = vmatpush.msra.mxu0 %v986
    %7332 = vmatmul.f32.gmra.mxu0 %v7314
    %v7333 = vpop.f32.mrf.mxu0
    %v7334 = vadd.f32 0.0, %v7333
    %7335 = vdwg.mxu0
    %v7337 = vsel %vm3945, %v4700, 0
    %7339 = vmatpush.msra.mxu0 0.0
    %7340 = vmatpush.msra.mxu0 0.0
    %7341 = vmatpush.msra.mxu0 0.0
    %7342 = vmatpush.msra.mxu0 0.0
    %7343 = vmatpush.msra.mxu0 0.0
    %7344 = vmatpush.msra.mxu0 0.0
    %7345 = vmatpush.msra.mxu0 0.0
    %7346 = vmatpush.msra.mxu0 0.0
    %7347 = vmatpush.msra.mxu0 0.0
    %7348 = vmatpush.msra.mxu0 0.0
    %7349 = vmatpush.msra.mxu0 0.0
    %7350 = vmatpush.msra.mxu0 0.0
    %7351 = vmatpush.msra.mxu0 0.0
    %7352 = vmatpush.msra.mxu0 0.0
    %7353 = vmatpush.msra.mxu0 0.0
    %7354 = vmatpush.msra.mxu0 %v987
    %7355 = vmatmul.f32.gmra.mxu0 %v7337
    %v7356 = vpop.f32.mrf.mxu0
    %v7357 = vadd.f32 0.0, %v7356
    %7358 = vdwg.mxu0
    %v7360 = vsel %vm3945, %v4701, 0
    %7362 = vmatpush.msra.mxu0 0.0
    %7363 = vmatpush.msra.mxu0 0.0
    %7364 = vmatpush.msra.mxu0 0.0
    %7365 = vmatpush.msra.mxu0 0.0
    %7366 = vmatpush.msra.mxu0 0.0
    %7367 = vmatpush.msra.mxu0 0.0
    %7368 = vmatpush.msra.mxu0 0.0
    %7369 = vmatpush.msra.mxu0 0.0
    %7370 = vmatpush.msra.mxu0 0.0
    %7371 = vmatpush.msra.mxu0 0.0
    %7372 = vmatpush.msra.mxu0 0.0
    %7373 = vmatpush.msra.mxu0 0.0
    %7374 = vmatpush.msra.mxu0 0.0
    %7375 = vmatpush.msra.mxu0 0.0
    %7376 = vmatpush.msra.mxu0 0.0
    %7377 = vmatpush.msra.mxu0 %v988
    %7378 = vmatmul.f32.gmra.mxu0 %v7360
    %v7379 = vpop.f32.mrf.mxu0
    %v7380 = vadd.f32 0.0, %v7379
    %7381 = vdwg.mxu0
    %v7383 = vsel %vm3945, %v4702, 0
    %7385 = vmatpush.msra.mxu0 0.0
    %7386 = vmatpush.msra.mxu0 0.0
    %7387 = vmatpush.msra.mxu0 0.0
    %7388 = vmatpush.msra.mxu0 0.0
    %7389 = vmatpush.msra.mxu0 0.0
    %7390 = vmatpush.msra.mxu0 0.0
    %7391 = vmatpush.msra.mxu0 0.0
    %7392 = vmatpush.msra.mxu0 0.0
    %7393 = vmatpush.msra.mxu0 0.0
    %7394 = vmatpush.msra.mxu0 0.0
    %7395 = vmatpush.msra.mxu0 0.0
    %7396 = vmatpush.msra.mxu0 0.0
    %7397 = vmatpush.msra.mxu0 0.0
    %7398 = vmatpush.msra.mxu0 0.0
    %7399 = vmatpush.msra.mxu0 0.0
    %7400 = vmatpush.msra.mxu0 %v989
    %7401 = vmatmul.f32.gmra.mxu0 %v7383
    %v7402 = vpop.f32.mrf.mxu0
    %v7403 = vadd.f32 0.0, %v7402
    %7404 = vdwg.mxu0
    %v7406 = vsel %vm3945, %v4703, 0
    %7408 = vmatpush.msra.mxu0 0.0
    %7409 = vmatpush.msra.mxu0 0.0
    %7410 = vmatpush.msra.mxu0 0.0
    %7411 = vmatpush.msra.mxu0 0.0
    %7412 = vmatpush.msra.mxu0 0.0
    %7413 = vmatpush.msra.mxu0 0.0
    %7414 = vmatpush.msra.mxu0 0.0
    %7415 = vmatpush.msra.mxu0 0.0
    %7416 = vmatpush.msra.mxu0 0.0
    %7417 = vmatpush.msra.mxu0 0.0
    %7418 = vmatpush.msra.mxu0 0.0
    %7419 = vmatpush.msra.mxu0 0.0
    %7420 = vmatpush.msra.mxu0 0.0
    %7421 = vmatpush.msra.mxu0 0.0
    %7422 = vmatpush.msra.mxu0 0.0
    %7423 = vmatpush.msra.mxu0 %v990
    %7424 = vmatmul.f32.gmra.mxu0 %v7406
    %v7425 = vpop.f32.mrf.mxu0
    %v7426 = vadd.f32 0.0, %v7425
    %7427 = vdwg.mxu0
    %v7429 = vsel %vm3945, %v4704, 0
    %7431 = vmatpush.msra.mxu0 0.0
    %7432 = vmatpush.msra.mxu0 0.0
    %7433 = vmatpush.msra.mxu0 0.0
    %7434 = vmatpush.msra.mxu0 0.0
    %7435 = vmatpush.msra.mxu0 0.0
    %7436 = vmatpush.msra.mxu0 0.0
    %7437 = vmatpush.msra.mxu0 0.0
    %7438 = vmatpush.msra.mxu0 0.0
    %7439 = vmatpush.msra.mxu0 0.0
    %7440 = vmatpush.msra.mxu0 0.0
    %7441 = vmatpush.msra.mxu0 0.0
    %7442 = vmatpush.msra.mxu0 0.0
    %7443 = vmatpush.msra.mxu0 0.0
    %7444 = vmatpush.msra.mxu0 0.0
    %7445 = vmatpush.msra.mxu0 0.0
    %7446 = vmatpush.msra.mxu0 %v991
    %7447 = vmatmul.f32.gmra.mxu0 %v7429
    %v7448 = vpop.f32.mrf.mxu0
    %v7449 = vadd.f32 0.0, %v7448
    %7450 = vdwg.mxu0
    %v7452 = vsel %vm3945, %v4705, 0
    %7454 = vmatpush.msra.mxu0 0.0
    %7455 = vmatpush.msra.mxu0 0.0
    %7456 = vmatpush.msra.mxu0 0.0
    %7457 = vmatpush.msra.mxu0 0.0
    %7458 = vmatpush.msra.mxu0 0.0
    %7459 = vmatpush.msra.mxu0 0.0
    %7460 = vmatpush.msra.mxu0 0.0
    %7461 = vmatpush.msra.mxu0 0.0
    %7462 = vmatpush.msra.mxu0 0.0
    %7463 = vmatpush.msra.mxu0 0.0
    %7464 = vmatpush.msra.mxu0 0.0
    %7465 = vmatpush.msra.mxu0 0.0
    %7466 = vmatpush.msra.mxu0 0.0
    %7467 = vmatpush.msra.mxu0 0.0
    %7468 = vmatpush.msra.mxu0 0.0
    %7469 = vmatpush.msra.mxu0 %v992
    %7470 = vmatmul.f32.gmra.mxu0 %v7452
    %v7471 = vpop.f32.mrf.mxu0
    %v7472 = vadd.f32 0.0, %v7471
    %7473 = vdwg.mxu0
    %v7475 = vsel %vm3945, %v4706, 0
    %7477 = vmatpush.msra.mxu0 0.0
    %7478 = vmatpush.msra.mxu0 0.0
    %7479 = vmatpush.msra.mxu0 0.0
    %7480 = vmatpush.msra.mxu0 0.0
    %7481 = vmatpush.msra.mxu0 0.0
    %7482 = vmatpush.msra.mxu0 0.0
    %7483 = vmatpush.msra.mxu0 0.0
    %7484 = vmatpush.msra.mxu0 0.0
    %7485 = vmatpush.msra.mxu0 0.0
    %7486 = vmatpush.msra.mxu0 0.0
    %7487 = vmatpush.msra.mxu0 0.0
    %7488 = vmatpush.msra.mxu0 0.0
    %7489 = vmatpush.msra.mxu0 0.0
    %7490 = vmatpush.msra.mxu0 0.0
    %7491 = vmatpush.msra.mxu0 0.0
    %7492 = vmatpush.msra.mxu0 %v993
    %7493 = vmatmul.f32.gmra.mxu0 %v7475
    %v7494 = vpop.f32.mrf.mxu0
    %v7495 = vadd.f32 0.0, %v7494
    %7496 = vdwg.mxu0
    %v7498 = vsel %vm3945, %v4707, 0
    %7500 = vmatpush.msra.mxu0 0.0
    %7501 = vmatpush.msra.mxu0 0.0
    %7502 = vmatpush.msra.mxu0 0.0
    %7503 = vmatpush.msra.mxu0 0.0
    %7504 = vmatpush.msra.mxu0 0.0
    %7505 = vmatpush.msra.mxu0 0.0
    %7506 = vmatpush.msra.mxu0 0.0
    %7507 = vmatpush.msra.mxu0 0.0
    %7508 = vmatpush.msra.mxu0 0.0
    %7509 = vmatpush.msra.mxu0 0.0
    %7510 = vmatpush.msra.mxu0 0.0
    %7511 = vmatpush.msra.mxu0 0.0
    %7512 = vmatpush.msra.mxu0 0.0
    %7513 = vmatpush.msra.mxu0 0.0
    %7514 = vmatpush.msra.mxu0 0.0
    %7515 = vmatpush.msra.mxu0 %v994
    %7516 = vmatmul.f32.gmra.mxu0 %v7498
    %v7517 = vpop.f32.mrf.mxu0
    %v7518 = vadd.f32 0.0, %v7517
    %7519 = vdwg.mxu0
    %v7521 = vsel %vm3945, %v4708, 0
    %7523 = vmatpush.msra.mxu0 0.0
    %7524 = vmatpush.msra.mxu0 0.0
    %7525 = vmatpush.msra.mxu0 0.0
    %7526 = vmatpush.msra.mxu0 0.0
    %7527 = vmatpush.msra.mxu0 0.0
    %7528 = vmatpush.msra.mxu0 0.0
    %7529 = vmatpush.msra.mxu0 0.0
    %7530 = vmatpush.msra.mxu0 0.0
    %7531 = vmatpush.msra.mxu0 0.0
    %7532 = vmatpush.msra.mxu0 0.0
    %7533 = vmatpush.msra.mxu0 0.0
    %7534 = vmatpush.msra.mxu0 0.0
    %7535 = vmatpush.msra.mxu0 0.0
    %7536 = vmatpush.msra.mxu0 0.0
    %7537 = vmatpush.msra.mxu0 0.0
    %7538 = vmatpush.msra.mxu0 %v995
    %7539 = vmatmul.f32.gmra.mxu0 %v7521
    %v7540 = vpop.f32.mrf.mxu0
    %v7541 = vadd.f32 0.0, %v7540
    %7542 = vdwg.mxu0
    %v7544 = vsel %vm3945, %v4709, 0
    %7546 = vmatpush.msra.mxu0 0.0
    %7547 = vmatpush.msra.mxu0 0.0
    %7548 = vmatpush.msra.mxu0 0.0
    %7549 = vmatpush.msra.mxu0 0.0
    %7550 = vmatpush.msra.mxu0 0.0
    %7551 = vmatpush.msra.mxu0 0.0
    %7552 = vmatpush.msra.mxu0 0.0
    %7553 = vmatpush.msra.mxu0 0.0
    %7554 = vmatpush.msra.mxu0 0.0
    %7555 = vmatpush.msra.mxu0 0.0
    %7556 = vmatpush.msra.mxu0 0.0
    %7557 = vmatpush.msra.mxu0 0.0
    %7558 = vmatpush.msra.mxu0 0.0
    %7559 = vmatpush.msra.mxu0 0.0
    %7560 = vmatpush.msra.mxu0 0.0
    %7561 = vmatpush.msra.mxu0 %v996
    %7562 = vmatmul.f32.gmra.mxu0 %v7544
    %v7563 = vpop.f32.mrf.mxu0
    %v7564 = vadd.f32 0.0, %v7563
    %7565 = vdwg.mxu0
    %v7567 = vsel %vm3945, %v4710, 0
    %7569 = vmatpush.msra.mxu0 0.0
    %7570 = vmatpush.msra.mxu0 0.0
    %7571 = vmatpush.msra.mxu0 0.0
    %7572 = vmatpush.msra.mxu0 0.0
    %7573 = vmatpush.msra.mxu0 0.0
    %7574 = vmatpush.msra.mxu0 0.0
    %7575 = vmatpush.msra.mxu0 0.0
    %7576 = vmatpush.msra.mxu0 0.0
    %7577 = vmatpush.msra.mxu0 0.0
    %7578 = vmatpush.msra.mxu0 0.0
    %7579 = vmatpush.msra.mxu0 0.0
    %7580 = vmatpush.msra.mxu0 0.0
    %7581 = vmatpush.msra.mxu0 0.0
    %7582 = vmatpush.msra.mxu0 0.0
    %7583 = vmatpush.msra.mxu0 0.0
    %7584 = vmatpush.msra.mxu0 %v997
    %7585 = vmatmul.f32.gmra.mxu0 %v7567
    %v7586 = vpop.f32.mrf.mxu0
    %v7587 = vadd.f32 0.0, %v7586
    %7588 = vdwg.mxu0
    %v7590 = vsel %vm3945, %v4711, 0
    %7592 = vmatpush.msra.mxu0 0.0
    %7593 = vmatpush.msra.mxu0 0.0
    %7594 = vmatpush.msra.mxu0 0.0
    %7595 = vmatpush.msra.mxu0 0.0
    %7596 = vmatpush.msra.mxu0 0.0
    %7597 = vmatpush.msra.mxu0 0.0
    %7598 = vmatpush.msra.mxu0 0.0
    %7599 = vmatpush.msra.mxu0 0.0
    %7600 = vmatpush.msra.mxu0 0.0
    %7601 = vmatpush.msra.mxu0 0.0
    %7602 = vmatpush.msra.mxu0 0.0
    %7603 = vmatpush.msra.mxu0 0.0
    %7604 = vmatpush.msra.mxu0 0.0
    %7605 = vmatpush.msra.mxu0 0.0
    %7606 = vmatpush.msra.mxu0 0.0
    %7607 = vmatpush.msra.mxu0 %v998
    %7608 = vmatmul.f32.gmra.mxu0 %v7590
    %v7609 = vpop.f32.mrf.mxu0
    %v7610 = vadd.f32 0.0, %v7609
    %7611 = vdwg.mxu0
    %v7613 = vsel %vm3945, %v4712, 0
    %7615 = vmatpush.msra.mxu0 0.0
    %7616 = vmatpush.msra.mxu0 0.0
    %7617 = vmatpush.msra.mxu0 0.0
    %7618 = vmatpush.msra.mxu0 0.0
    %7619 = vmatpush.msra.mxu0 0.0
    %7620 = vmatpush.msra.mxu0 0.0
    %7621 = vmatpush.msra.mxu0 0.0
    %7622 = vmatpush.msra.mxu0 0.0
    %7623 = vmatpush.msra.mxu0 0.0
    %7624 = vmatpush.msra.mxu0 0.0
    %7625 = vmatpush.msra.mxu0 0.0
    %7626 = vmatpush.msra.mxu0 0.0
    %7627 = vmatpush.msra.mxu0 0.0
    %7628 = vmatpush.msra.mxu0 0.0
    %7629 = vmatpush.msra.mxu0 0.0
    %7630 = vmatpush.msra.mxu0 %v999
    %7631 = vmatmul.f32.gmra.mxu0 %v7613
    %v7632 = vpop.f32.mrf.mxu0
    %v7633 = vadd.f32 0.0, %v7632
    %7634 = vdwg.mxu0
    %v7636 = vsel %vm3945, %v4713, 0
    %7638 = vmatpush.msra.mxu0 0.0
    %7639 = vmatpush.msra.mxu0 0.0
    %7640 = vmatpush.msra.mxu0 0.0
    %7641 = vmatpush.msra.mxu0 0.0
    %7642 = vmatpush.msra.mxu0 0.0
    %7643 = vmatpush.msra.mxu0 0.0
    %7644 = vmatpush.msra.mxu0 0.0
    %7645 = vmatpush.msra.mxu0 0.0
    %7646 = vmatpush.msra.mxu0 0.0
    %7647 = vmatpush.msra.mxu0 0.0
    %7648 = vmatpush.msra.mxu0 0.0
    %7649 = vmatpush.msra.mxu0 0.0
    %7650 = vmatpush.msra.mxu0 0.0
    %7651 = vmatpush.msra.mxu0 0.0
    %7652 = vmatpush.msra.mxu0 0.0
    %7653 = vmatpush.msra.mxu0 %v1000
    %7654 = vmatmul.f32.gmra.mxu0 %v7636
    %v7655 = vpop.f32.mrf.mxu0
    %v7656 = vadd.f32 0.0, %v7655
    %7657 = vdwg.mxu0
    %v7658 = vadd.f32 %v4735, %v4758
    %v7659 = vadd.f32 %v7658, %v4781
    %v7660 = vadd.f32 %v7659, %v4804
    %v7661 = vadd.f32 %v4827, %v4850
    %v7662 = vadd.f32 %v7661, %v4873
    %v7663 = vadd.f32 %v7662, %v4896
    %v7664 = vadd.f32 %v4919, %v4942
    %v7665 = vadd.f32 %v7664, %v4965
    %v7666 = vadd.f32 %v7665, %v4988
    %v7667 = vadd.f32 %v5011, %v5034
    %v7668 = vadd.f32 %v7667, %v5057
    %v7669 = vadd.f32 %v7668, %v5080
    %v7670 = vadd.f32 %v5103, %v5126
    %v7671 = vadd.f32 %v7670, %v5149
    %v7672 = vadd.f32 %v7671, %v5172
    %v7673 = vadd.f32 %v5195, %v5218
    %v7674 = vadd.f32 %v7673, %v5241
    %v7675 = vadd.f32 %v7674, %v5264
    %v7676 = vadd.f32 %v5287, %v5310
    %v7677 = vadd.f32 %v7676, %v5333
    %v7678 = vadd.f32 %v7677, %v5356
    %v7679 = vadd.f32 %v5379, %v5402
    %v7680 = vadd.f32 %v7679, %v5425
    %v7681 = vadd.f32 %v7680, %v5448
    %v7682 = vadd.f32 %v5471, %v5494
    %v7683 = vadd.f32 %v7682, %v5517
    %v7684 = vadd.f32 %v7683, %v5540
    %v7685 = vadd.f32 %v5563, %v5586
    %v7686 = vadd.f32 %v7685, %v5609
    %v7687 = vadd.f32 %v7686, %v5632
    %v7688 = vadd.f32 %v5655, %v5678
    %v7689 = vadd.f32 %v7688, %v5701
    %v7690 = vadd.f32 %v7689, %v5724
    %v7691 = vadd.f32 %v5747, %v5770
    %v7692 = vadd.f32 %v7691, %v5793
    %v7693 = vadd.f32 %v7692, %v5816
    %v7694 = vadd.f32 %v5839, %v5862
    %v7695 = vadd.f32 %v7694, %v5885
    %v7696 = vadd.f32 %v7695, %v5908
    %v7697 = vadd.f32 %v5931, %v5954
    %v7698 = vadd.f32 %v7697, %v5977
    %v7699 = vadd.f32 %v7698, %v6000
    %v7700 = vadd.f32 %v6023, %v6046
    %v7701 = vadd.f32 %v7700, %v6069
    %v7702 = vadd.f32 %v7701, %v6092
    %v7703 = vadd.f32 %v6115, %v6138
    %v7704 = vadd.f32 %v7703, %v6161
    %v7705 = vadd.f32 %v7704, %v6184
    %v7706 = vadd.f32 %v6207, %v6230
    %v7707 = vadd.f32 %v7706, %v6253
    %v7708 = vadd.f32 %v7707, %v6276
    %v7709 = vadd.f32 %v6299, %v6322
    %v7710 = vadd.f32 %v7709, %v6345
    %v7711 = vadd.f32 %v7710, %v6368
    %v7712 = vadd.f32 %v6391, %v6414
    %v7713 = vadd.f32 %v7712, %v6437
    %v7714 = vadd.f32 %v7713, %v6460
    %v7715 = vadd.f32 %v6483, %v6506
    %v7716 = vadd.f32 %v7715, %v6529
    %v7717 = vadd.f32 %v7716, %v6552
    %v7718 = vadd.f32 %v6575, %v6598
    %v7719 = vadd.f32 %v7718, %v6621
    %v7720 = vadd.f32 %v7719, %v6644
    %v7721 = vadd.f32 %v6667, %v6690
    %v7722 = vadd.f32 %v7721, %v6713
    %v7723 = vadd.f32 %v7722, %v6736
    %v7724 = vadd.f32 %v6759, %v6782
    %v7725 = vadd.f32 %v7724, %v6805
    %v7726 = vadd.f32 %v7725, %v6828
    %v7727 = vadd.f32 %v6851, %v6874
    %v7728 = vadd.f32 %v7727, %v6897
    %v7729 = vadd.f32 %v7728, %v6920
    %v7730 = vadd.f32 %v6943, %v6966
    %v7731 = vadd.f32 %v7730, %v6989
    %v7732 = vadd.f32 %v7731, %v7012
    %v7733 = vadd.f32 %v7035, %v7058
    %v7734 = vadd.f32 %v7733, %v7081
    %v7735 = vadd.f32 %v7734, %v7104
    %v7736 = vadd.f32 %v7127, %v7150
    %v7737 = vadd.f32 %v7736, %v7173
    %v7738 = vadd.f32 %v7737, %v7196
    %v7739 = vadd.f32 %v7219, %v7242
    %v7740 = vadd.f32 %v7739, %v7265
    %v7741 = vadd.f32 %v7740, %v7288
    %v7742 = vadd.f32 %v7311, %v7334
    %v7743 = vadd.f32 %v7742, %v7357
    %v7744 = vadd.f32 %v7743, %v7380
    %v7745 = vadd.f32 %v7403, %v7426
    %v7746 = vadd.f32 %v7745, %v7449
    %v7747 = vadd.f32 %v7746, %v7472
    %v7748 = vadd.f32 %v7495, %v7518
    %v7749 = vadd.f32 %v7748, %v7541
    %v7750 = vadd.f32 %v7749, %v7564
    %v7751 = vadd.f32 %v7587, %v7610
    %v7752 = vadd.f32 %v7751, %v7633
    %v7753 = vadd.f32 %v7752, %v7656
    %v7754 = vpack.c.bf16 %v7663, %v7660
    %v7755 = vpack.c.bf16 %v7669, %v7666
    %v7756 = vpack.c.bf16 %v7675, %v7672
    %v7757 = vpack.c.bf16 %v7681, %v7678
    %v7758 = vpack.c.bf16 %v7687, %v7684
    %v7759 = vpack.c.bf16 %v7693, %v7690
    %v7760 = vpack.c.bf16 %v7699, %v7696
    %v7761 = vpack.c.bf16 %v7705, %v7702
    %v7762 = vpack.c.bf16 %v7711, %v7708
    %v7763 = vpack.c.bf16 %v7717, %v7714
    %v7764 = vpack.c.bf16 %v7723, %v7720
    %v7765 = vpack.c.bf16 %v7729, %v7726
    %v7766 = vpack.c.bf16 %v7735, %v7732
    %v7767 = vpack.c.bf16 %v7741, %v7738
    %v7768 = vpack.c.bf16 %v7747, %v7744
    %v7769 = vpack.c.bf16 %v7753, %v7750
    %v7770 = vld [vmem:[#allocation8] sm:$0xf]
    %v7771 = vld [vmem:[#allocation8 + $0x4] sm:$0xf]
    %v7772 = vld [vmem:[#allocation8 + $0x8] sm:$0xf]
    %v7773 = vld [vmem:[#allocation8 + $0xc] sm:$0xf]
    %v7774 = vld [vmem:[#allocation8 + $0x10] sm:$0xf]
    %v7775 = vld [vmem:[#allocation8 + $0x14] sm:$0xf]
    %v7776 = vld [vmem:[#allocation8 + $0x18] sm:$0xf]
    %v7777 = vld [vmem:[#allocation8 + $0x1c] sm:$0xf]
    %v7778 = vld [vmem:[#allocation8 + $0x20] sm:$0xf]
    %v7779 = vld [vmem:[#allocation8 + $0x24] sm:$0xf]
    %v7780 = vld [vmem:[#allocation8 + $0x28] sm:$0xf]
    %v7781 = vld [vmem:[#allocation8 + $0x2c] sm:$0xf]
    %v7782 = vld [vmem:[#allocation8 + $0x30] sm:$0xf]
    %v7783 = vld [vmem:[#allocation8 + $0x34] sm:$0xf]
    %v7784 = vld [vmem:[#allocation8 + $0x38] sm:$0xf]
    %v7785 = vld [vmem:[#allocation8 + $0x3c] sm:$0xf]
    %v7786 = vld [vmem:[#allocation11 + $0x3] sm:$0x1]
    %v7788 = vperm.slane %v7786, 0
    %v7806 = vunpack.c.l.b16 %v7770
    %v7807 = vunpack.c.l.b16 %v7771
    %v7808 = vunpack.c.l.b16 %v7772
    %v7809 = vunpack.c.l.b16 %v7773
    %v7810 = vunpack.c.l.b16 %v7774
    %v7811 = vunpack.c.l.b16 %v7775
    %v7812 = vunpack.c.l.b16 %v7776
    %v7813 = vunpack.c.l.b16 %v7777
    %v7814 = vunpack.c.l.b16 %v7778
    %v7815 = vunpack.c.l.b16 %v7779
    %v7816 = vunpack.c.l.b16 %v7780
    %v7817 = vunpack.c.l.b16 %v7781
    %v7818 = vunpack.c.l.b16 %v7782
    %v7819 = vunpack.c.l.b16 %v7783
    %v7820 = vunpack.c.l.b16 %v7784
    %v7821 = vunpack.c.l.b16 %v7785
    %v7822 = vpack.c.b16 %v7807, %v7806
    %v7823 = vpack.c.b16 %v7809, %v7808
    %v7824 = vpack.c.b16 %v7811, %v7810
    %v7825 = vpack.c.b16 %v7813, %v7812
    %v7826 = vpack.c.b16 %v7815, %v7814
    %v7827 = vpack.c.b16 %v7817, %v7816
    %v7828 = vpack.c.b16 %v7819, %v7818
    %v7829 = vpack.c.b16 %v7821, %v7820
    %7838 = vmatpush.bf16.msra.mxu0 %v7829
    %7839 = vmatpush.bf16.msra.mxu0 %v7828
    %7840 = vmatpush.bf16.msra.mxu0 %v7827
    %7841 = vmatpush.bf16.msra.mxu0 %v7826
    %7842 = vmatpush.bf16.msra.mxu0 %v7825
    %7843 = vmatpush.bf16.msra.mxu0 %v7824
    %7844 = vmatpush.bf16.msra.mxu0 %v7823
    %7845 = vmatpush.bf16.msra.mxu0 %v7822
    %7846 = vmatmul.bf16.gmra.mxu0 %v7754
    %v7847 = vpop.f32.mrf.mxu0
    %v7848 = vadd.f32 %v7788, %v7847
    %v7849 = vpop.f32.mrf.mxu0
    %v7850 = vadd.f32 %v7788, %v7849
    %7851 = vmatmul.bf16.gmra.mxu0 %v7755
    %v7852 = vpop.f32.mrf.mxu0
    %v7853 = vadd.f32 %v7788, %v7852
    %v7854 = vpop.f32.mrf.mxu0
    %v7855 = vadd.f32 %v7788, %v7854
    %7856 = vmatmul.bf16.gmra.mxu0 %v7756
    %v7857 = vpop.f32.mrf.mxu0
    %v7858 = vadd.f32 %v7788, %v7857
    %v7859 = vpop.f32.mrf.mxu0
    %v7860 = vadd.f32 %v7788, %v7859
    %7861 = vmatmul.bf16.gmra.mxu0 %v7757
    %v7862 = vpop.f32.mrf.mxu0
    %v7863 = vadd.f32 %v7788, %v7862
    %v7864 = vpop.f32.mrf.mxu0
    %v7865 = vadd.f32 %v7788, %v7864
    %7866 = vmatmul.bf16.gmra.mxu0 %v7758
    %v7867 = vpop.f32.mrf.mxu0
    %v7868 = vadd.f32 %v7788, %v7867
    %v7869 = vpop.f32.mrf.mxu0
    %v7870 = vadd.f32 %v7788, %v7869
    %7871 = vmatmul.bf16.gmra.mxu0 %v7759
    %v7872 = vpop.f32.mrf.mxu0
    %v7873 = vadd.f32 %v7788, %v7872
    %v7874 = vpop.f32.mrf.mxu0
    %v7875 = vadd.f32 %v7788, %v7874
    %7876 = vmatmul.bf16.gmra.mxu0 %v7760
    %v7877 = vpop.f32.mrf.mxu0
    %v7878 = vadd.f32 %v7788, %v7877
    %v7879 = vpop.f32.mrf.mxu0
    %v7880 = vadd.f32 %v7788, %v7879
    %7881 = vmatmul.bf16.gmra.mxu0 %v7761
    %v7882 = vpop.f32.mrf.mxu0
    %v7883 = vadd.f32 %v7788, %v7882
    %v7884 = vpop.f32.mrf.mxu0
    %v7885 = vadd.f32 %v7788, %v7884
    %7886 = vmatmul.bf16.gmra.mxu0 %v7762
    %v7887 = vpop.f32.mrf.mxu0
    %v7888 = vadd.f32 %v7788, %v7887
    %v7889 = vpop.f32.mrf.mxu0
    %v7890 = vadd.f32 %v7788, %v7889
    %7891 = vmatmul.bf16.gmra.mxu0 %v7763
    %v7892 = vpop.f32.mrf.mxu0
    %v7893 = vadd.f32 %v7788, %v7892
    %v7894 = vpop.f32.mrf.mxu0
    %v7895 = vadd.f32 %v7788, %v7894
    %7896 = vmatmul.bf16.gmra.mxu0 %v7764
    %v7897 = vpop.f32.mrf.mxu0
    %v7898 = vadd.f32 %v7788, %v7897
    %v7899 = vpop.f32.mrf.mxu0
    %v7900 = vadd.f32 %v7788, %v7899
    %7901 = vmatmul.bf16.gmra.mxu0 %v7765
    %v7902 = vpop.f32.mrf.mxu0
    %v7903 = vadd.f32 %v7788, %v7902
    %v7904 = vpop.f32.mrf.mxu0
    %v7905 = vadd.f32 %v7788, %v7904
    %7906 = vmatmul.bf16.gmra.mxu0 %v7766
    %v7907 = vpop.f32.mrf.mxu0
    %v7908 = vadd.f32 %v7788, %v7907
    %v7909 = vpop.f32.mrf.mxu0
    %v7910 = vadd.f32 %v7788, %v7909
    %7911 = vmatmul.bf16.gmra.mxu0 %v7767
    %v7912 = vpop.f32.mrf.mxu0
    %v7913 = vadd.f32 %v7788, %v7912
    %v7914 = vpop.f32.mrf.mxu0
    %v7915 = vadd.f32 %v7788, %v7914
    %7916 = vmatmul.bf16.gmra.mxu0 %v7768
    %v7917 = vpop.f32.mrf.mxu0
    %v7918 = vadd.f32 %v7788, %v7917
    %v7919 = vpop.f32.mrf.mxu0
    %v7920 = vadd.f32 %v7788, %v7919
    %7921 = vmatmul.bf16.gmra.mxu0 %v7769
    %v7922 = vpop.f32.mrf.mxu0
    %v7923 = vadd.f32 %v7788, %v7922
    %v7924 = vpop.f32.mrf.mxu0
    %v7925 = vadd.f32 %v7788, %v7924
    %7926 = vdwg.mxu0
    %v7927 = vtanh.pop %v7848
    %v7928 = vtanh.pop %v7850
    %v7929 = vtanh.pop %v7853
    %v7930 = vtanh.pop %v7855
    %v7931 = vtanh.pop %v7858
    %v7932 = vtanh.pop %v7860
    %v7933 = vtanh.pop %v7863
    %v7934 = vtanh.pop %v7865
    %v7935 = vtanh.pop %v7868
    %v7936 = vtanh.pop %v7870
    %v7937 = vtanh.pop %v7873
    %v7938 = vtanh.pop %v7875
    %v7939 = vtanh.pop %v7878
    %v7940 = vtanh.pop %v7880
    %v7941 = vtanh.pop %v7883
    %v7942 = vtanh.pop %v7885
    %v7943 = vtanh.pop %v7888
    %v7944 = vtanh.pop %v7890
    %v7945 = vtanh.pop %v7893
    %v7946 = vtanh.pop %v7895
    %v7947 = vtanh.pop %v7898
    %v7948 = vtanh.pop %v7900
    %v7949 = vtanh.pop %v7903
    %v7950 = vtanh.pop %v7905
    %v7951 = vtanh.pop %v7908
    %v7952 = vtanh.pop %v7910
    %v7953 = vtanh.pop %v7913
    %v7954 = vtanh.pop %v7915
    %v7955 = vtanh.pop %v7918
    %v7956 = vtanh.pop %v7920
    %v7957 = vtanh.pop %v7923
    %v7958 = vtanh.pop %v7925
    %v7959 = vld [vmem:[#allocation11 + $0x4] sm:$0x1]
    %v7960 = vld [vmem:[#allocation11 + $0x5] sm:$0x1]
    %vm7961 = vcmask 1040384
    %v7962 = vsel %vm7961, %v7960, 0.0
    %7963 = vadd.xlane.f32.xlu0 %v7962
    %v7964 = vpop.xlane.xlu0 %7963
    %v7966 = vperm.slane %v7959, 0
    %v7968 = vmul.f32 %v7927, %v7966
    %v7969 = vmul.f32 %v7928, %v7966
    %v7970 = vmul.f32 %v7929, %v7966
    %v7971 = vmul.f32 %v7930, %v7966
    %v7972 = vmul.f32 %v7931, %v7966
    %v7973 = vmul.f32 %v7932, %v7966
    %v7974 = vmul.f32 %v7933, %v7966
    %v7975 = vmul.f32 %v7934, %v7966
    %v7976 = vmul.f32 %v7935, %v7966
    %v7977 = vmul.f32 %v7936, %v7966
    %v7978 = vmul.f32 %v7937, %v7966
    %v7979 = vmul.f32 %v7938, %v7966
    %v7980 = vmul.f32 %v7939, %v7966
    %v7981 = vmul.f32 %v7940, %v7966
    %v7982 = vmul.f32 %v7941, %v7966
    %v7983 = vmul.f32 %v7942, %v7966
    %v7984 = vmul.f32 %v7943, %v7966
    %v7985 = vmul.f32 %v7944, %v7966
    %v7986 = vmul.f32 %v7945, %v7966
    %v7987 = vmul.f32 %v7946, %v7966
    %v7988 = vmul.f32 %v7947, %v7966
    %v7989 = vmul.f32 %v7948, %v7966
    %v7990 = vmul.f32 %v7949, %v7966
    %v7991 = vmul.f32 %v7950, %v7966
    %v7992 = vmul.f32 %v7951, %v7966
    %v7993 = vmul.f32 %v7952, %v7966
    %v7994 = vmul.f32 %v7953, %v7966
    %v7995 = vmul.f32 %v7954, %v7966
    %v7996 = vmul.f32 %v7955, %v7966
    %v7997 = vmul.f32 %v7956, %v7966
    %v7998 = vmul.f32 %v7957, %v7966
    %v7999 = vmul.f32 %v7958, %v7966
    %8000 = vadd.xlane.f32.xlu0 %v7968
    %v8001 = vpop.xlane.xlu0 %8000
    %8002 = vadd.xlane.f32.xlu0 %v7969
    %v8003 = vpop.xlane.xlu0 %8002
    %8004 = vadd.xlane.f32.xlu0 %v7970
    %v8005 = vpop.xlane.xlu0 %8004
    %8006 = vadd.xlane.f32.xlu0 %v7971
    %v8007 = vpop.xlane.xlu0 %8006
    %8008 = vadd.xlane.f32.xlu0 %v7972
    %v8009 = vpop.xlane.xlu0 %8008
    %8010 = vadd.xlane.f32.xlu0 %v7973
    %v8011 = vpop.xlane.xlu0 %8010
    %8012 = vadd.xlane.f32.xlu0 %v7974
    %v8013 = vpop.xlane.xlu0 %8012
    %8014 = vadd.xlane.f32.xlu0 %v7975
    %v8015 = vpop.xlane.xlu0 %8014
    %8016 = vadd.xlane.f32.xlu0 %v7976
    %v8017 = vpop.xlane.xlu0 %8016
    %8018 = vadd.xlane.f32.xlu0 %v7977
    %v8019 = vpop.xlane.xlu0 %8018
    %8020 = vadd.xlane.f32.xlu0 %v7978
    %v8021 = vpop.xlane.xlu0 %8020
    %8022 = vadd.xlane.f32.xlu0 %v7979
    %v8023 = vpop.xlane.xlu0 %8022
    %8024 = vadd.xlane.f32.xlu0 %v7980
    %v8025 = vpop.xlane.xlu0 %8024
    %8026 = vadd.xlane.f32.xlu0 %v7981
    %v8027 = vpop.xlane.xlu0 %8026
    %8028 = vadd.xlane.f32.xlu0 %v7982
    %v8029 = vpop.xlane.xlu0 %8028
    %8030 = vadd.xlane.f32.xlu0 %v7983
    %v8031 = vpop.xlane.xlu0 %8030
    %8032 = vadd.xlane.f32.xlu0 %v7984
    %v8033 = vpop.xlane.xlu0 %8032
    %8034 = vadd.xlane.f32.xlu0 %v7985
    %v8035 = vpop.xlane.xlu0 %8034
    %8036 = vadd.xlane.f32.xlu0 %v7986
    %v8037 = vpop.xlane.xlu0 %8036
    %8038 = vadd.xlane.f32.xlu0 %v7987
    %v8039 = vpop.xlane.xlu0 %8038
    %8040 = vadd.xlane.f32.xlu0 %v7988
    %v8041 = vpop.xlane.xlu0 %8040
    %8042 = vadd.xlane.f32.xlu0 %v7989
    %v8043 = vpop.xlane.xlu0 %8042
    %8044 = vadd.xlane.f32.xlu0 %v7990
    %v8045 = vpop.xlane.xlu0 %8044
    %8046 = vadd.xlane.f32.xlu0 %v7991
    %v8047 = vpop.xlane.xlu0 %8046
    %8048 = vadd.xlane.f32.xlu0 %v7992
    %v8049 = vpop.xlane.xlu0 %8048
    %8050 = vadd.xlane.f32.xlu0 %v7993
    %v8051 = vpop.xlane.xlu0 %8050
    %8052 = vadd.xlane.f32.xlu0 %v7994
    %v8053 = vpop.xlane.xlu0 %8052
    %8054 = vadd.xlane.f32.xlu0 %v7995
    %v8055 = vpop.xlane.xlu0 %8054
    %8056 = vadd.xlane.f32.xlu0 %v7996
    %v8057 = vpop.xlane.xlu0 %8056
    %8058 = vadd.xlane.f32.xlu0 %v7997
    %v8059 = vpop.xlane.xlu0 %8058
    %8060 = vadd.xlane.f32.xlu0 %v7998
    %v8061 = vpop.xlane.xlu0 %8060
    %8062 = vadd.xlane.f32.xlu0 %v7999
    %v8063 = vpop.xlane.xlu0 %8062
    %v8064 = vperm.slane %v7964, 0
    %v8065 = vadd.f32 %v8001, %v8064
    %v8066 = vadd.f32 %v8003, %v8064
    %v8067 = vadd.f32 %v8005, %v8064
    %v8068 = vadd.f32 %v8007, %v8064
    %v8069 = vadd.f32 %v8009, %v8064
    %v8070 = vadd.f32 %v8011, %v8064
    %v8071 = vadd.f32 %v8013, %v8064
    %v8072 = vadd.f32 %v8015, %v8064
    %v8073 = vadd.f32 %v8017, %v8064
    %v8074 = vadd.f32 %v8019, %v8064
    %v8075 = vadd.f32 %v8021, %v8064
    %v8076 = vadd.f32 %v8023, %v8064
    %v8077 = vadd.f32 %v8025, %v8064
    %v8078 = vadd.f32 %v8027, %v8064
    %v8079 = vadd.f32 %v8029, %v8064
    %v8080 = vadd.f32 %v8031, %v8064
    %v8081 = vadd.f32 %v8033, %v8064
    %v8082 = vadd.f32 %v8035, %v8064
    %v8083 = vadd.f32 %v8037, %v8064
    %v8084 = vadd.f32 %v8039, %v8064
    %v8085 = vadd.f32 %v8041, %v8064
    %v8086 = vadd.f32 %v8043, %v8064
    %v8087 = vadd.f32 %v8045, %v8064
    %v8088 = vadd.f32 %v8047, %v8064
    %v8089 = vadd.f32 %v8049, %v8064
    %v8090 = vadd.f32 %v8051, %v8064
    %v8091 = vadd.f32 %v8053, %v8064
    %v8092 = vadd.f32 %v8055, %v8064
    %v8093 = vadd.f32 %v8057, %v8064
    %v8094 = vadd.f32 %v8059, %v8064
    %v8095 = vadd.f32 %v8061, %v8064
    %v8096 = vadd.f32 %v8063, %v8064
    %v8097 = vmul.f32 %v8065, 1.442695
    %v8098 = vpow.pop %v8097
    %v8099 = vmul.f32 %v8066, 1.442695
    %v8100 = vpow.pop %v8099
    %v8101 = vmul.f32 %v8067, 1.442695
    %v8102 = vpow.pop %v8101
    %v8103 = vmul.f32 %v8068, 1.442695
    %v8104 = vpow.pop %v8103
    %v8105 = vmul.f32 %v8069, 1.442695
    %v8106 = vpow.pop %v8105
    %v8107 = vmul.f32 %v8070, 1.442695
    %v8108 = vpow.pop %v8107
    %v8109 = vmul.f32 %v8071, 1.442695
    %v8110 = vpow.pop %v8109
    %v8111 = vmul.f32 %v8072, 1.442695
    %v8112 = vpow.pop %v8111
    %v8113 = vmul.f32 %v8073, 1.442695
    %v8114 = vpow.pop %v8113
    %v8115 = vmul.f32 %v8074, 1.442695
    %v8116 = vpow.pop %v8115
    %v8117 = vmul.f32 %v8075, 1.442695
    %v8118 = vpow.pop %v8117
    %v8119 = vmul.f32 %v8076, 1.442695
    %v8120 = vpow.pop %v8119
    %v8121 = vmul.f32 %v8077, 1.442695
    %v8122 = vpow.pop %v8121
    %v8123 = vmul.f32 %v8078, 1.442695
    %v8124 = vpow.pop %v8123
    %v8125 = vmul.f32 %v8079, 1.442695
    %v8126 = vpow.pop %v8125
    %v8127 = vmul.f32 %v8080, 1.442695
    %v8128 = vpow.pop %v8127
    %v8129 = vmul.f32 %v8081, 1.442695
    %v8130 = vpow.pop %v8129
    %v8131 = vmul.f32 %v8082, 1.442695
    %v8132 = vpow.pop %v8131
    %v8133 = vmul.f32 %v8083, 1.442695
    %v8134 = vpow.pop %v8133
    %v8135 = vmul.f32 %v8084, 1.442695
    %v8136 = vpow.pop %v8135
    %v8137 = vmul.f32 %v8085, 1.442695
    %v8138 = vpow.pop %v8137
    %v8139 = vmul.f32 %v8086, 1.442695
    %v8140 = vpow.pop %v8139
    %v8141 = vmul.f32 %v8087, 1.442695
    %v8142 = vpow.pop %v8141
    %v8143 = vmul.f32 %v8088, 1.442695
    %v8144 = vpow.pop %v8143
    %v8145 = vmul.f32 %v8089, 1.442695
    %v8146 = vpow.pop %v8145
    %v8147 = vmul.f32 %v8090, 1.442695
    %v8148 = vpow.pop %v8147
    %v8149 = vmul.f32 %v8091, 1.442695
    %v8150 = vpow.pop %v8149
    %v8151 = vmul.f32 %v8092, 1.442695
    %v8152 = vpow.pop %v8151
    %v8153 = vmul.f32 %v8093, 1.442695
    %v8154 = vpow.pop %v8153
    %v8155 = vmul.f32 %v8094, 1.442695
    %v8156 = vpow.pop %v8155
    %v8157 = vmul.f32 %v8095, 1.442695
    %v8158 = vpow.pop %v8157
    %v8159 = vmul.f32 %v8096, 1.442695
    %v8160 = vpow.pop %v8159
    %v8161 = vrot.slane %v8098, 4
    %v8162 = vadd.f32 %v8098, %v8161
    %v8163 = vrot.slane %v8162, 2
    %v8164 = vadd.f32 %v8162, %v8163
    %v8165 = vrot.slane %v8164, 1
    %v8166 = vadd.f32 %v8164, %v8165
    %v8167 = vrot.slane %v8100, 4
    %v8168 = vadd.f32 %v8100, %v8167
    %v8169 = vrot.slane %v8168, 2
    %v8170 = vadd.f32 %v8168, %v8169
    %v8171 = vrot.slane %v8170, 1
    %v8172 = vadd.f32 %v8170, %v8171
    %v8173 = vrot.slane %v8102, 4
    %v8174 = vadd.f32 %v8102, %v8173
    %v8175 = vrot.slane %v8174, 2
    %v8176 = vadd.f32 %v8174, %v8175
    %v8177 = vrot.slane %v8176, 1
    %v8178 = vadd.f32 %v8176, %v8177
    %v8179 = vrot.slane %v8104, 4
    %v8180 = vadd.f32 %v8104, %v8179
    %v8181 = vrot.slane %v8180, 2
    %v8182 = vadd.f32 %v8180, %v8181
    %v8183 = vrot.slane %v8182, 1
    %v8184 = vadd.f32 %v8182, %v8183
    %v8185 = vrot.slane %v8106, 4
    %v8186 = vadd.f32 %v8106, %v8185
    %v8187 = vrot.slane %v8186, 2
    %v8188 = vadd.f32 %v8186, %v8187
    %v8189 = vrot.slane %v8188, 1
    %v8190 = vadd.f32 %v8188, %v8189
    %v8191 = vrot.slane %v8108, 4
    %v8192 = vadd.f32 %v8108, %v8191
    %v8193 = vrot.slane %v8192, 2
    %v8194 = vadd.f32 %v8192, %v8193
    %v8195 = vrot.slane %v8194, 1
    %v8196 = vadd.f32 %v8194, %v8195
    %v8197 = vrot.slane %v8110, 4
    %v8198 = vadd.f32 %v8110, %v8197
    %v8199 = vrot.slane %v8198, 2
    %v8200 = vadd.f32 %v8198, %v8199
    %v8201 = vrot.slane %v8200, 1
    %v8202 = vadd.f32 %v8200, %v8201
    %v8203 = vrot.slane %v8112, 4
    %v8204 = vadd.f32 %v8112, %v8203
    %v8205 = vrot.slane %v8204, 2
    %v8206 = vadd.f32 %v8204, %v8205
    %v8207 = vrot.slane %v8206, 1
    %v8208 = vadd.f32 %v8206, %v8207
    %v8209 = vrot.slane %v8114, 4
    %v8210 = vadd.f32 %v8114, %v8209
    %v8211 = vrot.slane %v8210, 2
    %v8212 = vadd.f32 %v8210, %v8211
    %v8213 = vrot.slane %v8212, 1
    %v8214 = vadd.f32 %v8212, %v8213
    %v8215 = vrot.slane %v8116, 4
    %v8216 = vadd.f32 %v8116, %v8215
    %v8217 = vrot.slane %v8216, 2
    %v8218 = vadd.f32 %v8216, %v8217
    %v8219 = vrot.slane %v8218, 1
    %v8220 = vadd.f32 %v8218, %v8219
    %v8221 = vrot.slane %v8118, 4
    %v8222 = vadd.f32 %v8118, %v8221
    %v8223 = vrot.slane %v8222, 2
    %v8224 = vadd.f32 %v8222, %v8223
    %v8225 = vrot.slane %v8224, 1
    %v8226 = vadd.f32 %v8224, %v8225
    %v8227 = vrot.slane %v8120, 4
    %v8228 = vadd.f32 %v8120, %v8227
    %v8229 = vrot.slane %v8228, 2
    %v8230 = vadd.f32 %v8228, %v8229
    %v8231 = vrot.slane %v8230, 1
    %v8232 = vadd.f32 %v8230, %v8231
    %v8233 = vrot.slane %v8122, 4
    %v8234 = vadd.f32 %v8122, %v8233
    %v8235 = vrot.slane %v8234, 2
    %v8236 = vadd.f32 %v8234, %v8235
    %v8237 = vrot.slane %v8236, 1
    %v8238 = vadd.f32 %v8236, %v8237
    %v8239 = vrot.slane %v8124, 4
    %v8240 = vadd.f32 %v8124, %v8239
    %v8241 = vrot.slane %v8240, 2
    %v8242 = vadd.f32 %v8240, %v8241
    %v8243 = vrot.slane %v8242, 1
    %v8244 = vadd.f32 %v8242, %v8243
    %v8245 = vrot.slane %v8126, 4
    %v8246 = vadd.f32 %v8126, %v8245
    %v8247 = vrot.slane %v8246, 2
    %v8248 = vadd.f32 %v8246, %v8247
    %v8249 = vrot.slane %v8248, 1
    %v8250 = vadd.f32 %v8248, %v8249
    %v8251 = vrot.slane %v8128, 4
    %v8252 = vadd.f32 %v8128, %v8251
    %v8253 = vrot.slane %v8252, 2
    %v8254 = vadd.f32 %v8252, %v8253
    %v8255 = vrot.slane %v8254, 1
    %v8256 = vadd.f32 %v8254, %v8255
    %v8257 = vrot.slane %v8130, 4
    %v8258 = vadd.f32 %v8130, %v8257
    %v8259 = vrot.slane %v8258, 2
    %v8260 = vadd.f32 %v8258, %v8259
    %v8261 = vrot.slane %v8260, 1
    %v8262 = vadd.f32 %v8260, %v8261
    %v8263 = vrot.slane %v8132, 4
    %v8264 = vadd.f32 %v8132, %v8263
    %v8265 = vrot.slane %v8264, 2
    %v8266 = vadd.f32 %v8264, %v8265
    %v8267 = vrot.slane %v8266, 1
    %v8268 = vadd.f32 %v8266, %v8267
    %v8269 = vrot.slane %v8134, 4
    %v8270 = vadd.f32 %v8134, %v8269
    %v8271 = vrot.slane %v8270, 2
    %v8272 = vadd.f32 %v8270, %v8271
    %v8273 = vrot.slane %v8272, 1
    %v8274 = vadd.f32 %v8272, %v8273
    %v8275 = vrot.slane %v8136, 4
    %v8276 = vadd.f32 %v8136, %v8275
    %v8277 = vrot.slane %v8276, 2
    %v8278 = vadd.f32 %v8276, %v8277
    %v8279 = vrot.slane %v8278, 1
    %v8280 = vadd.f32 %v8278, %v8279
    %v8281 = vrot.slane %v8138, 4
    %v8282 = vadd.f32 %v8138, %v8281
    %v8283 = vrot.slane %v8282, 2
    %v8284 = vadd.f32 %v8282, %v8283
    %v8285 = vrot.slane %v8284, 1
    %v8286 = vadd.f32 %v8284, %v8285
    %v8287 = vrot.slane %v8140, 4
    %v8288 = vadd.f32 %v8140, %v8287
    %v8289 = vrot.slane %v8288, 2
    %v8290 = vadd.f32 %v8288, %v8289
    %v8291 = vrot.slane %v8290, 1
    %v8292 = vadd.f32 %v8290, %v8291
    %v8293 = vrot.slane %v8142, 4
    %v8294 = vadd.f32 %v8142, %v8293
    %v8295 = vrot.slane %v8294, 2
    %v8296 = vadd.f32 %v8294, %v8295
    %v8297 = vrot.slane %v8296, 1
    %v8298 = vadd.f32 %v8296, %v8297
    %v8299 = vrot.slane %v8144, 4
    %v8300 = vadd.f32 %v8144, %v8299
    %v8301 = vrot.slane %v8300, 2
    %v8302 = vadd.f32 %v8300, %v8301
    %v8303 = vrot.slane %v8302, 1
    %v8304 = vadd.f32 %v8302, %v8303
    %v8305 = vrot.slane %v8146, 4
    %v8306 = vadd.f32 %v8146, %v8305
    %v8307 = vrot.slane %v8306, 2
    %v8308 = vadd.f32 %v8306, %v8307
    %v8309 = vrot.slane %v8308, 1
    %v8310 = vadd.f32 %v8308, %v8309
    %v8311 = vrot.slane %v8148, 4
    %v8312 = vadd.f32 %v8148, %v8311
    %v8313 = vrot.slane %v8312, 2
    %v8314 = vadd.f32 %v8312, %v8313
    %v8315 = vrot.slane %v8314, 1
    %v8316 = vadd.f32 %v8314, %v8315
    %v8317 = vrot.slane %v8150, 4
    %v8318 = vadd.f32 %v8150, %v8317
    %v8319 = vrot.slane %v8318, 2
    %v8320 = vadd.f32 %v8318, %v8319
    %v8321 = vrot.slane %v8320, 1
    %v8322 = vadd.f32 %v8320, %v8321
    %v8323 = vrot.slane %v8152, 4
    %v8324 = vadd.f32 %v8152, %v8323
    %v8325 = vrot.slane %v8324, 2
    %v8326 = vadd.f32 %v8324, %v8325
    %v8327 = vrot.slane %v8326, 1
    %v8328 = vadd.f32 %v8326, %v8327
    %v8329 = vrot.slane %v8154, 4
    %v8330 = vadd.f32 %v8154, %v8329
    %v8331 = vrot.slane %v8330, 2
    %v8332 = vadd.f32 %v8330, %v8331
    %v8333 = vrot.slane %v8332, 1
    %v8334 = vadd.f32 %v8332, %v8333
    %v8335 = vrot.slane %v8156, 4
    %v8336 = vadd.f32 %v8156, %v8335
    %v8337 = vrot.slane %v8336, 2
    %v8338 = vadd.f32 %v8336, %v8337
    %v8339 = vrot.slane %v8338, 1
    %v8340 = vadd.f32 %v8338, %v8339
    %v8341 = vrot.slane %v8158, 4
    %v8342 = vadd.f32 %v8158, %v8341
    %v8343 = vrot.slane %v8342, 2
    %v8344 = vadd.f32 %v8342, %v8343
    %v8345 = vrot.slane %v8344, 1
    %v8346 = vadd.f32 %v8344, %v8345
    %v8347 = vrot.slane %v8160, 4
    %v8348 = vadd.f32 %v8160, %v8347
    %v8349 = vrot.slane %v8348, 2
    %v8350 = vadd.f32 %v8348, %v8349
    %v8351 = vrot.slane %v8350, 1
    %v8352 = vadd.f32 %v8350, %v8351
    %v8353 = vadd.f32 %v8166, 1e-08
    %v8354 = vadd.f32 %v8172, 1e-08
    %v8355 = vadd.f32 %v8178, 1e-08
    %v8356 = vadd.f32 %v8184, 1e-08
    %v8357 = vadd.f32 %v8190, 1e-08
    %v8358 = vadd.f32 %v8196, 1e-08
    %v8359 = vadd.f32 %v8202, 1e-08
    %v8360 = vadd.f32 %v8208, 1e-08
    %v8361 = vadd.f32 %v8214, 1e-08
    %v8362 = vadd.f32 %v8220, 1e-08
    %v8363 = vadd.f32 %v8226, 1e-08
    %v8364 = vadd.f32 %v8232, 1e-08
    %v8365 = vadd.f32 %v8238, 1e-08
    %v8366 = vadd.f32 %v8244, 1e-08
    %v8367 = vadd.f32 %v8250, 1e-08
    %v8368 = vadd.f32 %v8256, 1e-08
    %v8369 = vadd.f32 %v8262, 1e-08
    %v8370 = vadd.f32 %v8268, 1e-08
    %v8371 = vadd.f32 %v8274, 1e-08
    %v8372 = vadd.f32 %v8280, 1e-08
    %v8373 = vadd.f32 %v8286, 1e-08
    %v8374 = vadd.f32 %v8292, 1e-08
    %v8375 = vadd.f32 %v8298, 1e-08
    %v8376 = vadd.f32 %v8304, 1e-08
    %v8377 = vadd.f32 %v8310, 1e-08
    %v8378 = vadd.f32 %v8316, 1e-08
    %v8379 = vadd.f32 %v8322, 1e-08
    %v8380 = vadd.f32 %v8328, 1e-08
    %v8381 = vadd.f32 %v8334, 1e-08
    %v8382 = vadd.f32 %v8340, 1e-08
    %v8383 = vadd.f32 %v8346, 1e-08
    %v8384 = vadd.f32 %v8352, 1e-08
    %v8385 = vrcp.pop %v8353
    %v8386 = vrcp.pop %v8354
    %v8387 = vrcp.pop %v8355
    %v8388 = vrcp.pop %v8356
    %v8389 = vrcp.pop %v8357
    %v8390 = vrcp.pop %v8358
    %v8391 = vrcp.pop %v8359
    %v8392 = vrcp.pop %v8360
    %v8393 = vrcp.pop %v8361
    %v8394 = vrcp.pop %v8362
    %v8395 = vrcp.pop %v8363
    %v8396 = vrcp.pop %v8364
    %v8397 = vrcp.pop %v8365
    %v8398 = vrcp.pop %v8366
    %v8399 = vrcp.pop %v8367
    %v8400 = vrcp.pop %v8368
    %v8401 = vrcp.pop %v8369
    %v8402 = vrcp.pop %v8370
    %v8403 = vrcp.pop %v8371
    %v8404 = vrcp.pop %v8372
    %v8405 = vrcp.pop %v8373
    %v8406 = vrcp.pop %v8374
    %v8407 = vrcp.pop %v8375
    %v8408 = vrcp.pop %v8376
    %v8409 = vrcp.pop %v8377
    %v8410 = vrcp.pop %v8378
    %v8411 = vrcp.pop %v8379
    %v8412 = vrcp.pop %v8380
    %v8413 = vrcp.pop %v8381
    %v8414 = vrcp.pop %v8382
    %v8415 = vrcp.pop %v8383
    %v8416 = vrcp.pop %v8384
    %v8417 = vmul.f32 %v8098, %v8385
    %v8418 = vmul.f32 %v8100, %v8386
    %v8419 = vmul.f32 %v8102, %v8387
    %v8420 = vmul.f32 %v8104, %v8388
    %v8421 = vmul.f32 %v8106, %v8389
    %v8422 = vmul.f32 %v8108, %v8390
    %v8423 = vmul.f32 %v8110, %v8391
    %v8424 = vmul.f32 %v8112, %v8392
    %v8425 = vmul.f32 %v8114, %v8393
    %v8426 = vmul.f32 %v8116, %v8394
    %v8427 = vmul.f32 %v8118, %v8395
    %v8428 = vmul.f32 %v8120, %v8396
    %v8429 = vmul.f32 %v8122, %v8397
    %v8430 = vmul.f32 %v8124, %v8398
    %v8431 = vmul.f32 %v8126, %v8399
    %v8432 = vmul.f32 %v8128, %v8400
    %v8433 = vmul.f32 %v8130, %v8401
    %v8434 = vmul.f32 %v8132, %v8402
    %v8435 = vmul.f32 %v8134, %v8403
    %v8436 = vmul.f32 %v8136, %v8404
    %v8437 = vmul.f32 %v8138, %v8405
    %v8438 = vmul.f32 %v8140, %v8406
    %v8439 = vmul.f32 %v8142, %v8407
    %v8440 = vmul.f32 %v8144, %v8408
    %v8441 = vmul.f32 %v8146, %v8409
    %v8442 = vmul.f32 %v8148, %v8410
    %v8443 = vmul.f32 %v8150, %v8411
    %v8444 = vmul.f32 %v8152, %v8412
    %v8445 = vmul.f32 %v8154, %v8413
    %v8446 = vmul.f32 %v8156, %v8414
    %v8447 = vmul.f32 %v8158, %v8415
    %v8448 = vmul.f32 %v8160, %v8416
    %v8449 = vmul.f32 %v7660, %v8417
    %v8450 = vmul.f32 %v7663, %v8418
    %v8451 = vmul.f32 %v7666, %v8419
    %v8452 = vmul.f32 %v7669, %v8420
    %v8453 = vmul.f32 %v7672, %v8421
    %v8454 = vmul.f32 %v7675, %v8422
    %v8455 = vmul.f32 %v7678, %v8423
    %v8456 = vmul.f32 %v7681, %v8424
    %v8457 = vmul.f32 %v7684, %v8425
    %v8458 = vmul.f32 %v7687, %v8426
    %v8459 = vmul.f32 %v7690, %v8427
    %v8460 = vmul.f32 %v7693, %v8428
    %v8461 = vmul.f32 %v7696, %v8429
    %v8462 = vmul.f32 %v7699, %v8430
    %v8463 = vmul.f32 %v7702, %v8431
    %v8464 = vmul.f32 %v7705, %v8432
    %v8465 = vmul.f32 %v7708, %v8433
    %v8466 = vmul.f32 %v7711, %v8434
    %v8467 = vmul.f32 %v7714, %v8435
    %v8468 = vmul.f32 %v7717, %v8436
    %v8469 = vmul.f32 %v7720, %v8437
    %v8470 = vmul.f32 %v7723, %v8438
    %v8471 = vmul.f32 %v7726, %v8439
    %v8472 = vmul.f32 %v7729, %v8440
    %v8473 = vmul.f32 %v7732, %v8441
    %v8474 = vmul.f32 %v7735, %v8442
    %v8475 = vmul.f32 %v7738, %v8443
    %v8476 = vmul.f32 %v7741, %v8444
    %v8477 = vmul.f32 %v7744, %v8445
    %v8478 = vmul.f32 %v7747, %v8446
    %v8479 = vmul.f32 %v7750, %v8447
    %v8480 = vmul.f32 %v7753, %v8448
    %v8481 = vrot.slane %v8449, 4
    %v8482 = vadd.f32 %v8449, %v8481
    %v8483 = vrot.slane %v8482, 2
    %v8484 = vadd.f32 %v8482, %v8483
    %v8485 = vrot.slane %v8484, 1
    %v8486 = vadd.f32 %v8484, %v8485
    %v8487 = vrot.slane %v8450, 4
    %v8488 = vadd.f32 %v8450, %v8487
    %v8489 = vrot.slane %v8488, 2
    %v8490 = vadd.f32 %v8488, %v8489
    %v8491 = vrot.slane %v8490, 1
    %v8492 = vadd.f32 %v8490, %v8491
    %v8493 = vrot.slane %v8451, 4
    %v8494 = vadd.f32 %v8451, %v8493
    %v8495 = vrot.slane %v8494, 2
    %v8496 = vadd.f32 %v8494, %v8495
    %v8497 = vrot.slane %v8496, 1
    %v8498 = vadd.f32 %v8496, %v8497
    %v8499 = vrot.slane %v8452, 4
    %v8500 = vadd.f32 %v8452, %v8499
    %v8501 = vrot.slane %v8500, 2
    %v8502 = vadd.f32 %v8500, %v8501
    %v8503 = vrot.slane %v8502, 1
    %v8504 = vadd.f32 %v8502, %v8503
    %v8505 = vrot.slane %v8453, 4
    %v8506 = vadd.f32 %v8453, %v8505
    %v8507 = vrot.slane %v8506, 2
    %v8508 = vadd.f32 %v8506, %v8507
    %v8509 = vrot.slane %v8508, 1
    %v8510 = vadd.f32 %v8508, %v8509
    %v8511 = vrot.slane %v8454, 4
    %v8512 = vadd.f32 %v8454, %v8511
    %v8513 = vrot.slane %v8512, 2
    %v8514 = vadd.f32 %v8512, %v8513
    %v8515 = vrot.slane %v8514, 1
    %v8516 = vadd.f32 %v8514, %v8515
    %v8517 = vrot.slane %v8455, 4
    %v8518 = vadd.f32 %v8455, %v8517
    %v8519 = vrot.slane %v8518, 2
    %v8520 = vadd.f32 %v8518, %v8519
    %v8521 = vrot.slane %v8520, 1
    %v8522 = vadd.f32 %v8520, %v8521
    %v8523 = vrot.slane %v8456, 4
    %v8524 = vadd.f32 %v8456, %v8523
    %v8525 = vrot.slane %v8524, 2
    %v8526 = vadd.f32 %v8524, %v8525
    %v8527 = vrot.slane %v8526, 1
    %v8528 = vadd.f32 %v8526, %v8527
    %v8529 = vrot.slane %v8457, 4
    %v8530 = vadd.f32 %v8457, %v8529
    %v8531 = vrot.slane %v8530, 2
    %v8532 = vadd.f32 %v8530, %v8531
    %v8533 = vrot.slane %v8532, 1
    %v8534 = vadd.f32 %v8532, %v8533
    %v8535 = vrot.slane %v8458, 4
    %v8536 = vadd.f32 %v8458, %v8535
    %v8537 = vrot.slane %v8536, 2
    %v8538 = vadd.f32 %v8536, %v8537
    %v8539 = vrot.slane %v8538, 1
    %v8540 = vadd.f32 %v8538, %v8539
    %v8541 = vrot.slane %v8459, 4
    %v8542 = vadd.f32 %v8459, %v8541
    %v8543 = vrot.slane %v8542, 2
    %v8544 = vadd.f32 %v8542, %v8543
    %v8545 = vrot.slane %v8544, 1
    %v8546 = vadd.f32 %v8544, %v8545
    %v8547 = vrot.slane %v8460, 4
    %v8548 = vadd.f32 %v8460, %v8547
    %v8549 = vrot.slane %v8548, 2
    %v8550 = vadd.f32 %v8548, %v8549
    %v8551 = vrot.slane %v8550, 1
    %v8552 = vadd.f32 %v8550, %v8551
    %v8553 = vrot.slane %v8461, 4
    %v8554 = vadd.f32 %v8461, %v8553
    %v8555 = vrot.slane %v8554, 2
    %v8556 = vadd.f32 %v8554, %v8555
    %v8557 = vrot.slane %v8556, 1
    %v8558 = vadd.f32 %v8556, %v8557
    %v8559 = vrot.slane %v8462, 4
    %v8560 = vadd.f32 %v8462, %v8559
    %v8561 = vrot.slane %v8560, 2
    %v8562 = vadd.f32 %v8560, %v8561
    %v8563 = vrot.slane %v8562, 1
    %v8564 = vadd.f32 %v8562, %v8563
    %v8565 = vrot.slane %v8463, 4
    %v8566 = vadd.f32 %v8463, %v8565
    %v8567 = vrot.slane %v8566, 2
    %v8568 = vadd.f32 %v8566, %v8567
    %v8569 = vrot.slane %v8568, 1
    %v8570 = vadd.f32 %v8568, %v8569
    %v8571 = vrot.slane %v8464, 4
    %v8572 = vadd.f32 %v8464, %v8571
    %v8573 = vrot.slane %v8572, 2
    %v8574 = vadd.f32 %v8572, %v8573
    %v8575 = vrot.slane %v8574, 1
    %v8576 = vadd.f32 %v8574, %v8575
    %v8577 = vrot.slane %v8465, 4
    %v8578 = vadd.f32 %v8465, %v8577
    %v8579 = vrot.slane %v8578, 2
    %v8580 = vadd.f32 %v8578, %v8579
    %v8581 = vrot.slane %v8580, 1
    %v8582 = vadd.f32 %v8580, %v8581
    %v8583 = vrot.slane %v8466, 4
    %v8584 = vadd.f32 %v8466, %v8583
    %v8585 = vrot.slane %v8584, 2
    %v8586 = vadd.f32 %v8584, %v8585
    %v8587 = vrot.slane %v8586, 1
    %v8588 = vadd.f32 %v8586, %v8587
    %v8589 = vrot.slane %v8467, 4
    %v8590 = vadd.f32 %v8467, %v8589
    %v8591 = vrot.slane %v8590, 2
    %v8592 = vadd.f32 %v8590, %v8591
    %v8593 = vrot.slane %v8592, 1
    %v8594 = vadd.f32 %v8592, %v8593
    %v8595 = vrot.slane %v8468, 4
    %v8596 = vadd.f32 %v8468, %v8595
    %v8597 = vrot.slane %v8596, 2
    %v8598 = vadd.f32 %v8596, %v8597
    %v8599 = vrot.slane %v8598, 1
    %v8600 = vadd.f32 %v8598, %v8599
    %v8601 = vrot.slane %v8469, 4
    %v8602 = vadd.f32 %v8469, %v8601
    %v8603 = vrot.slane %v8602, 2
    %v8604 = vadd.f32 %v8602, %v8603
    %v8605 = vrot.slane %v8604, 1
    %v8606 = vadd.f32 %v8604, %v8605
    %v8607 = vrot.slane %v8470, 4
    %v8608 = vadd.f32 %v8470, %v8607
    %v8609 = vrot.slane %v8608, 2
    %v8610 = vadd.f32 %v8608, %v8609
    %v8611 = vrot.slane %v8610, 1
    %v8612 = vadd.f32 %v8610, %v8611
    %v8613 = vrot.slane %v8471, 4
    %v8614 = vadd.f32 %v8471, %v8613
    %v8615 = vrot.slane %v8614, 2
    %v8616 = vadd.f32 %v8614, %v8615
    %v8617 = vrot.slane %v8616, 1
    %v8618 = vadd.f32 %v8616, %v8617
    %v8619 = vrot.slane %v8472, 4
    %v8620 = vadd.f32 %v8472, %v8619
    %v8621 = vrot.slane %v8620, 2
    %v8622 = vadd.f32 %v8620, %v8621
    %v8623 = vrot.slane %v8622, 1
    %v8624 = vadd.f32 %v8622, %v8623
    %v8625 = vrot.slane %v8473, 4
    %v8626 = vadd.f32 %v8473, %v8625
    %v8627 = vrot.slane %v8626, 2
    %v8628 = vadd.f32 %v8626, %v8627
    %v8629 = vrot.slane %v8628, 1
    %v8630 = vadd.f32 %v8628, %v8629
    %v8631 = vrot.slane %v8474, 4
    %v8632 = vadd.f32 %v8474, %v8631
    %v8633 = vrot.slane %v8632, 2
    %v8634 = vadd.f32 %v8632, %v8633
    %v8635 = vrot.slane %v8634, 1
    %v8636 = vadd.f32 %v8634, %v8635
    %v8637 = vrot.slane %v8475, 4
    %v8638 = vadd.f32 %v8475, %v8637
    %v8639 = vrot.slane %v8638, 2
    %v8640 = vadd.f32 %v8638, %v8639
    %v8641 = vrot.slane %v8640, 1
    %v8642 = vadd.f32 %v8640, %v8641
    %v8643 = vrot.slane %v8476, 4
    %v8644 = vadd.f32 %v8476, %v8643
    %v8645 = vrot.slane %v8644, 2
    %v8646 = vadd.f32 %v8644, %v8645
    %v8647 = vrot.slane %v8646, 1
    %v8648 = vadd.f32 %v8646, %v8647
    %v8649 = vrot.slane %v8477, 4
    %v8650 = vadd.f32 %v8477, %v8649
    %v8651 = vrot.slane %v8650, 2
    %v8652 = vadd.f32 %v8650, %v8651
    %v8653 = vrot.slane %v8652, 1
    %v8654 = vadd.f32 %v8652, %v8653
    %v8655 = vrot.slane %v8478, 4
    %v8656 = vadd.f32 %v8478, %v8655
    %v8657 = vrot.slane %v8656, 2
    %v8658 = vadd.f32 %v8656, %v8657
    %v8659 = vrot.slane %v8658, 1
    %v8660 = vadd.f32 %v8658, %v8659
    %v8661 = vrot.slane %v8479, 4
    %v8662 = vadd.f32 %v8479, %v8661
    %v8663 = vrot.slane %v8662, 2
    %v8664 = vadd.f32 %v8662, %v8663
    %v8665 = vrot.slane %v8664, 1
    %v8666 = vadd.f32 %v8664, %v8665
    %v8667 = vrot.slane %v8480, 4
    %v8668 = vadd.f32 %v8480, %v8667
    %v8669 = vrot.slane %v8668, 2
    %v8670 = vadd.f32 %v8668, %v8669
    %v8671 = vrot.slane %v8670, 1
    %v8672 = vadd.f32 %v8670, %v8671
    %v8673 = vld [vmem:[#allocation5] sm:$0xff]
    %v8674 = vld [vmem:[#allocation5 + $0x8] sm:$0xff]
    %v8675 = vld [vmem:[#allocation5 + $0x10] sm:$0xff]
    %v8676 = vld [vmem:[#allocation5 + $0x18] sm:$0xff]
    %v8681 = vrot.slane %v8673, 1
    %v8682 = vrot.slane %v8673, 2
    %v8683 = vrot.slane %v8673, 3
    %v8684 = vrot.slane %v8673, 4
    %v8685 = vrot.slane %v8673, 5
    %v8686 = vrot.slane %v8673, 6
    %v8687 = vrot.slane %v8673, 7
    %v8688 = vrot.slane %v8674, 1
    %v8689 = vrot.slane %v8674, 2
    %v8690 = vrot.slane %v8674, 3
    %v8691 = vrot.slane %v8674, 4
    %v8692 = vrot.slane %v8674, 5
    %v8693 = vrot.slane %v8674, 6
    %v8694 = vrot.slane %v8674, 7
    %v8695 = vrot.slane %v8675, 1
    %v8696 = vrot.slane %v8675, 2
    %v8697 = vrot.slane %v8675, 3
    %v8698 = vrot.slane %v8675, 4
    %v8699 = vrot.slane %v8675, 5
    %v8700 = vrot.slane %v8675, 6
    %v8701 = vrot.slane %v8675, 7
    %v8702 = vrot.slane %v8676, 1
    %v8703 = vrot.slane %v8676, 2
    %v8704 = vrot.slane %v8676, 3
    %v8705 = vrot.slane %v8676, 4
    %v8706 = vrot.slane %v8676, 5
    %v8707 = vrot.slane %v8676, 6
    %v8708 = vrot.slane %v8676, 7
    %v8741 = vadd.f32 %v8486, %v8673
    %v8742 = vadd.f32 %v8492, %v8681
    %v8743 = vadd.f32 %v8498, %v8682
    %v8744 = vadd.f32 %v8504, %v8683
    %v8745 = vadd.f32 %v8510, %v8684
    %v8746 = vadd.f32 %v8516, %v8685
    %v8747 = vadd.f32 %v8522, %v8686
    %v8748 = vadd.f32 %v8528, %v8687
    %v8749 = vadd.f32 %v8534, %v8674
    %v8750 = vadd.f32 %v8540, %v8688
    %v8751 = vadd.f32 %v8546, %v8689
    %v8752 = vadd.f32 %v8552, %v8690
    %v8753 = vadd.f32 %v8558, %v8691
    %v8754 = vadd.f32 %v8564, %v8692
    %v8755 = vadd.f32 %v8570, %v8693
    %v8756 = vadd.f32 %v8576, %v8694
    %v8757 = vadd.f32 %v8582, %v8675
    %v8758 = vadd.f32 %v8588, %v8695
    %v8759 = vadd.f32 %v8594, %v8696
    %v8760 = vadd.f32 %v8600, %v8697
    %v8761 = vadd.f32 %v8606, %v8698
    %v8762 = vadd.f32 %v8612, %v8699
    %v8763 = vadd.f32 %v8618, %v8700
    %v8764 = vadd.f32 %v8624, %v8701
    %v8765 = vadd.f32 %v8630, %v8676
    %v8766 = vadd.f32 %v8636, %v8702
    %v8767 = vadd.f32 %v8642, %v8703
    %v8768 = vadd.f32 %v8648, %v8704
    %v8769 = vadd.f32 %v8654, %v8705
    %v8770 = vadd.f32 %v8660, %v8706
    %v8771 = vadd.f32 %v8666, %v8707
    %v8772 = vadd.f32 %v8672, %v8708
    %v8773 = vpack.c.bf16 %v8741, %v8741
    %v8774 = vpack.c.bf16 %v8742, %v8742
    %v8775 = vpack.c.bf16 %v8743, %v8743
    %v8776 = vpack.c.bf16 %v8744, %v8744
    %v8777 = vpack.c.bf16 %v8745, %v8745
    %v8778 = vpack.c.bf16 %v8746, %v8746
    %v8779 = vpack.c.bf16 %v8747, %v8747
    %v8780 = vpack.c.bf16 %v8748, %v8748
    %v8781 = vpack.c.bf16 %v8749, %v8749
    %v8782 = vpack.c.bf16 %v8750, %v8750
    %v8783 = vpack.c.bf16 %v8751, %v8751
    %v8784 = vpack.c.bf16 %v8752, %v8752
    %v8785 = vpack.c.bf16 %v8753, %v8753
    %v8786 = vpack.c.bf16 %v8754, %v8754
    %v8787 = vpack.c.bf16 %v8755, %v8755
    %v8788 = vpack.c.bf16 %v8756, %v8756
    %v8789 = vpack.c.bf16 %v8757, %v8757
    %v8790 = vpack.c.bf16 %v8758, %v8758
    %v8791 = vpack.c.bf16 %v8759, %v8759
    %v8792 = vpack.c.bf16 %v8760, %v8760
    %v8793 = vpack.c.bf16 %v8761, %v8761
    %v8794 = vpack.c.bf16 %v8762, %v8762
    %v8795 = vpack.c.bf16 %v8763, %v8763
    %v8796 = vpack.c.bf16 %v8764, %v8764
    %v8797 = vpack.c.bf16 %v8765, %v8765
    %v8798 = vpack.c.bf16 %v8766, %v8766
    %v8799 = vpack.c.bf16 %v8767, %v8767
    %v8800 = vpack.c.bf16 %v8768, %v8768
    %v8801 = vpack.c.bf16 %v8769, %v8769
    %v8802 = vpack.c.bf16 %v8770, %v8770
    %v8803 = vpack.c.bf16 %v8771, %v8771
    %v8804 = vpack.c.bf16 %v8772, %v8772
    %v8805 = vld [vmem:[#allocation10] sm:$0xf]
    %v8806 = vld [vmem:[#allocation10 + $0x4] sm:$0xf]
    %v8807 = vld [vmem:[#allocation10 + $0x8] sm:$0xf]
    %v8808 = vld [vmem:[#allocation10 + $0xc] sm:$0xf]
    %v8809 = vld [vmem:[#allocation10 + $0x10] sm:$0xf]
    %v8810 = vld [vmem:[#allocation10 + $0x14] sm:$0xf]
    %v8811 = vld [vmem:[#allocation10 + $0x18] sm:$0xf]
    %v8812 = vld [vmem:[#allocation10 + $0x1c] sm:$0xf]
    %v8813 = vld [vmem:[#allocation10 + $0x20] sm:$0xf]
    %v8814 = vld [vmem:[#allocation10 + $0x24] sm:$0xf]
    %v8815 = vld [vmem:[#allocation10 + $0x28] sm:$0xf]
    %v8816 = vld [vmem:[#allocation10 + $0x2c] sm:$0xf]
    %v8817 = vld [vmem:[#allocation10 + $0x30] sm:$0xf]
    %v8818 = vld [vmem:[#allocation10 + $0x34] sm:$0xf]
    %v8819 = vld [vmem:[#allocation10 + $0x38] sm:$0xf]
    %v8820 = vld [vmem:[#allocation10 + $0x3c] sm:$0xf]
    %v8821 = vld [vmem:[#allocation11 + $0x6] sm:$0x1]
    %v8823 = vperm.slane %v8821, 0
    %v8857 = vunpack.c.l.b16 %v8773
    %v8858 = vunpack.c.l.b16 %v8774
    %v8859 = vunpack.c.l.b16 %v8775
    %v8860 = vunpack.c.l.b16 %v8776
    %v8861 = vunpack.c.l.b16 %v8777
    %v8862 = vunpack.c.l.b16 %v8778
    %v8863 = vunpack.c.l.b16 %v8779
    %v8864 = vunpack.c.l.b16 %v8780
    %v8865 = vunpack.c.l.b16 %v8781
    %v8866 = vunpack.c.l.b16 %v8782
    %v8867 = vunpack.c.l.b16 %v8783
    %v8868 = vunpack.c.l.b16 %v8784
    %v8869 = vunpack.c.l.b16 %v8785
    %v8870 = vunpack.c.l.b16 %v8786
    %v8871 = vunpack.c.l.b16 %v8787
    %v8872 = vunpack.c.l.b16 %v8788
    %v8873 = vunpack.c.l.b16 %v8789
    %v8874 = vunpack.c.l.b16 %v8790
    %v8875 = vunpack.c.l.b16 %v8791
    %v8876 = vunpack.c.l.b16 %v8792
    %v8877 = vunpack.c.l.b16 %v8793
    %v8878 = vunpack.c.l.b16 %v8794
    %v8879 = vunpack.c.l.b16 %v8795
    %v8880 = vunpack.c.l.b16 %v8796
    %v8881 = vunpack.c.l.b16 %v8797
    %v8882 = vunpack.c.l.b16 %v8798
    %v8883 = vunpack.c.l.b16 %v8799
    %v8884 = vunpack.c.l.b16 %v8800
    %v8885 = vunpack.c.l.b16 %v8801
    %v8886 = vunpack.c.l.b16 %v8802
    %v8887 = vunpack.c.l.b16 %v8803
    %v8888 = vunpack.c.l.b16 %v8804
    %v8889 = vrot.slane %v8858, 7
    %vm8890 = vcmask 1041409
    %v8891 = vsel %vm8890, %v8889, %v8857
    %v8892 = vrot.slane %v8859, 6
    %vm8893 = vcmask 1042434
    %v8894 = vsel %vm8893, %v8892, %v8891
    %v8895 = vrot.slane %v8860, 5
    %vm8896 = vcmask 1043459
    %v8897 = vsel %vm8896, %v8895, %v8894
    %v8898 = vrot.slane %v8861, 4
    %vm8899 = vcmask 1044484
    %v8900 = vsel %vm8899, %v8898, %v8897
    %v8901 = vrot.slane %v8862, 3
    %vm8902 = vcmask 1045509
    %v8903 = vsel %vm8902, %v8901, %v8900
    %v8904 = vrot.slane %v8863, 2
    %vm8905 = vcmask 1046534
    %v8906 = vsel %vm8905, %v8904, %v8903
    %v8907 = vrot.slane %v8864, 1
    %vm8908 = vcmask 1047559
    %v8909 = vsel %vm8908, %v8907, %v8906
    %v8910 = vrot.slane %v8866, 7
    %v8911 = vsel %vm8890, %v8910, %v8865
    %v8912 = vrot.slane %v8867, 6
    %v8913 = vsel %vm8893, %v8912, %v8911
    %v8914 = vrot.slane %v8868, 5
    %v8915 = vsel %vm8896, %v8914, %v8913
    %v8916 = vrot.slane %v8869, 4
    %v8917 = vsel %vm8899, %v8916, %v8915
    %v8918 = vrot.slane %v8870, 3
    %v8919 = vsel %vm8902, %v8918, %v8917
    %v8920 = vrot.slane %v8871, 2
    %v8921 = vsel %vm8905, %v8920, %v8919
    %v8922 = vrot.slane %v8872, 1
    %v8923 = vsel %vm8908, %v8922, %v8921
    %v8924 = vrot.slane %v8874, 7
    %v8925 = vsel %vm8890, %v8924, %v8873
    %v8926 = vrot.slane %v8875, 6
    %v8927 = vsel %vm8893, %v8926, %v8925
    %v8928 = vrot.slane %v8876, 5
    %v8929 = vsel %vm8896, %v8928, %v8927
    %v8930 = vrot.slane %v8877, 4
    %v8931 = vsel %vm8899, %v8930, %v8929
    %v8932 = vrot.slane %v8878, 3
    %v8933 = vsel %vm8902, %v8932, %v8931
    %v8934 = vrot.slane %v8879, 2
    %v8935 = vsel %vm8905, %v8934, %v8933
    %v8936 = vrot.slane %v8880, 1
    %v8937 = vsel %vm8908, %v8936, %v8935
    %v8938 = vrot.slane %v8882, 7
    %v8939 = vsel %vm8890, %v8938, %v8881
    %v8940 = vrot.slane %v8883, 6
    %v8941 = vsel %vm8893, %v8940, %v8939
    %v8942 = vrot.slane %v8884, 5
    %v8943 = vsel %vm8896, %v8942, %v8941
    %v8944 = vrot.slane %v8885, 4
    %v8945 = vsel %vm8899, %v8944, %v8943
    %v8946 = vrot.slane %v8886, 3
    %v8947 = vsel %vm8902, %v8946, %v8945
    %v8948 = vrot.slane %v8887, 2
    %v8949 = vsel %vm8905, %v8948, %v8947
    %v8950 = vrot.slane %v8888, 1
    %v8951 = vsel %vm8908, %v8950, %v8949
    %v8952 = vpack.c.b16 %v8923, %v8909
    %v8953 = vpack.c.b16 %v8951, %v8937
    %v8972 = vunpack.c.l.b16 %v8805
    %v8973 = vunpack.c.l.b16 %v8806
    %v8974 = vunpack.c.l.b16 %v8807
    %v8975 = vunpack.c.l.b16 %v8808
    %v8976 = vunpack.c.l.b16 %v8809
    %v8977 = vunpack.c.l.b16 %v8810
    %v8978 = vunpack.c.l.b16 %v8811
    %v8979 = vunpack.c.l.b16 %v8812
    %v8980 = vunpack.c.l.b16 %v8813
    %v8981 = vunpack.c.l.b16 %v8814
    %v8982 = vunpack.c.l.b16 %v8815
    %v8983 = vunpack.c.l.b16 %v8816
    %v8984 = vunpack.c.l.b16 %v8817
    %v8985 = vunpack.c.l.b16 %v8818
    %v8986 = vunpack.c.l.b16 %v8819
    %v8987 = vunpack.c.l.b16 %v8820
    %v8988 = vpack.c.b16 %v8973, %v8972
    %v8989 = vpack.c.b16 %v8975, %v8974
    %v8990 = vpack.c.b16 %v8977, %v8976
    %v8991 = vpack.c.b16 %v8979, %v8978
    %v8992 = vpack.c.b16 %v8981, %v8980
    %v8993 = vpack.c.b16 %v8983, %v8982
    %v8994 = vpack.c.b16 %v8985, %v8984
    %v8995 = vpack.c.b16 %v8987, %v8986
    %9004 = vmatpush.bf16.msra.mxu0 %v8995
    %9005 = vmatpush.bf16.msra.mxu0 %v8994
    %9006 = vmatpush.bf16.msra.mxu0 %v8993
    %9007 = vmatpush.bf16.msra.mxu0 %v8992
    %9008 = vmatpush.bf16.msra.mxu0 %v8991
    %9009 = vmatpush.bf16.msra.mxu0 %v8990
    %9010 = vmatpush.bf16.msra.mxu0 %v8989
    %9011 = vmatpush.bf16.msra.mxu0 %v8988
    %9012 = vmatmul.bf16.gmra.mxu0 %v8952
    %v9013 = vpop.f32.mrf.mxu0
    %v9014 = vadd.f32 %v8823, %v9013
    %v9015 = vpop.f32.mrf.mxu0
    %v9016 = vadd.f32 %v8823, %v9015
    %9017 = vmatmul.bf16.gmra.mxu0 %v8953
    %v9018 = vpop.f32.mrf.mxu0
    %v9019 = vadd.f32 %v8823, %v9018
    %v9020 = vpop.f32.mrf.mxu0
    %v9021 = vadd.f32 %v8823, %v9020
    %9022 = vdwg.mxu0
    %9023 = vst [vmem:[#allocation13] sm:$0xff] %v9014
    %9024 = vst [vmem:[#allocation13 + $0x8] sm:$0xff] %v9016
    %9025 = vst [vmem:[#allocation13 + $0x10] sm:$0xff] %v9019
    %9026 = vst [vmem:[#allocation13 + $0x18] sm:$0xff] %v9021
    // Predicated region
    $region50: #{tpu_custom_call.1} parent=1 // pred_check
      _
    $region51: #{tpu_custom_call.1} parent=1 // pred_check_branch
      %9028 = sbr.rel (0) target = $region53
    $region52: #{tpu_custom_call.1} parent=1 // pred_region
      %9030 = vsyncadd [#allocation4], 0
      %s9031 = sshll.u32 [#allocation13], 4
      %s9032 = int_to_ptr.vmem [resolvable:$true] %s9031
      %s9033 = sshll.u32 %s6, 4
      %s9034 = int_to_ptr.hbm [resolvable:$true] %s9033
      %9039 = dma.vmem_to_hbm [thread:$0]  %s9032, 512, %s9034, [#allocation4], 128, 128, 8
    $region53: #{tpu_custom_call.1} parent=1 // pred_fallthru
      _
    // Predicated region
    $region54: #{tpu_custom_call.1} parent=1 // pred_check
      _
    $region55: #{tpu_custom_call.1} parent=1 // pred_check_branch
      %9041 = sbr.rel (0) target = $region57
    $region56: #{tpu_custom_call.1} parent=1 // pred_region
      %9043 = dma.done [#allocation4], 512
    $region57: #{tpu_custom_call.1} parent=1 // pred_fallthru
      _
    %9044 = vsyncpa [#allocation3], 1
    %9045 = vsyncpa [#allocation6], 1
    %9046 = vsyncpa [#allocation9], 1
    %9047 = vsyncpa [#allocation12], 1
    %9048 = vsyncpa [#allocation4], 1

</llo_original>
